<compile_context>
chip_gen: v7x
topology: tpu7x:2x2x1
jax: 0.10.0
libtpu: 0.0.40
codegen_flags: <defaults>
</compile_context>

<pallas_src>
import math
from functools import partial

import jax
import jax.numpy as jnp
from jax import lax
from jax.experimental import pallas as pl
from jax.experimental.pallas import tpu as pltpu

KH = KW = 3
K = KH * KW          # 9 kernel positions
PAD = 1              # padding = 1, stride = 1, dilation = 1, deformable_groups = 1


def _dcn_bn_relu_kernel(H, W, Hp, Wp, Ci, Co, RT,
                        om_ref, xpad_ref, w2_ref, shift_ref, o_ref):
    WpCi = Wp * Ci
    om = om_ref[0]                        # (RT, 3K) f32: [dh(K) | dw(K) | mask_logits(K)]
    xpad = xpad_ref[0]                    # (Hp, Wp*Ci) bf16, zero-padded input (packed)

    dh_all = om[:, 0:K]                   # (RT, K)
    dw_all = om[:, K:2 * K]               # (RT, K)
    mask = jax.nn.sigmoid(om[:, 2 * K:3 * K])        # (RT, K) modulation mask

    # output-pixel coordinates for this row tile (generated in-kernel, no DMA)
    row0 = (pl.program_id(1) * RT).astype(jnp.float32)
    p = row0 + lax.broadcasted_iota(jnp.int32, (RT, 1), 0).astype(jnp.float32)  # flat idx
    h_base = jnp.floor((p + 0.5) * (1.0 / W))
    w_base = p - h_base * float(W)

    rcoord = lax.broadcasted_iota(jnp.int32, (1, Hp), 1).astype(jnp.float32)     # padded rows
    jcoord = lax.broadcasted_iota(jnp.int32, (1, WpCi), 1).astype(jnp.float32)
    scoord = jnp.floor((jcoord + 0.5) * (1.0 / Ci))   # padded col index per packed lane

    out = jnp.zeros((RT, Co), jnp.float32)
    for k in range(K):                    # statically unrolled, 9 positions
        kh, kw = k // KW, k % KW
        dh = dh_all[:, k:k + 1]
        dw = dw_all[:, k:k + 1]
        ph = h_base + float(kh - PAD) + dh            # sample row (unpadded coords)
        pw = w_base + float(kw - PAD) + dw            # sample col
        valid = ((ph > -1.0) & (ph < float(H)) &
                 (pw > -1.0) & (pw < float(W))).astype(jnp.float32)
        m = mask[:, k:k + 1] * valid                  # modulation * boundary-valid
        # Bilinear sampling == separable tent weights on the zero-padded grid.
        th = jnp.maximum(0.0, 1.0 - jnp.abs((ph + float(PAD)) - rcoord)) * m    # (RT, Hp)
        tw = jnp.maximum(0.0, 1.0 - jnp.abs((pw + float(PAD)) - scoord))        # (RT, Wp*Ci)
        tmp = jnp.dot(th.astype(jnp.bfloat16), xpad,
                      preferred_element_type=jnp.float32)                        # (RT, Wp*Ci)
        s = (tmp * tw).astype(jnp.bfloat16)
        w2k = w2_ref[k]                                                          # (Wp*Ci, Co) bf16
        out = out + jnp.dot(s, w2k, preferred_element_type=jnp.float32)

    # ---- folded BatchNorm shift (scale + bias folded into W2/shift) + ReLU ----
    o_ref[0] = jnp.maximum(out + shift_ref[...], 0.0)


def deform_conv_forward(x_nchw, params, row_tile=None):
    N, Ci, H, W = x_nchw.shape
    Co = params["w_main"].shape[0]
    Hp, Wp = H + 2 * PAD, W + 2 * PAD
    HW = H * W
    WpCi = Wp * Ci

    if row_tile is None:
        row_tile = HW
        for cand in (512, 256, 128, 64, 32, 16, 8):
            if HW % cand == 0:
                row_tile = cand
                break
    assert HW % row_tile == 0
    RT = row_tile

    x_nhwc = jnp.transpose(x_nchw, (0, 2, 3, 1)).astype(jnp.float32)

    # ---- offset / modulation-mask 3x3 conv (plain dense conv, runs in XLA) ----
    w_om_hwio = jnp.transpose(params["w_om"].astype(jnp.float32), (2, 3, 1, 0))  # (KH,KW,Ci,3K)
    om = lax.conv_general_dilated(
        x_nhwc, w_om_hwio, window_strides=(1, 1),
        padding=((PAD, PAD), (PAD, PAD)),
        dimension_numbers=("NHWC", "HWIO", "NHWC"))
    om = om + params["b_om"].astype(jnp.float32).reshape(1, 1, 1, 3 * K)
    # DCNv2 channel layout is interleaved [dh0, dw0, dh1, dw1, ..., m0..m8];
    # de-interleave to [dh0..dh8 | dw0..dw8 | m0..m8] so the kernel slices
    # contiguous column blocks instead of 18 single-lane strided extracts.
    perm = ([2 * k for k in range(K)] + [2 * k + 1 for k in range(K)]
            + [2 * K + k for k in range(K)])
    om = om[..., jnp.asarray(perm)].reshape(N, HW, 3 * K)

    # zero-padded input, packed (Hp, Wp*Ci), bf16 MXU operand
    xpad = jnp.pad(x_nhwc, ((0, 0), (PAD, PAD), (PAD, PAD), (0, 0)))
    xpad_packed = xpad.reshape(N, Hp, WpCi).astype(jnp.bfloat16)

    # fused main-conv weights: W2[k] = tile_Wp(w_main[:,:,kh,kw].T) * bn_scale
    # (folds the old `red` strided-reduction matmul, the (Ci,Co) matmul and the
    #  BN scale into one weight; bias + BN mean/beta fold into `shift`).
    eps = 1e-5
    scale = params["gamma"] / jnp.sqrt(params["running_var"] + eps)              # (Co,)
    shift = params["beta"] - params["running_mean"] * scale + scale * params["b_main"]
    w_main = params["w_main"].astype(jnp.float32)                                # (Co,Ci,KH,KW)
    w2_list = []
    for k in range(K):
        kh, kw = k // KW, k % KW
        wk = jnp.transpose(w_main[:, :, kh, kw], (1, 0))                         # (Ci, Co)
        w2_list.append(jnp.tile(wk, (Wp, 1)) * scale[None, :])                   # (Wp*Ci, Co)
    w2 = jnp.stack(w2_list, axis=0).astype(jnp.bfloat16)                         # (K, Wp*Ci, Co)
    shift = shift.reshape(1, Co).astype(jnp.float32)

    kernel = partial(_dcn_bn_relu_kernel, H, W, Hp, Wp, Ci, Co, RT)

    out = pl.pallas_call(
        kernel,
        out_shape=jax.ShapeDtypeStruct((N, HW, Co), jnp.float32),
        grid_spec=pltpu.PrefetchScalarGridSpec(
            num_scalar_prefetch=0,
            grid=(N, HW // RT),                       # batch x spatial row-tiles
            in_specs=[
                pl.BlockSpec((1, RT, 3 * K), lambda n, t: (n, t, 0)),
                pl.BlockSpec((1, Hp, WpCi), lambda n, t: (n, 0, 0)),
                pl.BlockSpec((K, WpCi, Co), lambda n, t: (0, 0, 0)),
                pl.BlockSpec((1, Co), lambda n, t: (0, 0)),
            ],
            out_specs=pl.BlockSpec((1, RT, Co), lambda n, t: (n, t, 0)),
        ),
        compiler_params=pltpu.CompilerParams(
            dimension_semantics=("parallel", "parallel")),
    )(om, xpad_packed, w2, shift)

    y = out.reshape(N, H, W, Co)
    return jnp.transpose(y, (0, 3, 1, 2))     # back to NCHW to match the PyTorch module


if __name__ == "__main__":
    key = jax.random.PRNGKey(0)
    k_x, k0, k1, k2, k3, k4, k5, k6, k7 = jax.random.split(key, 9)
    N, Ci, Co, H, W = 2, 4, 8, 16, 16
    x = jax.random.normal(k_x, (N, Ci, H, W), jnp.float32)

    stdv = 1.0 / math.sqrt(Ci * KH * KW)
    params = {
        # main deformable-conv weight/bias (DCN reset_parameters uses uniform(-stdv, stdv))
        "w_main": jax.random.uniform(k0, (Co, Ci, KH, KW), jnp.float32, -stdv, stdv),
        "b_main": jax.random.uniform(k1, (Co,), jnp.float32, -stdv, stdv),
        # NOTE: DCN zero-initializes conv_offset_mask; small random values are used here
        # so the deformable bilinear-sampling path is actually exercised.
        "w_om": jax.random.normal(k2, (3 * K, Ci, KH, KW), jnp.float32) * 0.1,
        "b_om": jax.random.normal(k3, (3 * K,), jnp.float32) * 0.1,
        # BatchNorm2d(cho) parameters + running stats (inference mode)
        "gamma": jax.random.uniform(k4, (Co,), jnp.float32, 0.5, 1.5),
        "beta": jax.random.normal(k5, (Co,), jnp.float32) * 0.1,
        "running_mean": jax.random.normal(k6, (Co,), jnp.float32) * 0.1,
        "running_var": jax.random.uniform(k7, (Co,), jnp.float32, 0.5, 1.5),
    }

    y = deform_conv_forward(x, params, row_tile=128)
    jax.block_until_ready(y)
    assert y.shape == (N, Co, H, W) and y.dtype == jnp.float32
    print("KERNEL_OK")
</pallas_src>

<mosaic_0001>
module attributes {stable_mosaic.version = 11 : i64} {
  func.func @_dcn_bn_relu_kernel(%arg0: i32, %arg1: i32, %arg2: memref<1x128x27xf32, #tpu.memory_space<vmem>>, %arg3: memref<1x18x72xbf16, #tpu.memory_space<vmem>>, %arg4: memref<9x72x8xbf16, #tpu.memory_space<vmem>>, %arg5: memref<1x8xf32, #tpu.memory_space<vmem>>, %arg6: memref<1x128x8xf32, #tpu.memory_space<vmem>>) attributes {dimension_semantics = [#tpu.dimension_semantics<parallel>, #tpu.dimension_semantics<parallel>], iteration_bounds = array<i64: 2, 2>, scalar_prefetch = 0 : i64, scratch_operands = 0 : i64, tpu.core_type = #tpu.core_type<tc>, window_params = [{transform_indices = @transform_0, window_bounds = array<i64: 1, 128, 27>}, {transform_indices = @transform_1, window_bounds = array<i64: 1, 18, 72>}, {pipeline_mode = #tpu.pipeline_mode<synchronous>, transform_indices = @transform_2, window_bounds = array<i64: 9, 72, 8>}, {pipeline_mode = #tpu.pipeline_mode<synchronous>, transform_indices = @transform_3, window_bounds = array<i64: 1, 8>}, {transform_indices = @transform_4, window_bounds = array<i64: 1, 128, 8>}]} {
    %c0 = arith.constant 0 : index
    %c0_0 = arith.constant 0 : index
    %c0_1 = arith.constant 0 : index
    %0 = vector.load %arg2[%c0, %c0_0, %c0_1] : memref<1x128x27xf32, #tpu.memory_space<vmem>>, vector<1x128x27xf32>
    %1 = vector.shape_cast %0 : vector<1x128x27xf32> to vector<128x27xf32>
    %c0_2 = arith.constant 0 : index
    %c0_3 = arith.constant 0 : index
    %c0_4 = arith.constant 0 : index
    %2 = vector.load %arg3[%c0_2, %c0_3, %c0_4] : memref<1x18x72xbf16, #tpu.memory_space<vmem>>, vector<1x18x72xbf16>
    %3 = vector.shape_cast %2 : vector<1x18x72xbf16> to vector<18x72xbf16>
    %4 = vector.extract_strided_slice %1 {offsets = [0, 0], sizes = [128, 9], strides = [1, 1]} : vector<128x27xf32> to vector<128x9xf32>
    %5 = vector.extract_strided_slice %1 {offsets = [0, 9], sizes = [128, 9], strides = [1, 1]} : vector<128x27xf32> to vector<128x9xf32>
    %6 = vector.extract_strided_slice %1 {offsets = [0, 18], sizes = [128, 9], strides = [1, 1]} : vector<128x27xf32> to vector<128x9xf32>
    %7 = arith.negf %6 : vector<128x9xf32>
    %8 = math.exp %7 : vector<128x9xf32>
    %cst = arith.constant 1.000000e+00 : f32
    %9 = vector.broadcast %cst : f32 to vector<128x9xf32>
    %10 = arith.addf %9, %8 : vector<128x9xf32>
    %11 = arith.divf %9, %10 : vector<128x9xf32>
    %c128_i32 = arith.constant 128 : i32
    %12 = arith.muli %arg1, %c128_i32 : i32
    %13 = arith.sitofp %12 : i32 to f32
    %14 = tpu.iota {dimensions = array<i32: 0>} : vector<128x1xi32>
    %15 = arith.sitofp %14 : vector<128x1xi32> to vector<128x1xf32>
    %16 = vector.broadcast %13 : f32 to vector<128x1xf32>
    %17 = arith.addf %16, %15 : vector<128x1xf32>
    %cst_5 = arith.constant 5.000000e-01 : f32
    %18 = vector.broadcast %cst_5 : f32 to vector<128x1xf32>
    %19 = arith.addf %17, %18 : vector<128x1xf32>
    %cst_6 = arith.constant 6.250000e-02 : f32
    %20 = vector.broadcast %cst_6 : f32 to vector<128x1xf32>
    %21 = arith.mulf %19, %20 : vector<128x1xf32>
    %22 = math.floor %21 : vector<128x1xf32>
    %cst_7 = arith.constant 1.600000e+01 : f32
    %23 = vector.broadcast %cst_7 : f32 to vector<128x1xf32>
    %24 = arith.mulf %22, %23 : vector<128x1xf32>
    %25 = arith.subf %17, %24 : vector<128x1xf32>
    %26 = tpu.iota {dimensions = array<i32: 1>} : vector<1x18xi32>
    %27 = arith.sitofp %26 : vector<1x18xi32> to vector<1x18xf32>
    %28 = tpu.iota {dimensions = array<i32: 1>} : vector<1x72xi32>
    %29 = arith.sitofp %28 : vector<1x72xi32> to vector<1x72xf32>
    %cst_8 = arith.constant 5.000000e-01 : f32
    %30 = vector.broadcast %cst_8 : f32 to vector<1x72xf32>
    %31 = arith.addf %29, %30 : vector<1x72xf32>
    %cst_9 = arith.constant 2.500000e-01 : f32
    %32 = vector.broadcast %cst_9 : f32 to vector<1x72xf32>
    %33 = arith.mulf %31, %32 : vector<1x72xf32>
    %34 = math.floor %33 : vector<1x72xf32>
    %cst_10 = arith.constant 0.000000e+00 : f32
    %35 = vector.broadcast %cst_10 : f32 to vector<128x8xf32>
    %36 = vector.extract_strided_slice %4 {offsets = [0, 0], sizes = [128, 1], strides = [1, 1]} : vector<128x9xf32> to vector<128x1xf32>
    %37 = vector.extract_strided_slice %5 {offsets = [0, 0], sizes = [128, 1], strides = [1, 1]} : vector<128x9xf32> to vector<128x1xf32>
    %cst_11 = arith.constant -1.000000e+00 : f32
    %38 = vector.broadcast %cst_11 : f32 to vector<128x1xf32>
    %39 = arith.addf %22, %38 : vector<128x1xf32>
    %40 = arith.addf %39, %36 : vector<128x1xf32>
    %cst_12 = arith.constant -1.000000e+00 : f32
    %41 = vector.broadcast %cst_12 : f32 to vector<128x1xf32>
    %42 = arith.addf %25, %41 : vector<128x1xf32>
    %43 = arith.addf %42, %37 : vector<128x1xf32>
    %cst_13 = arith.constant -1.000000e+00 : f32
    %44 = vector.broadcast %cst_13 : f32 to vector<128x1xf32>
    %45 = arith.cmpf ogt, %40, %44 : vector<128x1xf32>
    %cst_14 = arith.constant 1.600000e+01 : f32
    %46 = vector.broadcast %cst_14 : f32 to vector<128x1xf32>
    %47 = arith.cmpf olt, %40, %46 : vector<128x1xf32>
    %48 = arith.andi %45, %47 : vector<128x1xi1>
    %cst_15 = arith.constant -1.000000e+00 : f32
    %49 = vector.broadcast %cst_15 : f32 to vector<128x1xf32>
    %50 = arith.cmpf ogt, %43, %49 : vector<128x1xf32>
    %51 = arith.andi %48, %50 : vector<128x1xi1>
    %cst_16 = arith.constant 1.600000e+01 : f32
    %52 = vector.broadcast %cst_16 : f32 to vector<128x1xf32>
    %53 = arith.cmpf olt, %43, %52 : vector<128x1xf32>
    %54 = arith.andi %51, %53 : vector<128x1xi1>
    %55 = arith.extui %54 : vector<128x1xi1> to vector<128x1xi32>
    %56 = arith.sitofp %55 : vector<128x1xi32> to vector<128x1xf32>
    %57 = vector.extract_strided_slice %11 {offsets = [0, 0], sizes = [128, 1], strides = [1, 1]} : vector<128x9xf32> to vector<128x1xf32>
    %58 = arith.mulf %57, %56 : vector<128x1xf32>
    %cst_17 = arith.constant 1.000000e+00 : f32
    %59 = vector.broadcast %cst_17 : f32 to vector<128x1xf32>
    %60 = arith.addf %40, %59 : vector<128x1xf32>
    %61 = vector.broadcast %60 : vector<128x1xf32> to vector<128x18xf32>
    %62 = vector.broadcast %27 : vector<1x18xf32> to vector<128x18xf32>
    %63 = arith.subf %61, %62 : vector<128x18xf32>
    %64 = math.absf %63 : vector<128x18xf32>
    %cst_18 = arith.constant 1.000000e+00 : f32
    %65 = vector.broadcast %cst_18 : f32 to vector<128x18xf32>
    %66 = arith.subf %65, %64 : vector<128x18xf32>
    %cst_19 = arith.constant 0.000000e+00 : f32
    %67 = vector.broadcast %cst_19 : f32 to vector<128x18xf32>
    %68 = arith.maximumf %67, %66 : vector<128x18xf32>
    %69 = vector.broadcast %58 : vector<128x1xf32> to vector<128x18xf32>
    %70 = arith.mulf %68, %69 : vector<128x18xf32>
    %cst_20 = arith.constant 1.000000e+00 : f32
    %71 = vector.broadcast %cst_20 : f32 to vector<128x1xf32>
    %72 = arith.addf %43, %71 : vector<128x1xf32>
    %73 = vector.broadcast %72 : vector<128x1xf32> to vector<128x72xf32>
    %74 = vector.broadcast %34 : vector<1x72xf32> to vector<128x72xf32>
    %75 = arith.subf %73, %74 : vector<128x72xf32>
    %76 = math.absf %75 : vector<128x72xf32>
    %cst_21 = arith.constant 1.000000e+00 : f32
    %77 = vector.broadcast %cst_21 : f32 to vector<128x72xf32>
    %78 = arith.subf %77, %76 : vector<128x72xf32>
    %cst_22 = arith.constant 0.000000e+00 : f32
    %79 = vector.broadcast %cst_22 : f32 to vector<128x72xf32>
    %80 = arith.maximumf %79, %78 : vector<128x72xf32>
    %81 = arith.truncf %70 : vector<128x18xf32> to vector<128x18xbf16>
    %cst_23 = arith.constant dense<0.000000e+00> : vector<128x72xf32>
    %82 = tpu.matmul %81, %3, %cst_23 {dimension_numbers = #tpu.dot_dimension_numbers<[1], [0], [0], [1], [0, 0, 1, 1], [], []>} : vector<128x18xbf16>, vector<18x72xbf16>, vector<128x72xf32> -> vector<128x72xf32>
    %83 = arith.mulf %82, %80 : vector<128x72xf32>
    %84 = arith.truncf %83 : vector<128x72xf32> to vector<128x72xbf16>
    %c0_24 = arith.constant 0 : index
    %c0_25 = arith.constant 0 : index
    %c0_26 = arith.constant 0 : index
    %85 = vector.load %arg4[%c0_24, %c0_25, %c0_26] : memref<9x72x8xbf16, #tpu.memory_space<vmem>>, vector<1x72x8xbf16>
    %86 = vector.shape_cast %85 : vector<1x72x8xbf16> to vector<72x8xbf16>
    %cst_27 = arith.constant dense<0.000000e+00> : vector<128x8xf32>
    %87 = tpu.matmul %84, %86, %cst_27 {dimension_numbers = #tpu.dot_dimension_numbers<[1], [0], [0], [1], [0, 0, 1, 1], [], []>} : vector<128x72xbf16>, vector<72x8xbf16>, vector<128x8xf32> -> vector<128x8xf32>
    %88 = arith.addf %35, %87 : vector<128x8xf32>
    %89 = vector.extract_strided_slice %4 {offsets = [0, 1], sizes = [128, 1], strides = [1, 1]} : vector<128x9xf32> to vector<128x1xf32>
    %90 = vector.extract_strided_slice %5 {offsets = [0, 1], sizes = [128, 1], strides = [1, 1]} : vector<128x9xf32> to vector<128x1xf32>
    %cst_28 = arith.constant -1.000000e+00 : f32
    %91 = vector.broadcast %cst_28 : f32 to vector<128x1xf32>
    %92 = arith.addf %22, %91 : vector<128x1xf32>
    %93 = arith.addf %92, %89 : vector<128x1xf32>
    %cst_29 = arith.constant 0.000000e+00 : f32
    %94 = vector.broadcast %cst_29 : f32 to vector<128x1xf32>
    %95 = arith.addf %25, %94 : vector<128x1xf32>
    %96 = arith.addf %95, %90 : vector<128x1xf32>
    %cst_30 = arith.constant -1.000000e+00 : f32
    %97 = vector.broadcast %cst_30 : f32 to vector<128x1xf32>
    %98 = arith.cmpf ogt, %93, %97 : vector<128x1xf32>
    %cst_31 = arith.constant 1.600000e+01 : f32
    %99 = vector.broadcast %cst_31 : f32 to vector<128x1xf32>
    %100 = arith.cmpf olt, %93, %99 : vector<128x1xf32>
    %101 = arith.andi %98, %100 : vector<128x1xi1>
    %cst_32 = arith.constant -1.000000e+00 : f32
    %102 = vector.broadcast %cst_32 : f32 to vector<128x1xf32>
    %103 = arith.cmpf ogt, %96, %102 : vector<128x1xf32>
    %104 = arith.andi %101, %103 : vector<128x1xi1>
    %cst_33 = arith.constant 1.600000e+01 : f32
    %105 = vector.broadcast %cst_33 : f32 to vector<128x1xf32>
    %106 = arith.cmpf olt, %96, %105 : vector<128x1xf32>
    %107 = arith.andi %104, %106 : vector<128x1xi1>
    %108 = arith.extui %107 : vector<128x1xi1> to vector<128x1xi32>
    %109 = arith.sitofp %108 : vector<128x1xi32> to vector<128x1xf32>
    %110 = vector.extract_strided_slice %11 {offsets = [0, 1], sizes = [128, 1], strides = [1, 1]} : vector<128x9xf32> to vector<128x1xf32>
    %111 = arith.mulf %110, %109 : vector<128x1xf32>
    %cst_34 = arith.constant 1.000000e+00 : f32
    %112 = vector.broadcast %cst_34 : f32 to vector<128x1xf32>
    %113 = arith.addf %93, %112 : vector<128x1xf32>
    %114 = vector.broadcast %113 : vector<128x1xf32> to vector<128x18xf32>
    %115 = vector.broadcast %27 : vector<1x18xf32> to vector<128x18xf32>
    %116 = arith.subf %114, %115 : vector<128x18xf32>
    %117 = math.absf %116 : vector<128x18xf32>
    %cst_35 = arith.constant 1.000000e+00 : f32
    %118 = vector.broadcast %cst_35 : f32 to vector<128x18xf32>
    %119 = arith.subf %118, %117 : vector<128x18xf32>
    %cst_36 = arith.constant 0.000000e+00 : f32
    %120 = vector.broadcast %cst_36 : f32 to vector<128x18xf32>
    %121 = arith.maximumf %120, %119 : vector<128x18xf32>
    %122 = vector.broadcast %111 : vector<128x1xf32> to vector<128x18xf32>
    %123 = arith.mulf %121, %122 : vector<128x18xf32>
    %cst_37 = arith.constant 1.000000e+00 : f32
    %124 = vector.broadcast %cst_37 : f32 to vector<128x1xf32>
    %125 = arith.addf %96, %124 : vector<128x1xf32>
    %126 = vector.broadcast %125 : vector<128x1xf32> to vector<128x72xf32>
    %127 = vector.broadcast %34 : vector<1x72xf32> to vector<128x72xf32>
    %128 = arith.subf %126, %127 : vector<128x72xf32>
    %129 = math.absf %128 : vector<128x72xf32>
    %cst_38 = arith.constant 1.000000e+00 : f32
    %130 = vector.broadcast %cst_38 : f32 to vector<128x72xf32>
    %131 = arith.subf %130, %129 : vector<128x72xf32>
    %cst_39 = arith.constant 0.000000e+00 : f32
    %132 = vector.broadcast %cst_39 : f32 to vector<128x72xf32>
    %133 = arith.maximumf %132, %131 : vector<128x72xf32>
    %134 = arith.truncf %123 : vector<128x18xf32> to vector<128x18xbf16>
    %cst_40 = arith.constant dense<0.000000e+00> : vector<128x72xf32>
    %135 = tpu.matmul %134, %3, %cst_40 {dimension_numbers = #tpu.dot_dimension_numbers<[1], [0], [0], [1], [0, 0, 1, 1], [], []>} : vector<128x18xbf16>, vector<18x72xbf16>, vector<128x72xf32> -> vector<128x72xf32>
    %136 = arith.mulf %135, %133 : vector<128x72xf32>
    %137 = arith.truncf %136 : vector<128x72xf32> to vector<128x72xbf16>
    %c1 = arith.constant 1 : index
    %c0_41 = arith.constant 0 : index
    %c0_42 = arith.constant 0 : index
    %138 = vector.load %arg4[%c1, %c0_41, %c0_42] : memref<9x72x8xbf16, #tpu.memory_space<vmem>>, vector<1x72x8xbf16>
    %139 = vector.shape_cast %138 : vector<1x72x8xbf16> to vector<72x8xbf16>
    %cst_43 = arith.constant dense<0.000000e+00> : vector<128x8xf32>
    %140 = tpu.matmul %137, %139, %cst_43 {dimension_numbers = #tpu.dot_dimension_numbers<[1], [0], [0], [1], [0, 0, 1, 1], [], []>} : vector<128x72xbf16>, vector<72x8xbf16>, vector<128x8xf32> -> vector<128x8xf32>
    %141 = arith.addf %88, %140 : vector<128x8xf32>
    %142 = vector.extract_strided_slice %4 {offsets = [0, 2], sizes = [128, 1], strides = [1, 1]} : vector<128x9xf32> to vector<128x1xf32>
    %143 = vector.extract_strided_slice %5 {offsets = [0, 2], sizes = [128, 1], strides = [1, 1]} : vector<128x9xf32> to vector<128x1xf32>
    %cst_44 = arith.constant -1.000000e+00 : f32
    %144 = vector.broadcast %cst_44 : f32 to vector<128x1xf32>
    %145 = arith.addf %22, %144 : vector<128x1xf32>
    %146 = arith.addf %145, %142 : vector<128x1xf32>
    %cst_45 = arith.constant 1.000000e+00 : f32
    %147 = vector.broadcast %cst_45 : f32 to vector<128x1xf32>
    %148 = arith.addf %25, %147 : vector<128x1xf32>
    %149 = arith.addf %148, %143 : vector<128x1xf32>
    %cst_46 = arith.constant -1.000000e+00 : f32
    %150 = vector.broadcast %cst_46 : f32 to vector<128x1xf32>
    %151 = arith.cmpf ogt, %146, %150 : vector<128x1xf32>
    %cst_47 = arith.constant 1.600000e+01 : f32
    %152 = vector.broadcast %cst_47 : f32 to vector<128x1xf32>
    %153 = arith.cmpf olt, %146, %152 : vector<128x1xf32>
    %154 = arith.andi %151, %153 : vector<128x1xi1>
    %cst_48 = arith.constant -1.000000e+00 : f32
    %155 = vector.broadcast %cst_48 : f32 to vector<128x1xf32>
    %156 = arith.cmpf ogt, %149, %155 : vector<128x1xf32>
    %157 = arith.andi %154, %156 : vector<128x1xi1>
    %cst_49 = arith.constant 1.600000e+01 : f32
    %158 = vector.broadcast %cst_49 : f32 to vector<128x1xf32>
    %159 = arith.cmpf olt, %149, %158 : vector<128x1xf32>
    %160 = arith.andi %157, %159 : vector<128x1xi1>
    %161 = arith.extui %160 : vector<128x1xi1> to vector<128x1xi32>
    %162 = arith.sitofp %161 : vector<128x1xi32> to vector<128x1xf32>
    %163 = vector.extract_strided_slice %11 {offsets = [0, 2], sizes = [128, 1], strides = [1, 1]} : vector<128x9xf32> to vector<128x1xf32>
    %164 = arith.mulf %163, %162 : vector<128x1xf32>
    %cst_50 = arith.constant 1.000000e+00 : f32
    %165 = vector.broadcast %cst_50 : f32 to vector<128x1xf32>
    %166 = arith.addf %146, %165 : vector<128x1xf32>
    %167 = vector.broadcast %166 : vector<128x1xf32> to vector<128x18xf32>
    %168 = vector.broadcast %27 : vector<1x18xf32> to vector<128x18xf32>
    %169 = arith.subf %167, %168 : vector<128x18xf32>
    %170 = math.absf %169 : vector<128x18xf32>
    %cst_51 = arith.constant 1.000000e+00 : f32
    %171 = vector.broadcast %cst_51 : f32 to vector<128x18xf32>
    %172 = arith.subf %171, %170 : vector<128x18xf32>
    %cst_52 = arith.constant 0.000000e+00 : f32
    %173 = vector.broadcast %cst_52 : f32 to vector<128x18xf32>
    %174 = arith.maximumf %173, %172 : vector<128x18xf32>
    %175 = vector.broadcast %164 : vector<128x1xf32> to vector<128x18xf32>
    %176 = arith.mulf %174, %175 : vector<128x18xf32>
    %cst_53 = arith.constant 1.000000e+00 : f32
    %177 = vector.broadcast %cst_53 : f32 to vector<128x1xf32>
    %178 = arith.addf %149, %177 : vector<128x1xf32>
    %179 = vector.broadcast %178 : vector<128x1xf32> to vector<128x72xf32>
    %180 = vector.broadcast %34 : vector<1x72xf32> to vector<128x72xf32>
    %181 = arith.subf %179, %180 : vector<128x72xf32>
    %182 = math.absf %181 : vector<128x72xf32>
    %cst_54 = arith.constant 1.000000e+00 : f32
    %183 = vector.broadcast %cst_54 : f32 to vector<128x72xf32>
    %184 = arith.subf %183, %182 : vector<128x72xf32>
    %cst_55 = arith.constant 0.000000e+00 : f32
    %185 = vector.broadcast %cst_55 : f32 to vector<128x72xf32>
    %186 = arith.maximumf %185, %184 : vector<128x72xf32>
    %187 = arith.truncf %176 : vector<128x18xf32> to vector<128x18xbf16>
    %cst_56 = arith.constant dense<0.000000e+00> : vector<128x72xf32>
    %188 = tpu.matmul %187, %3, %cst_56 {dimension_numbers = #tpu.dot_dimension_numbers<[1], [0], [0], [1], [0, 0, 1, 1], [], []>} : vector<128x18xbf16>, vector<18x72xbf16>, vector<128x72xf32> -> vector<128x72xf32>
    %189 = arith.mulf %188, %186 : vector<128x72xf32>
    %190 = arith.truncf %189 : vector<128x72xf32> to vector<128x72xbf16>
    %c2 = arith.constant 2 : index
    %c0_57 = arith.constant 0 : index
    %c0_58 = arith.constant 0 : index
    %191 = vector.load %arg4[%c2, %c0_57, %c0_58] : memref<9x72x8xbf16, #tpu.memory_space<vmem>>, vector<1x72x8xbf16>
    %192 = vector.shape_cast %191 : vector<1x72x8xbf16> to vector<72x8xbf16>
    %cst_59 = arith.constant dense<0.000000e+00> : vector<128x8xf32>
    %193 = tpu.matmul %190, %192, %cst_59 {dimension_numbers = #tpu.dot_dimension_numbers<[1], [0], [0], [1], [0, 0, 1, 1], [], []>} : vector<128x72xbf16>, vector<72x8xbf16>, vector<128x8xf32> -> vector<128x8xf32>
    %194 = arith.addf %141, %193 : vector<128x8xf32>
    %195 = vector.extract_strided_slice %4 {offsets = [0, 3], sizes = [128, 1], strides = [1, 1]} : vector<128x9xf32> to vector<128x1xf32>
    %196 = vector.extract_strided_slice %5 {offsets = [0, 3], sizes = [128, 1], strides = [1, 1]} : vector<128x9xf32> to vector<128x1xf32>
    %cst_60 = arith.constant 0.000000e+00 : f32
    %197 = vector.broadcast %cst_60 : f32 to vector<128x1xf32>
    %198 = arith.addf %22, %197 : vector<128x1xf32>
    %199 = arith.addf %198, %195 : vector<128x1xf32>
    %cst_61 = arith.constant -1.000000e+00 : f32
    %200 = vector.broadcast %cst_61 : f32 to vector<128x1xf32>
    %201 = arith.addf %25, %200 : vector<128x1xf32>
    %202 = arith.addf %201, %196 : vector<128x1xf32>
    %cst_62 = arith.constant -1.000000e+00 : f32
    %203 = vector.broadcast %cst_62 : f32 to vector<128x1xf32>
    %204 = arith.cmpf ogt, %199, %203 : vector<128x1xf32>
    %cst_63 = arith.constant 1.600000e+01 : f32
    %205 = vector.broadcast %cst_63 : f32 to vector<128x1xf32>
    %206 = arith.cmpf olt, %199, %205 : vector<128x1xf32>
    %207 = arith.andi %204, %206 : vector<128x1xi1>
    %cst_64 = arith.constant -1.000000e+00 : f32
    %208 = vector.broadcast %cst_64 : f32 to vector<128x1xf32>
    %209 = arith.cmpf ogt, %202, %208 : vector<128x1xf32>
    %210 = arith.andi %207, %209 : vector<128x1xi1>
    %cst_65 = arith.constant 1.600000e+01 : f32
    %211 = vector.broadcast %cst_65 : f32 to vector<128x1xf32>
    %212 = arith.cmpf olt, %202, %211 : vector<128x1xf32>
    %213 = arith.andi %210, %212 : vector<128x1xi1>
    %214 = arith.extui %213 : vector<128x1xi1> to vector<128x1xi32>
    %215 = arith.sitofp %214 : vector<128x1xi32> to vector<128x1xf32>
    %216 = vector.extract_strided_slice %11 {offsets = [0, 3], sizes = [128, 1], strides = [1, 1]} : vector<128x9xf32> to vector<128x1xf32>
    %217 = arith.mulf %216, %215 : vector<128x1xf32>
    %cst_66 = arith.constant 1.000000e+00 : f32
    %218 = vector.broadcast %cst_66 : f32 to vector<128x1xf32>
    %219 = arith.addf %199, %218 : vector<128x1xf32>
    %220 = vector.broadcast %219 : vector<128x1xf32> to vector<128x18xf32>
    %221 = vector.broadcast %27 : vector<1x18xf32> to vector<128x18xf32>
    %222 = arith.subf %220, %221 : vector<128x18xf32>
    %223 = math.absf %222 : vector<128x18xf32>
    %cst_67 = arith.constant 1.000000e+00 : f32
    %224 = vector.broadcast %cst_67 : f32 to vector<128x18xf32>
    %225 = arith.subf %224, %223 : vector<128x18xf32>
    %cst_68 = arith.constant 0.000000e+00 : f32
    %226 = vector.broadcast %cst_68 : f32 to vector<128x18xf32>
    %227 = arith.maximumf %226, %225 : vector<128x18xf32>
    %228 = vector.broadcast %217 : vector<128x1xf32> to vector<128x18xf32>
    %229 = arith.mulf %227, %228 : vector<128x18xf32>
    %cst_69 = arith.constant 1.000000e+00 : f32
    %230 = vector.broadcast %cst_69 : f32 to vector<128x1xf32>
    %231 = arith.addf %202, %230 : vector<128x1xf32>
    %232 = vector.broadcast %231 : vector<128x1xf32> to vector<128x72xf32>
    %233 = vector.broadcast %34 : vector<1x72xf32> to vector<128x72xf32>
    %234 = arith.subf %232, %233 : vector<128x72xf32>
    %235 = math.absf %234 : vector<128x72xf32>
    %cst_70 = arith.constant 1.000000e+00 : f32
    %236 = vector.broadcast %cst_70 : f32 to vector<128x72xf32>
    %237 = arith.subf %236, %235 : vector<128x72xf32>
    %cst_71 = arith.constant 0.000000e+00 : f32
    %238 = vector.broadcast %cst_71 : f32 to vector<128x72xf32>
    %239 = arith.maximumf %238, %237 : vector<128x72xf32>
    %240 = arith.truncf %229 : vector<128x18xf32> to vector<128x18xbf16>
    %cst_72 = arith.constant dense<0.000000e+00> : vector<128x72xf32>
    %241 = tpu.matmul %240, %3, %cst_72 {dimension_numbers = #tpu.dot_dimension_numbers<[1], [0], [0], [1], [0, 0, 1, 1], [], []>} : vector<128x18xbf16>, vector<18x72xbf16>, vector<128x72xf32> -> vector<128x72xf32>
    %242 = arith.mulf %241, %239 : vector<128x72xf32>
    %243 = arith.truncf %242 : vector<128x72xf32> to vector<128x72xbf16>
    %c3 = arith.constant 3 : index
    %c0_73 = arith.constant 0 : index
    %c0_74 = arith.constant 0 : index
    %244 = vector.load %arg4[%c3, %c0_73, %c0_74] : memref<9x72x8xbf16, #tpu.memory_space<vmem>>, vector<1x72x8xbf16>
    %245 = vector.shape_cast %244 : vector<1x72x8xbf16> to vector<72x8xbf16>
    %cst_75 = arith.constant dense<0.000000e+00> : vector<128x8xf32>
    %246 = tpu.matmul %243, %245, %cst_75 {dimension_numbers = #tpu.dot_dimension_numbers<[1], [0], [0], [1], [0, 0, 1, 1], [], []>} : vector<128x72xbf16>, vector<72x8xbf16>, vector<128x8xf32> -> vector<128x8xf32>
    %247 = arith.addf %194, %246 : vector<128x8xf32>
    %248 = vector.extract_strided_slice %4 {offsets = [0, 4], sizes = [128, 1], strides = [1, 1]} : vector<128x9xf32> to vector<128x1xf32>
    %249 = vector.extract_strided_slice %5 {offsets = [0, 4], sizes = [128, 1], strides = [1, 1]} : vector<128x9xf32> to vector<128x1xf32>
    %cst_76 = arith.constant 0.000000e+00 : f32
    %250 = vector.broadcast %cst_76 : f32 to vector<128x1xf32>
    %251 = arith.addf %22, %250 : vector<128x1xf32>
    %252 = arith.addf %251, %248 : vector<128x1xf32>
    %cst_77 = arith.constant 0.000000e+00 : f32
    %253 = vector.broadcast %cst_77 : f32 to vector<128x1xf32>
    %254 = arith.addf %25, %253 : vector<128x1xf32>
    %255 = arith.addf %254, %249 : vector<128x1xf32>
    %cst_78 = arith.constant -1.000000e+00 : f32
    %256 = vector.broadcast %cst_78 : f32 to vector<128x1xf32>
    %257 = arith.cmpf ogt, %252, %256 : vector<128x1xf32>
    %cst_79 = arith.constant 1.600000e+01 : f32
    %258 = vector.broadcast %cst_79 : f32 to vector<128x1xf32>
    %259 = arith.cmpf olt, %252, %258 : vector<128x1xf32>
    %260 = arith.andi %257, %259 : vector<128x1xi1>
    %cst_80 = arith.constant -1.000000e+00 : f32
    %261 = vector.broadcast %cst_80 : f32 to vector<128x1xf32>
    %262 = arith.cmpf ogt, %255, %261 : vector<128x1xf32>
    %263 = arith.andi %260, %262 : vector<128x1xi1>
    %cst_81 = arith.constant 1.600000e+01 : f32
    %264 = vector.broadcast %cst_81 : f32 to vector<128x1xf32>
    %265 = arith.cmpf olt, %255, %264 : vector<128x1xf32>
    %266 = arith.andi %263, %265 : vector<128x1xi1>
    %267 = arith.extui %266 : vector<128x1xi1> to vector<128x1xi32>
    %268 = arith.sitofp %267 : vector<128x1xi32> to vector<128x1xf32>
    %269 = vector.extract_strided_slice %11 {offsets = [0, 4], sizes = [128, 1], strides = [1, 1]} : vector<128x9xf32> to vector<128x1xf32>
    %270 = arith.mulf %269, %268 : vector<128x1xf32>
    %cst_82 = arith.constant 1.000000e+00 : f32
    %271 = vector.broadcast %cst_82 : f32 to vector<128x1xf32>
    %272 = arith.addf %252, %271 : vector<128x1xf32>
    %273 = vector.broadcast %272 : vector<128x1xf32> to vector<128x18xf32>
    %274 = vector.broadcast %27 : vector<1x18xf32> to vector<128x18xf32>
    %275 = arith.subf %273, %274 : vector<128x18xf32>
    %276 = math.absf %275 : vector<128x18xf32>
    %cst_83 = arith.constant 1.000000e+00 : f32
    %277 = vector.broadcast %cst_83 : f32 to vector<128x18xf32>
    %278 = arith.subf %277, %276 : vector<128x18xf32>
    %cst_84 = arith.constant 0.000000e+00 : f32
    %279 = vector.broadcast %cst_84 : f32 to vector<128x18xf32>
    %280 = arith.maximumf %279, %278 : vector<128x18xf32>
    %281 = vector.broadcast %270 : vector<128x1xf32> to vector<128x18xf32>
    %282 = arith.mulf %280, %281 : vector<128x18xf32>
    %cst_85 = arith.constant 1.000000e+00 : f32
    %283 = vector.broadcast %cst_85 : f32 to vector<128x1xf32>
    %284 = arith.addf %255, %283 : vector<128x1xf32>
    %285 = vector.broadcast %284 : vector<128x1xf32> to vector<128x72xf32>
    %286 = vector.broadcast %34 : vector<1x72xf32> to vector<128x72xf32>
    %287 = arith.subf %285, %286 : vector<128x72xf32>
    %288 = math.absf %287 : vector<128x72xf32>
    %cst_86 = arith.constant 1.000000e+00 : f32
    %289 = vector.broadcast %cst_86 : f32 to vector<128x72xf32>
    %290 = arith.subf %289, %288 : vector<128x72xf32>
    %cst_87 = arith.constant 0.000000e+00 : f32
    %291 = vector.broadcast %cst_87 : f32 to vector<128x72xf32>
    %292 = arith.maximumf %291, %290 : vector<128x72xf32>
    %293 = arith.truncf %282 : vector<128x18xf32> to vector<128x18xbf16>
    %cst_88 = arith.constant dense<0.000000e+00> : vector<128x72xf32>
    %294 = tpu.matmul %293, %3, %cst_88 {dimension_numbers = #tpu.dot_dimension_numbers<[1], [0], [0], [1], [0, 0, 1, 1], [], []>} : vector<128x18xbf16>, vector<18x72xbf16>, vector<128x72xf32> -> vector<128x72xf32>
    %295 = arith.mulf %294, %292 : vector<128x72xf32>
    %296 = arith.truncf %295 : vector<128x72xf32> to vector<128x72xbf16>
    %c4 = arith.constant 4 : index
    %c0_89 = arith.constant 0 : index
    %c0_90 = arith.constant 0 : index
    %297 = vector.load %arg4[%c4, %c0_89, %c0_90] : memref<9x72x8xbf16, #tpu.memory_space<vmem>>, vector<1x72x8xbf16>
    %298 = vector.shape_cast %297 : vector<1x72x8xbf16> to vector<72x8xbf16>
    %cst_91 = arith.constant dense<0.000000e+00> : vector<128x8xf32>
    %299 = tpu.matmul %296, %298, %cst_91 {dimension_numbers = #tpu.dot_dimension_numbers<[1], [0], [0], [1], [0, 0, 1, 1], [], []>} : vector<128x72xbf16>, vector<72x8xbf16>, vector<128x8xf32> -> vector<128x8xf32>
    %300 = arith.addf %247, %299 : vector<128x8xf32>
    %301 = vector.extract_strided_slice %4 {offsets = [0, 5], sizes = [128, 1], strides = [1, 1]} : vector<128x9xf32> to vector<128x1xf32>
    %302 = vector.extract_strided_slice %5 {offsets = [0, 5], sizes = [128, 1], strides = [1, 1]} : vector<128x9xf32> to vector<128x1xf32>
    %cst_92 = arith.constant 0.000000e+00 : f32
    %303 = vector.broadcast %cst_92 : f32 to vector<128x1xf32>
    %304 = arith.addf %22, %303 : vector<128x1xf32>
    %305 = arith.addf %304, %301 : vector<128x1xf32>
    %cst_93 = arith.constant 1.000000e+00 : f32
    %306 = vector.broadcast %cst_93 : f32 to vector<128x1xf32>
    %307 = arith.addf %25, %306 : vector<128x1xf32>
    %308 = arith.addf %307, %302 : vector<128x1xf32>
    %cst_94 = arith.constant -1.000000e+00 : f32
    %309 = vector.broadcast %cst_94 : f32 to vector<128x1xf32>
    %310 = arith.cmpf ogt, %305, %309 : vector<128x1xf32>
    %cst_95 = arith.constant 1.600000e+01 : f32
    %311 = vector.broadcast %cst_95 : f32 to vector<128x1xf32>
    %312 = arith.cmpf olt, %305, %311 : vector<128x1xf32>
    %313 = arith.andi %310, %312 : vector<128x1xi1>
    %cst_96 = arith.constant -1.000000e+00 : f32
    %314 = vector.broadcast %cst_96 : f32 to vector<128x1xf32>
    %315 = arith.cmpf ogt, %308, %314 : vector<128x1xf32>
    %316 = arith.andi %313, %315 : vector<128x1xi1>
    %cst_97 = arith.constant 1.600000e+01 : f32
    %317 = vector.broadcast %cst_97 : f32 to vector<128x1xf32>
    %318 = arith.cmpf olt, %308, %317 : vector<128x1xf32>
    %319 = arith.andi %316, %318 : vector<128x1xi1>
    %320 = arith.extui %319 : vector<128x1xi1> to vector<128x1xi32>
    %321 = arith.sitofp %320 : vector<128x1xi32> to vector<128x1xf32>
    %322 = vector.extract_strided_slice %11 {offsets = [0, 5], sizes = [128, 1], strides = [1, 1]} : vector<128x9xf32> to vector<128x1xf32>
    %323 = arith.mulf %322, %321 : vector<128x1xf32>
    %cst_98 = arith.constant 1.000000e+00 : f32
    %324 = vector.broadcast %cst_98 : f32 to vector<128x1xf32>
    %325 = arith.addf %305, %324 : vector<128x1xf32>
    %326 = vector.broadcast %325 : vector<128x1xf32> to vector<128x18xf32>
    %327 = vector.broadcast %27 : vector<1x18xf32> to vector<128x18xf32>
    %328 = arith.subf %326, %327 : vector<128x18xf32>
    %329 = math.absf %328 : vector<128x18xf32>
    %cst_99 = arith.constant 1.000000e+00 : f32
    %330 = vector.broadcast %cst_99 : f32 to vector<128x18xf32>
    %331 = arith.subf %330, %329 : vector<128x18xf32>
    %cst_100 = arith.constant 0.000000e+00 : f32
    %332 = vector.broadcast %cst_100 : f32 to vector<128x18xf32>
    %333 = arith.maximumf %332, %331 : vector<128x18xf32>
    %334 = vector.broadcast %323 : vector<128x1xf32> to vector<128x18xf32>
    %335 = arith.mulf %333, %334 : vector<128x18xf32>
    %cst_101 = arith.constant 1.000000e+00 : f32
    %336 = vector.broadcast %cst_101 : f32 to vector<128x1xf32>
    %337 = arith.addf %308, %336 : vector<128x1xf32>
    %338 = vector.broadcast %337 : vector<128x1xf32> to vector<128x72xf32>
    %339 = vector.broadcast %34 : vector<1x72xf32> to vector<128x72xf32>
    %340 = arith.subf %338, %339 : vector<128x72xf32>
    %341 = math.absf %340 : vector<128x72xf32>
    %cst_102 = arith.constant 1.000000e+00 : f32
    %342 = vector.broadcast %cst_102 : f32 to vector<128x72xf32>
    %343 = arith.subf %342, %341 : vector<128x72xf32>
    %cst_103 = arith.constant 0.000000e+00 : f32
    %344 = vector.broadcast %cst_103 : f32 to vector<128x72xf32>
    %345 = arith.maximumf %344, %343 : vector<128x72xf32>
    %346 = arith.truncf %335 : vector<128x18xf32> to vector<128x18xbf16>
    %cst_104 = arith.constant dense<0.000000e+00> : vector<128x72xf32>
    %347 = tpu.matmul %346, %3, %cst_104 {dimension_numbers = #tpu.dot_dimension_numbers<[1], [0], [0], [1], [0, 0, 1, 1], [], []>} : vector<128x18xbf16>, vector<18x72xbf16>, vector<128x72xf32> -> vector<128x72xf32>
    %348 = arith.mulf %347, %345 : vector<128x72xf32>
    %349 = arith.truncf %348 : vector<128x72xf32> to vector<128x72xbf16>
    %c5 = arith.constant 5 : index
    %c0_105 = arith.constant 0 : index
    %c0_106 = arith.constant 0 : index
    %350 = vector.load %arg4[%c5, %c0_105, %c0_106] : memref<9x72x8xbf16, #tpu.memory_space<vmem>>, vector<1x72x8xbf16>
    %351 = vector.shape_cast %350 : vector<1x72x8xbf16> to vector<72x8xbf16>
    %cst_107 = arith.constant dense<0.000000e+00> : vector<128x8xf32>
    %352 = tpu.matmul %349, %351, %cst_107 {dimension_numbers = #tpu.dot_dimension_numbers<[1], [0], [0], [1], [0, 0, 1, 1], [], []>} : vector<128x72xbf16>, vector<72x8xbf16>, vector<128x8xf32> -> vector<128x8xf32>
    %353 = arith.addf %300, %352 : vector<128x8xf32>
    %354 = vector.extract_strided_slice %4 {offsets = [0, 6], sizes = [128, 1], strides = [1, 1]} : vector<128x9xf32> to vector<128x1xf32>
    %355 = vector.extract_strided_slice %5 {offsets = [0, 6], sizes = [128, 1], strides = [1, 1]} : vector<128x9xf32> to vector<128x1xf32>
    %cst_108 = arith.constant 1.000000e+00 : f32
    %356 = vector.broadcast %cst_108 : f32 to vector<128x1xf32>
    %357 = arith.addf %22, %356 : vector<128x1xf32>
    %358 = arith.addf %357, %354 : vector<128x1xf32>
    %cst_109 = arith.constant -1.000000e+00 : f32
    %359 = vector.broadcast %cst_109 : f32 to vector<128x1xf32>
    %360 = arith.addf %25, %359 : vector<128x1xf32>
    %361 = arith.addf %360, %355 : vector<128x1xf32>
    %cst_110 = arith.constant -1.000000e+00 : f32
    %362 = vector.broadcast %cst_110 : f32 to vector<128x1xf32>
    %363 = arith.cmpf ogt, %358, %362 : vector<128x1xf32>
    %cst_111 = arith.constant 1.600000e+01 : f32
    %364 = vector.broadcast %cst_111 : f32 to vector<128x1xf32>
    %365 = arith.cmpf olt, %358, %364 : vector<128x1xf32>
    %366 = arith.andi %363, %365 : vector<128x1xi1>
    %cst_112 = arith.constant -1.000000e+00 : f32
    %367 = vector.broadcast %cst_112 : f32 to vector<128x1xf32>
    %368 = arith.cmpf ogt, %361, %367 : vector<128x1xf32>
    %369 = arith.andi %366, %368 : vector<128x1xi1>
    %cst_113 = arith.constant 1.600000e+01 : f32
    %370 = vector.broadcast %cst_113 : f32 to vector<128x1xf32>
    %371 = arith.cmpf olt, %361, %370 : vector<128x1xf32>
    %372 = arith.andi %369, %371 : vector<128x1xi1>
    %373 = arith.extui %372 : vector<128x1xi1> to vector<128x1xi32>
    %374 = arith.sitofp %373 : vector<128x1xi32> to vector<128x1xf32>
    %375 = vector.extract_strided_slice %11 {offsets = [0, 6], sizes = [128, 1], strides = [1, 1]} : vector<128x9xf32> to vector<128x1xf32>
    %376 = arith.mulf %375, %374 : vector<128x1xf32>
    %cst_114 = arith.constant 1.000000e+00 : f32
    %377 = vector.broadcast %cst_114 : f32 to vector<128x1xf32>
    %378 = arith.addf %358, %377 : vector<128x1xf32>
    %379 = vector.broadcast %378 : vector<128x1xf32> to vector<128x18xf32>
    %380 = vector.broadcast %27 : vector<1x18xf32> to vector<128x18xf32>
    %381 = arith.subf %379, %380 : vector<128x18xf32>
    %382 = math.absf %381 : vector<128x18xf32>
    %cst_115 = arith.constant 1.000000e+00 : f32
    %383 = vector.broadcast %cst_115 : f32 to vector<128x18xf32>
    %384 = arith.subf %383, %382 : vector<128x18xf32>
    %cst_116 = arith.constant 0.000000e+00 : f32
    %385 = vector.broadcast %cst_116 : f32 to vector<128x18xf32>
    %386 = arith.maximumf %385, %384 : vector<128x18xf32>
    %387 = vector.broadcast %376 : vector<128x1xf32> to vector<128x18xf32>
    %388 = arith.mulf %386, %387 : vector<128x18xf32>
    %cst_117 = arith.constant 1.000000e+00 : f32
    %389 = vector.broadcast %cst_117 : f32 to vector<128x1xf32>
    %390 = arith.addf %361, %389 : vector<128x1xf32>
    %391 = vector.broadcast %390 : vector<128x1xf32> to vector<128x72xf32>
    %392 = vector.broadcast %34 : vector<1x72xf32> to vector<128x72xf32>
    %393 = arith.subf %391, %392 : vector<128x72xf32>
    %394 = math.absf %393 : vector<128x72xf32>
    %cst_118 = arith.constant 1.000000e+00 : f32
    %395 = vector.broadcast %cst_118 : f32 to vector<128x72xf32>
    %396 = arith.subf %395, %394 : vector<128x72xf32>
    %cst_119 = arith.constant 0.000000e+00 : f32
    %397 = vector.broadcast %cst_119 : f32 to vector<128x72xf32>
    %398 = arith.maximumf %397, %396 : vector<128x72xf32>
    %399 = arith.truncf %388 : vector<128x18xf32> to vector<128x18xbf16>
    %cst_120 = arith.constant dense<0.000000e+00> : vector<128x72xf32>
    %400 = tpu.matmul %399, %3, %cst_120 {dimension_numbers = #tpu.dot_dimension_numbers<[1], [0], [0], [1], [0, 0, 1, 1], [], []>} : vector<128x18xbf16>, vector<18x72xbf16>, vector<128x72xf32> -> vector<128x72xf32>
    %401 = arith.mulf %400, %398 : vector<128x72xf32>
    %402 = arith.truncf %401 : vector<128x72xf32> to vector<128x72xbf16>
    %c6 = arith.constant 6 : index
    %c0_121 = arith.constant 0 : index
    %c0_122 = arith.constant 0 : index
    %403 = vector.load %arg4[%c6, %c0_121, %c0_122] : memref<9x72x8xbf16, #tpu.memory_space<vmem>>, vector<1x72x8xbf16>
    %404 = vector.shape_cast %403 : vector<1x72x8xbf16> to vector<72x8xbf16>
    %cst_123 = arith.constant dense<0.000000e+00> : vector<128x8xf32>
    %405 = tpu.matmul %402, %404, %cst_123 {dimension_numbers = #tpu.dot_dimension_numbers<[1], [0], [0], [1], [0, 0, 1, 1], [], []>} : vector<128x72xbf16>, vector<72x8xbf16>, vector<128x8xf32> -> vector<128x8xf32>
    %406 = arith.addf %353, %405 : vector<128x8xf32>
    %407 = vector.extract_strided_slice %4 {offsets = [0, 7], sizes = [128, 1], strides = [1, 1]} : vector<128x9xf32> to vector<128x1xf32>
    %408 = vector.extract_strided_slice %5 {offsets = [0, 7], sizes = [128, 1], strides = [1, 1]} : vector<128x9xf32> to vector<128x1xf32>
    %cst_124 = arith.constant 1.000000e+00 : f32
    %409 = vector.broadcast %cst_124 : f32 to vector<128x1xf32>
    %410 = arith.addf %22, %409 : vector<128x1xf32>
    %411 = arith.addf %410, %407 : vector<128x1xf32>
    %cst_125 = arith.constant 0.000000e+00 : f32
    %412 = vector.broadcast %cst_125 : f32 to vector<128x1xf32>
    %413 = arith.addf %25, %412 : vector<128x1xf32>
    %414 = arith.addf %413, %408 : vector<128x1xf32>
    %cst_126 = arith.constant -1.000000e+00 : f32
    %415 = vector.broadcast %cst_126 : f32 to vector<128x1xf32>
    %416 = arith.cmpf ogt, %411, %415 : vector<128x1xf32>
    %cst_127 = arith.constant 1.600000e+01 : f32
    %417 = vector.broadcast %cst_127 : f32 to vector<128x1xf32>
    %418 = arith.cmpf olt, %411, %417 : vector<128x1xf32>
    %419 = arith.andi %416, %418 : vector<128x1xi1>
    %cst_128 = arith.constant -1.000000e+00 : f32
    %420 = vector.broadcast %cst_128 : f32 to vector<128x1xf32>
    %421 = arith.cmpf ogt, %414, %420 : vector<128x1xf32>
    %422 = arith.andi %419, %421 : vector<128x1xi1>
    %cst_129 = arith.constant 1.600000e+01 : f32
    %423 = vector.broadcast %cst_129 : f32 to vector<128x1xf32>
    %424 = arith.cmpf olt, %414, %423 : vector<128x1xf32>
    %425 = arith.andi %422, %424 : vector<128x1xi1>
    %426 = arith.extui %425 : vector<128x1xi1> to vector<128x1xi32>
    %427 = arith.sitofp %426 : vector<128x1xi32> to vector<128x1xf32>
    %428 = vector.extract_strided_slice %11 {offsets = [0, 7], sizes = [128, 1], strides = [1, 1]} : vector<128x9xf32> to vector<128x1xf32>
    %429 = arith.mulf %428, %427 : vector<128x1xf32>
    %cst_130 = arith.constant 1.000000e+00 : f32
    %430 = vector.broadcast %cst_130 : f32 to vector<128x1xf32>
    %431 = arith.addf %411, %430 : vector<128x1xf32>
    %432 = vector.broadcast %431 : vector<128x1xf32> to vector<128x18xf32>
    %433 = vector.broadcast %27 : vector<1x18xf32> to vector<128x18xf32>
    %434 = arith.subf %432, %433 : vector<128x18xf32>
    %435 = math.absf %434 : vector<128x18xf32>
    %cst_131 = arith.constant 1.000000e+00 : f32
    %436 = vector.broadcast %cst_131 : f32 to vector<128x18xf32>
    %437 = arith.subf %436, %435 : vector<128x18xf32>
    %cst_132 = arith.constant 0.000000e+00 : f32
    %438 = vector.broadcast %cst_132 : f32 to vector<128x18xf32>
    %439 = arith.maximumf %438, %437 : vector<128x18xf32>
    %440 = vector.broadcast %429 : vector<128x1xf32> to vector<128x18xf32>
    %441 = arith.mulf %439, %440 : vector<128x18xf32>
    %cst_133 = arith.constant 1.000000e+00 : f32
    %442 = vector.broadcast %cst_133 : f32 to vector<128x1xf32>
    %443 = arith.addf %414, %442 : vector<128x1xf32>
    %444 = vector.broadcast %443 : vector<128x1xf32> to vector<128x72xf32>
    %445 = vector.broadcast %34 : vector<1x72xf32> to vector<128x72xf32>
    %446 = arith.subf %444, %445 : vector<128x72xf32>
    %447 = math.absf %446 : vector<128x72xf32>
    %cst_134 = arith.constant 1.000000e+00 : f32
    %448 = vector.broadcast %cst_134 : f32 to vector<128x72xf32>
    %449 = arith.subf %448, %447 : vector<128x72xf32>
    %cst_135 = arith.constant 0.000000e+00 : f32
    %450 = vector.broadcast %cst_135 : f32 to vector<128x72xf32>
    %451 = arith.maximumf %450, %449 : vector<128x72xf32>
    %452 = arith.truncf %441 : vector<128x18xf32> to vector<128x18xbf16>
    %cst_136 = arith.constant dense<0.000000e+00> : vector<128x72xf32>
    %453 = tpu.matmul %452, %3, %cst_136 {dimension_numbers = #tpu.dot_dimension_numbers<[1], [0], [0], [1], [0, 0, 1, 1], [], []>} : vector<128x18xbf16>, vector<18x72xbf16>, vector<128x72xf32> -> vector<128x72xf32>
    %454 = arith.mulf %453, %451 : vector<128x72xf32>
    %455 = arith.truncf %454 : vector<128x72xf32> to vector<128x72xbf16>
    %c7 = arith.constant 7 : index
    %c0_137 = arith.constant 0 : index
    %c0_138 = arith.constant 0 : index
    %456 = vector.load %arg4[%c7, %c0_137, %c0_138] : memref<9x72x8xbf16, #tpu.memory_space<vmem>>, vector<1x72x8xbf16>
    %457 = vector.shape_cast %456 : vector<1x72x8xbf16> to vector<72x8xbf16>
    %cst_139 = arith.constant dense<0.000000e+00> : vector<128x8xf32>
    %458 = tpu.matmul %455, %457, %cst_139 {dimension_numbers = #tpu.dot_dimension_numbers<[1], [0], [0], [1], [0, 0, 1, 1], [], []>} : vector<128x72xbf16>, vector<72x8xbf16>, vector<128x8xf32> -> vector<128x8xf32>
    %459 = arith.addf %406, %458 : vector<128x8xf32>
    %460 = vector.extract_strided_slice %4 {offsets = [0, 8], sizes = [128, 1], strides = [1, 1]} : vector<128x9xf32> to vector<128x1xf32>
    %461 = vector.extract_strided_slice %5 {offsets = [0, 8], sizes = [128, 1], strides = [1, 1]} : vector<128x9xf32> to vector<128x1xf32>
    %cst_140 = arith.constant 1.000000e+00 : f32
    %462 = vector.broadcast %cst_140 : f32 to vector<128x1xf32>
    %463 = arith.addf %22, %462 : vector<128x1xf32>
    %464 = arith.addf %463, %460 : vector<128x1xf32>
    %cst_141 = arith.constant 1.000000e+00 : f32
    %465 = vector.broadcast %cst_141 : f32 to vector<128x1xf32>
    %466 = arith.addf %25, %465 : vector<128x1xf32>
    %467 = arith.addf %466, %461 : vector<128x1xf32>
    %cst_142 = arith.constant -1.000000e+00 : f32
    %468 = vector.broadcast %cst_142 : f32 to vector<128x1xf32>
    %469 = arith.cmpf ogt, %464, %468 : vector<128x1xf32>
    %cst_143 = arith.constant 1.600000e+01 : f32
    %470 = vector.broadcast %cst_143 : f32 to vector<128x1xf32>
    %471 = arith.cmpf olt, %464, %470 : vector<128x1xf32>
    %472 = arith.andi %469, %471 : vector<128x1xi1>
    %cst_144 = arith.constant -1.000000e+00 : f32
    %473 = vector.broadcast %cst_144 : f32 to vector<128x1xf32>
    %474 = arith.cmpf ogt, %467, %473 : vector<128x1xf32>
    %475 = arith.andi %472, %474 : vector<128x1xi1>
    %cst_145 = arith.constant 1.600000e+01 : f32
    %476 = vector.broadcast %cst_145 : f32 to vector<128x1xf32>
    %477 = arith.cmpf olt, %467, %476 : vector<128x1xf32>
    %478 = arith.andi %475, %477 : vector<128x1xi1>
    %479 = arith.extui %478 : vector<128x1xi1> to vector<128x1xi32>
    %480 = arith.sitofp %479 : vector<128x1xi32> to vector<128x1xf32>
    %481 = vector.extract_strided_slice %11 {offsets = [0, 8], sizes = [128, 1], strides = [1, 1]} : vector<128x9xf32> to vector<128x1xf32>
    %482 = arith.mulf %481, %480 : vector<128x1xf32>
    %cst_146 = arith.constant 1.000000e+00 : f32
    %483 = vector.broadcast %cst_146 : f32 to vector<128x1xf32>
    %484 = arith.addf %464, %483 : vector<128x1xf32>
    %485 = vector.broadcast %484 : vector<128x1xf32> to vector<128x18xf32>
    %486 = vector.broadcast %27 : vector<1x18xf32> to vector<128x18xf32>
    %487 = arith.subf %485, %486 : vector<128x18xf32>
    %488 = math.absf %487 : vector<128x18xf32>
    %cst_147 = arith.constant 1.000000e+00 : f32
    %489 = vector.broadcast %cst_147 : f32 to vector<128x18xf32>
    %490 = arith.subf %489, %488 : vector<128x18xf32>
    %cst_148 = arith.constant 0.000000e+00 : f32
    %491 = vector.broadcast %cst_148 : f32 to vector<128x18xf32>
    %492 = arith.maximumf %491, %490 : vector<128x18xf32>
    %493 = vector.broadcast %482 : vector<128x1xf32> to vector<128x18xf32>
    %494 = arith.mulf %492, %493 : vector<128x18xf32>
    %cst_149 = arith.constant 1.000000e+00 : f32
    %495 = vector.broadcast %cst_149 : f32 to vector<128x1xf32>
    %496 = arith.addf %467, %495 : vector<128x1xf32>
    %497 = vector.broadcast %496 : vector<128x1xf32> to vector<128x72xf32>
    %498 = vector.broadcast %34 : vector<1x72xf32> to vector<128x72xf32>
    %499 = arith.subf %497, %498 : vector<128x72xf32>
    %500 = math.absf %499 : vector<128x72xf32>
    %cst_150 = arith.constant 1.000000e+00 : f32
    %501 = vector.broadcast %cst_150 : f32 to vector<128x72xf32>
    %502 = arith.subf %501, %500 : vector<128x72xf32>
    %cst_151 = arith.constant 0.000000e+00 : f32
    %503 = vector.broadcast %cst_151 : f32 to vector<128x72xf32>
    %504 = arith.maximumf %503, %502 : vector<128x72xf32>
    %505 = arith.truncf %494 : vector<128x18xf32> to vector<128x18xbf16>
    %cst_152 = arith.constant dense<0.000000e+00> : vector<128x72xf32>
    %506 = tpu.matmul %505, %3, %cst_152 {dimension_numbers = #tpu.dot_dimension_numbers<[1], [0], [0], [1], [0, 0, 1, 1], [], []>} : vector<128x18xbf16>, vector<18x72xbf16>, vector<128x72xf32> -> vector<128x72xf32>
    %507 = arith.mulf %506, %504 : vector<128x72xf32>
    %508 = arith.truncf %507 : vector<128x72xf32> to vector<128x72xbf16>
    %c8 = arith.constant 8 : index
    %c0_153 = arith.constant 0 : index
    %c0_154 = arith.constant 0 : index
    %509 = vector.load %arg4[%c8, %c0_153, %c0_154] : memref<9x72x8xbf16, #tpu.memory_space<vmem>>, vector<1x72x8xbf16>
    %510 = vector.shape_cast %509 : vector<1x72x8xbf16> to vector<72x8xbf16>
    %cst_155 = arith.constant dense<0.000000e+00> : vector<128x8xf32>
    %511 = tpu.matmul %508, %510, %cst_155 {dimension_numbers = #tpu.dot_dimension_numbers<[1], [0], [0], [1], [0, 0, 1, 1], [], []>} : vector<128x72xbf16>, vector<72x8xbf16>, vector<128x8xf32> -> vector<128x8xf32>
    %512 = arith.addf %459, %511 : vector<128x8xf32>
    %c0_156 = arith.constant 0 : index
    %c0_157 = arith.constant 0 : index
    %513 = vector.load %arg5[%c0_156, %c0_157] : memref<1x8xf32, #tpu.memory_space<vmem>>, vector<1x8xf32>
    %514 = vector.broadcast %513 : vector<1x8xf32> to vector<128x8xf32>
    %515 = arith.addf %512, %514 : vector<128x8xf32>
    %cst_158 = arith.constant 0.000000e+00 : f32
    %516 = vector.broadcast %cst_158 : f32 to vector<128x8xf32>
    %517 = arith.maximumf %515, %516 : vector<128x8xf32>
    %c0_159 = arith.constant 0 : index
    %c0_160 = arith.constant 0 : index
    %c0_161 = arith.constant 0 : index
    %518 = vector.load %arg6[%c0_159, %c0_160, %c0_161] : memref<1x128x8xf32, #tpu.memory_space<vmem>>, vector<1x128x8xf32>
    %519 = vector.shape_cast %518 : vector<1x128x8xf32> to vector<128x8xf32>
    %520 = vector.shape_cast %517 : vector<128x8xf32> to vector<1x128x8xf32>
    tpu.vector_store %arg6[%c0_159, %c0_160, %c0_161], %520 {strides = array<i32>} : memref<1x128x8xf32, #tpu.memory_space<vmem>>, vector<1x128x8xf32>,
    return
  }
  func.func @transform_0(%arg0: i32, %arg1: i32) -> (i32, i32, i32) {
    %c0_i32 = arith.constant 0 : i32
    %c0_i32_0 = arith.constant 0 : i32
    return %arg0, %arg1, %c0_i32 : i32, i32, i32
  }
  func.func @transform_1(%arg0: i32, %arg1: i32) -> (i32, i32, i32) {
    %c0_i32 = arith.constant 0 : i32
    %c0_i32_0 = arith.constant 0 : i32
    %c0_i32_1 = arith.constant 0 : i32
    return %arg0, %c0_i32, %c0_i32_0 : i32, i32, i32
  }
  func.func @transform_2(%arg0: i32, %arg1: i32) -> (i32, i32, i32) {
    %c0_i32 = arith.constant 0 : i32
    %c0_i32_0 = arith.constant 0 : i32
    %c0_i32_1 = arith.constant 0 : i32
    %c0_i32_2 = arith.constant 0 : i32
    return %c0_i32, %c0_i32_0, %c0_i32_1 : i32, i32, i32
  }
  func.func @transform_3(%arg0: i32, %arg1: i32) -> (i32, i32) {
    %c0_i32 = arith.constant 0 : i32
    %c0_i32_0 = arith.constant 0 : i32
    %c0_i32_1 = arith.constant 0 : i32
    return %c0_i32, %c0_i32_0 : i32, i32
  }
  func.func @transform_4(%arg0: i32, %arg1: i32) -> (i32, i32, i32) {
    %c0_i32 = arith.constant 0 : i32
    %c0_i32_0 = arith.constant 0 : i32
    return %arg0, %arg1, %c0_i32 : i32, i32, i32
  }
}

</mosaic_0001>

<llo_original>
// kernel: tpu_custom_call.1
$region0: #{tpu_custom_call.1}
  #allocation0 [shape = 'u32[]', space=smem, size = 0x4, offset = 0x4, fixed_abs, tag = 'smem constant byte address 0x4 - core index']
  #allocation1 [shape = 'u32[144,128]{1,0:T(1,128)}', space=vmem, size = 0x12000, scoped, tag = 'internal scratch']
  %s0 = inlined_call_operand.vmem [shape: f32[2,256,27], index: 0, kind: input, shape index: {}]
  %s1 = inlined_call_operand.vmem [shape: bf16[2,18,72], index: 1, kind: input, shape index: {}]
  %s2 = inlined_call_operand.vmem [shape: bf16[9,72,8], index: 2, kind: input, shape index: {}]
  %s3 = inlined_call_operand.vmem [shape: f32[1,8], index: 3, kind: input, shape index: {}]
  %s4 = inlined_call_operand.vmem [shape: f32[2,256,8], index: 4, kind: output, shape index: {}]
  %s5 = sld [smem:[#allocation0]]
  $region49: #{tpu_custom_call.1} parent=0
    _
  %s7 = ssub.s32 1, %s5
  %s8 = scalar_select 0, %s7, %s5
  loop: start=0, step=1, limit=6
  $region2: #{tpu_custom_call.1} parent=0 // loop_pre_header
    _
  $region3: #{tpu_custom_call.1} parent=0 // loop_header
    %s10 = sphi 0, %s14
    %p11 = scmp.ge.s32.totalorder %s10, 6
    %s17 = sphi 0, %s29
    %s18 = sphi 0, %s25
    %s19 = sphi 0, %s17
    %s20 = sphi 0, %s18
    %s21 = sphi 0, %s19
    %s22 = sphi 0, %s20
    %s34 = sphi 0, %s36
    %s37 = sphi 0, %s34
    %s38 = sphi 0, %s37
    %s54 = sphi 0, %s38
    %s60 = sphi 0, %s62
    %s63 = sphi 0, %s60
    %s64 = sphi 0, %s63
    %s80 = sphi 0, %s64
    %s84 = sphi 0, %s84
    %s86 = sphi 0, %s84
    %s87 = sphi 0, %s86
    %s101 = sphi 0, %s87
    %s105 = sphi 0, %s105
    %s107 = sphi 0, %s105
    %s108 = sphi 0, %s107
    %s122 = sphi 0, %s108
    %s130 = sphi 0, %s132
    %s133 = sphi 0, %s130
    %s134 = sphi 0, %s133
    %s150 = sphi 0, %s134
  $region4: #{tpu_custom_call.1} parent=0 // loop_header_branch
    %13 = sbr.rel (%p11) target = $region8
  $region5: #{tpu_custom_call.1} parent=0 // loop_body
    %s15 = ssub.s32 %s10, 1
    %s16 = ssub.s32 %s10, 2
    %s23 = sadd.s32 1, %s18
    %p24 = scmp.ge.s32.totalorder %s23, 2
    %s25 = scalar_select %p24, 0, %s23
    %s26 = sadd.s32 1, %s17
    %s27 = scalar_select %p24, %s26, %s17
    %p28 = scmp.ge.s32.totalorder %s27, 2
    %s29 = scalar_select %p28, 0, %s27
    %s30 = ssub.s32 %s17, %s29
    %s31 = ssub.s32 %s18, %s25
    %s32 = sor.u32 %s30, %s31
    %p33 = scmp.eq.s32.totalorder %s32, 0
    %s35 = sadd.s32 %s34, 1
    %s36 = scalar_select %p33, %s34, %s35
    %p39 = pneg %p33
    %p40 = scmp.eq.s32.totalorder %s10, 3
    %p41 = por %p39, %p40
    %p42 = scmp.ne.s32.totalorder %s34, %s37
    %p43 = scmp.eq.s32.totalorder %s10, 0
    %p44 = por %p42, %p43
    %p45 = scmp.ne.s32.totalorder %s34, %s37
    %p46 = scmp.eq.s32.totalorder %s15, 3
    %p47 = por %p45, %p46
    %p48 = scmp.ne.s32.totalorder %s37, %s38
    %p49 = scmp.eq.s32.totalorder %s15, 0
    %p50 = por %p48, %p49
    %p51 = scmp.ne.s32.totalorder %s37, %s38
    %p52 = scmp.eq.s32.totalorder %s16, 3
    %p53 = por %p51, %p52
    %p55 = scmp.ne.s32.totalorder %s38, %s54
    %p56 = scmp.eq.s32.totalorder %s16, 0
    %p57 = por %p55, %p56
    %s58 = ssub.s32 %s17, %s29
    %p59 = scmp.eq.s32.totalorder %s58, 0
    %s61 = sadd.s32 %s60, 1
    %s62 = scalar_select %p59, %s60, %s61
    %p65 = pneg %p59
    %p66 = scmp.eq.s32.totalorder %s10, 3
    %p67 = por %p65, %p66
    %p68 = scmp.ne.s32.totalorder %s60, %s63
    %p69 = scmp.eq.s32.totalorder %s10, 0
    %p70 = por %p68, %p69
    %p71 = scmp.ne.s32.totalorder %s60, %s63
    %p72 = scmp.eq.s32.totalorder %s15, 3
    %p73 = por %p71, %p72
    %p74 = scmp.ne.s32.totalorder %s63, %s64
    %p75 = scmp.eq.s32.totalorder %s15, 0
    %p76 = por %p74, %p75
    %p77 = scmp.ne.s32.totalorder %s63, %s64
    %p78 = scmp.eq.s32.totalorder %s16, 3
    %p79 = por %p77, %p78
    %p81 = scmp.ne.s32.totalorder %s64, %s80
    %p82 = scmp.eq.s32.totalorder %s16, 0
    %p83 = por %p81, %p82
    %s85 = sadd.s32 %s84, 1
    %p88 = scmp.eq.s32.totalorder %s10, 3
    %p89 = scmp.ne.s32.totalorder %s84, %s86
    %p90 = scmp.eq.s32.totalorder %s10, 0
    %p91 = por %p89, %p90
    %p92 = scmp.ne.s32.totalorder %s84, %s86
    %p93 = scmp.eq.s32.totalorder %s15, 3
    %p94 = por %p92, %p93
    %p95 = scmp.ne.s32.totalorder %s86, %s87
    %p96 = scmp.eq.s32.totalorder %s15, 0
    %p97 = por %p95, %p96
    %p98 = scmp.ne.s32.totalorder %s86, %s87
    %p99 = scmp.eq.s32.totalorder %s16, 3
    %p100 = por %p98, %p99
    %p102 = scmp.ne.s32.totalorder %s87, %s101
    %p103 = scmp.eq.s32.totalorder %s16, 0
    %p104 = por %p102, %p103
    %s106 = sadd.s32 %s105, 1
    %p109 = scmp.eq.s32.totalorder %s10, 3
    %p110 = scmp.ne.s32.totalorder %s105, %s107
    %p111 = scmp.eq.s32.totalorder %s10, 0
    %p112 = por %p110, %p111
    %p113 = scmp.ne.s32.totalorder %s105, %s107
    %p114 = scmp.eq.s32.totalorder %s15, 3
    %p115 = por %p113, %p114
    %p116 = scmp.ne.s32.totalorder %s107, %s108
    %p117 = scmp.eq.s32.totalorder %s15, 0
    %p118 = por %p116, %p117
    %p119 = scmp.ne.s32.totalorder %s107, %s108
    %p120 = scmp.eq.s32.totalorder %s16, 3
    %p121 = por %p119, %p120
    %p123 = scmp.ne.s32.totalorder %s108, %s122
    %p124 = scmp.eq.s32.totalorder %s16, 0
    %p125 = por %p123, %p124
    %s126 = ssub.s32 %s17, %s29
    %s127 = ssub.s32 %s18, %s25
    %s128 = sor.u32 %s126, %s127
    %p129 = scmp.eq.s32.totalorder %s128, 0
    %s131 = sadd.s32 %s130, 1
    %s132 = scalar_select %p129, %s130, %s131
    %p135 = pneg %p129
    %p136 = scmp.eq.s32.totalorder %s10, 3
    %p137 = por %p135, %p136
    %p138 = scmp.ne.s32.totalorder %s130, %s133
    %p139 = scmp.eq.s32.totalorder %s10, 0
    %p140 = por %p138, %p139
    %p141 = scmp.ne.s32.totalorder %s130, %s133
    %p142 = scmp.eq.s32.totalorder %s15, 3
    %p143 = por %p141, %p142
    %p144 = scmp.ne.s32.totalorder %s133, %s134
    %p145 = scmp.eq.s32.totalorder %s15, 0
    %p146 = por %p144, %p145
    %p147 = scmp.ne.s32.totalorder %s133, %s134
    %p148 = scmp.eq.s32.totalorder %s16, 3
    %p149 = por %p147, %p148
    %p151 = scmp.ne.s32.totalorder %s134, %s150
    %p152 = scmp.eq.s32.totalorder %s16, 0
    %p153 = por %p151, %p152
    %p154 = scmp.le.s32.totalorder 1, %s10
    %p155 = scmp.lt.s32.totalorder %s10, 5
    %p156 = pnand %p154, %p155
    %p157 = pneg %p156
    // Predicated region
    $region9: #{tpu_custom_call.1} parent=5 // pred_check
      _
    $region10: #{tpu_custom_call.1} parent=5 // pred_check_branch
      %159 = sbr.rel (%p156) target = $region12
    $region11: #{tpu_custom_call.1} parent=5 // pred_region
      %s160 = ssub.s32 %s10, 1
      // Predicated region
      $region13: #{tpu_custom_call.1} parent=11 // pred_check
        %p161 = pneg %p97
      $region14: #{tpu_custom_call.1} parent=11 // pred_check_branch
        %163 = sbr.rel (%p161) target = $region16
      $region15: #{tpu_custom_call.1} parent=11 // pred_region
        _
      $region16: #{tpu_custom_call.1} parent=11 // pred_fallthru
        _
      // Predicated region
      $region17: #{tpu_custom_call.1} parent=11 // pred_check
        %p164 = pneg %p118
      $region18: #{tpu_custom_call.1} parent=11 // pred_check_branch
        %166 = sbr.rel (%p164) target = $region20
      $region19: #{tpu_custom_call.1} parent=11 // pred_region
        _
      $region20: #{tpu_custom_call.1} parent=11 // pred_fallthru
        _
    $region12: #{tpu_custom_call.1} parent=5 // pred_fallthru
      _
    %p167 = scmp.lt.s32.totalorder %s10, 4
    // Predicated region
    $region21: #{tpu_custom_call.1} parent=5 // pred_check
      %p168 = pneg %p167
    $region22: #{tpu_custom_call.1} parent=5 // pred_check_branch
      %170 = sbr.rel (%p168) target = $region24
    $region23: #{tpu_custom_call.1} parent=5 // pred_region
      // Predicated region
      $region25: #{tpu_custom_call.1} parent=23 // pred_check
        %p171 = pneg %p44
      $region26: #{tpu_custom_call.1} parent=23 // pred_check_branch
        %173 = sbr.rel (%p171) target = $region28
      $region27: #{tpu_custom_call.1} parent=23 // pred_region
        %s174 = smul.u32 16, %s18
        %p175 = scmp.lt.s32.totalorder %s17, 1
        %s176 = scalar_select %p175, %s17, 1
        %p177 = scmp.lt.s32.totalorder %s174, 31
        %s178 = scalar_select %p177, %s174, 31
        %s179 = smul.addr %s176, 32
        %s180 = sadd.s32 %s178, %s179
        %s181 = smul.addr %s180, 8
        %s182 = scalar_lea.vmem %s0, %s181
        %s183 = smul.u32 16, %s18
      $region28: #{tpu_custom_call.1} parent=23 // pred_fallthru
        _
      // Predicated region
      $region29: #{tpu_custom_call.1} parent=23 // pred_check
        %p184 = pneg %p70
      $region30: #{tpu_custom_call.1} parent=23 // pred_check_branch
        %186 = sbr.rel (%p184) target = $region32
      $region31: #{tpu_custom_call.1} parent=23 // pred_region
        %p187 = scmp.lt.s32.totalorder %s17, 1
        %s188 = scalar_select %p187, %s17, 1
        %s189 = smul.addr %s188, 3
        %s190 = smul.addr %s189, 4
        %s191 = scalar_lea.vmem %s1, %s190
      $region32: #{tpu_custom_call.1} parent=23 // pred_fallthru
        _
    $region24: #{tpu_custom_call.1} parent=5 // pred_fallthru
      _
    %p192 = scmp.le.s32.totalorder 1, %s10
    %p193 = scmp.lt.s32.totalorder %s10, 5
    %p194 = pnand %p192, %p193
    %p195 = pneg %p194
    // Predicated region
    $region33: #{tpu_custom_call.1} parent=5 // pred_check
      _
    $region34: #{tpu_custom_call.1} parent=5 // pred_check_branch
      %197 = sbr.rel (%p194) target = $region36
    $region35: #{tpu_custom_call.1} parent=5 // pred_region
      %s198 = ssub.s32 %s10, 1
      %s199 = smul.u32 16, %s20
      %p200 = scmp.lt.s32.totalorder %s19, 1
      %s201 = scalar_select %p200, %s19, 1
      %p202 = scmp.lt.s32.totalorder %s199, 31
      %s203 = scalar_select %p202, %s199, 31
      %s204 = smul.addr %s201, 32
      %s205 = sadd.s32 %s203, %s204
      %s206 = smul.addr %s205, 8
      %s207 = scalar_lea.vmem %s0, %s206
      %p208 = pneg %p50
      %p209 = pneg %p47
      %p210 = scmp.lt.s32.totalorder %s19, 1
      %s211 = scalar_select %p210, %s19, 1
      %s212 = smul.addr %s211, 3
      %s213 = smul.addr %s212, 4
      %s214 = scalar_lea.vmem %s1, %s213
      %p215 = pneg %p76
      %p216 = pneg %p73
      %p217 = pneg %p97
      %p218 = pneg %p94
      %p219 = pneg %p118
      %p220 = pneg %p115
      %p221 = pneg %p146
      %p222 = pneg %p143
      %s223 = smul.u32 16, %s20
      %p224 = scmp.lt.s32.totalorder %s19, 1
      %s225 = scalar_select %p224, %s19, 1
      %p226 = scmp.lt.s32.totalorder %s223, 31
      %s227 = scalar_select %p226, %s223, 31
      %s228 = smul.addr %s225, 32
      %s229 = sadd.s32 %s227, %s228
      %s230 = smul.addr %s229, 8
      %s231 = scalar_lea.vmem %s4, %s230
      %s232 = smul.u32 16, %s20
      %p233 = scmp.lt.s32.totalorder %s19, 1
      %s234 = scalar_select %p233, %s19, 1
      %p235 = scmp.lt.s32.totalorder %s232, 31
      %s236 = scalar_select %p235, %s232, 31
      %s237 = smul.addr %s234, 32
      %s238 = sadd.s32 %s236, %s237
      %s239 = smul.addr %s238, 8
      %s240 = scalar_lea.vmem %s0, %s239
      %s241 = smul.u32 16, %s20
      %p242 = scmp.lt.s32.totalorder %s19, 1
      %s243 = scalar_select %p242, %s19, 1
      %s244 = smul.addr %s243, 3
      %s245 = smul.addr %s244, 4
      %s246 = scalar_lea.vmem %s1, %s245
      %s247 = smul.u32 16, %s20
      %p248 = scmp.lt.s32.totalorder %s19, 1
      %s249 = scalar_select %p248, %s19, 1
      %p250 = scmp.lt.s32.totalorder %s247, 31
      %s251 = scalar_select %p250, %s247, 31
      %s252 = smul.addr %s249, 32
      %s253 = sadd.s32 %s251, %s252
      %s254 = smul.addr %s253, 8
      %s255 = scalar_lea.vmem %s4, %s254
      %s256 = smul.u32 16, %s20
      %v258 = vld [vmem:[%s240] sm:$0xff]
      %v259 = vld [vmem:[%s240 + $0x8] sm:$0xff]
      %v260 = vld [vmem:[%s240 + $0x10] sm:$0xff]
      %v261 = vld [vmem:[%s240 + $0x18] sm:$0xff]
      %v262 = vld [vmem:[%s240 + $0x20] sm:$0xff]
      %v263 = vld [vmem:[%s240 + $0x28] sm:$0xff]
      %v264 = vld [vmem:[%s240 + $0x30] sm:$0xff]
      %v265 = vld [vmem:[%s240 + $0x38] sm:$0xff]
      %v266 = vld [vmem:[%s240 + $0x40] sm:$0xff]
      %v267 = vld [vmem:[%s240 + $0x48] sm:$0xff]
      %v268 = vld [vmem:[%s240 + $0x50] sm:$0xff]
      %v269 = vld [vmem:[%s240 + $0x58] sm:$0xff]
      %v270 = vld [vmem:[%s240 + $0x60] sm:$0xff]
      %v271 = vld [vmem:[%s240 + $0x68] sm:$0xff]
      %v272 = vld [vmem:[%s240 + $0x70] sm:$0xff]
      %v273 = vld [vmem:[%s240 + $0x78] sm:$0xff]
      %v274 = vld [vmem:[%s246] sm:$0xf]
      %v275 = vld [vmem:[%s246 + $0x4] sm:$0xf]
      %v276 = vld [vmem:[%s246 + $0x8] sm:$0x1]
      %v277 = vxor.u32 %v258, 2147483648
      %v278 = vxor.u32 %v259, 2147483648
      %v279 = vxor.u32 %v260, 2147483648
      %v280 = vxor.u32 %v261, 2147483648
      %v281 = vxor.u32 %v262, 2147483648
      %v282 = vxor.u32 %v263, 2147483648
      %v283 = vxor.u32 %v264, 2147483648
      %v284 = vxor.u32 %v265, 2147483648
      %v285 = vxor.u32 %v266, 2147483648
      %v286 = vxor.u32 %v267, 2147483648
      %v287 = vxor.u32 %v268, 2147483648
      %v288 = vxor.u32 %v269, 2147483648
      %v289 = vxor.u32 %v270, 2147483648
      %v290 = vxor.u32 %v271, 2147483648
      %v291 = vxor.u32 %v272, 2147483648
      %v292 = vxor.u32 %v273, 2147483648
      %v293 = vmul.f32 %v277, 1.442695
      %v294 = vpow.pop %v293
      %v295 = vmul.f32 %v278, 1.442695
      %v296 = vpow.pop %v295
      %v297 = vmul.f32 %v279, 1.442695
      %v298 = vpow.pop %v297
      %v299 = vmul.f32 %v280, 1.442695
      %v300 = vpow.pop %v299
      %v301 = vmul.f32 %v281, 1.442695
      %v302 = vpow.pop %v301
      %v303 = vmul.f32 %v282, 1.442695
      %v304 = vpow.pop %v303
      %v305 = vmul.f32 %v283, 1.442695
      %v306 = vpow.pop %v305
      %v307 = vmul.f32 %v284, 1.442695
      %v308 = vpow.pop %v307
      %v309 = vmul.f32 %v285, 1.442695
      %v310 = vpow.pop %v309
      %v311 = vmul.f32 %v286, 1.442695
      %v312 = vpow.pop %v311
      %v313 = vmul.f32 %v287, 1.442695
      %v314 = vpow.pop %v313
      %v315 = vmul.f32 %v288, 1.442695
      %v316 = vpow.pop %v315
      %v317 = vmul.f32 %v289, 1.442695
      %v318 = vpow.pop %v317
      %v319 = vmul.f32 %v290, 1.442695
      %v320 = vpow.pop %v319
      %v321 = vmul.f32 %v291, 1.442695
      %v322 = vpow.pop %v321
      %v323 = vmul.f32 %v292, 1.442695
      %v324 = vpow.pop %v323
      %v325 = vadd.f32 %v294, 1.0
      %v326 = vadd.f32 %v296, 1.0
      %v327 = vadd.f32 %v298, 1.0
      %v328 = vadd.f32 %v300, 1.0
      %v329 = vadd.f32 %v302, 1.0
      %v330 = vadd.f32 %v304, 1.0
      %v331 = vadd.f32 %v306, 1.0
      %v332 = vadd.f32 %v308, 1.0
      %v333 = vadd.f32 %v310, 1.0
      %v334 = vadd.f32 %v312, 1.0
      %v335 = vadd.f32 %v314, 1.0
      %v336 = vadd.f32 %v316, 1.0
      %v337 = vadd.f32 %v318, 1.0
      %v338 = vadd.f32 %v320, 1.0
      %v339 = vadd.f32 %v322, 1.0
      %v340 = vadd.f32 %v324, 1.0
      %v341 = vrcp.pop %v325
      %v342 = vmul.f32 1.0, %v341
      %v343 = vrcp.pop %v326
      %v344 = vmul.f32 1.0, %v343
      %v345 = vrcp.pop %v327
      %v346 = vmul.f32 1.0, %v345
      %v347 = vrcp.pop %v328
      %v348 = vmul.f32 1.0, %v347
      %v349 = vrcp.pop %v329
      %v350 = vmul.f32 1.0, %v349
      %v351 = vrcp.pop %v330
      %v352 = vmul.f32 1.0, %v351
      %v353 = vrcp.pop %v331
      %v354 = vmul.f32 1.0, %v353
      %v355 = vrcp.pop %v332
      %v356 = vmul.f32 1.0, %v355
      %v357 = vrcp.pop %v333
      %v358 = vmul.f32 1.0, %v357
      %v359 = vrcp.pop %v334
      %v360 = vmul.f32 1.0, %v359
      %v361 = vrcp.pop %v335
      %v362 = vmul.f32 1.0, %v361
      %v363 = vrcp.pop %v336
      %v364 = vmul.f32 1.0, %v363
      %v365 = vrcp.pop %v337
      %v366 = vmul.f32 1.0, %v365
      %v367 = vrcp.pop %v338
      %v368 = vmul.f32 1.0, %v367
      %v369 = vrcp.pop %v339
      %v370 = vmul.f32 1.0, %v369
      %v371 = vrcp.pop %v340
      %v372 = vmul.f32 1.0, %v371
      %s373 = smul.u32 %s20, 128
      %s374 = scvt.s32.f32 %s373
      %v375 = vlaneseq
      %v376 = vshrl.u32 %v375, 7
      %v377 = vadd.s32 %v376, 8
      %v378 = vadd.s32 %v376, 16
      %v379 = vadd.s32 %v376, 24
      %v380 = vadd.s32 %v376, 32
      %v381 = vadd.s32 %v376, 40
      %v382 = vadd.s32 %v376, 48
      %v383 = vadd.s32 %v376, 56
      %v384 = vadd.s32 %v376, 64
      %v385 = vadd.s32 %v376, 72
      %v386 = vadd.s32 %v376, 80
      %v387 = vadd.s32 %v376, 88
      %v388 = vadd.s32 %v376, 96
      %v389 = vadd.s32 %v376, 104
      %v390 = vadd.s32 %v376, 112
      %v391 = vadd.s32 %v376, 120
      %v392 = vcvt.s32.f32 %v376
      %v393 = vcvt.s32.f32 %v377
      %v394 = vcvt.s32.f32 %v378
      %v395 = vcvt.s32.f32 %v379
      %v396 = vcvt.s32.f32 %v380
      %v397 = vcvt.s32.f32 %v381
      %v398 = vcvt.s32.f32 %v382
      %v399 = vcvt.s32.f32 %v383
      %v400 = vcvt.s32.f32 %v384
      %v401 = vcvt.s32.f32 %v385
      %v402 = vcvt.s32.f32 %v386
      %v403 = vcvt.s32.f32 %v387
      %v404 = vcvt.s32.f32 %v388
      %v405 = vcvt.s32.f32 %v389
      %v406 = vcvt.s32.f32 %v390
      %v407 = vcvt.s32.f32 %v391
      %v408 = vstv %s374
      %v409 = vadd.f32 %v408, %v392
      %v410 = vadd.f32 %v408, %v393
      %v411 = vadd.f32 %v408, %v394
      %v412 = vadd.f32 %v408, %v395
      %v413 = vadd.f32 %v408, %v396
      %v414 = vadd.f32 %v408, %v397
      %v415 = vadd.f32 %v408, %v398
      %v416 = vadd.f32 %v408, %v399
      %v417 = vadd.f32 %v408, %v400
      %v418 = vadd.f32 %v408, %v401
      %v419 = vadd.f32 %v408, %v402
      %v420 = vadd.f32 %v408, %v403
      %v421 = vadd.f32 %v408, %v404
      %v422 = vadd.f32 %v408, %v405
      %v423 = vadd.f32 %v408, %v406
      %v424 = vadd.f32 %v408, %v407
      %v425 = vadd.f32 %v409, 0.5
      %v426 = vadd.f32 %v410, 0.5
      %v427 = vadd.f32 %v411, 0.5
      %v428 = vadd.f32 %v412, 0.5
      %v429 = vadd.f32 %v413, 0.5
      %v430 = vadd.f32 %v414, 0.5
      %v431 = vadd.f32 %v415, 0.5
      %v432 = vadd.f32 %v416, 0.5
      %v433 = vadd.f32 %v417, 0.5
      %v434 = vadd.f32 %v418, 0.5
      %v435 = vadd.f32 %v419, 0.5
      %v436 = vadd.f32 %v420, 0.5
      %v437 = vadd.f32 %v421, 0.5
      %v438 = vadd.f32 %v422, 0.5
      %v439 = vadd.f32 %v423, 0.5
      %v440 = vadd.f32 %v424, 0.5
      %v441 = vmul.f32 %v425, 0.0625
      %v442 = vmul.f32 %v426, 0.0625
      %v443 = vmul.f32 %v427, 0.0625
      %v444 = vmul.f32 %v428, 0.0625
      %v445 = vmul.f32 %v429, 0.0625
      %v446 = vmul.f32 %v430, 0.0625
      %v447 = vmul.f32 %v431, 0.0625
      %v448 = vmul.f32 %v432, 0.0625
      %v449 = vmul.f32 %v433, 0.0625
      %v450 = vmul.f32 %v434, 0.0625
      %v451 = vmul.f32 %v435, 0.0625
      %v452 = vmul.f32 %v436, 0.0625
      %v453 = vmul.f32 %v437, 0.0625
      %v454 = vmul.f32 %v438, 0.0625
      %v455 = vmul.f32 %v439, 0.0625
      %v456 = vmul.f32 %v440, 0.0625
      %v457 = vfloor.f32 %v441
      %v458 = vfloor.f32 %v442
      %v459 = vfloor.f32 %v443
      %v460 = vfloor.f32 %v444
      %v461 = vfloor.f32 %v445
      %v462 = vfloor.f32 %v446
      %v463 = vfloor.f32 %v447
      %v464 = vfloor.f32 %v448
      %v465 = vfloor.f32 %v449
      %v466 = vfloor.f32 %v450
      %v467 = vfloor.f32 %v451
      %v468 = vfloor.f32 %v452
      %v469 = vfloor.f32 %v453
      %v470 = vfloor.f32 %v454
      %v471 = vfloor.f32 %v455
      %v472 = vfloor.f32 %v456
      %v473 = vmul.f32 %v457, 16.0
      %v474 = vmul.f32 %v458, 16.0
      %v475 = vmul.f32 %v459, 16.0
      %v476 = vmul.f32 %v460, 16.0
      %v477 = vmul.f32 %v461, 16.0
      %v478 = vmul.f32 %v462, 16.0
      %v479 = vmul.f32 %v463, 16.0
      %v480 = vmul.f32 %v464, 16.0
      %v481 = vmul.f32 %v465, 16.0
      %v482 = vmul.f32 %v466, 16.0
      %v483 = vmul.f32 %v467, 16.0
      %v484 = vmul.f32 %v468, 16.0
      %v485 = vmul.f32 %v469, 16.0
      %v486 = vmul.f32 %v470, 16.0
      %v487 = vmul.f32 %v471, 16.0
      %v488 = vmul.f32 %v472, 16.0
      %v489 = vsub.f32 %v409, %v473
      %v490 = vsub.f32 %v410, %v474
      %v491 = vsub.f32 %v411, %v475
      %v492 = vsub.f32 %v412, %v476
      %v493 = vsub.f32 %v413, %v477
      %v494 = vsub.f32 %v414, %v478
      %v495 = vsub.f32 %v415, %v479
      %v496 = vsub.f32 %v416, %v480
      %v497 = vsub.f32 %v417, %v481
      %v498 = vsub.f32 %v418, %v482
      %v499 = vsub.f32 %v419, %v483
      %v500 = vsub.f32 %v420, %v484
      %v501 = vsub.f32 %v421, %v485
      %v502 = vsub.f32 %v422, %v486
      %v503 = vsub.f32 %v423, %v487
      %v504 = vsub.f32 %v424, %v488
      %v505 = vlaneseq
      %v506 = vand.u32 %v505, 127
      %v507 = vcvt.s32.f32 %v506
      %v508 = vadd.f32 %v507, 0.5
      %v509 = vmul.f32 %v508, 0.25
      %v510 = vfloor.f32 %v509
      %v511 = vadd.f32 %v457, -1.0
      %v512 = vadd.f32 %v458, -1.0
      %v513 = vadd.f32 %v459, -1.0
      %v514 = vadd.f32 %v460, -1.0
      %v515 = vadd.f32 %v461, -1.0
      %v516 = vadd.f32 %v462, -1.0
      %v517 = vadd.f32 %v463, -1.0
      %v518 = vadd.f32 %v464, -1.0
      %v519 = vadd.f32 %v465, -1.0
      %v520 = vadd.f32 %v466, -1.0
      %v521 = vadd.f32 %v467, -1.0
      %v522 = vadd.f32 %v468, -1.0
      %v523 = vadd.f32 %v469, -1.0
      %v524 = vadd.f32 %v470, -1.0
      %v525 = vadd.f32 %v471, -1.0
      %v526 = vadd.f32 %v472, -1.0
      %v527 = vadd.f32 %v511, %v258
      %v528 = vadd.f32 %v512, %v259
      %v529 = vadd.f32 %v513, %v260
      %v530 = vadd.f32 %v514, %v261
      %v531 = vadd.f32 %v515, %v262
      %v532 = vadd.f32 %v516, %v263
      %v533 = vadd.f32 %v517, %v264
      %v534 = vadd.f32 %v518, %v265
      %v535 = vadd.f32 %v519, %v266
      %v536 = vadd.f32 %v520, %v267
      %v537 = vadd.f32 %v521, %v268
      %v538 = vadd.f32 %v522, %v269
      %v539 = vadd.f32 %v523, %v270
      %v540 = vadd.f32 %v524, %v271
      %v541 = vadd.f32 %v525, %v272
      %v542 = vadd.f32 %v526, %v273
      %v543 = vadd.f32 %v489, -1.0
      %v544 = vadd.f32 %v490, -1.0
      %v545 = vadd.f32 %v491, -1.0
      %v546 = vadd.f32 %v492, -1.0
      %v547 = vadd.f32 %v493, -1.0
      %v548 = vadd.f32 %v494, -1.0
      %v549 = vadd.f32 %v495, -1.0
      %v550 = vadd.f32 %v496, -1.0
      %v551 = vadd.f32 %v497, -1.0
      %v552 = vadd.f32 %v498, -1.0
      %v553 = vadd.f32 %v499, -1.0
      %v554 = vadd.f32 %v500, -1.0
      %v555 = vadd.f32 %v501, -1.0
      %v556 = vadd.f32 %v502, -1.0
      %v557 = vadd.f32 %v503, -1.0
      %v558 = vadd.f32 %v504, -1.0
      %v559 = vadd.f32 %v543, %v258
      %v560 = vadd.f32 %v544, %v259
      %v561 = vadd.f32 %v545, %v260
      %v562 = vadd.f32 %v546, %v261
      %v563 = vadd.f32 %v547, %v262
      %v564 = vadd.f32 %v548, %v263
      %v565 = vadd.f32 %v549, %v264
      %v566 = vadd.f32 %v550, %v265
      %v567 = vadd.f32 %v551, %v266
      %v568 = vadd.f32 %v552, %v267
      %v569 = vadd.f32 %v553, %v268
      %v570 = vadd.f32 %v554, %v269
      %v571 = vadd.f32 %v555, %v270
      %v572 = vadd.f32 %v556, %v271
      %v573 = vadd.f32 %v557, %v272
      %v574 = vadd.f32 %v558, %v273
      %vm575 = vcmp.gt.f32.partialorder %v527, -1.0
      %vm576 = vcmp.gt.f32.partialorder %v528, -1.0
      %vm577 = vcmp.gt.f32.partialorder %v529, -1.0
      %vm578 = vcmp.gt.f32.partialorder %v530, -1.0
      %vm579 = vcmp.gt.f32.partialorder %v531, -1.0
      %vm580 = vcmp.gt.f32.partialorder %v532, -1.0
      %vm581 = vcmp.gt.f32.partialorder %v533, -1.0
      %vm582 = vcmp.gt.f32.partialorder %v534, -1.0
      %vm583 = vcmp.gt.f32.partialorder %v535, -1.0
      %vm584 = vcmp.gt.f32.partialorder %v536, -1.0
      %vm585 = vcmp.gt.f32.partialorder %v537, -1.0
      %vm586 = vcmp.gt.f32.partialorder %v538, -1.0
      %vm587 = vcmp.gt.f32.partialorder %v539, -1.0
      %vm588 = vcmp.gt.f32.partialorder %v540, -1.0
      %vm589 = vcmp.gt.f32.partialorder %v541, -1.0
      %vm590 = vcmp.gt.f32.partialorder %v542, -1.0
      %vm591 = vcmp.lt.f32.partialorder %v527, 16.0
      %vm592 = vcmp.lt.f32.partialorder %v528, 16.0
      %vm593 = vcmp.lt.f32.partialorder %v529, 16.0
      %vm594 = vcmp.lt.f32.partialorder %v530, 16.0
      %vm595 = vcmp.lt.f32.partialorder %v531, 16.0
      %vm596 = vcmp.lt.f32.partialorder %v532, 16.0
      %vm597 = vcmp.lt.f32.partialorder %v533, 16.0
      %vm598 = vcmp.lt.f32.partialorder %v534, 16.0
      %vm599 = vcmp.lt.f32.partialorder %v535, 16.0
      %vm600 = vcmp.lt.f32.partialorder %v536, 16.0
      %vm601 = vcmp.lt.f32.partialorder %v537, 16.0
      %vm602 = vcmp.lt.f32.partialorder %v538, 16.0
      %vm603 = vcmp.lt.f32.partialorder %v539, 16.0
      %vm604 = vcmp.lt.f32.partialorder %v540, 16.0
      %vm605 = vcmp.lt.f32.partialorder %v541, 16.0
      %vm606 = vcmp.lt.f32.partialorder %v542, 16.0
      %vm607 = vmand %vm575, %vm591
      %vm608 = vmand %vm576, %vm592
      %vm609 = vmand %vm577, %vm593
      %vm610 = vmand %vm578, %vm594
      %vm611 = vmand %vm579, %vm595
      %vm612 = vmand %vm580, %vm596
      %vm613 = vmand %vm581, %vm597
      %vm614 = vmand %vm582, %vm598
      %vm615 = vmand %vm583, %vm599
      %vm616 = vmand %vm584, %vm600
      %vm617 = vmand %vm585, %vm601
      %vm618 = vmand %vm586, %vm602
      %vm619 = vmand %vm587, %vm603
      %vm620 = vmand %vm588, %vm604
      %vm621 = vmand %vm589, %vm605
      %vm622 = vmand %vm590, %vm606
      %vm623 = vcmp.gt.f32.partialorder %v559, -1.0
      %vm624 = vcmp.gt.f32.partialorder %v560, -1.0
      %vm625 = vcmp.gt.f32.partialorder %v561, -1.0
      %vm626 = vcmp.gt.f32.partialorder %v562, -1.0
      %vm627 = vcmp.gt.f32.partialorder %v563, -1.0
      %vm628 = vcmp.gt.f32.partialorder %v564, -1.0
      %vm629 = vcmp.gt.f32.partialorder %v565, -1.0
      %vm630 = vcmp.gt.f32.partialorder %v566, -1.0
      %vm631 = vcmp.gt.f32.partialorder %v567, -1.0
      %vm632 = vcmp.gt.f32.partialorder %v568, -1.0
      %vm633 = vcmp.gt.f32.partialorder %v569, -1.0
      %vm634 = vcmp.gt.f32.partialorder %v570, -1.0
      %vm635 = vcmp.gt.f32.partialorder %v571, -1.0
      %vm636 = vcmp.gt.f32.partialorder %v572, -1.0
      %vm637 = vcmp.gt.f32.partialorder %v573, -1.0
      %vm638 = vcmp.gt.f32.partialorder %v574, -1.0
      %v639 = vsel %vm623, 1, 0
      %v640 = vsel %vm624, 1, 0
      %v641 = vsel %vm625, 1, 0
      %v642 = vsel %vm626, 1, 0
      %v643 = vsel %vm627, 1, 0
      %v644 = vsel %vm628, 1, 0
      %v645 = vsel %vm629, 1, 0
      %v646 = vsel %vm630, 1, 0
      %v647 = vsel %vm631, 1, 0
      %v648 = vsel %vm632, 1, 0
      %v649 = vsel %vm633, 1, 0
      %v650 = vsel %vm634, 1, 0
      %v651 = vsel %vm635, 1, 0
      %v652 = vsel %vm636, 1, 0
      %v653 = vsel %vm637, 1, 0
      %v654 = vsel %vm638, 1, 0
      %655 = vrot.lane.b32.xlu0 %v639, 119
      %v656 = vpop.permute.xlu0 %655
      %657 = vrot.lane.b32.xlu0 %v640, 119
      %v658 = vpop.permute.xlu0 %657
      %659 = vrot.lane.b32.xlu0 %v641, 119
      %v660 = vpop.permute.xlu0 %659
      %661 = vrot.lane.b32.xlu0 %v642, 119
      %v662 = vpop.permute.xlu0 %661
      %663 = vrot.lane.b32.xlu0 %v643, 119
      %v664 = vpop.permute.xlu0 %663
      %665 = vrot.lane.b32.xlu0 %v644, 119
      %v666 = vpop.permute.xlu0 %665
      %667 = vrot.lane.b32.xlu0 %v645, 119
      %v668 = vpop.permute.xlu0 %667
      %669 = vrot.lane.b32.xlu0 %v646, 119
      %v670 = vpop.permute.xlu0 %669
      %671 = vrot.lane.b32.xlu0 %v647, 119
      %v672 = vpop.permute.xlu0 %671
      %673 = vrot.lane.b32.xlu0 %v648, 119
      %v674 = vpop.permute.xlu0 %673
      %675 = vrot.lane.b32.xlu0 %v649, 119
      %v676 = vpop.permute.xlu0 %675
      %677 = vrot.lane.b32.xlu0 %v650, 119
      %v678 = vpop.permute.xlu0 %677
      %679 = vrot.lane.b32.xlu0 %v651, 119
      %v680 = vpop.permute.xlu0 %679
      %681 = vrot.lane.b32.xlu0 %v652, 119
      %v682 = vpop.permute.xlu0 %681
      %683 = vrot.lane.b32.xlu0 %v653, 119
      %v684 = vpop.permute.xlu0 %683
      %685 = vrot.lane.b32.xlu0 %v654, 119
      %v686 = vpop.permute.xlu0 %685
      %vm687 = vcmp.ne.s32.totalorder %v656, 0
      %vm688 = vcmp.ne.s32.totalorder %v658, 0
      %vm689 = vcmp.ne.s32.totalorder %v660, 0
      %vm690 = vcmp.ne.s32.totalorder %v662, 0
      %vm691 = vcmp.ne.s32.totalorder %v664, 0
      %vm692 = vcmp.ne.s32.totalorder %v666, 0
      %vm693 = vcmp.ne.s32.totalorder %v668, 0
      %vm694 = vcmp.ne.s32.totalorder %v670, 0
      %vm695 = vcmp.ne.s32.totalorder %v672, 0
      %vm696 = vcmp.ne.s32.totalorder %v674, 0
      %vm697 = vcmp.ne.s32.totalorder %v676, 0
      %vm698 = vcmp.ne.s32.totalorder %v678, 0
      %vm699 = vcmp.ne.s32.totalorder %v680, 0
      %vm700 = vcmp.ne.s32.totalorder %v682, 0
      %vm701 = vcmp.ne.s32.totalorder %v684, 0
      %vm702 = vcmp.ne.s32.totalorder %v686, 0
      %vm703 = vmand %vm607, %vm687
      %vm704 = vmand %vm608, %vm688
      %vm705 = vmand %vm609, %vm689
      %vm706 = vmand %vm610, %vm690
      %vm707 = vmand %vm611, %vm691
      %vm708 = vmand %vm612, %vm692
      %vm709 = vmand %vm613, %vm693
      %vm710 = vmand %vm614, %vm694
      %vm711 = vmand %vm615, %vm695
      %vm712 = vmand %vm616, %vm696
      %vm713 = vmand %vm617, %vm697
      %vm714 = vmand %vm618, %vm698
      %vm715 = vmand %vm619, %vm699
      %vm716 = vmand %vm620, %vm700
      %vm717 = vmand %vm621, %vm701
      %vm718 = vmand %vm622, %vm702
      %vm719 = vcmp.lt.f32.partialorder %v559, 16.0
      %vm720 = vcmp.lt.f32.partialorder %v560, 16.0
      %vm721 = vcmp.lt.f32.partialorder %v561, 16.0
      %vm722 = vcmp.lt.f32.partialorder %v562, 16.0
      %vm723 = vcmp.lt.f32.partialorder %v563, 16.0
      %vm724 = vcmp.lt.f32.partialorder %v564, 16.0
      %vm725 = vcmp.lt.f32.partialorder %v565, 16.0
      %vm726 = vcmp.lt.f32.partialorder %v566, 16.0
      %vm727 = vcmp.lt.f32.partialorder %v567, 16.0
      %vm728 = vcmp.lt.f32.partialorder %v568, 16.0
      %vm729 = vcmp.lt.f32.partialorder %v569, 16.0
      %vm730 = vcmp.lt.f32.partialorder %v570, 16.0
      %vm731 = vcmp.lt.f32.partialorder %v571, 16.0
      %vm732 = vcmp.lt.f32.partialorder %v572, 16.0
      %vm733 = vcmp.lt.f32.partialorder %v573, 16.0
      %vm734 = vcmp.lt.f32.partialorder %v574, 16.0
      %v735 = vsel %vm719, 1, 0
      %v736 = vsel %vm720, 1, 0
      %v737 = vsel %vm721, 1, 0
      %v738 = vsel %vm722, 1, 0
      %v739 = vsel %vm723, 1, 0
      %v740 = vsel %vm724, 1, 0
      %v741 = vsel %vm725, 1, 0
      %v742 = vsel %vm726, 1, 0
      %v743 = vsel %vm727, 1, 0
      %v744 = vsel %vm728, 1, 0
      %v745 = vsel %vm729, 1, 0
      %v746 = vsel %vm730, 1, 0
      %v747 = vsel %vm731, 1, 0
      %v748 = vsel %vm732, 1, 0
      %v749 = vsel %vm733, 1, 0
      %v750 = vsel %vm734, 1, 0
      %751 = vrot.lane.b32.xlu0 %v735, 119
      %v752 = vpop.permute.xlu0 %751
      %753 = vrot.lane.b32.xlu0 %v736, 119
      %v754 = vpop.permute.xlu0 %753
      %755 = vrot.lane.b32.xlu0 %v737, 119
      %v756 = vpop.permute.xlu0 %755
      %757 = vrot.lane.b32.xlu0 %v738, 119
      %v758 = vpop.permute.xlu0 %757
      %759 = vrot.lane.b32.xlu0 %v739, 119
      %v760 = vpop.permute.xlu0 %759
      %761 = vrot.lane.b32.xlu0 %v740, 119
      %v762 = vpop.permute.xlu0 %761
      %763 = vrot.lane.b32.xlu0 %v741, 119
      %v764 = vpop.permute.xlu0 %763
      %765 = vrot.lane.b32.xlu0 %v742, 119
      %v766 = vpop.permute.xlu0 %765
      %767 = vrot.lane.b32.xlu0 %v743, 119
      %v768 = vpop.permute.xlu0 %767
      %769 = vrot.lane.b32.xlu0 %v744, 119
      %v770 = vpop.permute.xlu0 %769
      %771 = vrot.lane.b32.xlu0 %v745, 119
      %v772 = vpop.permute.xlu0 %771
      %773 = vrot.lane.b32.xlu0 %v746, 119
      %v774 = vpop.permute.xlu0 %773
      %775 = vrot.lane.b32.xlu0 %v747, 119
      %v776 = vpop.permute.xlu0 %775
      %777 = vrot.lane.b32.xlu0 %v748, 119
      %v778 = vpop.permute.xlu0 %777
      %779 = vrot.lane.b32.xlu0 %v749, 119
      %v780 = vpop.permute.xlu0 %779
      %781 = vrot.lane.b32.xlu0 %v750, 119
      %v782 = vpop.permute.xlu0 %781
      %vm783 = vcmp.ne.s32.totalorder %v752, 0
      %vm784 = vcmp.ne.s32.totalorder %v754, 0
      %vm785 = vcmp.ne.s32.totalorder %v756, 0
      %vm786 = vcmp.ne.s32.totalorder %v758, 0
      %vm787 = vcmp.ne.s32.totalorder %v760, 0
      %vm788 = vcmp.ne.s32.totalorder %v762, 0
      %vm789 = vcmp.ne.s32.totalorder %v764, 0
      %vm790 = vcmp.ne.s32.totalorder %v766, 0
      %vm791 = vcmp.ne.s32.totalorder %v768, 0
      %vm792 = vcmp.ne.s32.totalorder %v770, 0
      %vm793 = vcmp.ne.s32.totalorder %v772, 0
      %vm794 = vcmp.ne.s32.totalorder %v774, 0
      %vm795 = vcmp.ne.s32.totalorder %v776, 0
      %vm796 = vcmp.ne.s32.totalorder %v778, 0
      %vm797 = vcmp.ne.s32.totalorder %v780, 0
      %vm798 = vcmp.ne.s32.totalorder %v782, 0
      %vm799 = vmand %vm703, %vm783
      %vm800 = vmand %vm704, %vm784
      %vm801 = vmand %vm705, %vm785
      %vm802 = vmand %vm706, %vm786
      %vm803 = vmand %vm707, %vm787
      %vm804 = vmand %vm708, %vm788
      %vm805 = vmand %vm709, %vm789
      %vm806 = vmand %vm710, %vm790
      %vm807 = vmand %vm711, %vm791
      %vm808 = vmand %vm712, %vm792
      %vm809 = vmand %vm713, %vm793
      %vm810 = vmand %vm714, %vm794
      %vm811 = vmand %vm715, %vm795
      %vm812 = vmand %vm716, %vm796
      %vm813 = vmand %vm717, %vm797
      %vm814 = vmand %vm718, %vm798
      %v815 = vsel %vm799, 1, 0
      %v816 = vsel %vm800, 1, 0
      %v817 = vsel %vm801, 1, 0
      %v818 = vsel %vm802, 1, 0
      %v819 = vsel %vm803, 1, 0
      %v820 = vsel %vm804, 1, 0
      %v821 = vsel %vm805, 1, 0
      %v822 = vsel %vm806, 1, 0
      %v823 = vsel %vm807, 1, 0
      %v824 = vsel %vm808, 1, 0
      %v825 = vsel %vm809, 1, 0
      %v826 = vsel %vm810, 1, 0
      %v827 = vsel %vm811, 1, 0
      %v828 = vsel %vm812, 1, 0
      %v829 = vsel %vm813, 1, 0
      %v830 = vsel %vm814, 1, 0
      %v831 = vcvt.s32.f32 %v815
      %v832 = vcvt.s32.f32 %v816
      %v833 = vcvt.s32.f32 %v817
      %v834 = vcvt.s32.f32 %v818
      %v835 = vcvt.s32.f32 %v819
      %v836 = vcvt.s32.f32 %v820
      %v837 = vcvt.s32.f32 %v821
      %v838 = vcvt.s32.f32 %v822
      %v839 = vcvt.s32.f32 %v823
      %v840 = vcvt.s32.f32 %v824
      %v841 = vcvt.s32.f32 %v825
      %v842 = vcvt.s32.f32 %v826
      %v843 = vcvt.s32.f32 %v827
      %v844 = vcvt.s32.f32 %v828
      %v845 = vcvt.s32.f32 %v829
      %v846 = vcvt.s32.f32 %v830
      %863 = vrot.lane.b32.xlu0 %v831, 18
      %v864 = vpop.permute.xlu0 %863
      %865 = vrot.lane.b32.xlu0 %v832, 18
      %v866 = vpop.permute.xlu0 %865
      %867 = vrot.lane.b32.xlu0 %v833, 18
      %v868 = vpop.permute.xlu0 %867
      %869 = vrot.lane.b32.xlu0 %v834, 18
      %v870 = vpop.permute.xlu0 %869
      %871 = vrot.lane.b32.xlu0 %v835, 18
      %v872 = vpop.permute.xlu0 %871
      %873 = vrot.lane.b32.xlu0 %v836, 18
      %v874 = vpop.permute.xlu0 %873
      %875 = vrot.lane.b32.xlu0 %v837, 18
      %v876 = vpop.permute.xlu0 %875
      %877 = vrot.lane.b32.xlu0 %v838, 18
      %v878 = vpop.permute.xlu0 %877
      %879 = vrot.lane.b32.xlu0 %v839, 18
      %v880 = vpop.permute.xlu0 %879
      %881 = vrot.lane.b32.xlu0 %v840, 18
      %v882 = vpop.permute.xlu0 %881
      %883 = vrot.lane.b32.xlu0 %v841, 18
      %v884 = vpop.permute.xlu0 %883
      %885 = vrot.lane.b32.xlu0 %v842, 18
      %v886 = vpop.permute.xlu0 %885
      %887 = vrot.lane.b32.xlu0 %v843, 18
      %v888 = vpop.permute.xlu0 %887
      %889 = vrot.lane.b32.xlu0 %v844, 18
      %v890 = vpop.permute.xlu0 %889
      %891 = vrot.lane.b32.xlu0 %v845, 18
      %v892 = vpop.permute.xlu0 %891
      %893 = vrot.lane.b32.xlu0 %v846, 18
      %v894 = vpop.permute.xlu0 %893
      %v911 = vmul.f32 %v342, %v864
      %v912 = vmul.f32 %v344, %v866
      %v913 = vmul.f32 %v346, %v868
      %v914 = vmul.f32 %v348, %v870
      %v915 = vmul.f32 %v350, %v872
      %v916 = vmul.f32 %v352, %v874
      %v917 = vmul.f32 %v354, %v876
      %v918 = vmul.f32 %v356, %v878
      %v919 = vmul.f32 %v358, %v880
      %v920 = vmul.f32 %v360, %v882
      %v921 = vmul.f32 %v362, %v884
      %v922 = vmul.f32 %v364, %v886
      %v923 = vmul.f32 %v366, %v888
      %v924 = vmul.f32 %v368, %v890
      %v925 = vmul.f32 %v370, %v892
      %v926 = vmul.f32 %v372, %v894
      %v927 = vadd.f32 %v527, 1.0
      %v928 = vadd.f32 %v528, 1.0
      %v929 = vadd.f32 %v529, 1.0
      %v930 = vadd.f32 %v530, 1.0
      %v931 = vadd.f32 %v531, 1.0
      %v932 = vadd.f32 %v532, 1.0
      %v933 = vadd.f32 %v533, 1.0
      %v934 = vadd.f32 %v534, 1.0
      %v935 = vadd.f32 %v535, 1.0
      %v936 = vadd.f32 %v536, 1.0
      %v937 = vadd.f32 %v537, 1.0
      %v938 = vadd.f32 %v538, 1.0
      %v939 = vadd.f32 %v539, 1.0
      %v940 = vadd.f32 %v540, 1.0
      %v941 = vadd.f32 %v541, 1.0
      %v942 = vadd.f32 %v542, 1.0
      %944 = vset.pattern.permute.xlu0 0
      %945 = vperm.xlu0 %944, %v927
      %v946 = vpop.permute.xlu0 %945
      %949 = vset.pattern.permute.xlu0 0
      %950 = vperm.xlu0 %949, %v928
      %v951 = vpop.permute.xlu0 %950
      %954 = vset.pattern.permute.xlu0 0
      %955 = vperm.xlu0 %954, %v929
      %v956 = vpop.permute.xlu0 %955
      %959 = vset.pattern.permute.xlu0 0
      %960 = vperm.xlu0 %959, %v930
      %v961 = vpop.permute.xlu0 %960
      %964 = vset.pattern.permute.xlu0 0
      %965 = vperm.xlu0 %964, %v931
      %v966 = vpop.permute.xlu0 %965
      %969 = vset.pattern.permute.xlu0 0
      %970 = vperm.xlu0 %969, %v932
      %v971 = vpop.permute.xlu0 %970
      %974 = vset.pattern.permute.xlu0 0
      %975 = vperm.xlu0 %974, %v933
      %v976 = vpop.permute.xlu0 %975
      %979 = vset.pattern.permute.xlu0 0
      %980 = vperm.xlu0 %979, %v934
      %v981 = vpop.permute.xlu0 %980
      %984 = vset.pattern.permute.xlu0 0
      %985 = vperm.xlu0 %984, %v935
      %v986 = vpop.permute.xlu0 %985
      %989 = vset.pattern.permute.xlu0 0
      %990 = vperm.xlu0 %989, %v936
      %v991 = vpop.permute.xlu0 %990
      %994 = vset.pattern.permute.xlu0 0
      %995 = vperm.xlu0 %994, %v937
      %v996 = vpop.permute.xlu0 %995
      %999 = vset.pattern.permute.xlu0 0
      %1000 = vperm.xlu0 %999, %v938
      %v1001 = vpop.permute.xlu0 %1000
      %1004 = vset.pattern.permute.xlu0 0
      %1005 = vperm.xlu0 %1004, %v939
      %v1006 = vpop.permute.xlu0 %1005
      %1009 = vset.pattern.permute.xlu0 0
      %1010 = vperm.xlu0 %1009, %v940
      %v1011 = vpop.permute.xlu0 %1010
      %1014 = vset.pattern.permute.xlu0 0
      %1015 = vperm.xlu0 %1014, %v941
      %v1016 = vpop.permute.xlu0 %1015
      %1019 = vset.pattern.permute.xlu0 0
      %1020 = vperm.xlu0 %1019, %v942
      %v1021 = vpop.permute.xlu0 %1020
      %v1023 = vsub.f32 %v946, %v507
      %v1024 = vsub.f32 %v951, %v507
      %v1025 = vsub.f32 %v956, %v507
      %v1026 = vsub.f32 %v961, %v507
      %v1027 = vsub.f32 %v966, %v507
      %v1028 = vsub.f32 %v971, %v507
      %v1029 = vsub.f32 %v976, %v507
      %v1030 = vsub.f32 %v981, %v507
      %v1031 = vsub.f32 %v986, %v507
      %v1032 = vsub.f32 %v991, %v507
      %v1033 = vsub.f32 %v996, %v507
      %v1034 = vsub.f32 %v1001, %v507
      %v1035 = vsub.f32 %v1006, %v507
      %v1036 = vsub.f32 %v1011, %v507
      %v1037 = vsub.f32 %v1016, %v507
      %v1038 = vsub.f32 %v1021, %v507
      %v1039 = vand.u32 2147483647, %v1023
      %v1040 = vand.u32 2147483647, %v1024
      %v1041 = vand.u32 2147483647, %v1025
      %v1042 = vand.u32 2147483647, %v1026
      %v1043 = vand.u32 2147483647, %v1027
      %v1044 = vand.u32 2147483647, %v1028
      %v1045 = vand.u32 2147483647, %v1029
      %v1046 = vand.u32 2147483647, %v1030
      %v1047 = vand.u32 2147483647, %v1031
      %v1048 = vand.u32 2147483647, %v1032
      %v1049 = vand.u32 2147483647, %v1033
      %v1050 = vand.u32 2147483647, %v1034
      %v1051 = vand.u32 2147483647, %v1035
      %v1052 = vand.u32 2147483647, %v1036
      %v1053 = vand.u32 2147483647, %v1037
      %v1054 = vand.u32 2147483647, %v1038
      %v1055 = vsub.f32 1.0, %v1039
      %v1056 = vsub.f32 1.0, %v1040
      %v1057 = vsub.f32 1.0, %v1041
      %v1058 = vsub.f32 1.0, %v1042
      %v1059 = vsub.f32 1.0, %v1043
      %v1060 = vsub.f32 1.0, %v1044
      %v1061 = vsub.f32 1.0, %v1045
      %v1062 = vsub.f32 1.0, %v1046
      %v1063 = vsub.f32 1.0, %v1047
      %v1064 = vsub.f32 1.0, %v1048
      %v1065 = vsub.f32 1.0, %v1049
      %v1066 = vsub.f32 1.0, %v1050
      %v1067 = vsub.f32 1.0, %v1051
      %v1068 = vsub.f32 1.0, %v1052
      %v1069 = vsub.f32 1.0, %v1053
      %v1070 = vsub.f32 1.0, %v1054
      %v1071 = vmax.f32 %v1055, 0.0
      %v1072 = vmax.f32 %v1056, 0.0
      %v1073 = vmax.f32 %v1057, 0.0
      %v1074 = vmax.f32 %v1058, 0.0
      %v1075 = vmax.f32 %v1059, 0.0
      %v1076 = vmax.f32 %v1060, 0.0
      %v1077 = vmax.f32 %v1061, 0.0
      %v1078 = vmax.f32 %v1062, 0.0
      %v1079 = vmax.f32 %v1063, 0.0
      %v1080 = vmax.f32 %v1064, 0.0
      %v1081 = vmax.f32 %v1065, 0.0
      %v1082 = vmax.f32 %v1066, 0.0
      %v1083 = vmax.f32 %v1067, 0.0
      %v1084 = vmax.f32 %v1068, 0.0
      %v1085 = vmax.f32 %v1069, 0.0
      %v1086 = vmax.f32 %v1070, 0.0
      %1088 = vset.pattern.permute.xlu0 18
      %1089 = vperm.xlu0 %1088, %v911
      %v1090 = vpop.permute.xlu0 %1089
      %1093 = vset.pattern.permute.xlu0 18
      %1094 = vperm.xlu0 %1093, %v912
      %v1095 = vpop.permute.xlu0 %1094
      %1098 = vset.pattern.permute.xlu0 18
      %1099 = vperm.xlu0 %1098, %v913
      %v1100 = vpop.permute.xlu0 %1099
      %1103 = vset.pattern.permute.xlu0 18
      %1104 = vperm.xlu0 %1103, %v914
      %v1105 = vpop.permute.xlu0 %1104
      %1108 = vset.pattern.permute.xlu0 18
      %1109 = vperm.xlu0 %1108, %v915
      %v1110 = vpop.permute.xlu0 %1109
      %1113 = vset.pattern.permute.xlu0 18
      %1114 = vperm.xlu0 %1113, %v916
      %v1115 = vpop.permute.xlu0 %1114
      %1118 = vset.pattern.permute.xlu0 18
      %1119 = vperm.xlu0 %1118, %v917
      %v1120 = vpop.permute.xlu0 %1119
      %1123 = vset.pattern.permute.xlu0 18
      %1124 = vperm.xlu0 %1123, %v918
      %v1125 = vpop.permute.xlu0 %1124
      %1128 = vset.pattern.permute.xlu0 18
      %1129 = vperm.xlu0 %1128, %v919
      %v1130 = vpop.permute.xlu0 %1129
      %1133 = vset.pattern.permute.xlu0 18
      %1134 = vperm.xlu0 %1133, %v920
      %v1135 = vpop.permute.xlu0 %1134
      %1138 = vset.pattern.permute.xlu0 18
      %1139 = vperm.xlu0 %1138, %v921
      %v1140 = vpop.permute.xlu0 %1139
      %1143 = vset.pattern.permute.xlu0 18
      %1144 = vperm.xlu0 %1143, %v922
      %v1145 = vpop.permute.xlu0 %1144
      %1148 = vset.pattern.permute.xlu0 18
      %1149 = vperm.xlu0 %1148, %v923
      %v1150 = vpop.permute.xlu0 %1149
      %1153 = vset.pattern.permute.xlu0 18
      %1154 = vperm.xlu0 %1153, %v924
      %v1155 = vpop.permute.xlu0 %1154
      %1158 = vset.pattern.permute.xlu0 18
      %1159 = vperm.xlu0 %1158, %v925
      %v1160 = vpop.permute.xlu0 %1159
      %1163 = vset.pattern.permute.xlu0 18
      %1164 = vperm.xlu0 %1163, %v926
      %v1165 = vpop.permute.xlu0 %1164
      %v1167 = vmul.f32 %v1071, %v1090
      %v1168 = vmul.f32 %v1072, %v1095
      %v1169 = vmul.f32 %v1073, %v1100
      %v1170 = vmul.f32 %v1074, %v1105
      %v1171 = vmul.f32 %v1075, %v1110
      %v1172 = vmul.f32 %v1076, %v1115
      %v1173 = vmul.f32 %v1077, %v1120
      %v1174 = vmul.f32 %v1078, %v1125
      %v1175 = vmul.f32 %v1079, %v1130
      %v1176 = vmul.f32 %v1080, %v1135
      %v1177 = vmul.f32 %v1081, %v1140
      %v1178 = vmul.f32 %v1082, %v1145
      %v1179 = vmul.f32 %v1083, %v1150
      %v1180 = vmul.f32 %v1084, %v1155
      %v1181 = vmul.f32 %v1085, %v1160
      %v1182 = vmul.f32 %v1086, %v1165
      %v1183 = vadd.f32 %v559, 1.0
      %v1184 = vadd.f32 %v560, 1.0
      %v1185 = vadd.f32 %v561, 1.0
      %v1186 = vadd.f32 %v562, 1.0
      %v1187 = vadd.f32 %v563, 1.0
      %v1188 = vadd.f32 %v564, 1.0
      %v1189 = vadd.f32 %v565, 1.0
      %v1190 = vadd.f32 %v566, 1.0
      %v1191 = vadd.f32 %v567, 1.0
      %v1192 = vadd.f32 %v568, 1.0
      %v1193 = vadd.f32 %v569, 1.0
      %v1194 = vadd.f32 %v570, 1.0
      %v1195 = vadd.f32 %v571, 1.0
      %v1196 = vadd.f32 %v572, 1.0
      %v1197 = vadd.f32 %v573, 1.0
      %v1198 = vadd.f32 %v574, 1.0
      %1200 = vset.pattern.permute.xlu0 9
      %1201 = vperm.xlu0 %1200, %v1183
      %v1202 = vpop.permute.xlu0 %1201
      %1205 = vset.pattern.permute.xlu0 9
      %1206 = vperm.xlu0 %1205, %v1184
      %v1207 = vpop.permute.xlu0 %1206
      %1210 = vset.pattern.permute.xlu0 9
      %1211 = vperm.xlu0 %1210, %v1185
      %v1212 = vpop.permute.xlu0 %1211
      %1215 = vset.pattern.permute.xlu0 9
      %1216 = vperm.xlu0 %1215, %v1186
      %v1217 = vpop.permute.xlu0 %1216
      %1220 = vset.pattern.permute.xlu0 9
      %1221 = vperm.xlu0 %1220, %v1187
      %v1222 = vpop.permute.xlu0 %1221
      %1225 = vset.pattern.permute.xlu0 9
      %1226 = vperm.xlu0 %1225, %v1188
      %v1227 = vpop.permute.xlu0 %1226
      %1230 = vset.pattern.permute.xlu0 9
      %1231 = vperm.xlu0 %1230, %v1189
      %v1232 = vpop.permute.xlu0 %1231
      %1235 = vset.pattern.permute.xlu0 9
      %1236 = vperm.xlu0 %1235, %v1190
      %v1237 = vpop.permute.xlu0 %1236
      %1240 = vset.pattern.permute.xlu0 9
      %1241 = vperm.xlu0 %1240, %v1191
      %v1242 = vpop.permute.xlu0 %1241
      %1245 = vset.pattern.permute.xlu0 9
      %1246 = vperm.xlu0 %1245, %v1192
      %v1247 = vpop.permute.xlu0 %1246
      %1250 = vset.pattern.permute.xlu0 9
      %1251 = vperm.xlu0 %1250, %v1193
      %v1252 = vpop.permute.xlu0 %1251
      %1255 = vset.pattern.permute.xlu0 9
      %1256 = vperm.xlu0 %1255, %v1194
      %v1257 = vpop.permute.xlu0 %1256
      %1260 = vset.pattern.permute.xlu0 9
      %1261 = vperm.xlu0 %1260, %v1195
      %v1262 = vpop.permute.xlu0 %1261
      %1265 = vset.pattern.permute.xlu0 9
      %1266 = vperm.xlu0 %1265, %v1196
      %v1267 = vpop.permute.xlu0 %1266
      %1270 = vset.pattern.permute.xlu0 9
      %1271 = vperm.xlu0 %1270, %v1197
      %v1272 = vpop.permute.xlu0 %1271
      %1275 = vset.pattern.permute.xlu0 9
      %1276 = vperm.xlu0 %1275, %v1198
      %v1277 = vpop.permute.xlu0 %1276
      %v1279 = vsub.f32 %v1202, %v510
      %v1280 = vsub.f32 %v1207, %v510
      %v1281 = vsub.f32 %v1212, %v510
      %v1282 = vsub.f32 %v1217, %v510
      %v1283 = vsub.f32 %v1222, %v510
      %v1284 = vsub.f32 %v1227, %v510
      %v1285 = vsub.f32 %v1232, %v510
      %v1286 = vsub.f32 %v1237, %v510
      %v1287 = vsub.f32 %v1242, %v510
      %v1288 = vsub.f32 %v1247, %v510
      %v1289 = vsub.f32 %v1252, %v510
      %v1290 = vsub.f32 %v1257, %v510
      %v1291 = vsub.f32 %v1262, %v510
      %v1292 = vsub.f32 %v1267, %v510
      %v1293 = vsub.f32 %v1272, %v510
      %v1294 = vsub.f32 %v1277, %v510
      %v1295 = vand.u32 2147483647, %v1279
      %v1296 = vand.u32 2147483647, %v1280
      %v1297 = vand.u32 2147483647, %v1281
      %v1298 = vand.u32 2147483647, %v1282
      %v1299 = vand.u32 2147483647, %v1283
      %v1300 = vand.u32 2147483647, %v1284
      %v1301 = vand.u32 2147483647, %v1285
      %v1302 = vand.u32 2147483647, %v1286
      %v1303 = vand.u32 2147483647, %v1287
      %v1304 = vand.u32 2147483647, %v1288
      %v1305 = vand.u32 2147483647, %v1289
      %v1306 = vand.u32 2147483647, %v1290
      %v1307 = vand.u32 2147483647, %v1291
      %v1308 = vand.u32 2147483647, %v1292
      %v1309 = vand.u32 2147483647, %v1293
      %v1310 = vand.u32 2147483647, %v1294
      %v1311 = vsub.f32 1.0, %v1295
      %v1312 = vsub.f32 1.0, %v1296
      %v1313 = vsub.f32 1.0, %v1297
      %v1314 = vsub.f32 1.0, %v1298
      %v1315 = vsub.f32 1.0, %v1299
      %v1316 = vsub.f32 1.0, %v1300
      %v1317 = vsub.f32 1.0, %v1301
      %v1318 = vsub.f32 1.0, %v1302
      %v1319 = vsub.f32 1.0, %v1303
      %v1320 = vsub.f32 1.0, %v1304
      %v1321 = vsub.f32 1.0, %v1305
      %v1322 = vsub.f32 1.0, %v1306
      %v1323 = vsub.f32 1.0, %v1307
      %v1324 = vsub.f32 1.0, %v1308
      %v1325 = vsub.f32 1.0, %v1309
      %v1326 = vsub.f32 1.0, %v1310
      %v1327 = vmax.f32 %v1311, 0.0
      %v1328 = vmax.f32 %v1312, 0.0
      %v1329 = vmax.f32 %v1313, 0.0
      %v1330 = vmax.f32 %v1314, 0.0
      %v1331 = vmax.f32 %v1315, 0.0
      %v1332 = vmax.f32 %v1316, 0.0
      %v1333 = vmax.f32 %v1317, 0.0
      %v1334 = vmax.f32 %v1318, 0.0
      %v1335 = vmax.f32 %v1319, 0.0
      %v1336 = vmax.f32 %v1320, 0.0
      %v1337 = vmax.f32 %v1321, 0.0
      %v1338 = vmax.f32 %v1322, 0.0
      %v1339 = vmax.f32 %v1323, 0.0
      %v1340 = vmax.f32 %v1324, 0.0
      %v1341 = vmax.f32 %v1325, 0.0
      %v1342 = vmax.f32 %v1326, 0.0
      %v1343 = vpack.c.bf16 %v1168, %v1167
      %v1344 = vpack.c.bf16 %v1170, %v1169
      %v1345 = vpack.c.bf16 %v1172, %v1171
      %v1346 = vpack.c.bf16 %v1174, %v1173
      %v1347 = vpack.c.bf16 %v1176, %v1175
      %v1348 = vpack.c.bf16 %v1178, %v1177
      %v1349 = vpack.c.bf16 %v1180, %v1179
      %v1350 = vpack.c.bf16 %v1182, %v1181
      %v1354 = vunpack.c.l.b16 %v274
      %v1355 = vunpack.c.l.b16 %v275
      %v1356 = vunpack.c.l.b16 %v276
      %v1357 = vpack.c.b16 %v1355, %v1354
      %v1358 = vpack.c.b16 %v1356, %v1356
      %vm1360 = vcmask 146432
      %v1362 = vsel %vm1360, %v1343, 0
      %v1365 = vsel %vm1360, %v1344, 0
      %v1368 = vsel %vm1360, %v1345, 0
      %v1371 = vsel %vm1360, %v1346, 0
      %v1374 = vsel %vm1360, %v1347, 0
      %v1377 = vsel %vm1360, %v1348, 0
      %v1380 = vsel %vm1360, %v1349, 0
      %v1383 = vsel %vm1360, %v1350, 0
      %vm1385 = vcmask 1040384
      %v1387 = vsel %vm1385, %v1358, 0
      %1389 = vmatprep.subr.bf16.mxu0 0
      %1390 = vmatpush1.bf16.msra.mxu0 %v1357
      %1391 = vmatprep.subr.bf16.mxu0 0
      %1392 = vmatpush1.bf16.msra.mxu0 %v1387
      %1393 = vmatprep.subr.bf16.mxu0 0
      %1394 = vmatpush1.bf16.msra.mxu0 0
      %1395 = vmatprep.subr.bf16.mxu0 0
      %1396 = vmatpush1.bf16.msra.mxu0 0
      %1397 = vmatprep.subr.bf16.mxu0 0
      %1398 = vmatpush1.bf16.msra.mxu0 0
      %1399 = vmatprep.subr.bf16.mxu0 0
      %1400 = vmatpush1.bf16.msra.mxu0 0
      %1401 = vmatprep.subr.bf16.mxu0 0
      %1402 = vmatpush1.bf16.msra.mxu0 0
      %1403 = vmatprep.subr.bf16.mxu0 0
      %1404 = vmatpush1.bf16.msra.mxu0 0
      %1405 = vmatprep.subr.bf16.mxu0 0
      %1406 = vmatpush1.bf16.msra.mxu0 0
      %1407 = vmatprep.subr.bf16.mxu0 0
      %1408 = vmatpush1.bf16.msra.mxu0 0
      %1409 = vmatprep.subr.bf16.mxu0 0
      %1410 = vmatpush1.bf16.msra.mxu0 0
      %1411 = vmatprep.subr.bf16.mxu0 0
      %1412 = vmatpush1.bf16.msra.mxu0 0
      %1413 = vmatprep.subr.bf16.mxu0 0
      %1414 = vmatpush1.bf16.msra.mxu0 0
      %1415 = vmatprep.subr.bf16.mxu0 0
      %1416 = vmatpush1.bf16.msra.mxu0 0
      %1417 = vmatprep.subr.bf16.mxu0 0
      %1418 = vmatpush1.bf16.msra.mxu0 0
      %1419 = vmatprep.subr.bf16.mxu0 0
      %1420 = vmatpush1.bf16.msra.mxu0 0
      %1421 = vmatprep.mubr.bf16.mxu0 0
      %1422 = vmatmul.mubr.bf16.gmra.mrb[0].mxu0 %v1362
      %v1423 = vpop.f32.mrb[0].mxu0
      %v1424 = vadd.f32 0.0, %v1423
      %v1425 = vpop.f32.mrb[0].mxu0
      %v1426 = vpop.f32.mrb[0].mxu0
      %v1427 = vadd.f32 0.0, %v1426
      %v1428 = vpop.f32.mrb[0].mxu0
      %1429 = vmatprep.mubr.bf16.mxu0 0
      %1430 = vmatmul.mubr.bf16.gmra.mrb[0].mxu0 %v1365
      %v1431 = vpop.f32.mrb[0].mxu0
      %v1432 = vadd.f32 0.0, %v1431
      %v1433 = vpop.f32.mrb[0].mxu0
      %v1434 = vpop.f32.mrb[0].mxu0
      %v1435 = vadd.f32 0.0, %v1434
      %v1436 = vpop.f32.mrb[0].mxu0
      %1437 = vmatprep.mubr.bf16.mxu0 0
      %1438 = vmatmul.mubr.bf16.gmra.mrb[0].mxu0 %v1368
      %v1439 = vpop.f32.mrb[0].mxu0
      %v1440 = vadd.f32 0.0, %v1439
      %v1441 = vpop.f32.mrb[0].mxu0
      %v1442 = vpop.f32.mrb[0].mxu0
      %v1443 = vadd.f32 0.0, %v1442
      %v1444 = vpop.f32.mrb[0].mxu0
      %1445 = vmatprep.mubr.bf16.mxu0 0
      %1446 = vmatmul.mubr.bf16.gmra.mrb[0].mxu0 %v1371
      %v1447 = vpop.f32.mrb[0].mxu0
      %v1448 = vadd.f32 0.0, %v1447
      %v1449 = vpop.f32.mrb[0].mxu0
      %v1450 = vpop.f32.mrb[0].mxu0
      %v1451 = vadd.f32 0.0, %v1450
      %v1452 = vpop.f32.mrb[0].mxu0
      %1453 = vmatprep.mubr.bf16.mxu0 0
      %1454 = vmatmul.mubr.bf16.gmra.mrb[0].mxu0 %v1374
      %v1455 = vpop.f32.mrb[0].mxu0
      %v1456 = vadd.f32 0.0, %v1455
      %v1457 = vpop.f32.mrb[0].mxu0
      %v1458 = vpop.f32.mrb[0].mxu0
      %v1459 = vadd.f32 0.0, %v1458
      %v1460 = vpop.f32.mrb[0].mxu0
      %1461 = vmatprep.mubr.bf16.mxu0 0
      %1462 = vmatmul.mubr.bf16.gmra.mrb[0].mxu0 %v1377
      %v1463 = vpop.f32.mrb[0].mxu0
      %v1464 = vadd.f32 0.0, %v1463
      %v1465 = vpop.f32.mrb[0].mxu0
      %v1466 = vpop.f32.mrb[0].mxu0
      %v1467 = vadd.f32 0.0, %v1466
      %v1468 = vpop.f32.mrb[0].mxu0
      %1469 = vmatprep.mubr.bf16.mxu0 0
      %1470 = vmatmul.mubr.bf16.gmra.mrb[0].mxu0 %v1380
      %v1471 = vpop.f32.mrb[0].mxu0
      %v1472 = vadd.f32 0.0, %v1471
      %v1473 = vpop.f32.mrb[0].mxu0
      %v1474 = vpop.f32.mrb[0].mxu0
      %v1475 = vadd.f32 0.0, %v1474
      %v1476 = vpop.f32.mrb[0].mxu0
      %1477 = vmatprep.mubr.bf16.mxu0 0
      %1478 = vmatmul.mubr.bf16.gmra.mrb[0].mxu0 %v1383
      %v1479 = vpop.f32.mrb[0].mxu0
      %v1480 = vadd.f32 0.0, %v1479
      %v1481 = vpop.f32.mrb[0].mxu0
      %v1482 = vpop.f32.mrb[0].mxu0
      %v1483 = vadd.f32 0.0, %v1482
      %v1484 = vpop.f32.mrb[0].mxu0
      %1485 = vdwg.mxu0
      %v1486 = vmul.f32 %v1424, %v1327
      %v1487 = vmul.f32 %v1427, %v1328
      %v1488 = vmul.f32 %v1432, %v1329
      %v1489 = vmul.f32 %v1435, %v1330
      %v1490 = vmul.f32 %v1440, %v1331
      %v1491 = vmul.f32 %v1443, %v1332
      %v1492 = vmul.f32 %v1448, %v1333
      %v1493 = vmul.f32 %v1451, %v1334
      %v1494 = vmul.f32 %v1456, %v1335
      %v1495 = vmul.f32 %v1459, %v1336
      %v1496 = vmul.f32 %v1464, %v1337
      %v1497 = vmul.f32 %v1467, %v1338
      %v1498 = vmul.f32 %v1472, %v1339
      %v1499 = vmul.f32 %v1475, %v1340
      %v1500 = vmul.f32 %v1480, %v1341
      %v1501 = vmul.f32 %v1483, %v1342
      %v1502 = vpack.c.bf16 %v1487, %v1486
      %v1503 = vpack.c.bf16 %v1489, %v1488
      %v1504 = vpack.c.bf16 %v1491, %v1490
      %v1505 = vpack.c.bf16 %v1493, %v1492
      %v1506 = vpack.c.bf16 %v1495, %v1494
      %v1507 = vpack.c.bf16 %v1497, %v1496
      %v1508 = vpack.c.bf16 %v1499, %v1498
      %v1509 = vpack.c.bf16 %v1501, %v1500
      %v1510 = vld [vmem:[%s2] sm:$0xf]
      %v1511 = vld [vmem:[%s2 + $0x4] sm:$0xf]
      %v1512 = vld [vmem:[%s2 + $0x8] sm:$0xf]
      %v1513 = vld [vmem:[%s2 + $0xc] sm:$0xf]
      %v1514 = vld [vmem:[%s2 + $0x10] sm:$0xf]
      %v1515 = vld [vmem:[%s2 + $0x14] sm:$0xf]
      %v1516 = vld [vmem:[%s2 + $0x18] sm:$0xf]
      %v1517 = vld [vmem:[%s2 + $0x1c] sm:$0xf]
      %v1518 = vld [vmem:[%s2 + $0x20] sm:$0xf]
      %v1519 = vadd.f32 %v489, 0.0
      %v1520 = vadd.f32 %v490, 0.0
      %v1521 = vadd.f32 %v491, 0.0
      %v1522 = vadd.f32 %v492, 0.0
      %v1523 = vadd.f32 %v493, 0.0
      %v1524 = vadd.f32 %v494, 0.0
      %v1525 = vadd.f32 %v495, 0.0
      %v1526 = vadd.f32 %v496, 0.0
      %v1527 = vadd.f32 %v497, 0.0
      %v1528 = vadd.f32 %v498, 0.0
      %v1529 = vadd.f32 %v499, 0.0
      %v1530 = vadd.f32 %v500, 0.0
      %v1531 = vadd.f32 %v501, 0.0
      %v1532 = vadd.f32 %v502, 0.0
      %v1533 = vadd.f32 %v503, 0.0
      %v1534 = vadd.f32 %v504, 0.0
      %v1535 = vadd.f32 %v1519, %v258
      %v1536 = vadd.f32 %v1520, %v259
      %v1537 = vadd.f32 %v1521, %v260
      %v1538 = vadd.f32 %v1522, %v261
      %v1539 = vadd.f32 %v1523, %v262
      %v1540 = vadd.f32 %v1524, %v263
      %v1541 = vadd.f32 %v1525, %v264
      %v1542 = vadd.f32 %v1526, %v265
      %v1543 = vadd.f32 %v1527, %v266
      %v1544 = vadd.f32 %v1528, %v267
      %v1545 = vadd.f32 %v1529, %v268
      %v1546 = vadd.f32 %v1530, %v269
      %v1547 = vadd.f32 %v1531, %v270
      %v1548 = vadd.f32 %v1532, %v271
      %v1549 = vadd.f32 %v1533, %v272
      %v1550 = vadd.f32 %v1534, %v273
      %vm1551 = vcmp.gt.f32.partialorder %v1535, -1.0
      %vm1552 = vcmp.gt.f32.partialorder %v1536, -1.0
      %vm1553 = vcmp.gt.f32.partialorder %v1537, -1.0
      %vm1554 = vcmp.gt.f32.partialorder %v1538, -1.0
      %vm1555 = vcmp.gt.f32.partialorder %v1539, -1.0
      %vm1556 = vcmp.gt.f32.partialorder %v1540, -1.0
      %vm1557 = vcmp.gt.f32.partialorder %v1541, -1.0
      %vm1558 = vcmp.gt.f32.partialorder %v1542, -1.0
      %vm1559 = vcmp.gt.f32.partialorder %v1543, -1.0
      %vm1560 = vcmp.gt.f32.partialorder %v1544, -1.0
      %vm1561 = vcmp.gt.f32.partialorder %v1545, -1.0
      %vm1562 = vcmp.gt.f32.partialorder %v1546, -1.0
      %vm1563 = vcmp.gt.f32.partialorder %v1547, -1.0
      %vm1564 = vcmp.gt.f32.partialorder %v1548, -1.0
      %vm1565 = vcmp.gt.f32.partialorder %v1549, -1.0
      %vm1566 = vcmp.gt.f32.partialorder %v1550, -1.0
      %v1567 = vsel %vm1551, 1, 0
      %v1568 = vsel %vm1552, 1, 0
      %v1569 = vsel %vm1553, 1, 0
      %v1570 = vsel %vm1554, 1, 0
      %v1571 = vsel %vm1555, 1, 0
      %v1572 = vsel %vm1556, 1, 0
      %v1573 = vsel %vm1557, 1, 0
      %v1574 = vsel %vm1558, 1, 0
      %v1575 = vsel %vm1559, 1, 0
      %v1576 = vsel %vm1560, 1, 0
      %v1577 = vsel %vm1561, 1, 0
      %v1578 = vsel %vm1562, 1, 0
      %v1579 = vsel %vm1563, 1, 0
      %v1580 = vsel %vm1564, 1, 0
      %v1581 = vsel %vm1565, 1, 0
      %v1582 = vsel %vm1566, 1, 0
      %1583 = vrot.lane.b32.xlu0 %v1567, 119
      %v1584 = vpop.permute.xlu0 %1583
      %1585 = vrot.lane.b32.xlu0 %v1568, 119
      %v1586 = vpop.permute.xlu0 %1585
      %1587 = vrot.lane.b32.xlu0 %v1569, 119
      %v1588 = vpop.permute.xlu0 %1587
      %1589 = vrot.lane.b32.xlu0 %v1570, 119
      %v1590 = vpop.permute.xlu0 %1589
      %1591 = vrot.lane.b32.xlu0 %v1571, 119
      %v1592 = vpop.permute.xlu0 %1591
      %1593 = vrot.lane.b32.xlu0 %v1572, 119
      %v1594 = vpop.permute.xlu0 %1593
      %1595 = vrot.lane.b32.xlu0 %v1573, 119
      %v1596 = vpop.permute.xlu0 %1595
      %1597 = vrot.lane.b32.xlu0 %v1574, 119
      %v1598 = vpop.permute.xlu0 %1597
      %1599 = vrot.lane.b32.xlu0 %v1575, 119
      %v1600 = vpop.permute.xlu0 %1599
      %1601 = vrot.lane.b32.xlu0 %v1576, 119
      %v1602 = vpop.permute.xlu0 %1601
      %1603 = vrot.lane.b32.xlu0 %v1577, 119
      %v1604 = vpop.permute.xlu0 %1603
      %1605 = vrot.lane.b32.xlu0 %v1578, 119
      %v1606 = vpop.permute.xlu0 %1605
      %1607 = vrot.lane.b32.xlu0 %v1579, 119
      %v1608 = vpop.permute.xlu0 %1607
      %1609 = vrot.lane.b32.xlu0 %v1580, 119
      %v1610 = vpop.permute.xlu0 %1609
      %1611 = vrot.lane.b32.xlu0 %v1581, 119
      %v1612 = vpop.permute.xlu0 %1611
      %1613 = vrot.lane.b32.xlu0 %v1582, 119
      %v1614 = vpop.permute.xlu0 %1613
      %vm1615 = vcmp.ne.s32.totalorder %v1584, 0
      %vm1616 = vcmp.ne.s32.totalorder %v1586, 0
      %vm1617 = vcmp.ne.s32.totalorder %v1588, 0
      %vm1618 = vcmp.ne.s32.totalorder %v1590, 0
      %vm1619 = vcmp.ne.s32.totalorder %v1592, 0
      %vm1620 = vcmp.ne.s32.totalorder %v1594, 0
      %vm1621 = vcmp.ne.s32.totalorder %v1596, 0
      %vm1622 = vcmp.ne.s32.totalorder %v1598, 0
      %vm1623 = vcmp.ne.s32.totalorder %v1600, 0
      %vm1624 = vcmp.ne.s32.totalorder %v1602, 0
      %vm1625 = vcmp.ne.s32.totalorder %v1604, 0
      %vm1626 = vcmp.ne.s32.totalorder %v1606, 0
      %vm1627 = vcmp.ne.s32.totalorder %v1608, 0
      %vm1628 = vcmp.ne.s32.totalorder %v1610, 0
      %vm1629 = vcmp.ne.s32.totalorder %v1612, 0
      %vm1630 = vcmp.ne.s32.totalorder %v1614, 0
      %vm1631 = vmand %vm607, %vm1615
      %vm1632 = vmand %vm608, %vm1616
      %vm1633 = vmand %vm609, %vm1617
      %vm1634 = vmand %vm610, %vm1618
      %vm1635 = vmand %vm611, %vm1619
      %vm1636 = vmand %vm612, %vm1620
      %vm1637 = vmand %vm613, %vm1621
      %vm1638 = vmand %vm614, %vm1622
      %vm1639 = vmand %vm615, %vm1623
      %vm1640 = vmand %vm616, %vm1624
      %vm1641 = vmand %vm617, %vm1625
      %vm1642 = vmand %vm618, %vm1626
      %vm1643 = vmand %vm619, %vm1627
      %vm1644 = vmand %vm620, %vm1628
      %vm1645 = vmand %vm621, %vm1629
      %vm1646 = vmand %vm622, %vm1630
      %vm1647 = vcmp.lt.f32.partialorder %v1535, 16.0
      %vm1648 = vcmp.lt.f32.partialorder %v1536, 16.0
      %vm1649 = vcmp.lt.f32.partialorder %v1537, 16.0
      %vm1650 = vcmp.lt.f32.partialorder %v1538, 16.0
      %vm1651 = vcmp.lt.f32.partialorder %v1539, 16.0
      %vm1652 = vcmp.lt.f32.partialorder %v1540, 16.0
      %vm1653 = vcmp.lt.f32.partialorder %v1541, 16.0
      %vm1654 = vcmp.lt.f32.partialorder %v1542, 16.0
      %vm1655 = vcmp.lt.f32.partialorder %v1543, 16.0
      %vm1656 = vcmp.lt.f32.partialorder %v1544, 16.0
      %vm1657 = vcmp.lt.f32.partialorder %v1545, 16.0
      %vm1658 = vcmp.lt.f32.partialorder %v1546, 16.0
      %vm1659 = vcmp.lt.f32.partialorder %v1547, 16.0
      %vm1660 = vcmp.lt.f32.partialorder %v1548, 16.0
      %vm1661 = vcmp.lt.f32.partialorder %v1549, 16.0
      %vm1662 = vcmp.lt.f32.partialorder %v1550, 16.0
      %v1663 = vsel %vm1647, 1, 0
      %v1664 = vsel %vm1648, 1, 0
      %v1665 = vsel %vm1649, 1, 0
      %v1666 = vsel %vm1650, 1, 0
      %v1667 = vsel %vm1651, 1, 0
      %v1668 = vsel %vm1652, 1, 0
      %v1669 = vsel %vm1653, 1, 0
      %v1670 = vsel %vm1654, 1, 0
      %v1671 = vsel %vm1655, 1, 0
      %v1672 = vsel %vm1656, 1, 0
      %v1673 = vsel %vm1657, 1, 0
      %v1674 = vsel %vm1658, 1, 0
      %v1675 = vsel %vm1659, 1, 0
      %v1676 = vsel %vm1660, 1, 0
      %v1677 = vsel %vm1661, 1, 0
      %v1678 = vsel %vm1662, 1, 0
      %1679 = vrot.lane.b32.xlu0 %v1663, 119
      %v1680 = vpop.permute.xlu0 %1679
      %1681 = vrot.lane.b32.xlu0 %v1664, 119
      %v1682 = vpop.permute.xlu0 %1681
      %1683 = vrot.lane.b32.xlu0 %v1665, 119
      %v1684 = vpop.permute.xlu0 %1683
      %1685 = vrot.lane.b32.xlu0 %v1666, 119
      %v1686 = vpop.permute.xlu0 %1685
      %1687 = vrot.lane.b32.xlu0 %v1667, 119
      %v1688 = vpop.permute.xlu0 %1687
      %1689 = vrot.lane.b32.xlu0 %v1668, 119
      %v1690 = vpop.permute.xlu0 %1689
      %1691 = vrot.lane.b32.xlu0 %v1669, 119
      %v1692 = vpop.permute.xlu0 %1691
      %1693 = vrot.lane.b32.xlu0 %v1670, 119
      %v1694 = vpop.permute.xlu0 %1693
      %1695 = vrot.lane.b32.xlu0 %v1671, 119
      %v1696 = vpop.permute.xlu0 %1695
      %1697 = vrot.lane.b32.xlu0 %v1672, 119
      %v1698 = vpop.permute.xlu0 %1697
      %1699 = vrot.lane.b32.xlu0 %v1673, 119
      %v1700 = vpop.permute.xlu0 %1699
      %1701 = vrot.lane.b32.xlu0 %v1674, 119
      %v1702 = vpop.permute.xlu0 %1701
      %1703 = vrot.lane.b32.xlu0 %v1675, 119
      %v1704 = vpop.permute.xlu0 %1703
      %1705 = vrot.lane.b32.xlu0 %v1676, 119
      %v1706 = vpop.permute.xlu0 %1705
      %1707 = vrot.lane.b32.xlu0 %v1677, 119
      %v1708 = vpop.permute.xlu0 %1707
      %1709 = vrot.lane.b32.xlu0 %v1678, 119
      %v1710 = vpop.permute.xlu0 %1709
      %vm1711 = vcmp.ne.s32.totalorder %v1680, 0
      %vm1712 = vcmp.ne.s32.totalorder %v1682, 0
      %vm1713 = vcmp.ne.s32.totalorder %v1684, 0
      %vm1714 = vcmp.ne.s32.totalorder %v1686, 0
      %vm1715 = vcmp.ne.s32.totalorder %v1688, 0
      %vm1716 = vcmp.ne.s32.totalorder %v1690, 0
      %vm1717 = vcmp.ne.s32.totalorder %v1692, 0
      %vm1718 = vcmp.ne.s32.totalorder %v1694, 0
      %vm1719 = vcmp.ne.s32.totalorder %v1696, 0
      %vm1720 = vcmp.ne.s32.totalorder %v1698, 0
      %vm1721 = vcmp.ne.s32.totalorder %v1700, 0
      %vm1722 = vcmp.ne.s32.totalorder %v1702, 0
      %vm1723 = vcmp.ne.s32.totalorder %v1704, 0
      %vm1724 = vcmp.ne.s32.totalorder %v1706, 0
      %vm1725 = vcmp.ne.s32.totalorder %v1708, 0
      %vm1726 = vcmp.ne.s32.totalorder %v1710, 0
      %vm1727 = vmand %vm1631, %vm1711
      %vm1728 = vmand %vm1632, %vm1712
      %vm1729 = vmand %vm1633, %vm1713
      %vm1730 = vmand %vm1634, %vm1714
      %vm1731 = vmand %vm1635, %vm1715
      %vm1732 = vmand %vm1636, %vm1716
      %vm1733 = vmand %vm1637, %vm1717
      %vm1734 = vmand %vm1638, %vm1718
      %vm1735 = vmand %vm1639, %vm1719
      %vm1736 = vmand %vm1640, %vm1720
      %vm1737 = vmand %vm1641, %vm1721
      %vm1738 = vmand %vm1642, %vm1722
      %vm1739 = vmand %vm1643, %vm1723
      %vm1740 = vmand %vm1644, %vm1724
      %vm1741 = vmand %vm1645, %vm1725
      %vm1742 = vmand %vm1646, %vm1726
      %v1743 = vsel %vm1727, 1, 0
      %v1744 = vsel %vm1728, 1, 0
      %v1745 = vsel %vm1729, 1, 0
      %v1746 = vsel %vm1730, 1, 0
      %v1747 = vsel %vm1731, 1, 0
      %v1748 = vsel %vm1732, 1, 0
      %v1749 = vsel %vm1733, 1, 0
      %v1750 = vsel %vm1734, 1, 0
      %v1751 = vsel %vm1735, 1, 0
      %v1752 = vsel %vm1736, 1, 0
      %v1753 = vsel %vm1737, 1, 0
      %v1754 = vsel %vm1738, 1, 0
      %v1755 = vsel %vm1739, 1, 0
      %v1756 = vsel %vm1740, 1, 0
      %v1757 = vsel %vm1741, 1, 0
      %v1758 = vsel %vm1742, 1, 0
      %v1759 = vcvt.s32.f32 %v1743
      %v1760 = vcvt.s32.f32 %v1744
      %v1761 = vcvt.s32.f32 %v1745
      %v1762 = vcvt.s32.f32 %v1746
      %v1763 = vcvt.s32.f32 %v1747
      %v1764 = vcvt.s32.f32 %v1748
      %v1765 = vcvt.s32.f32 %v1749
      %v1766 = vcvt.s32.f32 %v1750
      %v1767 = vcvt.s32.f32 %v1751
      %v1768 = vcvt.s32.f32 %v1752
      %v1769 = vcvt.s32.f32 %v1753
      %v1770 = vcvt.s32.f32 %v1754
      %v1771 = vcvt.s32.f32 %v1755
      %v1772 = vcvt.s32.f32 %v1756
      %v1773 = vcvt.s32.f32 %v1757
      %v1774 = vcvt.s32.f32 %v1758
      %1791 = vrot.lane.b32.xlu0 %v1759, 18
      %v1792 = vpop.permute.xlu0 %1791
      %1793 = vrot.lane.b32.xlu0 %v1760, 18
      %v1794 = vpop.permute.xlu0 %1793
      %1795 = vrot.lane.b32.xlu0 %v1761, 18
      %v1796 = vpop.permute.xlu0 %1795
      %1797 = vrot.lane.b32.xlu0 %v1762, 18
      %v1798 = vpop.permute.xlu0 %1797
      %1799 = vrot.lane.b32.xlu0 %v1763, 18
      %v1800 = vpop.permute.xlu0 %1799
      %1801 = vrot.lane.b32.xlu0 %v1764, 18
      %v1802 = vpop.permute.xlu0 %1801
      %1803 = vrot.lane.b32.xlu0 %v1765, 18
      %v1804 = vpop.permute.xlu0 %1803
      %1805 = vrot.lane.b32.xlu0 %v1766, 18
      %v1806 = vpop.permute.xlu0 %1805
      %1807 = vrot.lane.b32.xlu0 %v1767, 18
      %v1808 = vpop.permute.xlu0 %1807
      %1809 = vrot.lane.b32.xlu0 %v1768, 18
      %v1810 = vpop.permute.xlu0 %1809
      %1811 = vrot.lane.b32.xlu0 %v1769, 18
      %v1812 = vpop.permute.xlu0 %1811
      %1813 = vrot.lane.b32.xlu0 %v1770, 18
      %v1814 = vpop.permute.xlu0 %1813
      %1815 = vrot.lane.b32.xlu0 %v1771, 18
      %v1816 = vpop.permute.xlu0 %1815
      %1817 = vrot.lane.b32.xlu0 %v1772, 18
      %v1818 = vpop.permute.xlu0 %1817
      %1819 = vrot.lane.b32.xlu0 %v1773, 18
      %v1820 = vpop.permute.xlu0 %1819
      %1821 = vrot.lane.b32.xlu0 %v1774, 18
      %v1822 = vpop.permute.xlu0 %1821
      %v1839 = vmul.f32 %v342, %v1792
      %v1840 = vmul.f32 %v344, %v1794
      %v1841 = vmul.f32 %v346, %v1796
      %v1842 = vmul.f32 %v348, %v1798
      %v1843 = vmul.f32 %v350, %v1800
      %v1844 = vmul.f32 %v352, %v1802
      %v1845 = vmul.f32 %v354, %v1804
      %v1846 = vmul.f32 %v356, %v1806
      %v1847 = vmul.f32 %v358, %v1808
      %v1848 = vmul.f32 %v360, %v1810
      %v1849 = vmul.f32 %v362, %v1812
      %v1850 = vmul.f32 %v364, %v1814
      %v1851 = vmul.f32 %v366, %v1816
      %v1852 = vmul.f32 %v368, %v1818
      %v1853 = vmul.f32 %v370, %v1820
      %v1854 = vmul.f32 %v372, %v1822
      %1855 = vset.pattern.permute.xlu0 1
      %1856 = vperm.xlu0 %1855, %v927
      %v1857 = vpop.permute.xlu0 %1856
      %1859 = vset.pattern.permute.xlu0 1
      %1860 = vperm.xlu0 %1859, %v928
      %v1861 = vpop.permute.xlu0 %1860
      %1863 = vset.pattern.permute.xlu0 1
      %1864 = vperm.xlu0 %1863, %v929
      %v1865 = vpop.permute.xlu0 %1864
      %1867 = vset.pattern.permute.xlu0 1
      %1868 = vperm.xlu0 %1867, %v930
      %v1869 = vpop.permute.xlu0 %1868
      %1871 = vset.pattern.permute.xlu0 1
      %1872 = vperm.xlu0 %1871, %v931
      %v1873 = vpop.permute.xlu0 %1872
      %1875 = vset.pattern.permute.xlu0 1
      %1876 = vperm.xlu0 %1875, %v932
      %v1877 = vpop.permute.xlu0 %1876
      %1879 = vset.pattern.permute.xlu0 1
      %1880 = vperm.xlu0 %1879, %v933
      %v1881 = vpop.permute.xlu0 %1880
      %1883 = vset.pattern.permute.xlu0 1
      %1884 = vperm.xlu0 %1883, %v934
      %v1885 = vpop.permute.xlu0 %1884
      %1887 = vset.pattern.permute.xlu0 1
      %1888 = vperm.xlu0 %1887, %v935
      %v1889 = vpop.permute.xlu0 %1888
      %1891 = vset.pattern.permute.xlu0 1
      %1892 = vperm.xlu0 %1891, %v936
      %v1893 = vpop.permute.xlu0 %1892
      %1895 = vset.pattern.permute.xlu0 1
      %1896 = vperm.xlu0 %1895, %v937
      %v1897 = vpop.permute.xlu0 %1896
      %1899 = vset.pattern.permute.xlu0 1
      %1900 = vperm.xlu0 %1899, %v938
      %v1901 = vpop.permute.xlu0 %1900
      %1903 = vset.pattern.permute.xlu0 1
      %1904 = vperm.xlu0 %1903, %v939
      %v1905 = vpop.permute.xlu0 %1904
      %1907 = vset.pattern.permute.xlu0 1
      %1908 = vperm.xlu0 %1907, %v940
      %v1909 = vpop.permute.xlu0 %1908
      %1911 = vset.pattern.permute.xlu0 1
      %1912 = vperm.xlu0 %1911, %v941
      %v1913 = vpop.permute.xlu0 %1912
      %1915 = vset.pattern.permute.xlu0 1
      %1916 = vperm.xlu0 %1915, %v942
      %v1917 = vpop.permute.xlu0 %1916
      %v1919 = vsub.f32 %v1857, %v507
      %v1920 = vsub.f32 %v1861, %v507
      %v1921 = vsub.f32 %v1865, %v507
      %v1922 = vsub.f32 %v1869, %v507
      %v1923 = vsub.f32 %v1873, %v507
      %v1924 = vsub.f32 %v1877, %v507
      %v1925 = vsub.f32 %v1881, %v507
      %v1926 = vsub.f32 %v1885, %v507
      %v1927 = vsub.f32 %v1889, %v507
      %v1928 = vsub.f32 %v1893, %v507
      %v1929 = vsub.f32 %v1897, %v507
      %v1930 = vsub.f32 %v1901, %v507
      %v1931 = vsub.f32 %v1905, %v507
      %v1932 = vsub.f32 %v1909, %v507
      %v1933 = vsub.f32 %v1913, %v507
      %v1934 = vsub.f32 %v1917, %v507
      %v1935 = vand.u32 2147483647, %v1919
      %v1936 = vand.u32 2147483647, %v1920
      %v1937 = vand.u32 2147483647, %v1921
      %v1938 = vand.u32 2147483647, %v1922
      %v1939 = vand.u32 2147483647, %v1923
      %v1940 = vand.u32 2147483647, %v1924
      %v1941 = vand.u32 2147483647, %v1925
      %v1942 = vand.u32 2147483647, %v1926
      %v1943 = vand.u32 2147483647, %v1927
      %v1944 = vand.u32 2147483647, %v1928
      %v1945 = vand.u32 2147483647, %v1929
      %v1946 = vand.u32 2147483647, %v1930
      %v1947 = vand.u32 2147483647, %v1931
      %v1948 = vand.u32 2147483647, %v1932
      %v1949 = vand.u32 2147483647, %v1933
      %v1950 = vand.u32 2147483647, %v1934
      %v1951 = vsub.f32 1.0, %v1935
      %v1952 = vsub.f32 1.0, %v1936
      %v1953 = vsub.f32 1.0, %v1937
      %v1954 = vsub.f32 1.0, %v1938
      %v1955 = vsub.f32 1.0, %v1939
      %v1956 = vsub.f32 1.0, %v1940
      %v1957 = vsub.f32 1.0, %v1941
      %v1958 = vsub.f32 1.0, %v1942
      %v1959 = vsub.f32 1.0, %v1943
      %v1960 = vsub.f32 1.0, %v1944
      %v1961 = vsub.f32 1.0, %v1945
      %v1962 = vsub.f32 1.0, %v1946
      %v1963 = vsub.f32 1.0, %v1947
      %v1964 = vsub.f32 1.0, %v1948
      %v1965 = vsub.f32 1.0, %v1949
      %v1966 = vsub.f32 1.0, %v1950
      %v1967 = vmax.f32 %v1951, 0.0
      %v1968 = vmax.f32 %v1952, 0.0
      %v1969 = vmax.f32 %v1953, 0.0
      %v1970 = vmax.f32 %v1954, 0.0
      %v1971 = vmax.f32 %v1955, 0.0
      %v1972 = vmax.f32 %v1956, 0.0
      %v1973 = vmax.f32 %v1957, 0.0
      %v1974 = vmax.f32 %v1958, 0.0
      %v1975 = vmax.f32 %v1959, 0.0
      %v1976 = vmax.f32 %v1960, 0.0
      %v1977 = vmax.f32 %v1961, 0.0
      %v1978 = vmax.f32 %v1962, 0.0
      %v1979 = vmax.f32 %v1963, 0.0
      %v1980 = vmax.f32 %v1964, 0.0
      %v1981 = vmax.f32 %v1965, 0.0
      %v1982 = vmax.f32 %v1966, 0.0
      %1984 = vset.pattern.permute.xlu0 19
      %1985 = vperm.xlu0 %1984, %v1839
      %v1986 = vpop.permute.xlu0 %1985
      %1989 = vset.pattern.permute.xlu0 19
      %1990 = vperm.xlu0 %1989, %v1840
      %v1991 = vpop.permute.xlu0 %1990
      %1994 = vset.pattern.permute.xlu0 19
      %1995 = vperm.xlu0 %1994, %v1841
      %v1996 = vpop.permute.xlu0 %1995
      %1999 = vset.pattern.permute.xlu0 19
      %2000 = vperm.xlu0 %1999, %v1842
      %v2001 = vpop.permute.xlu0 %2000
      %2004 = vset.pattern.permute.xlu0 19
      %2005 = vperm.xlu0 %2004, %v1843
      %v2006 = vpop.permute.xlu0 %2005
      %2009 = vset.pattern.permute.xlu0 19
      %2010 = vperm.xlu0 %2009, %v1844
      %v2011 = vpop.permute.xlu0 %2010
      %2014 = vset.pattern.permute.xlu0 19
      %2015 = vperm.xlu0 %2014, %v1845
      %v2016 = vpop.permute.xlu0 %2015
      %2019 = vset.pattern.permute.xlu0 19
      %2020 = vperm.xlu0 %2019, %v1846
      %v2021 = vpop.permute.xlu0 %2020
      %2024 = vset.pattern.permute.xlu0 19
      %2025 = vperm.xlu0 %2024, %v1847
      %v2026 = vpop.permute.xlu0 %2025
      %2029 = vset.pattern.permute.xlu0 19
      %2030 = vperm.xlu0 %2029, %v1848
      %v2031 = vpop.permute.xlu0 %2030
      %2034 = vset.pattern.permute.xlu0 19
      %2035 = vperm.xlu0 %2034, %v1849
      %v2036 = vpop.permute.xlu0 %2035
      %2039 = vset.pattern.permute.xlu0 19
      %2040 = vperm.xlu0 %2039, %v1850
      %v2041 = vpop.permute.xlu0 %2040
      %2044 = vset.pattern.permute.xlu0 19
      %2045 = vperm.xlu0 %2044, %v1851
      %v2046 = vpop.permute.xlu0 %2045
      %2049 = vset.pattern.permute.xlu0 19
      %2050 = vperm.xlu0 %2049, %v1852
      %v2051 = vpop.permute.xlu0 %2050
      %2054 = vset.pattern.permute.xlu0 19
      %2055 = vperm.xlu0 %2054, %v1853
      %v2056 = vpop.permute.xlu0 %2055
      %2059 = vset.pattern.permute.xlu0 19
      %2060 = vperm.xlu0 %2059, %v1854
      %v2061 = vpop.permute.xlu0 %2060
      %v2063 = vmul.f32 %v1967, %v1986
      %v2064 = vmul.f32 %v1968, %v1991
      %v2065 = vmul.f32 %v1969, %v1996
      %v2066 = vmul.f32 %v1970, %v2001
      %v2067 = vmul.f32 %v1971, %v2006
      %v2068 = vmul.f32 %v1972, %v2011
      %v2069 = vmul.f32 %v1973, %v2016
      %v2070 = vmul.f32 %v1974, %v2021
      %v2071 = vmul.f32 %v1975, %v2026
      %v2072 = vmul.f32 %v1976, %v2031
      %v2073 = vmul.f32 %v1977, %v2036
      %v2074 = vmul.f32 %v1978, %v2041
      %v2075 = vmul.f32 %v1979, %v2046
      %v2076 = vmul.f32 %v1980, %v2051
      %v2077 = vmul.f32 %v1981, %v2056
      %v2078 = vmul.f32 %v1982, %v2061
      %v2079 = vadd.f32 %v1535, 1.0
      %v2080 = vadd.f32 %v1536, 1.0
      %v2081 = vadd.f32 %v1537, 1.0
      %v2082 = vadd.f32 %v1538, 1.0
      %v2083 = vadd.f32 %v1539, 1.0
      %v2084 = vadd.f32 %v1540, 1.0
      %v2085 = vadd.f32 %v1541, 1.0
      %v2086 = vadd.f32 %v1542, 1.0
      %v2087 = vadd.f32 %v1543, 1.0
      %v2088 = vadd.f32 %v1544, 1.0
      %v2089 = vadd.f32 %v1545, 1.0
      %v2090 = vadd.f32 %v1546, 1.0
      %v2091 = vadd.f32 %v1547, 1.0
      %v2092 = vadd.f32 %v1548, 1.0
      %v2093 = vadd.f32 %v1549, 1.0
      %v2094 = vadd.f32 %v1550, 1.0
      %2096 = vset.pattern.permute.xlu0 10
      %2097 = vperm.xlu0 %2096, %v2079
      %v2098 = vpop.permute.xlu0 %2097
      %2101 = vset.pattern.permute.xlu0 10
      %2102 = vperm.xlu0 %2101, %v2080
      %v2103 = vpop.permute.xlu0 %2102
      %2106 = vset.pattern.permute.xlu0 10
      %2107 = vperm.xlu0 %2106, %v2081
      %v2108 = vpop.permute.xlu0 %2107
      %2111 = vset.pattern.permute.xlu0 10
      %2112 = vperm.xlu0 %2111, %v2082
      %v2113 = vpop.permute.xlu0 %2112
      %2116 = vset.pattern.permute.xlu0 10
      %2117 = vperm.xlu0 %2116, %v2083
      %v2118 = vpop.permute.xlu0 %2117
      %2121 = vset.pattern.permute.xlu0 10
      %2122 = vperm.xlu0 %2121, %v2084
      %v2123 = vpop.permute.xlu0 %2122
      %2126 = vset.pattern.permute.xlu0 10
      %2127 = vperm.xlu0 %2126, %v2085
      %v2128 = vpop.permute.xlu0 %2127
      %2131 = vset.pattern.permute.xlu0 10
      %2132 = vperm.xlu0 %2131, %v2086
      %v2133 = vpop.permute.xlu0 %2132
      %2136 = vset.pattern.permute.xlu0 10
      %2137 = vperm.xlu0 %2136, %v2087
      %v2138 = vpop.permute.xlu0 %2137
      %2141 = vset.pattern.permute.xlu0 10
      %2142 = vperm.xlu0 %2141, %v2088
      %v2143 = vpop.permute.xlu0 %2142
      %2146 = vset.pattern.permute.xlu0 10
      %2147 = vperm.xlu0 %2146, %v2089
      %v2148 = vpop.permute.xlu0 %2147
      %2151 = vset.pattern.permute.xlu0 10
      %2152 = vperm.xlu0 %2151, %v2090
      %v2153 = vpop.permute.xlu0 %2152
      %2156 = vset.pattern.permute.xlu0 10
      %2157 = vperm.xlu0 %2156, %v2091
      %v2158 = vpop.permute.xlu0 %2157
      %2161 = vset.pattern.permute.xlu0 10
      %2162 = vperm.xlu0 %2161, %v2092
      %v2163 = vpop.permute.xlu0 %2162
      %2166 = vset.pattern.permute.xlu0 10
      %2167 = vperm.xlu0 %2166, %v2093
      %v2168 = vpop.permute.xlu0 %2167
      %2171 = vset.pattern.permute.xlu0 10
      %2172 = vperm.xlu0 %2171, %v2094
      %v2173 = vpop.permute.xlu0 %2172
      %v2175 = vsub.f32 %v2098, %v510
      %v2176 = vsub.f32 %v2103, %v510
      %v2177 = vsub.f32 %v2108, %v510
      %v2178 = vsub.f32 %v2113, %v510
      %v2179 = vsub.f32 %v2118, %v510
      %v2180 = vsub.f32 %v2123, %v510
      %v2181 = vsub.f32 %v2128, %v510
      %v2182 = vsub.f32 %v2133, %v510
      %v2183 = vsub.f32 %v2138, %v510
      %v2184 = vsub.f32 %v2143, %v510
      %v2185 = vsub.f32 %v2148, %v510
      %v2186 = vsub.f32 %v2153, %v510
      %v2187 = vsub.f32 %v2158, %v510
      %v2188 = vsub.f32 %v2163, %v510
      %v2189 = vsub.f32 %v2168, %v510
      %v2190 = vsub.f32 %v2173, %v510
      %v2191 = vand.u32 2147483647, %v2175
      %v2192 = vand.u32 2147483647, %v2176
      %v2193 = vand.u32 2147483647, %v2177
      %v2194 = vand.u32 2147483647, %v2178
      %v2195 = vand.u32 2147483647, %v2179
      %v2196 = vand.u32 2147483647, %v2180
      %v2197 = vand.u32 2147483647, %v2181
      %v2198 = vand.u32 2147483647, %v2182
      %v2199 = vand.u32 2147483647, %v2183
      %v2200 = vand.u32 2147483647, %v2184
      %v2201 = vand.u32 2147483647, %v2185
      %v2202 = vand.u32 2147483647, %v2186
      %v2203 = vand.u32 2147483647, %v2187
      %v2204 = vand.u32 2147483647, %v2188
      %v2205 = vand.u32 2147483647, %v2189
      %v2206 = vand.u32 2147483647, %v2190
      %v2207 = vsub.f32 1.0, %v2191
      %v2208 = vsub.f32 1.0, %v2192
      %v2209 = vsub.f32 1.0, %v2193
      %v2210 = vsub.f32 1.0, %v2194
      %v2211 = vsub.f32 1.0, %v2195
      %v2212 = vsub.f32 1.0, %v2196
      %v2213 = vsub.f32 1.0, %v2197
      %v2214 = vsub.f32 1.0, %v2198
      %v2215 = vsub.f32 1.0, %v2199
      %v2216 = vsub.f32 1.0, %v2200
      %v2217 = vsub.f32 1.0, %v2201
      %v2218 = vsub.f32 1.0, %v2202
      %v2219 = vsub.f32 1.0, %v2203
      %v2220 = vsub.f32 1.0, %v2204
      %v2221 = vsub.f32 1.0, %v2205
      %v2222 = vsub.f32 1.0, %v2206
      %v2223 = vmax.f32 %v2207, 0.0
      %v2224 = vmax.f32 %v2208, 0.0
      %v2225 = vmax.f32 %v2209, 0.0
      %v2226 = vmax.f32 %v2210, 0.0
      %v2227 = vmax.f32 %v2211, 0.0
      %v2228 = vmax.f32 %v2212, 0.0
      %v2229 = vmax.f32 %v2213, 0.0
      %v2230 = vmax.f32 %v2214, 0.0
      %v2231 = vmax.f32 %v2215, 0.0
      %v2232 = vmax.f32 %v2216, 0.0
      %v2233 = vmax.f32 %v2217, 0.0
      %v2234 = vmax.f32 %v2218, 0.0
      %v2235 = vmax.f32 %v2219, 0.0
      %v2236 = vmax.f32 %v2220, 0.0
      %v2237 = vmax.f32 %v2221, 0.0
      %v2238 = vmax.f32 %v2222, 0.0
      %v2239 = vpack.c.bf16 %v2064, %v2063
      %v2240 = vpack.c.bf16 %v2066, %v2065
      %v2241 = vpack.c.bf16 %v2068, %v2067
      %v2242 = vpack.c.bf16 %v2070, %v2069
      %v2243 = vpack.c.bf16 %v2072, %v2071
      %v2244 = vpack.c.bf16 %v2074, %v2073
      %v2245 = vpack.c.bf16 %v2076, %v2075
      %v2246 = vpack.c.bf16 %v2078, %v2077
      %v2248 = vsel %vm1360, %v2239, 0
      %v2251 = vsel %vm1360, %v2240, 0
      %v2254 = vsel %vm1360, %v2241, 0
      %v2257 = vsel %vm1360, %v2242, 0
      %v2260 = vsel %vm1360, %v2243, 0
      %v2263 = vsel %vm1360, %v2244, 0
      %v2266 = vsel %vm1360, %v2245, 0
      %v2269 = vsel %vm1360, %v2246, 0
      %2271 = vmatprep.subr.bf16.mxu0 0
      %2272 = vmatpush1.bf16.msra.mxu0 %v1357
      %2273 = vmatprep.subr.bf16.mxu0 0
      %2274 = vmatpush1.bf16.msra.mxu0 %v1387
      %2275 = vmatprep.subr.bf16.mxu0 0
      %2276 = vmatpush1.bf16.msra.mxu0 0
      %2277 = vmatprep.subr.bf16.mxu0 0
      %2278 = vmatpush1.bf16.msra.mxu0 0
      %2279 = vmatprep.subr.bf16.mxu0 0
      %2280 = vmatpush1.bf16.msra.mxu0 0
      %2281 = vmatprep.subr.bf16.mxu0 0
      %2282 = vmatpush1.bf16.msra.mxu0 0
      %2283 = vmatprep.subr.bf16.mxu0 0
      %2284 = vmatpush1.bf16.msra.mxu0 0
      %2285 = vmatprep.subr.bf16.mxu0 0
      %2286 = vmatpush1.bf16.msra.mxu0 0
      %2287 = vmatprep.subr.bf16.mxu0 0
      %2288 = vmatpush1.bf16.msra.mxu0 0
      %2289 = vmatprep.subr.bf16.mxu0 0
      %2290 = vmatpush1.bf16.msra.mxu0 0
      %2291 = vmatprep.subr.bf16.mxu0 0
      %2292 = vmatpush1.bf16.msra.mxu0 0
      %2293 = vmatprep.subr.bf16.mxu0 0
      %2294 = vmatpush1.bf16.msra.mxu0 0
      %2295 = vmatprep.subr.bf16.mxu0 0
      %2296 = vmatpush1.bf16.msra.mxu0 0
      %2297 = vmatprep.subr.bf16.mxu0 0
      %2298 = vmatpush1.bf16.msra.mxu0 0
      %2299 = vmatprep.subr.bf16.mxu0 0
      %2300 = vmatpush1.bf16.msra.mxu0 0
      %2301 = vmatprep.subr.bf16.mxu0 0
      %2302 = vmatpush1.bf16.msra.mxu0 0
      %2303 = vmatprep.mubr.bf16.mxu0 0
      %2304 = vmatmul.mubr.bf16.gmra.mrb[0].mxu0 %v2248
      %v2305 = vpop.f32.mrb[0].mxu0
      %v2306 = vadd.f32 0.0, %v2305
      %v2307 = vpop.f32.mrb[0].mxu0
      %v2308 = vpop.f32.mrb[0].mxu0
      %v2309 = vadd.f32 0.0, %v2308
      %v2310 = vpop.f32.mrb[0].mxu0
      %2311 = vmatprep.mubr.bf16.mxu0 0
      %2312 = vmatmul.mubr.bf16.gmra.mrb[0].mxu0 %v2251
      %v2313 = vpop.f32.mrb[0].mxu0
      %v2314 = vadd.f32 0.0, %v2313
      %v2315 = vpop.f32.mrb[0].mxu0
      %v2316 = vpop.f32.mrb[0].mxu0
      %v2317 = vadd.f32 0.0, %v2316
      %v2318 = vpop.f32.mrb[0].mxu0
      %2319 = vmatprep.mubr.bf16.mxu0 0
      %2320 = vmatmul.mubr.bf16.gmra.mrb[0].mxu0 %v2254
      %v2321 = vpop.f32.mrb[0].mxu0
      %v2322 = vadd.f32 0.0, %v2321
      %v2323 = vpop.f32.mrb[0].mxu0
      %v2324 = vpop.f32.mrb[0].mxu0
      %v2325 = vadd.f32 0.0, %v2324
      %v2326 = vpop.f32.mrb[0].mxu0
      %2327 = vmatprep.mubr.bf16.mxu0 0
      %2328 = vmatmul.mubr.bf16.gmra.mrb[0].mxu0 %v2257
      %v2329 = vpop.f32.mrb[0].mxu0
      %v2330 = vadd.f32 0.0, %v2329
      %v2331 = vpop.f32.mrb[0].mxu0
      %v2332 = vpop.f32.mrb[0].mxu0
      %v2333 = vadd.f32 0.0, %v2332
      %v2334 = vpop.f32.mrb[0].mxu0
      %2335 = vmatprep.mubr.bf16.mxu0 0
      %2336 = vmatmul.mubr.bf16.gmra.mrb[0].mxu0 %v2260
      %v2337 = vpop.f32.mrb[0].mxu0
      %v2338 = vadd.f32 0.0, %v2337
      %v2339 = vpop.f32.mrb[0].mxu0
      %v2340 = vpop.f32.mrb[0].mxu0
      %v2341 = vadd.f32 0.0, %v2340
      %v2342 = vpop.f32.mrb[0].mxu0
      %2343 = vmatprep.mubr.bf16.mxu0 0
      %2344 = vmatmul.mubr.bf16.gmra.mrb[0].mxu0 %v2263
      %v2345 = vpop.f32.mrb[0].mxu0
      %v2346 = vadd.f32 0.0, %v2345
      %v2347 = vpop.f32.mrb[0].mxu0
      %v2348 = vpop.f32.mrb[0].mxu0
      %v2349 = vadd.f32 0.0, %v2348
      %v2350 = vpop.f32.mrb[0].mxu0
      %2351 = vmatprep.mubr.bf16.mxu0 0
      %2352 = vmatmul.mubr.bf16.gmra.mrb[0].mxu0 %v2266
      %v2353 = vpop.f32.mrb[0].mxu0
      %v2354 = vadd.f32 0.0, %v2353
      %v2355 = vpop.f32.mrb[0].mxu0
      %v2356 = vpop.f32.mrb[0].mxu0
      %v2357 = vadd.f32 0.0, %v2356
      %v2358 = vpop.f32.mrb[0].mxu0
      %2359 = vmatprep.mubr.bf16.mxu0 0
      %2360 = vmatmul.mubr.bf16.gmra.mrb[0].mxu0 %v2269
      %v2361 = vpop.f32.mrb[0].mxu0
      %v2362 = vadd.f32 0.0, %v2361
      %v2363 = vpop.f32.mrb[0].mxu0
      %v2364 = vpop.f32.mrb[0].mxu0
      %v2365 = vadd.f32 0.0, %v2364
      %v2366 = vpop.f32.mrb[0].mxu0
      %2367 = vdwg.mxu0
      %v2368 = vmul.f32 %v2306, %v2223
      %v2369 = vmul.f32 %v2309, %v2224
      %v2370 = vmul.f32 %v2314, %v2225
      %v2371 = vmul.f32 %v2317, %v2226
      %v2372 = vmul.f32 %v2322, %v2227
      %v2373 = vmul.f32 %v2325, %v2228
      %v2374 = vmul.f32 %v2330, %v2229
      %v2375 = vmul.f32 %v2333, %v2230
      %v2376 = vmul.f32 %v2338, %v2231
      %v2377 = vmul.f32 %v2341, %v2232
      %v2378 = vmul.f32 %v2346, %v2233
      %v2379 = vmul.f32 %v2349, %v2234
      %v2380 = vmul.f32 %v2354, %v2235
      %v2381 = vmul.f32 %v2357, %v2236
      %v2382 = vmul.f32 %v2362, %v2237
      %v2383 = vmul.f32 %v2365, %v2238
      %v2384 = vpack.c.bf16 %v2369, %v2368
      %v2385 = vpack.c.bf16 %v2371, %v2370
      %v2386 = vpack.c.bf16 %v2373, %v2372
      %v2387 = vpack.c.bf16 %v2375, %v2374
      %v2388 = vpack.c.bf16 %v2377, %v2376
      %v2389 = vpack.c.bf16 %v2379, %v2378
      %v2390 = vpack.c.bf16 %v2381, %v2380
      %v2391 = vpack.c.bf16 %v2383, %v2382
      %s2392 = scalar_lea.vmem %s2, 36
      %v2393 = vld [vmem:[%s2392] sm:$0xf]
      %v2394 = vld [vmem:[%s2392 + $0x4] sm:$0xf]
      %v2395 = vld [vmem:[%s2392 + $0x8] sm:$0xf]
      %v2396 = vld [vmem:[%s2392 + $0xc] sm:$0xf]
      %v2397 = vld [vmem:[%s2392 + $0x10] sm:$0xf]
      %v2398 = vld [vmem:[%s2392 + $0x14] sm:$0xf]
      %v2399 = vld [vmem:[%s2392 + $0x18] sm:$0xf]
      %v2400 = vld [vmem:[%s2392 + $0x1c] sm:$0xf]
      %v2401 = vld [vmem:[%s2392 + $0x20] sm:$0xf]
      %v2411 = vunpack.c.l.b16 %v2393
      %v2412 = vunpack.c.l.b16 %v2394
      %v2413 = vunpack.c.l.b16 %v2395
      %v2414 = vunpack.c.l.b16 %v2396
      %v2415 = vunpack.c.l.b16 %v2397
      %v2416 = vunpack.c.l.b16 %v2398
      %v2417 = vunpack.c.l.b16 %v2399
      %v2418 = vunpack.c.l.b16 %v2400
      %v2419 = vunpack.c.l.b16 %v2401
      %v2420 = vpack.c.b16 %v2412, %v2411
      %v2421 = vpack.c.b16 %v2414, %v2413
      %v2422 = vpack.c.b16 %v2416, %v2415
      %v2423 = vpack.c.b16 %v2418, %v2417
      %v2424 = vpack.c.b16 %v2419, %v2419
      %vm2429 = vcmask 588800
      %v2431 = vsel %vm2429, %v2384, 0
      %v2434 = vsel %vm2429, %v2385, 0
      %v2437 = vsel %vm2429, %v2386, 0
      %v2440 = vsel %vm2429, %v2387, 0
      %v2443 = vsel %vm2429, %v2388, 0
      %v2446 = vsel %vm2429, %v2389, 0
      %v2449 = vsel %vm2429, %v2390, 0
      %v2452 = vsel %vm2429, %v2391, 0
      %vm2454 = vcmask 1043456
      %v2456 = vsel %vm2454, %v2424, 0
      %2458 = vmatprep.subr.bf16.mxu0 0
      %2459 = vmatpush1.bf16.msra.mxu0 %v2420
      %2460 = vmatprep.subr.bf16.mxu0 0
      %2461 = vmatpush1.bf16.msra.mxu0 %v2421
      %2462 = vmatprep.subr.bf16.mxu0 0
      %2463 = vmatpush1.bf16.msra.mxu0 %v2422
      %2464 = vmatprep.subr.bf16.mxu0 0
      %2465 = vmatpush1.bf16.msra.mxu0 %v2423
      %2466 = vmatprep.subr.bf16.mxu0 0
      %2467 = vmatpush1.bf16.msra.mxu0 %v2456
      %2468 = vmatprep.subr.bf16.mxu0 0
      %2469 = vmatpush1.bf16.msra.mxu0 0
      %2470 = vmatprep.subr.bf16.mxu0 0
      %2471 = vmatpush1.bf16.msra.mxu0 0
      %2472 = vmatprep.subr.bf16.mxu0 0
      %2473 = vmatpush1.bf16.msra.mxu0 0
      %2474 = vmatprep.subr.bf16.mxu0 0
      %2475 = vmatpush1.bf16.msra.mxu0 0
      %2476 = vmatprep.subr.bf16.mxu0 0
      %2477 = vmatpush1.bf16.msra.mxu0 0
      %2478 = vmatprep.subr.bf16.mxu0 0
      %2479 = vmatpush1.bf16.msra.mxu0 0
      %2480 = vmatprep.subr.bf16.mxu0 0
      %2481 = vmatpush1.bf16.msra.mxu0 0
      %2482 = vmatprep.subr.bf16.mxu0 0
      %2483 = vmatpush1.bf16.msra.mxu0 0
      %2484 = vmatprep.subr.bf16.mxu0 0
      %2485 = vmatpush1.bf16.msra.mxu0 0
      %2486 = vmatprep.subr.bf16.mxu0 0
      %2487 = vmatpush1.bf16.msra.mxu0 0
      %2488 = vmatprep.subr.bf16.mxu0 0
      %2489 = vmatpush1.bf16.msra.mxu0 0
      %2490 = vmatprep.mubr.bf16.mxu0 0
      %2491 = vmatmul.mubr.bf16.gmra.mrb[0].mxu0 %v2431
      %v2492 = vpop.f32.mrb[0].mxu0
      %v2493 = vadd.f32 0.0, %v2492
      %v2494 = vpop.f32.mrb[0].mxu0
      %v2495 = vpop.f32.mrb[0].mxu0
      %v2496 = vadd.f32 0.0, %v2495
      %v2497 = vpop.f32.mrb[0].mxu0
      %2498 = vmatprep.mubr.bf16.mxu0 0
      %2499 = vmatmul.mubr.bf16.gmra.mrb[0].mxu0 %v2434
      %v2500 = vpop.f32.mrb[0].mxu0
      %v2501 = vadd.f32 0.0, %v2500
      %v2502 = vpop.f32.mrb[0].mxu0
      %v2503 = vpop.f32.mrb[0].mxu0
      %v2504 = vadd.f32 0.0, %v2503
      %v2505 = vpop.f32.mrb[0].mxu0
      %2506 = vmatprep.mubr.bf16.mxu0 0
      %2507 = vmatmul.mubr.bf16.gmra.mrb[0].mxu0 %v2437
      %v2508 = vpop.f32.mrb[0].mxu0
      %v2509 = vadd.f32 0.0, %v2508
      %v2510 = vpop.f32.mrb[0].mxu0
      %v2511 = vpop.f32.mrb[0].mxu0
      %v2512 = vadd.f32 0.0, %v2511
      %v2513 = vpop.f32.mrb[0].mxu0
      %2514 = vmatprep.mubr.bf16.mxu0 0
      %2515 = vmatmul.mubr.bf16.gmra.mrb[0].mxu0 %v2440
      %v2516 = vpop.f32.mrb[0].mxu0
      %v2517 = vadd.f32 0.0, %v2516
      %v2518 = vpop.f32.mrb[0].mxu0
      %v2519 = vpop.f32.mrb[0].mxu0
      %v2520 = vadd.f32 0.0, %v2519
      %v2521 = vpop.f32.mrb[0].mxu0
      %2522 = vmatprep.mubr.bf16.mxu0 0
      %2523 = vmatmul.mubr.bf16.gmra.mrb[0].mxu0 %v2443
      %v2524 = vpop.f32.mrb[0].mxu0
      %v2525 = vadd.f32 0.0, %v2524
      %v2526 = vpop.f32.mrb[0].mxu0
      %v2527 = vpop.f32.mrb[0].mxu0
      %v2528 = vadd.f32 0.0, %v2527
      %v2529 = vpop.f32.mrb[0].mxu0
      %2530 = vmatprep.mubr.bf16.mxu0 0
      %2531 = vmatmul.mubr.bf16.gmra.mrb[0].mxu0 %v2446
      %v2532 = vpop.f32.mrb[0].mxu0
      %v2533 = vadd.f32 0.0, %v2532
      %v2534 = vpop.f32.mrb[0].mxu0
      %v2535 = vpop.f32.mrb[0].mxu0
      %v2536 = vadd.f32 0.0, %v2535
      %v2537 = vpop.f32.mrb[0].mxu0
      %2538 = vmatprep.mubr.bf16.mxu0 0
      %2539 = vmatmul.mubr.bf16.gmra.mrb[0].mxu0 %v2449
      %v2540 = vpop.f32.mrb[0].mxu0
      %v2541 = vadd.f32 0.0, %v2540
      %v2542 = vpop.f32.mrb[0].mxu0
      %v2543 = vpop.f32.mrb[0].mxu0
      %v2544 = vadd.f32 0.0, %v2543
      %v2545 = vpop.f32.mrb[0].mxu0
      %2546 = vmatprep.mubr.bf16.mxu0 0
      %2547 = vmatmul.mubr.bf16.gmra.mrb[0].mxu0 %v2452
      %v2548 = vpop.f32.mrb[0].mxu0
      %v2549 = vadd.f32 0.0, %v2548
      %v2550 = vpop.f32.mrb[0].mxu0
      %v2551 = vpop.f32.mrb[0].mxu0
      %v2552 = vadd.f32 0.0, %v2551
      %v2553 = vpop.f32.mrb[0].mxu0
      %2554 = vdwg.mxu0
      %v2564 = vunpack.c.l.b16 %v1510
      %v2565 = vunpack.c.l.b16 %v1511
      %v2566 = vunpack.c.l.b16 %v1512
      %v2567 = vunpack.c.l.b16 %v1513
      %v2568 = vunpack.c.l.b16 %v1514
      %v2569 = vunpack.c.l.b16 %v1515
      %v2570 = vunpack.c.l.b16 %v1516
      %v2571 = vunpack.c.l.b16 %v1517
      %v2572 = vunpack.c.l.b16 %v1518
      %v2573 = vpack.c.b16 %v2565, %v2564
      %v2574 = vpack.c.b16 %v2567, %v2566
      %v2575 = vpack.c.b16 %v2569, %v2568
      %v2576 = vpack.c.b16 %v2571, %v2570
      %v2577 = vpack.c.b16 %v2572, %v2572
      %v2583 = vsel %vm2429, %v1502, 0
      %v2586 = vsel %vm2429, %v1503, 0
      %v2589 = vsel %vm2429, %v1504, 0
      %v2592 = vsel %vm2429, %v1505, 0
      %v2595 = vsel %vm2429, %v1506, 0
      %v2598 = vsel %vm2429, %v1507, 0
      %v2601 = vsel %vm2429, %v1508, 0
      %v2604 = vsel %vm2429, %v1509, 0
      %v2607 = vsel %vm2454, %v2577, 0
      %2609 = vmatprep.subr.bf16.mxu0 0
      %2610 = vmatpush1.bf16.msra.mxu0 %v2573
      %2611 = vmatprep.subr.bf16.mxu0 0
      %2612 = vmatpush1.bf16.msra.mxu0 %v2574
      %2613 = vmatprep.subr.bf16.mxu0 0
      %2614 = vmatpush1.bf16.msra.mxu0 %v2575
      %2615 = vmatprep.subr.bf16.mxu0 0
      %2616 = vmatpush1.bf16.msra.mxu0 %v2576
      %2617 = vmatprep.subr.bf16.mxu0 0
      %2618 = vmatpush1.bf16.msra.mxu0 %v2607
      %2619 = vmatprep.subr.bf16.mxu0 0
      %2620 = vmatpush1.bf16.msra.mxu0 0
      %2621 = vmatprep.subr.bf16.mxu0 0
      %2622 = vmatpush1.bf16.msra.mxu0 0
      %2623 = vmatprep.subr.bf16.mxu0 0
      %2624 = vmatpush1.bf16.msra.mxu0 0
      %2625 = vmatprep.subr.bf16.mxu0 0
      %2626 = vmatpush1.bf16.msra.mxu0 0
      %2627 = vmatprep.subr.bf16.mxu0 0
      %2628 = vmatpush1.bf16.msra.mxu0 0
      %2629 = vmatprep.subr.bf16.mxu0 0
      %2630 = vmatpush1.bf16.msra.mxu0 0
      %2631 = vmatprep.subr.bf16.mxu0 0
      %2632 = vmatpush1.bf16.msra.mxu0 0
      %2633 = vmatprep.subr.bf16.mxu0 0
      %2634 = vmatpush1.bf16.msra.mxu0 0
      %2635 = vmatprep.subr.bf16.mxu0 0
      %2636 = vmatpush1.bf16.msra.mxu0 0
      %2637 = vmatprep.subr.bf16.mxu0 0
      %2638 = vmatpush1.bf16.msra.mxu0 0
      %2639 = vmatprep.subr.bf16.mxu0 0
      %2640 = vmatpush1.bf16.msra.mxu0 0
      %2641 = vmatprep.mubr.bf16.mxu0 0
      %2642 = vmatmul.mubr.bf16.gmra.mrb[0].mxu0 %v2583
      %v2643 = vpop.f32.mrb[0].mxu0
      %v2644 = vadd.f32 %v2493, %v2643
      %v2645 = vpop.f32.mrb[0].mxu0
      %v2646 = vpop.f32.mrb[0].mxu0
      %v2647 = vadd.f32 %v2496, %v2646
      %v2648 = vpop.f32.mrb[0].mxu0
      %2649 = vmatprep.mubr.bf16.mxu0 0
      %2650 = vmatmul.mubr.bf16.gmra.mrb[0].mxu0 %v2586
      %v2651 = vpop.f32.mrb[0].mxu0
      %v2652 = vadd.f32 %v2501, %v2651
      %v2653 = vpop.f32.mrb[0].mxu0
      %v2654 = vpop.f32.mrb[0].mxu0
      %v2655 = vadd.f32 %v2504, %v2654
      %v2656 = vpop.f32.mrb[0].mxu0
      %2657 = vmatprep.mubr.bf16.mxu0 0
      %2658 = vmatmul.mubr.bf16.gmra.mrb[0].mxu0 %v2589
      %v2659 = vpop.f32.mrb[0].mxu0
      %v2660 = vadd.f32 %v2509, %v2659
      %v2661 = vpop.f32.mrb[0].mxu0
      %v2662 = vpop.f32.mrb[0].mxu0
      %v2663 = vadd.f32 %v2512, %v2662
      %v2664 = vpop.f32.mrb[0].mxu0
      %2665 = vmatprep.mubr.bf16.mxu0 0
      %2666 = vmatmul.mubr.bf16.gmra.mrb[0].mxu0 %v2592
      %v2667 = vpop.f32.mrb[0].mxu0
      %v2668 = vadd.f32 %v2517, %v2667
      %v2669 = vpop.f32.mrb[0].mxu0
      %v2670 = vpop.f32.mrb[0].mxu0
      %v2671 = vadd.f32 %v2520, %v2670
      %v2672 = vpop.f32.mrb[0].mxu0
      %2673 = vmatprep.mubr.bf16.mxu0 0
      %2674 = vmatmul.mubr.bf16.gmra.mrb[0].mxu0 %v2595
      %v2675 = vpop.f32.mrb[0].mxu0
      %v2676 = vadd.f32 %v2525, %v2675
      %v2677 = vpop.f32.mrb[0].mxu0
      %v2678 = vpop.f32.mrb[0].mxu0
      %v2679 = vadd.f32 %v2528, %v2678
      %v2680 = vpop.f32.mrb[0].mxu0
      %2681 = vmatprep.mubr.bf16.mxu0 0
      %2682 = vmatmul.mubr.bf16.gmra.mrb[0].mxu0 %v2598
      %v2683 = vpop.f32.mrb[0].mxu0
      %v2684 = vadd.f32 %v2533, %v2683
      %v2685 = vpop.f32.mrb[0].mxu0
      %v2686 = vpop.f32.mrb[0].mxu0
      %v2687 = vadd.f32 %v2536, %v2686
      %v2688 = vpop.f32.mrb[0].mxu0
      %2689 = vmatprep.mubr.bf16.mxu0 0
      %2690 = vmatmul.mubr.bf16.gmra.mrb[0].mxu0 %v2601
      %v2691 = vpop.f32.mrb[0].mxu0
      %v2692 = vadd.f32 %v2541, %v2691
      %v2693 = vpop.f32.mrb[0].mxu0
      %v2694 = vpop.f32.mrb[0].mxu0
      %v2695 = vadd.f32 %v2544, %v2694
      %v2696 = vpop.f32.mrb[0].mxu0
      %2697 = vmatprep.mubr.bf16.mxu0 0
      %2698 = vmatmul.mubr.bf16.gmra.mrb[0].mxu0 %v2604
      %v2699 = vpop.f32.mrb[0].mxu0
      %v2700 = vadd.f32 %v2549, %v2699
      %v2701 = vpop.f32.mrb[0].mxu0
      %v2702 = vpop.f32.mrb[0].mxu0
      %v2703 = vadd.f32 %v2552, %v2702
      %v2704 = vpop.f32.mrb[0].mxu0
      %2705 = vdwg.mxu0
      %v2706 = vadd.f32 %v489, 1.0
      %v2707 = vadd.f32 %v490, 1.0
      %v2708 = vadd.f32 %v491, 1.0
      %v2709 = vadd.f32 %v492, 1.0
      %v2710 = vadd.f32 %v493, 1.0
      %v2711 = vadd.f32 %v494, 1.0
      %v2712 = vadd.f32 %v495, 1.0
      %v2713 = vadd.f32 %v496, 1.0
      %v2714 = vadd.f32 %v497, 1.0
      %v2715 = vadd.f32 %v498, 1.0
      %v2716 = vadd.f32 %v499, 1.0
      %v2717 = vadd.f32 %v500, 1.0
      %v2718 = vadd.f32 %v501, 1.0
      %v2719 = vadd.f32 %v502, 1.0
      %v2720 = vadd.f32 %v503, 1.0
      %v2721 = vadd.f32 %v504, 1.0
      %v2722 = vadd.f32 %v2706, %v258
      %v2723 = vadd.f32 %v2707, %v259
      %v2724 = vadd.f32 %v2708, %v260
      %v2725 = vadd.f32 %v2709, %v261
      %v2726 = vadd.f32 %v2710, %v262
      %v2727 = vadd.f32 %v2711, %v263
      %v2728 = vadd.f32 %v2712, %v264
      %v2729 = vadd.f32 %v2713, %v265
      %v2730 = vadd.f32 %v2714, %v266
      %v2731 = vadd.f32 %v2715, %v267
      %v2732 = vadd.f32 %v2716, %v268
      %v2733 = vadd.f32 %v2717, %v269
      %v2734 = vadd.f32 %v2718, %v270
      %v2735 = vadd.f32 %v2719, %v271
      %v2736 = vadd.f32 %v2720, %v272
      %v2737 = vadd.f32 %v2721, %v273
      %vm2738 = vcmp.gt.f32.partialorder %v2722, -1.0
      %vm2739 = vcmp.gt.f32.partialorder %v2723, -1.0
      %vm2740 = vcmp.gt.f32.partialorder %v2724, -1.0
      %vm2741 = vcmp.gt.f32.partialorder %v2725, -1.0
      %vm2742 = vcmp.gt.f32.partialorder %v2726, -1.0
      %vm2743 = vcmp.gt.f32.partialorder %v2727, -1.0
      %vm2744 = vcmp.gt.f32.partialorder %v2728, -1.0
      %vm2745 = vcmp.gt.f32.partialorder %v2729, -1.0
      %vm2746 = vcmp.gt.f32.partialorder %v2730, -1.0
      %vm2747 = vcmp.gt.f32.partialorder %v2731, -1.0
      %vm2748 = vcmp.gt.f32.partialorder %v2732, -1.0
      %vm2749 = vcmp.gt.f32.partialorder %v2733, -1.0
      %vm2750 = vcmp.gt.f32.partialorder %v2734, -1.0
      %vm2751 = vcmp.gt.f32.partialorder %v2735, -1.0
      %vm2752 = vcmp.gt.f32.partialorder %v2736, -1.0
      %vm2753 = vcmp.gt.f32.partialorder %v2737, -1.0
      %v2754 = vsel %vm2738, 1, 0
      %v2755 = vsel %vm2739, 1, 0
      %v2756 = vsel %vm2740, 1, 0
      %v2757 = vsel %vm2741, 1, 0
      %v2758 = vsel %vm2742, 1, 0
      %v2759 = vsel %vm2743, 1, 0
      %v2760 = vsel %vm2744, 1, 0
      %v2761 = vsel %vm2745, 1, 0
      %v2762 = vsel %vm2746, 1, 0
      %v2763 = vsel %vm2747, 1, 0
      %v2764 = vsel %vm2748, 1, 0
      %v2765 = vsel %vm2749, 1, 0
      %v2766 = vsel %vm2750, 1, 0
      %v2767 = vsel %vm2751, 1, 0
      %v2768 = vsel %vm2752, 1, 0
      %v2769 = vsel %vm2753, 1, 0
      %2770 = vrot.lane.b32.xlu0 %v2754, 119
      %v2771 = vpop.permute.xlu0 %2770
      %2772 = vrot.lane.b32.xlu0 %v2755, 119
      %v2773 = vpop.permute.xlu0 %2772
      %2774 = vrot.lane.b32.xlu0 %v2756, 119
      %v2775 = vpop.permute.xlu0 %2774
      %2776 = vrot.lane.b32.xlu0 %v2757, 119
      %v2777 = vpop.permute.xlu0 %2776
      %2778 = vrot.lane.b32.xlu0 %v2758, 119
      %v2779 = vpop.permute.xlu0 %2778
      %2780 = vrot.lane.b32.xlu0 %v2759, 119
      %v2781 = vpop.permute.xlu0 %2780
      %2782 = vrot.lane.b32.xlu0 %v2760, 119
      %v2783 = vpop.permute.xlu0 %2782
      %2784 = vrot.lane.b32.xlu0 %v2761, 119
      %v2785 = vpop.permute.xlu0 %2784
      %2786 = vrot.lane.b32.xlu0 %v2762, 119
      %v2787 = vpop.permute.xlu0 %2786
      %2788 = vrot.lane.b32.xlu0 %v2763, 119
      %v2789 = vpop.permute.xlu0 %2788
      %2790 = vrot.lane.b32.xlu0 %v2764, 119
      %v2791 = vpop.permute.xlu0 %2790
      %2792 = vrot.lane.b32.xlu0 %v2765, 119
      %v2793 = vpop.permute.xlu0 %2792
      %2794 = vrot.lane.b32.xlu0 %v2766, 119
      %v2795 = vpop.permute.xlu0 %2794
      %2796 = vrot.lane.b32.xlu0 %v2767, 119
      %v2797 = vpop.permute.xlu0 %2796
      %2798 = vrot.lane.b32.xlu0 %v2768, 119
      %v2799 = vpop.permute.xlu0 %2798
      %2800 = vrot.lane.b32.xlu0 %v2769, 119
      %v2801 = vpop.permute.xlu0 %2800
      %vm2802 = vcmp.ne.s32.totalorder %v2771, 0
      %vm2803 = vcmp.ne.s32.totalorder %v2773, 0
      %vm2804 = vcmp.ne.s32.totalorder %v2775, 0
      %vm2805 = vcmp.ne.s32.totalorder %v2777, 0
      %vm2806 = vcmp.ne.s32.totalorder %v2779, 0
      %vm2807 = vcmp.ne.s32.totalorder %v2781, 0
      %vm2808 = vcmp.ne.s32.totalorder %v2783, 0
      %vm2809 = vcmp.ne.s32.totalorder %v2785, 0
      %vm2810 = vcmp.ne.s32.totalorder %v2787, 0
      %vm2811 = vcmp.ne.s32.totalorder %v2789, 0
      %vm2812 = vcmp.ne.s32.totalorder %v2791, 0
      %vm2813 = vcmp.ne.s32.totalorder %v2793, 0
      %vm2814 = vcmp.ne.s32.totalorder %v2795, 0
      %vm2815 = vcmp.ne.s32.totalorder %v2797, 0
      %vm2816 = vcmp.ne.s32.totalorder %v2799, 0
      %vm2817 = vcmp.ne.s32.totalorder %v2801, 0
      %vm2818 = vmand %vm607, %vm2802
      %vm2819 = vmand %vm608, %vm2803
      %vm2820 = vmand %vm609, %vm2804
      %vm2821 = vmand %vm610, %vm2805
      %vm2822 = vmand %vm611, %vm2806
      %vm2823 = vmand %vm612, %vm2807
      %vm2824 = vmand %vm613, %vm2808
      %vm2825 = vmand %vm614, %vm2809
      %vm2826 = vmand %vm615, %vm2810
      %vm2827 = vmand %vm616, %vm2811
      %vm2828 = vmand %vm617, %vm2812
      %vm2829 = vmand %vm618, %vm2813
      %vm2830 = vmand %vm619, %vm2814
      %vm2831 = vmand %vm620, %vm2815
      %vm2832 = vmand %vm621, %vm2816
      %vm2833 = vmand %vm622, %vm2817
      %vm2834 = vcmp.lt.f32.partialorder %v2722, 16.0
      %vm2835 = vcmp.lt.f32.partialorder %v2723, 16.0
      %vm2836 = vcmp.lt.f32.partialorder %v2724, 16.0
      %vm2837 = vcmp.lt.f32.partialorder %v2725, 16.0
      %vm2838 = vcmp.lt.f32.partialorder %v2726, 16.0
      %vm2839 = vcmp.lt.f32.partialorder %v2727, 16.0
      %vm2840 = vcmp.lt.f32.partialorder %v2728, 16.0
      %vm2841 = vcmp.lt.f32.partialorder %v2729, 16.0
      %vm2842 = vcmp.lt.f32.partialorder %v2730, 16.0
      %vm2843 = vcmp.lt.f32.partialorder %v2731, 16.0
      %vm2844 = vcmp.lt.f32.partialorder %v2732, 16.0
      %vm2845 = vcmp.lt.f32.partialorder %v2733, 16.0
      %vm2846 = vcmp.lt.f32.partialorder %v2734, 16.0
      %vm2847 = vcmp.lt.f32.partialorder %v2735, 16.0
      %vm2848 = vcmp.lt.f32.partialorder %v2736, 16.0
      %vm2849 = vcmp.lt.f32.partialorder %v2737, 16.0
      %v2850 = vsel %vm2834, 1, 0
      %v2851 = vsel %vm2835, 1, 0
      %v2852 = vsel %vm2836, 1, 0
      %v2853 = vsel %vm2837, 1, 0
      %v2854 = vsel %vm2838, 1, 0
      %v2855 = vsel %vm2839, 1, 0
      %v2856 = vsel %vm2840, 1, 0
      %v2857 = vsel %vm2841, 1, 0
      %v2858 = vsel %vm2842, 1, 0
      %v2859 = vsel %vm2843, 1, 0
      %v2860 = vsel %vm2844, 1, 0
      %v2861 = vsel %vm2845, 1, 0
      %v2862 = vsel %vm2846, 1, 0
      %v2863 = vsel %vm2847, 1, 0
      %v2864 = vsel %vm2848, 1, 0
      %v2865 = vsel %vm2849, 1, 0
      %2866 = vrot.lane.b32.xlu0 %v2850, 119
      %v2867 = vpop.permute.xlu0 %2866
      %2868 = vrot.lane.b32.xlu0 %v2851, 119
      %v2869 = vpop.permute.xlu0 %2868
      %2870 = vrot.lane.b32.xlu0 %v2852, 119
      %v2871 = vpop.permute.xlu0 %2870
      %2872 = vrot.lane.b32.xlu0 %v2853, 119
      %v2873 = vpop.permute.xlu0 %2872
      %2874 = vrot.lane.b32.xlu0 %v2854, 119
      %v2875 = vpop.permute.xlu0 %2874
      %2876 = vrot.lane.b32.xlu0 %v2855, 119
      %v2877 = vpop.permute.xlu0 %2876
      %2878 = vrot.lane.b32.xlu0 %v2856, 119
      %v2879 = vpop.permute.xlu0 %2878
      %2880 = vrot.lane.b32.xlu0 %v2857, 119
      %v2881 = vpop.permute.xlu0 %2880
      %2882 = vrot.lane.b32.xlu0 %v2858, 119
      %v2883 = vpop.permute.xlu0 %2882
      %2884 = vrot.lane.b32.xlu0 %v2859, 119
      %v2885 = vpop.permute.xlu0 %2884
      %2886 = vrot.lane.b32.xlu0 %v2860, 119
      %v2887 = vpop.permute.xlu0 %2886
      %2888 = vrot.lane.b32.xlu0 %v2861, 119
      %v2889 = vpop.permute.xlu0 %2888
      %2890 = vrot.lane.b32.xlu0 %v2862, 119
      %v2891 = vpop.permute.xlu0 %2890
      %2892 = vrot.lane.b32.xlu0 %v2863, 119
      %v2893 = vpop.permute.xlu0 %2892
      %2894 = vrot.lane.b32.xlu0 %v2864, 119
      %v2895 = vpop.permute.xlu0 %2894
      %2896 = vrot.lane.b32.xlu0 %v2865, 119
      %v2897 = vpop.permute.xlu0 %2896
      %vm2898 = vcmp.ne.s32.totalorder %v2867, 0
      %vm2899 = vcmp.ne.s32.totalorder %v2869, 0
      %vm2900 = vcmp.ne.s32.totalorder %v2871, 0
      %vm2901 = vcmp.ne.s32.totalorder %v2873, 0
      %vm2902 = vcmp.ne.s32.totalorder %v2875, 0
      %vm2903 = vcmp.ne.s32.totalorder %v2877, 0
      %vm2904 = vcmp.ne.s32.totalorder %v2879, 0
      %vm2905 = vcmp.ne.s32.totalorder %v2881, 0
      %vm2906 = vcmp.ne.s32.totalorder %v2883, 0
      %vm2907 = vcmp.ne.s32.totalorder %v2885, 0
      %vm2908 = vcmp.ne.s32.totalorder %v2887, 0
      %vm2909 = vcmp.ne.s32.totalorder %v2889, 0
      %vm2910 = vcmp.ne.s32.totalorder %v2891, 0
      %vm2911 = vcmp.ne.s32.totalorder %v2893, 0
      %vm2912 = vcmp.ne.s32.totalorder %v2895, 0
      %vm2913 = vcmp.ne.s32.totalorder %v2897, 0
      %vm2914 = vmand %vm2818, %vm2898
      %vm2915 = vmand %vm2819, %vm2899
      %vm2916 = vmand %vm2820, %vm2900
      %vm2917 = vmand %vm2821, %vm2901
      %vm2918 = vmand %vm2822, %vm2902
      %vm2919 = vmand %vm2823, %vm2903
      %vm2920 = vmand %vm2824, %vm2904
      %vm2921 = vmand %vm2825, %vm2905
      %vm2922 = vmand %vm2826, %vm2906
      %vm2923 = vmand %vm2827, %vm2907
      %vm2924 = vmand %vm2828, %vm2908
      %vm2925 = vmand %vm2829, %vm2909
      %vm2926 = vmand %vm2830, %vm2910
      %vm2927 = vmand %vm2831, %vm2911
      %vm2928 = vmand %vm2832, %vm2912
      %vm2929 = vmand %vm2833, %vm2913
      %v2930 = vsel %vm2914, 1, 0
      %v2931 = vsel %vm2915, 1, 0
      %v2932 = vsel %vm2916, 1, 0
      %v2933 = vsel %vm2917, 1, 0
      %v2934 = vsel %vm2918, 1, 0
      %v2935 = vsel %vm2919, 1, 0
      %v2936 = vsel %vm2920, 1, 0
      %v2937 = vsel %vm2921, 1, 0
      %v2938 = vsel %vm2922, 1, 0
      %v2939 = vsel %vm2923, 1, 0
      %v2940 = vsel %vm2924, 1, 0
      %v2941 = vsel %vm2925, 1, 0
      %v2942 = vsel %vm2926, 1, 0
      %v2943 = vsel %vm2927, 1, 0
      %v2944 = vsel %vm2928, 1, 0
      %v2945 = vsel %vm2929, 1, 0
      %v2946 = vcvt.s32.f32 %v2930
      %v2947 = vcvt.s32.f32 %v2931
      %v2948 = vcvt.s32.f32 %v2932
      %v2949 = vcvt.s32.f32 %v2933
      %v2950 = vcvt.s32.f32 %v2934
      %v2951 = vcvt.s32.f32 %v2935
      %v2952 = vcvt.s32.f32 %v2936
      %v2953 = vcvt.s32.f32 %v2937
      %v2954 = vcvt.s32.f32 %v2938
      %v2955 = vcvt.s32.f32 %v2939
      %v2956 = vcvt.s32.f32 %v2940
      %v2957 = vcvt.s32.f32 %v2941
      %v2958 = vcvt.s32.f32 %v2942
      %v2959 = vcvt.s32.f32 %v2943
      %v2960 = vcvt.s32.f32 %v2944
      %v2961 = vcvt.s32.f32 %v2945
      %2978 = vrot.lane.b32.xlu0 %v2946, 18
      %v2979 = vpop.permute.xlu0 %2978
      %2980 = vrot.lane.b32.xlu0 %v2947, 18
      %v2981 = vpop.permute.xlu0 %2980
      %2982 = vrot.lane.b32.xlu0 %v2948, 18
      %v2983 = vpop.permute.xlu0 %2982
      %2984 = vrot.lane.b32.xlu0 %v2949, 18
      %v2985 = vpop.permute.xlu0 %2984
      %2986 = vrot.lane.b32.xlu0 %v2950, 18
      %v2987 = vpop.permute.xlu0 %2986
      %2988 = vrot.lane.b32.xlu0 %v2951, 18
      %v2989 = vpop.permute.xlu0 %2988
      %2990 = vrot.lane.b32.xlu0 %v2952, 18
      %v2991 = vpop.permute.xlu0 %2990
      %2992 = vrot.lane.b32.xlu0 %v2953, 18
      %v2993 = vpop.permute.xlu0 %2992
      %2994 = vrot.lane.b32.xlu0 %v2954, 18
      %v2995 = vpop.permute.xlu0 %2994
      %2996 = vrot.lane.b32.xlu0 %v2955, 18
      %v2997 = vpop.permute.xlu0 %2996
      %2998 = vrot.lane.b32.xlu0 %v2956, 18
      %v2999 = vpop.permute.xlu0 %2998
      %3000 = vrot.lane.b32.xlu0 %v2957, 18
      %v3001 = vpop.permute.xlu0 %3000
      %3002 = vrot.lane.b32.xlu0 %v2958, 18
      %v3003 = vpop.permute.xlu0 %3002
      %3004 = vrot.lane.b32.xlu0 %v2959, 18
      %v3005 = vpop.permute.xlu0 %3004
      %3006 = vrot.lane.b32.xlu0 %v2960, 18
      %v3007 = vpop.permute.xlu0 %3006
      %3008 = vrot.lane.b32.xlu0 %v2961, 18
      %v3009 = vpop.permute.xlu0 %3008
      %v3026 = vmul.f32 %v342, %v2979
      %v3027 = vmul.f32 %v344, %v2981
      %v3028 = vmul.f32 %v346, %v2983
      %v3029 = vmul.f32 %v348, %v2985
      %v3030 = vmul.f32 %v350, %v2987
      %v3031 = vmul.f32 %v352, %v2989
      %v3032 = vmul.f32 %v354, %v2991
      %v3033 = vmul.f32 %v356, %v2993
      %v3034 = vmul.f32 %v358, %v2995
      %v3035 = vmul.f32 %v360, %v2997
      %v3036 = vmul.f32 %v362, %v2999
      %v3037 = vmul.f32 %v364, %v3001
      %v3038 = vmul.f32 %v366, %v3003
      %v3039 = vmul.f32 %v368, %v3005
      %v3040 = vmul.f32 %v370, %v3007
      %v3041 = vmul.f32 %v372, %v3009
      %3042 = vset.pattern.permute.xlu0 2
      %3043 = vperm.xlu0 %3042, %v927
      %v3044 = vpop.permute.xlu0 %3043
      %3046 = vset.pattern.permute.xlu0 2
      %3047 = vperm.xlu0 %3046, %v928
      %v3048 = vpop.permute.xlu0 %3047
      %3050 = vset.pattern.permute.xlu0 2
      %3051 = vperm.xlu0 %3050, %v929
      %v3052 = vpop.permute.xlu0 %3051
      %3054 = vset.pattern.permute.xlu0 2
      %3055 = vperm.xlu0 %3054, %v930
      %v3056 = vpop.permute.xlu0 %3055
      %3058 = vset.pattern.permute.xlu0 2
      %3059 = vperm.xlu0 %3058, %v931
      %v3060 = vpop.permute.xlu0 %3059
      %3062 = vset.pattern.permute.xlu0 2
      %3063 = vperm.xlu0 %3062, %v932
      %v3064 = vpop.permute.xlu0 %3063
      %3066 = vset.pattern.permute.xlu0 2
      %3067 = vperm.xlu0 %3066, %v933
      %v3068 = vpop.permute.xlu0 %3067
      %3070 = vset.pattern.permute.xlu0 2
      %3071 = vperm.xlu0 %3070, %v934
      %v3072 = vpop.permute.xlu0 %3071
      %3074 = vset.pattern.permute.xlu0 2
      %3075 = vperm.xlu0 %3074, %v935
      %v3076 = vpop.permute.xlu0 %3075
      %3078 = vset.pattern.permute.xlu0 2
      %3079 = vperm.xlu0 %3078, %v936
      %v3080 = vpop.permute.xlu0 %3079
      %3082 = vset.pattern.permute.xlu0 2
      %3083 = vperm.xlu0 %3082, %v937
      %v3084 = vpop.permute.xlu0 %3083
      %3086 = vset.pattern.permute.xlu0 2
      %3087 = vperm.xlu0 %3086, %v938
      %v3088 = vpop.permute.xlu0 %3087
      %3090 = vset.pattern.permute.xlu0 2
      %3091 = vperm.xlu0 %3090, %v939
      %v3092 = vpop.permute.xlu0 %3091
      %3094 = vset.pattern.permute.xlu0 2
      %3095 = vperm.xlu0 %3094, %v940
      %v3096 = vpop.permute.xlu0 %3095
      %3098 = vset.pattern.permute.xlu0 2
      %3099 = vperm.xlu0 %3098, %v941
      %v3100 = vpop.permute.xlu0 %3099
      %3102 = vset.pattern.permute.xlu0 2
      %3103 = vperm.xlu0 %3102, %v942
      %v3104 = vpop.permute.xlu0 %3103
      %v3106 = vsub.f32 %v3044, %v507
      %v3107 = vsub.f32 %v3048, %v507
      %v3108 = vsub.f32 %v3052, %v507
      %v3109 = vsub.f32 %v3056, %v507
      %v3110 = vsub.f32 %v3060, %v507
      %v3111 = vsub.f32 %v3064, %v507
      %v3112 = vsub.f32 %v3068, %v507
      %v3113 = vsub.f32 %v3072, %v507
      %v3114 = vsub.f32 %v3076, %v507
      %v3115 = vsub.f32 %v3080, %v507
      %v3116 = vsub.f32 %v3084, %v507
      %v3117 = vsub.f32 %v3088, %v507
      %v3118 = vsub.f32 %v3092, %v507
      %v3119 = vsub.f32 %v3096, %v507
      %v3120 = vsub.f32 %v3100, %v507
      %v3121 = vsub.f32 %v3104, %v507
      %v3122 = vand.u32 2147483647, %v3106
      %v3123 = vand.u32 2147483647, %v3107
      %v3124 = vand.u32 2147483647, %v3108
      %v3125 = vand.u32 2147483647, %v3109
      %v3126 = vand.u32 2147483647, %v3110
      %v3127 = vand.u32 2147483647, %v3111
      %v3128 = vand.u32 2147483647, %v3112
      %v3129 = vand.u32 2147483647, %v3113
      %v3130 = vand.u32 2147483647, %v3114
      %v3131 = vand.u32 2147483647, %v3115
      %v3132 = vand.u32 2147483647, %v3116
      %v3133 = vand.u32 2147483647, %v3117
      %v3134 = vand.u32 2147483647, %v3118
      %v3135 = vand.u32 2147483647, %v3119
      %v3136 = vand.u32 2147483647, %v3120
      %v3137 = vand.u32 2147483647, %v3121
      %v3138 = vsub.f32 1.0, %v3122
      %v3139 = vsub.f32 1.0, %v3123
      %v3140 = vsub.f32 1.0, %v3124
      %v3141 = vsub.f32 1.0, %v3125
      %v3142 = vsub.f32 1.0, %v3126
      %v3143 = vsub.f32 1.0, %v3127
      %v3144 = vsub.f32 1.0, %v3128
      %v3145 = vsub.f32 1.0, %v3129
      %v3146 = vsub.f32 1.0, %v3130
      %v3147 = vsub.f32 1.0, %v3131
      %v3148 = vsub.f32 1.0, %v3132
      %v3149 = vsub.f32 1.0, %v3133
      %v3150 = vsub.f32 1.0, %v3134
      %v3151 = vsub.f32 1.0, %v3135
      %v3152 = vsub.f32 1.0, %v3136
      %v3153 = vsub.f32 1.0, %v3137
      %v3154 = vmax.f32 %v3138, 0.0
      %v3155 = vmax.f32 %v3139, 0.0
      %v3156 = vmax.f32 %v3140, 0.0
      %v3157 = vmax.f32 %v3141, 0.0
      %v3158 = vmax.f32 %v3142, 0.0
      %v3159 = vmax.f32 %v3143, 0.0
      %v3160 = vmax.f32 %v3144, 0.0
      %v3161 = vmax.f32 %v3145, 0.0
      %v3162 = vmax.f32 %v3146, 0.0
      %v3163 = vmax.f32 %v3147, 0.0
      %v3164 = vmax.f32 %v3148, 0.0
      %v3165 = vmax.f32 %v3149, 0.0
      %v3166 = vmax.f32 %v3150, 0.0
      %v3167 = vmax.f32 %v3151, 0.0
      %v3168 = vmax.f32 %v3152, 0.0
      %v3169 = vmax.f32 %v3153, 0.0
      %3171 = vset.pattern.permute.xlu0 20
      %3172 = vperm.xlu0 %3171, %v3026
      %v3173 = vpop.permute.xlu0 %3172
      %3176 = vset.pattern.permute.xlu0 20
      %3177 = vperm.xlu0 %3176, %v3027
      %v3178 = vpop.permute.xlu0 %3177
      %3181 = vset.pattern.permute.xlu0 20
      %3182 = vperm.xlu0 %3181, %v3028
      %v3183 = vpop.permute.xlu0 %3182
      %3186 = vset.pattern.permute.xlu0 20
      %3187 = vperm.xlu0 %3186, %v3029
      %v3188 = vpop.permute.xlu0 %3187
      %3191 = vset.pattern.permute.xlu0 20
      %3192 = vperm.xlu0 %3191, %v3030
      %v3193 = vpop.permute.xlu0 %3192
      %3196 = vset.pattern.permute.xlu0 20
      %3197 = vperm.xlu0 %3196, %v3031
      %v3198 = vpop.permute.xlu0 %3197
      %3201 = vset.pattern.permute.xlu0 20
      %3202 = vperm.xlu0 %3201, %v3032
      %v3203 = vpop.permute.xlu0 %3202
      %3206 = vset.pattern.permute.xlu0 20
      %3207 = vperm.xlu0 %3206, %v3033
      %v3208 = vpop.permute.xlu0 %3207
      %3211 = vset.pattern.permute.xlu0 20
      %3212 = vperm.xlu0 %3211, %v3034
      %v3213 = vpop.permute.xlu0 %3212
      %3216 = vset.pattern.permute.xlu0 20
      %3217 = vperm.xlu0 %3216, %v3035
      %v3218 = vpop.permute.xlu0 %3217
      %3221 = vset.pattern.permute.xlu0 20
      %3222 = vperm.xlu0 %3221, %v3036
      %v3223 = vpop.permute.xlu0 %3222
      %3226 = vset.pattern.permute.xlu0 20
      %3227 = vperm.xlu0 %3226, %v3037
      %v3228 = vpop.permute.xlu0 %3227
      %3231 = vset.pattern.permute.xlu0 20
      %3232 = vperm.xlu0 %3231, %v3038
      %v3233 = vpop.permute.xlu0 %3232
      %3236 = vset.pattern.permute.xlu0 20
      %3237 = vperm.xlu0 %3236, %v3039
      %v3238 = vpop.permute.xlu0 %3237
      %3241 = vset.pattern.permute.xlu0 20
      %3242 = vperm.xlu0 %3241, %v3040
      %v3243 = vpop.permute.xlu0 %3242
      %3246 = vset.pattern.permute.xlu0 20
      %3247 = vperm.xlu0 %3246, %v3041
      %v3248 = vpop.permute.xlu0 %3247
      %v3250 = vmul.f32 %v3154, %v3173
      %v3251 = vmul.f32 %v3155, %v3178
      %v3252 = vmul.f32 %v3156, %v3183
      %v3253 = vmul.f32 %v3157, %v3188
      %v3254 = vmul.f32 %v3158, %v3193
      %v3255 = vmul.f32 %v3159, %v3198
      %v3256 = vmul.f32 %v3160, %v3203
      %v3257 = vmul.f32 %v3161, %v3208
      %v3258 = vmul.f32 %v3162, %v3213
      %v3259 = vmul.f32 %v3163, %v3218
      %v3260 = vmul.f32 %v3164, %v3223
      %v3261 = vmul.f32 %v3165, %v3228
      %v3262 = vmul.f32 %v3166, %v3233
      %v3263 = vmul.f32 %v3167, %v3238
      %v3264 = vmul.f32 %v3168, %v3243
      %v3265 = vmul.f32 %v3169, %v3248
      %v3266 = vadd.f32 %v2722, 1.0
      %v3267 = vadd.f32 %v2723, 1.0
      %v3268 = vadd.f32 %v2724, 1.0
      %v3269 = vadd.f32 %v2725, 1.0
      %v3270 = vadd.f32 %v2726, 1.0
      %v3271 = vadd.f32 %v2727, 1.0
      %v3272 = vadd.f32 %v2728, 1.0
      %v3273 = vadd.f32 %v2729, 1.0
      %v3274 = vadd.f32 %v2730, 1.0
      %v3275 = vadd.f32 %v2731, 1.0
      %v3276 = vadd.f32 %v2732, 1.0
      %v3277 = vadd.f32 %v2733, 1.0
      %v3278 = vadd.f32 %v2734, 1.0
      %v3279 = vadd.f32 %v2735, 1.0
      %v3280 = vadd.f32 %v2736, 1.0
      %v3281 = vadd.f32 %v2737, 1.0
      %3283 = vset.pattern.permute.xlu0 11
      %3284 = vperm.xlu0 %3283, %v3266
      %v3285 = vpop.permute.xlu0 %3284
      %3288 = vset.pattern.permute.xlu0 11
      %3289 = vperm.xlu0 %3288, %v3267
      %v3290 = vpop.permute.xlu0 %3289
      %3293 = vset.pattern.permute.xlu0 11
      %3294 = vperm.xlu0 %3293, %v3268
      %v3295 = vpop.permute.xlu0 %3294
      %3298 = vset.pattern.permute.xlu0 11
      %3299 = vperm.xlu0 %3298, %v3269
      %v3300 = vpop.permute.xlu0 %3299
      %3303 = vset.pattern.permute.xlu0 11
      %3304 = vperm.xlu0 %3303, %v3270
      %v3305 = vpop.permute.xlu0 %3304
      %3308 = vset.pattern.permute.xlu0 11
      %3309 = vperm.xlu0 %3308, %v3271
      %v3310 = vpop.permute.xlu0 %3309
      %3313 = vset.pattern.permute.xlu0 11
      %3314 = vperm.xlu0 %3313, %v3272
      %v3315 = vpop.permute.xlu0 %3314
      %3318 = vset.pattern.permute.xlu0 11
      %3319 = vperm.xlu0 %3318, %v3273
      %v3320 = vpop.permute.xlu0 %3319
      %3323 = vset.pattern.permute.xlu0 11
      %3324 = vperm.xlu0 %3323, %v3274
      %v3325 = vpop.permute.xlu0 %3324
      %3328 = vset.pattern.permute.xlu0 11
      %3329 = vperm.xlu0 %3328, %v3275
      %v3330 = vpop.permute.xlu0 %3329
      %3333 = vset.pattern.permute.xlu0 11
      %3334 = vperm.xlu0 %3333, %v3276
      %v3335 = vpop.permute.xlu0 %3334
      %3338 = vset.pattern.permute.xlu0 11
      %3339 = vperm.xlu0 %3338, %v3277
      %v3340 = vpop.permute.xlu0 %3339
      %3343 = vset.pattern.permute.xlu0 11
      %3344 = vperm.xlu0 %3343, %v3278
      %v3345 = vpop.permute.xlu0 %3344
      %3348 = vset.pattern.permute.xlu0 11
      %3349 = vperm.xlu0 %3348, %v3279
      %v3350 = vpop.permute.xlu0 %3349
      %3353 = vset.pattern.permute.xlu0 11
      %3354 = vperm.xlu0 %3353, %v3280
      %v3355 = vpop.permute.xlu0 %3354
      %3358 = vset.pattern.permute.xlu0 11
      %3359 = vperm.xlu0 %3358, %v3281
      %v3360 = vpop.permute.xlu0 %3359
      %v3362 = vsub.f32 %v3285, %v510
      %v3363 = vsub.f32 %v3290, %v510
      %v3364 = vsub.f32 %v3295, %v510
      %v3365 = vsub.f32 %v3300, %v510
      %v3366 = vsub.f32 %v3305, %v510
      %v3367 = vsub.f32 %v3310, %v510
      %v3368 = vsub.f32 %v3315, %v510
      %v3369 = vsub.f32 %v3320, %v510
      %v3370 = vsub.f32 %v3325, %v510
      %v3371 = vsub.f32 %v3330, %v510
      %v3372 = vsub.f32 %v3335, %v510
      %v3373 = vsub.f32 %v3340, %v510
      %v3374 = vsub.f32 %v3345, %v510
      %v3375 = vsub.f32 %v3350, %v510
      %v3376 = vsub.f32 %v3355, %v510
      %v3377 = vsub.f32 %v3360, %v510
      %v3378 = vand.u32 2147483647, %v3362
      %v3379 = vand.u32 2147483647, %v3363
      %v3380 = vand.u32 2147483647, %v3364
      %v3381 = vand.u32 2147483647, %v3365
      %v3382 = vand.u32 2147483647, %v3366
      %v3383 = vand.u32 2147483647, %v3367
      %v3384 = vand.u32 2147483647, %v3368
      %v3385 = vand.u32 2147483647, %v3369
      %v3386 = vand.u32 2147483647, %v3370
      %v3387 = vand.u32 2147483647, %v3371
      %v3388 = vand.u32 2147483647, %v3372
      %v3389 = vand.u32 2147483647, %v3373
      %v3390 = vand.u32 2147483647, %v3374
      %v3391 = vand.u32 2147483647, %v3375
      %v3392 = vand.u32 2147483647, %v3376
      %v3393 = vand.u32 2147483647, %v3377
      %v3394 = vsub.f32 1.0, %v3378
      %v3395 = vsub.f32 1.0, %v3379
      %v3396 = vsub.f32 1.0, %v3380
      %v3397 = vsub.f32 1.0, %v3381
      %v3398 = vsub.f32 1.0, %v3382
      %v3399 = vsub.f32 1.0, %v3383
      %v3400 = vsub.f32 1.0, %v3384
      %v3401 = vsub.f32 1.0, %v3385
      %v3402 = vsub.f32 1.0, %v3386
      %v3403 = vsub.f32 1.0, %v3387
      %v3404 = vsub.f32 1.0, %v3388
      %v3405 = vsub.f32 1.0, %v3389
      %v3406 = vsub.f32 1.0, %v3390
      %v3407 = vsub.f32 1.0, %v3391
      %v3408 = vsub.f32 1.0, %v3392
      %v3409 = vsub.f32 1.0, %v3393
      %v3410 = vmax.f32 %v3394, 0.0
      %v3411 = vmax.f32 %v3395, 0.0
      %v3412 = vmax.f32 %v3396, 0.0
      %v3413 = vmax.f32 %v3397, 0.0
      %v3414 = vmax.f32 %v3398, 0.0
      %v3415 = vmax.f32 %v3399, 0.0
      %v3416 = vmax.f32 %v3400, 0.0
      %v3417 = vmax.f32 %v3401, 0.0
      %v3418 = vmax.f32 %v3402, 0.0
      %v3419 = vmax.f32 %v3403, 0.0
      %v3420 = vmax.f32 %v3404, 0.0
      %v3421 = vmax.f32 %v3405, 0.0
      %v3422 = vmax.f32 %v3406, 0.0
      %v3423 = vmax.f32 %v3407, 0.0
      %v3424 = vmax.f32 %v3408, 0.0
      %v3425 = vmax.f32 %v3409, 0.0
      %v3426 = vpack.c.bf16 %v3251, %v3250
      %v3427 = vpack.c.bf16 %v3253, %v3252
      %v3428 = vpack.c.bf16 %v3255, %v3254
      %v3429 = vpack.c.bf16 %v3257, %v3256
      %v3430 = vpack.c.bf16 %v3259, %v3258
      %v3431 = vpack.c.bf16 %v3261, %v3260
      %v3432 = vpack.c.bf16 %v3263, %v3262
      %v3433 = vpack.c.bf16 %v3265, %v3264
      %v3435 = vsel %vm1360, %v3426, 0
      %v3438 = vsel %vm1360, %v3427, 0
      %v3441 = vsel %vm1360, %v3428, 0
      %v3444 = vsel %vm1360, %v3429, 0
      %v3447 = vsel %vm1360, %v3430, 0
      %v3450 = vsel %vm1360, %v3431, 0
      %v3453 = vsel %vm1360, %v3432, 0
      %v3456 = vsel %vm1360, %v3433, 0
      %3458 = vmatprep.subr.bf16.mxu0 0
      %3459 = vmatpush1.bf16.msra.mxu0 %v1357
      %3460 = vmatprep.subr.bf16.mxu0 0
      %3461 = vmatpush1.bf16.msra.mxu0 %v1387
      %3462 = vmatprep.subr.bf16.mxu0 0
      %3463 = vmatpush1.bf16.msra.mxu0 0
      %3464 = vmatprep.subr.bf16.mxu0 0
      %3465 = vmatpush1.bf16.msra.mxu0 0
      %3466 = vmatprep.subr.bf16.mxu0 0
      %3467 = vmatpush1.bf16.msra.mxu0 0
      %3468 = vmatprep.subr.bf16.mxu0 0
      %3469 = vmatpush1.bf16.msra.mxu0 0
      %3470 = vmatprep.subr.bf16.mxu0 0
      %3471 = vmatpush1.bf16.msra.mxu0 0
      %3472 = vmatprep.subr.bf16.mxu0 0
      %3473 = vmatpush1.bf16.msra.mxu0 0
      %3474 = vmatprep.subr.bf16.mxu0 0
      %3475 = vmatpush1.bf16.msra.mxu0 0
      %3476 = vmatprep.subr.bf16.mxu0 0
      %3477 = vmatpush1.bf16.msra.mxu0 0
      %3478 = vmatprep.subr.bf16.mxu0 0
      %3479 = vmatpush1.bf16.msra.mxu0 0
      %3480 = vmatprep.subr.bf16.mxu0 0
      %3481 = vmatpush1.bf16.msra.mxu0 0
      %3482 = vmatprep.subr.bf16.mxu0 0
      %3483 = vmatpush1.bf16.msra.mxu0 0
      %3484 = vmatprep.subr.bf16.mxu0 0
      %3485 = vmatpush1.bf16.msra.mxu0 0
      %3486 = vmatprep.subr.bf16.mxu0 0
      %3487 = vmatpush1.bf16.msra.mxu0 0
      %3488 = vmatprep.subr.bf16.mxu0 0
      %3489 = vmatpush1.bf16.msra.mxu0 0
      %3490 = vmatprep.mubr.bf16.mxu0 0
      %3491 = vmatmul.mubr.bf16.gmra.mrb[0].mxu0 %v3435
      %v3492 = vpop.f32.mrb[0].mxu0
      %v3493 = vadd.f32 0.0, %v3492
      %v3494 = vpop.f32.mrb[0].mxu0
      %v3495 = vpop.f32.mrb[0].mxu0
      %v3496 = vadd.f32 0.0, %v3495
      %v3497 = vpop.f32.mrb[0].mxu0
      %3498 = vmatprep.mubr.bf16.mxu0 0
      %3499 = vmatmul.mubr.bf16.gmra.mrb[0].mxu0 %v3438
      %v3500 = vpop.f32.mrb[0].mxu0
      %v3501 = vadd.f32 0.0, %v3500
      %v3502 = vpop.f32.mrb[0].mxu0
      %v3503 = vpop.f32.mrb[0].mxu0
      %v3504 = vadd.f32 0.0, %v3503
      %v3505 = vpop.f32.mrb[0].mxu0
      %3506 = vmatprep.mubr.bf16.mxu0 0
      %3507 = vmatmul.mubr.bf16.gmra.mrb[0].mxu0 %v3441
      %v3508 = vpop.f32.mrb[0].mxu0
      %v3509 = vadd.f32 0.0, %v3508
      %v3510 = vpop.f32.mrb[0].mxu0
      %v3511 = vpop.f32.mrb[0].mxu0
      %v3512 = vadd.f32 0.0, %v3511
      %v3513 = vpop.f32.mrb[0].mxu0
      %3514 = vmatprep.mubr.bf16.mxu0 0
      %3515 = vmatmul.mubr.bf16.gmra.mrb[0].mxu0 %v3444
      %v3516 = vpop.f32.mrb[0].mxu0
      %v3517 = vadd.f32 0.0, %v3516
      %v3518 = vpop.f32.mrb[0].mxu0
      %v3519 = vpop.f32.mrb[0].mxu0
      %v3520 = vadd.f32 0.0, %v3519
      %v3521 = vpop.f32.mrb[0].mxu0
      %3522 = vmatprep.mubr.bf16.mxu0 0
      %3523 = vmatmul.mubr.bf16.gmra.mrb[0].mxu0 %v3447
      %v3524 = vpop.f32.mrb[0].mxu0
      %v3525 = vadd.f32 0.0, %v3524
      %v3526 = vpop.f32.mrb[0].mxu0
      %v3527 = vpop.f32.mrb[0].mxu0
      %v3528 = vadd.f32 0.0, %v3527
      %v3529 = vpop.f32.mrb[0].mxu0
      %3530 = vmatprep.mubr.bf16.mxu0 0
      %3531 = vmatmul.mubr.bf16.gmra.mrb[0].mxu0 %v3450
      %v3532 = vpop.f32.mrb[0].mxu0
      %v3533 = vadd.f32 0.0, %v3532
      %v3534 = vpop.f32.mrb[0].mxu0
      %v3535 = vpop.f32.mrb[0].mxu0
      %v3536 = vadd.f32 0.0, %v3535
      %v3537 = vpop.f32.mrb[0].mxu0
      %3538 = vmatprep.mubr.bf16.mxu0 0
      %3539 = vmatmul.mubr.bf16.gmra.mrb[0].mxu0 %v3453
      %v3540 = vpop.f32.mrb[0].mxu0
      %v3541 = vadd.f32 0.0, %v3540
      %v3542 = vpop.f32.mrb[0].mxu0
      %v3543 = vpop.f32.mrb[0].mxu0
      %v3544 = vadd.f32 0.0, %v3543
      %v3545 = vpop.f32.mrb[0].mxu0
      %3546 = vmatprep.mubr.bf16.mxu0 0
      %3547 = vmatmul.mubr.bf16.gmra.mrb[0].mxu0 %v3456
      %v3548 = vpop.f32.mrb[0].mxu0
      %v3549 = vadd.f32 0.0, %v3548
      %v3550 = vpop.f32.mrb[0].mxu0
      %v3551 = vpop.f32.mrb[0].mxu0
      %v3552 = vadd.f32 0.0, %v3551
      %v3553 = vpop.f32.mrb[0].mxu0
      %3554 = vdwg.mxu0
      %v3555 = vmul.f32 %v3493, %v3410
      %v3556 = vmul.f32 %v3496, %v3411
      %v3557 = vmul.f32 %v3501, %v3412
      %v3558 = vmul.f32 %v3504, %v3413
      %v3559 = vmul.f32 %v3509, %v3414
      %v3560 = vmul.f32 %v3512, %v3415
      %v3561 = vmul.f32 %v3517, %v3416
      %v3562 = vmul.f32 %v3520, %v3417
      %v3563 = vmul.f32 %v3525, %v3418
      %v3564 = vmul.f32 %v3528, %v3419
      %v3565 = vmul.f32 %v3533, %v3420
      %v3566 = vmul.f32 %v3536, %v3421
      %v3567 = vmul.f32 %v3541, %v3422
      %v3568 = vmul.f32 %v3544, %v3423
      %v3569 = vmul.f32 %v3549, %v3424
      %v3570 = vmul.f32 %v3552, %v3425
      %v3571 = vpack.c.bf16 %v3556, %v3555
      %v3572 = vpack.c.bf16 %v3558, %v3557
      %v3573 = vpack.c.bf16 %v3560, %v3559
      %v3574 = vpack.c.bf16 %v3562, %v3561
      %v3575 = vpack.c.bf16 %v3564, %v3563
      %v3576 = vpack.c.bf16 %v3566, %v3565
      %v3577 = vpack.c.bf16 %v3568, %v3567
      %v3578 = vpack.c.bf16 %v3570, %v3569
      %s3579 = scalar_lea.vmem %s2, 72
      %v3580 = vld [vmem:[%s3579] sm:$0xf]
      %v3581 = vld [vmem:[%s3579 + $0x4] sm:$0xf]
      %v3582 = vld [vmem:[%s3579 + $0x8] sm:$0xf]
      %v3583 = vld [vmem:[%s3579 + $0xc] sm:$0xf]
      %v3584 = vld [vmem:[%s3579 + $0x10] sm:$0xf]
      %v3585 = vld [vmem:[%s3579 + $0x14] sm:$0xf]
      %v3586 = vld [vmem:[%s3579 + $0x18] sm:$0xf]
      %v3587 = vld [vmem:[%s3579 + $0x1c] sm:$0xf]
      %v3588 = vld [vmem:[%s3579 + $0x20] sm:$0xf]
      %v3598 = vunpack.c.l.b16 %v3580
      %v3599 = vunpack.c.l.b16 %v3581
      %v3600 = vunpack.c.l.b16 %v3582
      %v3601 = vunpack.c.l.b16 %v3583
      %v3602 = vunpack.c.l.b16 %v3584
      %v3603 = vunpack.c.l.b16 %v3585
      %v3604 = vunpack.c.l.b16 %v3586
      %v3605 = vunpack.c.l.b16 %v3587
      %v3606 = vunpack.c.l.b16 %v3588
      %v3607 = vpack.c.b16 %v3599, %v3598
      %v3608 = vpack.c.b16 %v3601, %v3600
      %v3609 = vpack.c.b16 %v3603, %v3602
      %v3610 = vpack.c.b16 %v3605, %v3604
      %v3611 = vpack.c.b16 %v3606, %v3606
      %v3617 = vsel %vm2429, %v3571, 0
      %v3620 = vsel %vm2429, %v3572, 0
      %v3623 = vsel %vm2429, %v3573, 0
      %v3626 = vsel %vm2429, %v3574, 0
      %v3629 = vsel %vm2429, %v3575, 0
      %v3632 = vsel %vm2429, %v3576, 0
      %v3635 = vsel %vm2429, %v3577, 0
      %v3638 = vsel %vm2429, %v3578, 0
      %v3641 = vsel %vm2454, %v3611, 0
      %3643 = vmatprep.subr.bf16.mxu0 0
      %3644 = vmatpush1.bf16.msra.mxu0 %v3607
      %3645 = vmatprep.subr.bf16.mxu0 0
      %3646 = vmatpush1.bf16.msra.mxu0 %v3608
      %3647 = vmatprep.subr.bf16.mxu0 0
      %3648 = vmatpush1.bf16.msra.mxu0 %v3609
      %3649 = vmatprep.subr.bf16.mxu0 0
      %3650 = vmatpush1.bf16.msra.mxu0 %v3610
      %3651 = vmatprep.subr.bf16.mxu0 0
      %3652 = vmatpush1.bf16.msra.mxu0 %v3641
      %3653 = vmatprep.subr.bf16.mxu0 0
      %3654 = vmatpush1.bf16.msra.mxu0 0
      %3655 = vmatprep.subr.bf16.mxu0 0
      %3656 = vmatpush1.bf16.msra.mxu0 0
      %3657 = vmatprep.subr.bf16.mxu0 0
      %3658 = vmatpush1.bf16.msra.mxu0 0
      %3659 = vmatprep.subr.bf16.mxu0 0
      %3660 = vmatpush1.bf16.msra.mxu0 0
      %3661 = vmatprep.subr.bf16.mxu0 0
      %3662 = vmatpush1.bf16.msra.mxu0 0
      %3663 = vmatprep.subr.bf16.mxu0 0
      %3664 = vmatpush1.bf16.msra.mxu0 0
      %3665 = vmatprep.subr.bf16.mxu0 0
      %3666 = vmatpush1.bf16.msra.mxu0 0
      %3667 = vmatprep.subr.bf16.mxu0 0
      %3668 = vmatpush1.bf16.msra.mxu0 0
      %3669 = vmatprep.subr.bf16.mxu0 0
      %3670 = vmatpush1.bf16.msra.mxu0 0
      %3671 = vmatprep.subr.bf16.mxu0 0
      %3672 = vmatpush1.bf16.msra.mxu0 0
      %3673 = vmatprep.subr.bf16.mxu0 0
      %3674 = vmatpush1.bf16.msra.mxu0 0
      %3675 = vmatprep.mubr.bf16.mxu0 0
      %3676 = vmatmul.mubr.bf16.gmra.mrb[0].mxu0 %v3617
      %v3677 = vpop.f32.mrb[0].mxu0
      %v3678 = vadd.f32 0.0, %v3677
      %v3679 = vpop.f32.mrb[0].mxu0
      %v3680 = vpop.f32.mrb[0].mxu0
      %v3681 = vadd.f32 0.0, %v3680
      %v3682 = vpop.f32.mrb[0].mxu0
      %3683 = vmatprep.mubr.bf16.mxu0 0
      %3684 = vmatmul.mubr.bf16.gmra.mrb[0].mxu0 %v3620
      %v3685 = vpop.f32.mrb[0].mxu0
      %v3686 = vadd.f32 0.0, %v3685
      %v3687 = vpop.f32.mrb[0].mxu0
      %v3688 = vpop.f32.mrb[0].mxu0
      %v3689 = vadd.f32 0.0, %v3688
      %v3690 = vpop.f32.mrb[0].mxu0
      %3691 = vmatprep.mubr.bf16.mxu0 0
      %3692 = vmatmul.mubr.bf16.gmra.mrb[0].mxu0 %v3623
      %v3693 = vpop.f32.mrb[0].mxu0
      %v3694 = vadd.f32 0.0, %v3693
      %v3695 = vpop.f32.mrb[0].mxu0
      %v3696 = vpop.f32.mrb[0].mxu0
      %v3697 = vadd.f32 0.0, %v3696
      %v3698 = vpop.f32.mrb[0].mxu0
      %3699 = vmatprep.mubr.bf16.mxu0 0
      %3700 = vmatmul.mubr.bf16.gmra.mrb[0].mxu0 %v3626
      %v3701 = vpop.f32.mrb[0].mxu0
      %v3702 = vadd.f32 0.0, %v3701
      %v3703 = vpop.f32.mrb[0].mxu0
      %v3704 = vpop.f32.mrb[0].mxu0
      %v3705 = vadd.f32 0.0, %v3704
      %v3706 = vpop.f32.mrb[0].mxu0
      %3707 = vmatprep.mubr.bf16.mxu0 0
      %3708 = vmatmul.mubr.bf16.gmra.mrb[0].mxu0 %v3629
      %v3709 = vpop.f32.mrb[0].mxu0
      %v3710 = vadd.f32 0.0, %v3709
      %v3711 = vpop.f32.mrb[0].mxu0
      %v3712 = vpop.f32.mrb[0].mxu0
      %v3713 = vadd.f32 0.0, %v3712
      %v3714 = vpop.f32.mrb[0].mxu0
      %3715 = vmatprep.mubr.bf16.mxu0 0
      %3716 = vmatmul.mubr.bf16.gmra.mrb[0].mxu0 %v3632
      %v3717 = vpop.f32.mrb[0].mxu0
      %v3718 = vadd.f32 0.0, %v3717
      %v3719 = vpop.f32.mrb[0].mxu0
      %v3720 = vpop.f32.mrb[0].mxu0
      %v3721 = vadd.f32 0.0, %v3720
      %v3722 = vpop.f32.mrb[0].mxu0
      %3723 = vmatprep.mubr.bf16.mxu0 0
      %3724 = vmatmul.mubr.bf16.gmra.mrb[0].mxu0 %v3635
      %v3725 = vpop.f32.mrb[0].mxu0
      %v3726 = vadd.f32 0.0, %v3725
      %v3727 = vpop.f32.mrb[0].mxu0
      %v3728 = vpop.f32.mrb[0].mxu0
      %v3729 = vadd.f32 0.0, %v3728
      %v3730 = vpop.f32.mrb[0].mxu0
      %3731 = vmatprep.mubr.bf16.mxu0 0
      %3732 = vmatmul.mubr.bf16.gmra.mrb[0].mxu0 %v3638
      %v3733 = vpop.f32.mrb[0].mxu0
      %v3734 = vadd.f32 0.0, %v3733
      %v3735 = vpop.f32.mrb[0].mxu0
      %v3736 = vpop.f32.mrb[0].mxu0
      %v3737 = vadd.f32 0.0, %v3736
      %v3738 = vpop.f32.mrb[0].mxu0
      %3739 = vdwg.mxu0
      %v3740 = vadd.f32 %v2644, %v3678
      %v3741 = vadd.f32 %v2647, %v3681
      %v3742 = vadd.f32 %v2652, %v3686
      %v3743 = vadd.f32 %v2655, %v3689
      %v3744 = vadd.f32 %v2660, %v3694
      %v3745 = vadd.f32 %v2663, %v3697
      %v3746 = vadd.f32 %v2668, %v3702
      %v3747 = vadd.f32 %v2671, %v3705
      %v3748 = vadd.f32 %v2676, %v3710
      %v3749 = vadd.f32 %v2679, %v3713
      %v3750 = vadd.f32 %v2684, %v3718
      %v3751 = vadd.f32 %v2687, %v3721
      %v3752 = vadd.f32 %v2692, %v3726
      %v3753 = vadd.f32 %v2695, %v3729
      %v3754 = vadd.f32 %v2700, %v3734
      %v3755 = vadd.f32 %v2703, %v3737
      %v3756 = vadd.f32 %v457, 0.0
      %v3757 = vadd.f32 %v458, 0.0
      %v3758 = vadd.f32 %v459, 0.0
      %v3759 = vadd.f32 %v460, 0.0
      %v3760 = vadd.f32 %v461, 0.0
      %v3761 = vadd.f32 %v462, 0.0
      %v3762 = vadd.f32 %v463, 0.0
      %v3763 = vadd.f32 %v464, 0.0
      %v3764 = vadd.f32 %v465, 0.0
      %v3765 = vadd.f32 %v466, 0.0
      %v3766 = vadd.f32 %v467, 0.0
      %v3767 = vadd.f32 %v468, 0.0
      %v3768 = vadd.f32 %v469, 0.0
      %v3769 = vadd.f32 %v470, 0.0
      %v3770 = vadd.f32 %v471, 0.0
      %v3771 = vadd.f32 %v472, 0.0
      %v3772 = vadd.f32 %v3756, %v258
      %v3773 = vadd.f32 %v3757, %v259
      %v3774 = vadd.f32 %v3758, %v260
      %v3775 = vadd.f32 %v3759, %v261
      %v3776 = vadd.f32 %v3760, %v262
      %v3777 = vadd.f32 %v3761, %v263
      %v3778 = vadd.f32 %v3762, %v264
      %v3779 = vadd.f32 %v3763, %v265
      %v3780 = vadd.f32 %v3764, %v266
      %v3781 = vadd.f32 %v3765, %v267
      %v3782 = vadd.f32 %v3766, %v268
      %v3783 = vadd.f32 %v3767, %v269
      %v3784 = vadd.f32 %v3768, %v270
      %v3785 = vadd.f32 %v3769, %v271
      %v3786 = vadd.f32 %v3770, %v272
      %v3787 = vadd.f32 %v3771, %v273
      %vm3788 = vcmp.gt.f32.partialorder %v3772, -1.0
      %vm3789 = vcmp.gt.f32.partialorder %v3773, -1.0
      %vm3790 = vcmp.gt.f32.partialorder %v3774, -1.0
      %vm3791 = vcmp.gt.f32.partialorder %v3775, -1.0
      %vm3792 = vcmp.gt.f32.partialorder %v3776, -1.0
      %vm3793 = vcmp.gt.f32.partialorder %v3777, -1.0
      %vm3794 = vcmp.gt.f32.partialorder %v3778, -1.0
      %vm3795 = vcmp.gt.f32.partialorder %v3779, -1.0
      %vm3796 = vcmp.gt.f32.partialorder %v3780, -1.0
      %vm3797 = vcmp.gt.f32.partialorder %v3781, -1.0
      %vm3798 = vcmp.gt.f32.partialorder %v3782, -1.0
      %vm3799 = vcmp.gt.f32.partialorder %v3783, -1.0
      %vm3800 = vcmp.gt.f32.partialorder %v3784, -1.0
      %vm3801 = vcmp.gt.f32.partialorder %v3785, -1.0
      %vm3802 = vcmp.gt.f32.partialorder %v3786, -1.0
      %vm3803 = vcmp.gt.f32.partialorder %v3787, -1.0
      %vm3804 = vcmp.lt.f32.partialorder %v3772, 16.0
      %vm3805 = vcmp.lt.f32.partialorder %v3773, 16.0
      %vm3806 = vcmp.lt.f32.partialorder %v3774, 16.0
      %vm3807 = vcmp.lt.f32.partialorder %v3775, 16.0
      %vm3808 = vcmp.lt.f32.partialorder %v3776, 16.0
      %vm3809 = vcmp.lt.f32.partialorder %v3777, 16.0
      %vm3810 = vcmp.lt.f32.partialorder %v3778, 16.0
      %vm3811 = vcmp.lt.f32.partialorder %v3779, 16.0
      %vm3812 = vcmp.lt.f32.partialorder %v3780, 16.0
      %vm3813 = vcmp.lt.f32.partialorder %v3781, 16.0
      %vm3814 = vcmp.lt.f32.partialorder %v3782, 16.0
      %vm3815 = vcmp.lt.f32.partialorder %v3783, 16.0
      %vm3816 = vcmp.lt.f32.partialorder %v3784, 16.0
      %vm3817 = vcmp.lt.f32.partialorder %v3785, 16.0
      %vm3818 = vcmp.lt.f32.partialorder %v3786, 16.0
      %vm3819 = vcmp.lt.f32.partialorder %v3787, 16.0
      %vm3820 = vmand %vm3788, %vm3804
      %vm3821 = vmand %vm3789, %vm3805
      %vm3822 = vmand %vm3790, %vm3806
      %vm3823 = vmand %vm3791, %vm3807
      %vm3824 = vmand %vm3792, %vm3808
      %vm3825 = vmand %vm3793, %vm3809
      %vm3826 = vmand %vm3794, %vm3810
      %vm3827 = vmand %vm3795, %vm3811
      %vm3828 = vmand %vm3796, %vm3812
      %vm3829 = vmand %vm3797, %vm3813
      %vm3830 = vmand %vm3798, %vm3814
      %vm3831 = vmand %vm3799, %vm3815
      %vm3832 = vmand %vm3800, %vm3816
      %vm3833 = vmand %vm3801, %vm3817
      %vm3834 = vmand %vm3802, %vm3818
      %vm3835 = vmand %vm3803, %vm3819
      %vm3836 = vmand %vm3820, %vm687
      %vm3837 = vmand %vm3821, %vm688
      %vm3838 = vmand %vm3822, %vm689
      %vm3839 = vmand %vm3823, %vm690
      %vm3840 = vmand %vm3824, %vm691
      %vm3841 = vmand %vm3825, %vm692
      %vm3842 = vmand %vm3826, %vm693
      %vm3843 = vmand %vm3827, %vm694
      %vm3844 = vmand %vm3828, %vm695
      %vm3845 = vmand %vm3829, %vm696
      %vm3846 = vmand %vm3830, %vm697
      %vm3847 = vmand %vm3831, %vm698
      %vm3848 = vmand %vm3832, %vm699
      %vm3849 = vmand %vm3833, %vm700
      %vm3850 = vmand %vm3834, %vm701
      %vm3851 = vmand %vm3835, %vm702
      %vm3852 = vmand %vm3836, %vm783
      %vm3853 = vmand %vm3837, %vm784
      %vm3854 = vmand %vm3838, %vm785
      %vm3855 = vmand %vm3839, %vm786
      %vm3856 = vmand %vm3840, %vm787
      %vm3857 = vmand %vm3841, %vm788
      %vm3858 = vmand %vm3842, %vm789
      %vm3859 = vmand %vm3843, %vm790
      %vm3860 = vmand %vm3844, %vm791
      %vm3861 = vmand %vm3845, %vm792
      %vm3862 = vmand %vm3846, %vm793
      %vm3863 = vmand %vm3847, %vm794
      %vm3864 = vmand %vm3848, %vm795
      %vm3865 = vmand %vm3849, %vm796
      %vm3866 = vmand %vm3850, %vm797
      %vm3867 = vmand %vm3851, %vm798
      %v3868 = vsel %vm3852, 1, 0
      %v3869 = vsel %vm3853, 1, 0
      %v3870 = vsel %vm3854, 1, 0
      %v3871 = vsel %vm3855, 1, 0
      %v3872 = vsel %vm3856, 1, 0
      %v3873 = vsel %vm3857, 1, 0
      %v3874 = vsel %vm3858, 1, 0
      %v3875 = vsel %vm3859, 1, 0
      %v3876 = vsel %vm3860, 1, 0
      %v3877 = vsel %vm3861, 1, 0
      %v3878 = vsel %vm3862, 1, 0
      %v3879 = vsel %vm3863, 1, 0
      %v3880 = vsel %vm3864, 1, 0
      %v3881 = vsel %vm3865, 1, 0
      %v3882 = vsel %vm3866, 1, 0
      %v3883 = vsel %vm3867, 1, 0
      %v3884 = vcvt.s32.f32 %v3868
      %v3885 = vcvt.s32.f32 %v3869
      %v3886 = vcvt.s32.f32 %v3870
      %v3887 = vcvt.s32.f32 %v3871
      %v3888 = vcvt.s32.f32 %v3872
      %v3889 = vcvt.s32.f32 %v3873
      %v3890 = vcvt.s32.f32 %v3874
      %v3891 = vcvt.s32.f32 %v3875
      %v3892 = vcvt.s32.f32 %v3876
      %v3893 = vcvt.s32.f32 %v3877
      %v3894 = vcvt.s32.f32 %v3878
      %v3895 = vcvt.s32.f32 %v3879
      %v3896 = vcvt.s32.f32 %v3880
      %v3897 = vcvt.s32.f32 %v3881
      %v3898 = vcvt.s32.f32 %v3882
      %v3899 = vcvt.s32.f32 %v3883
      %3916 = vrot.lane.b32.xlu0 %v3884, 18
      %v3917 = vpop.permute.xlu0 %3916
      %3918 = vrot.lane.b32.xlu0 %v3885, 18
      %v3919 = vpop.permute.xlu0 %3918
      %3920 = vrot.lane.b32.xlu0 %v3886, 18
      %v3921 = vpop.permute.xlu0 %3920
      %3922 = vrot.lane.b32.xlu0 %v3887, 18
      %v3923 = vpop.permute.xlu0 %3922
      %3924 = vrot.lane.b32.xlu0 %v3888, 18
      %v3925 = vpop.permute.xlu0 %3924
      %3926 = vrot.lane.b32.xlu0 %v3889, 18
      %v3927 = vpop.permute.xlu0 %3926
      %3928 = vrot.lane.b32.xlu0 %v3890, 18
      %v3929 = vpop.permute.xlu0 %3928
      %3930 = vrot.lane.b32.xlu0 %v3891, 18
      %v3931 = vpop.permute.xlu0 %3930
      %3932 = vrot.lane.b32.xlu0 %v3892, 18
      %v3933 = vpop.permute.xlu0 %3932
      %3934 = vrot.lane.b32.xlu0 %v3893, 18
      %v3935 = vpop.permute.xlu0 %3934
      %3936 = vrot.lane.b32.xlu0 %v3894, 18
      %v3937 = vpop.permute.xlu0 %3936
      %3938 = vrot.lane.b32.xlu0 %v3895, 18
      %v3939 = vpop.permute.xlu0 %3938
      %3940 = vrot.lane.b32.xlu0 %v3896, 18
      %v3941 = vpop.permute.xlu0 %3940
      %3942 = vrot.lane.b32.xlu0 %v3897, 18
      %v3943 = vpop.permute.xlu0 %3942
      %3944 = vrot.lane.b32.xlu0 %v3898, 18
      %v3945 = vpop.permute.xlu0 %3944
      %3946 = vrot.lane.b32.xlu0 %v3899, 18
      %v3947 = vpop.permute.xlu0 %3946
      %v3964 = vmul.f32 %v342, %v3917
      %v3965 = vmul.f32 %v344, %v3919
      %v3966 = vmul.f32 %v346, %v3921
      %v3967 = vmul.f32 %v348, %v3923
      %v3968 = vmul.f32 %v350, %v3925
      %v3969 = vmul.f32 %v352, %v3927
      %v3970 = vmul.f32 %v354, %v3929
      %v3971 = vmul.f32 %v356, %v3931
      %v3972 = vmul.f32 %v358, %v3933
      %v3973 = vmul.f32 %v360, %v3935
      %v3974 = vmul.f32 %v362, %v3937
      %v3975 = vmul.f32 %v364, %v3939
      %v3976 = vmul.f32 %v366, %v3941
      %v3977 = vmul.f32 %v368, %v3943
      %v3978 = vmul.f32 %v370, %v3945
      %v3979 = vmul.f32 %v372, %v3947
      %v3980 = vadd.f32 %v3772, 1.0
      %v3981 = vadd.f32 %v3773, 1.0
      %v3982 = vadd.f32 %v3774, 1.0
      %v3983 = vadd.f32 %v3775, 1.0
      %v3984 = vadd.f32 %v3776, 1.0
      %v3985 = vadd.f32 %v3777, 1.0
      %v3986 = vadd.f32 %v3778, 1.0
      %v3987 = vadd.f32 %v3779, 1.0
      %v3988 = vadd.f32 %v3780, 1.0
      %v3989 = vadd.f32 %v3781, 1.0
      %v3990 = vadd.f32 %v3782, 1.0
      %v3991 = vadd.f32 %v3783, 1.0
      %v3992 = vadd.f32 %v3784, 1.0
      %v3993 = vadd.f32 %v3785, 1.0
      %v3994 = vadd.f32 %v3786, 1.0
      %v3995 = vadd.f32 %v3787, 1.0
      %3997 = vset.pattern.permute.xlu0 3
      %3998 = vperm.xlu0 %3997, %v3980
      %v3999 = vpop.permute.xlu0 %3998
      %4002 = vset.pattern.permute.xlu0 3
      %4003 = vperm.xlu0 %4002, %v3981
      %v4004 = vpop.permute.xlu0 %4003
      %4007 = vset.pattern.permute.xlu0 3
      %4008 = vperm.xlu0 %4007, %v3982
      %v4009 = vpop.permute.xlu0 %4008
      %4012 = vset.pattern.permute.xlu0 3
      %4013 = vperm.xlu0 %4012, %v3983
      %v4014 = vpop.permute.xlu0 %4013
      %4017 = vset.pattern.permute.xlu0 3
      %4018 = vperm.xlu0 %4017, %v3984
      %v4019 = vpop.permute.xlu0 %4018
      %4022 = vset.pattern.permute.xlu0 3
      %4023 = vperm.xlu0 %4022, %v3985
      %v4024 = vpop.permute.xlu0 %4023
      %4027 = vset.pattern.permute.xlu0 3
      %4028 = vperm.xlu0 %4027, %v3986
      %v4029 = vpop.permute.xlu0 %4028
      %4032 = vset.pattern.permute.xlu0 3
      %4033 = vperm.xlu0 %4032, %v3987
      %v4034 = vpop.permute.xlu0 %4033
      %4037 = vset.pattern.permute.xlu0 3
      %4038 = vperm.xlu0 %4037, %v3988
      %v4039 = vpop.permute.xlu0 %4038
      %4042 = vset.pattern.permute.xlu0 3
      %4043 = vperm.xlu0 %4042, %v3989
      %v4044 = vpop.permute.xlu0 %4043
      %4047 = vset.pattern.permute.xlu0 3
      %4048 = vperm.xlu0 %4047, %v3990
      %v4049 = vpop.permute.xlu0 %4048
      %4052 = vset.pattern.permute.xlu0 3
      %4053 = vperm.xlu0 %4052, %v3991
      %v4054 = vpop.permute.xlu0 %4053
      %4057 = vset.pattern.permute.xlu0 3
      %4058 = vperm.xlu0 %4057, %v3992
      %v4059 = vpop.permute.xlu0 %4058
      %4062 = vset.pattern.permute.xlu0 3
      %4063 = vperm.xlu0 %4062, %v3993
      %v4064 = vpop.permute.xlu0 %4063
      %4067 = vset.pattern.permute.xlu0 3
      %4068 = vperm.xlu0 %4067, %v3994
      %v4069 = vpop.permute.xlu0 %4068
      %4072 = vset.pattern.permute.xlu0 3
      %4073 = vperm.xlu0 %4072, %v3995
      %v4074 = vpop.permute.xlu0 %4073
      %v4076 = vsub.f32 %v3999, %v507
      %v4077 = vsub.f32 %v4004, %v507
      %v4078 = vsub.f32 %v4009, %v507
      %v4079 = vsub.f32 %v4014, %v507
      %v4080 = vsub.f32 %v4019, %v507
      %v4081 = vsub.f32 %v4024, %v507
      %v4082 = vsub.f32 %v4029, %v507
      %v4083 = vsub.f32 %v4034, %v507
      %v4084 = vsub.f32 %v4039, %v507
      %v4085 = vsub.f32 %v4044, %v507
      %v4086 = vsub.f32 %v4049, %v507
      %v4087 = vsub.f32 %v4054, %v507
      %v4088 = vsub.f32 %v4059, %v507
      %v4089 = vsub.f32 %v4064, %v507
      %v4090 = vsub.f32 %v4069, %v507
      %v4091 = vsub.f32 %v4074, %v507
      %v4092 = vand.u32 2147483647, %v4076
      %v4093 = vand.u32 2147483647, %v4077
      %v4094 = vand.u32 2147483647, %v4078
      %v4095 = vand.u32 2147483647, %v4079
      %v4096 = vand.u32 2147483647, %v4080
      %v4097 = vand.u32 2147483647, %v4081
      %v4098 = vand.u32 2147483647, %v4082
      %v4099 = vand.u32 2147483647, %v4083
      %v4100 = vand.u32 2147483647, %v4084
      %v4101 = vand.u32 2147483647, %v4085
      %v4102 = vand.u32 2147483647, %v4086
      %v4103 = vand.u32 2147483647, %v4087
      %v4104 = vand.u32 2147483647, %v4088
      %v4105 = vand.u32 2147483647, %v4089
      %v4106 = vand.u32 2147483647, %v4090
      %v4107 = vand.u32 2147483647, %v4091
      %v4108 = vsub.f32 1.0, %v4092
      %v4109 = vsub.f32 1.0, %v4093
      %v4110 = vsub.f32 1.0, %v4094
      %v4111 = vsub.f32 1.0, %v4095
      %v4112 = vsub.f32 1.0, %v4096
      %v4113 = vsub.f32 1.0, %v4097
      %v4114 = vsub.f32 1.0, %v4098
      %v4115 = vsub.f32 1.0, %v4099
      %v4116 = vsub.f32 1.0, %v4100
      %v4117 = vsub.f32 1.0, %v4101
      %v4118 = vsub.f32 1.0, %v4102
      %v4119 = vsub.f32 1.0, %v4103
      %v4120 = vsub.f32 1.0, %v4104
      %v4121 = vsub.f32 1.0, %v4105
      %v4122 = vsub.f32 1.0, %v4106
      %v4123 = vsub.f32 1.0, %v4107
      %v4124 = vmax.f32 %v4108, 0.0
      %v4125 = vmax.f32 %v4109, 0.0
      %v4126 = vmax.f32 %v4110, 0.0
      %v4127 = vmax.f32 %v4111, 0.0
      %v4128 = vmax.f32 %v4112, 0.0
      %v4129 = vmax.f32 %v4113, 0.0
      %v4130 = vmax.f32 %v4114, 0.0
      %v4131 = vmax.f32 %v4115, 0.0
      %v4132 = vmax.f32 %v4116, 0.0
      %v4133 = vmax.f32 %v4117, 0.0
      %v4134 = vmax.f32 %v4118, 0.0
      %v4135 = vmax.f32 %v4119, 0.0
      %v4136 = vmax.f32 %v4120, 0.0
      %v4137 = vmax.f32 %v4121, 0.0
      %v4138 = vmax.f32 %v4122, 0.0
      %v4139 = vmax.f32 %v4123, 0.0
      %4141 = vset.pattern.permute.xlu0 21
      %4142 = vperm.xlu0 %4141, %v3964
      %v4143 = vpop.permute.xlu0 %4142
      %4146 = vset.pattern.permute.xlu0 21
      %4147 = vperm.xlu0 %4146, %v3965
      %v4148 = vpop.permute.xlu0 %4147
      %4151 = vset.pattern.permute.xlu0 21
      %4152 = vperm.xlu0 %4151, %v3966
      %v4153 = vpop.permute.xlu0 %4152
      %4156 = vset.pattern.permute.xlu0 21
      %4157 = vperm.xlu0 %4156, %v3967
      %v4158 = vpop.permute.xlu0 %4157
      %4161 = vset.pattern.permute.xlu0 21
      %4162 = vperm.xlu0 %4161, %v3968
      %v4163 = vpop.permute.xlu0 %4162
      %4166 = vset.pattern.permute.xlu0 21
      %4167 = vperm.xlu0 %4166, %v3969
      %v4168 = vpop.permute.xlu0 %4167
      %4171 = vset.pattern.permute.xlu0 21
      %4172 = vperm.xlu0 %4171, %v3970
      %v4173 = vpop.permute.xlu0 %4172
      %4176 = vset.pattern.permute.xlu0 21
      %4177 = vperm.xlu0 %4176, %v3971
      %v4178 = vpop.permute.xlu0 %4177
      %4181 = vset.pattern.permute.xlu0 21
      %4182 = vperm.xlu0 %4181, %v3972
      %v4183 = vpop.permute.xlu0 %4182
      %4186 = vset.pattern.permute.xlu0 21
      %4187 = vperm.xlu0 %4186, %v3973
      %v4188 = vpop.permute.xlu0 %4187
      %4191 = vset.pattern.permute.xlu0 21
      %4192 = vperm.xlu0 %4191, %v3974
      %v4193 = vpop.permute.xlu0 %4192
      %4196 = vset.pattern.permute.xlu0 21
      %4197 = vperm.xlu0 %4196, %v3975
      %v4198 = vpop.permute.xlu0 %4197
      %4201 = vset.pattern.permute.xlu0 21
      %4202 = vperm.xlu0 %4201, %v3976
      %v4203 = vpop.permute.xlu0 %4202
      %4206 = vset.pattern.permute.xlu0 21
      %4207 = vperm.xlu0 %4206, %v3977
      %v4208 = vpop.permute.xlu0 %4207
      %4211 = vset.pattern.permute.xlu0 21
      %4212 = vperm.xlu0 %4211, %v3978
      %v4213 = vpop.permute.xlu0 %4212
      %4216 = vset.pattern.permute.xlu0 21
      %4217 = vperm.xlu0 %4216, %v3979
      %v4218 = vpop.permute.xlu0 %4217
      %v4220 = vmul.f32 %v4124, %v4143
      %v4221 = vmul.f32 %v4125, %v4148
      %v4222 = vmul.f32 %v4126, %v4153
      %v4223 = vmul.f32 %v4127, %v4158
      %v4224 = vmul.f32 %v4128, %v4163
      %v4225 = vmul.f32 %v4129, %v4168
      %v4226 = vmul.f32 %v4130, %v4173
      %v4227 = vmul.f32 %v4131, %v4178
      %v4228 = vmul.f32 %v4132, %v4183
      %v4229 = vmul.f32 %v4133, %v4188
      %v4230 = vmul.f32 %v4134, %v4193
      %v4231 = vmul.f32 %v4135, %v4198
      %v4232 = vmul.f32 %v4136, %v4203
      %v4233 = vmul.f32 %v4137, %v4208
      %v4234 = vmul.f32 %v4138, %v4213
      %v4235 = vmul.f32 %v4139, %v4218
      %4236 = vset.pattern.permute.xlu0 12
      %4237 = vperm.xlu0 %4236, %v1183
      %v4238 = vpop.permute.xlu0 %4237
      %4240 = vset.pattern.permute.xlu0 12
      %4241 = vperm.xlu0 %4240, %v1184
      %v4242 = vpop.permute.xlu0 %4241
      %4244 = vset.pattern.permute.xlu0 12
      %4245 = vperm.xlu0 %4244, %v1185
      %v4246 = vpop.permute.xlu0 %4245
      %4248 = vset.pattern.permute.xlu0 12
      %4249 = vperm.xlu0 %4248, %v1186
      %v4250 = vpop.permute.xlu0 %4249
      %4252 = vset.pattern.permute.xlu0 12
      %4253 = vperm.xlu0 %4252, %v1187
      %v4254 = vpop.permute.xlu0 %4253
      %4256 = vset.pattern.permute.xlu0 12
      %4257 = vperm.xlu0 %4256, %v1188
      %v4258 = vpop.permute.xlu0 %4257
      %4260 = vset.pattern.permute.xlu0 12
      %4261 = vperm.xlu0 %4260, %v1189
      %v4262 = vpop.permute.xlu0 %4261
      %4264 = vset.pattern.permute.xlu0 12
      %4265 = vperm.xlu0 %4264, %v1190
      %v4266 = vpop.permute.xlu0 %4265
      %4268 = vset.pattern.permute.xlu0 12
      %4269 = vperm.xlu0 %4268, %v1191
      %v4270 = vpop.permute.xlu0 %4269
      %4272 = vset.pattern.permute.xlu0 12
      %4273 = vperm.xlu0 %4272, %v1192
      %v4274 = vpop.permute.xlu0 %4273
      %4276 = vset.pattern.permute.xlu0 12
      %4277 = vperm.xlu0 %4276, %v1193
      %v4278 = vpop.permute.xlu0 %4277
      %4280 = vset.pattern.permute.xlu0 12
      %4281 = vperm.xlu0 %4280, %v1194
      %v4282 = vpop.permute.xlu0 %4281
      %4284 = vset.pattern.permute.xlu0 12
      %4285 = vperm.xlu0 %4284, %v1195
      %v4286 = vpop.permute.xlu0 %4285
      %4288 = vset.pattern.permute.xlu0 12
      %4289 = vperm.xlu0 %4288, %v1196
      %v4290 = vpop.permute.xlu0 %4289
      %4292 = vset.pattern.permute.xlu0 12
      %4293 = vperm.xlu0 %4292, %v1197
      %v4294 = vpop.permute.xlu0 %4293
      %4296 = vset.pattern.permute.xlu0 12
      %4297 = vperm.xlu0 %4296, %v1198
      %v4298 = vpop.permute.xlu0 %4297
      %v4300 = vsub.f32 %v4238, %v510
      %v4301 = vsub.f32 %v4242, %v510
      %v4302 = vsub.f32 %v4246, %v510
      %v4303 = vsub.f32 %v4250, %v510
      %v4304 = vsub.f32 %v4254, %v510
      %v4305 = vsub.f32 %v4258, %v510
      %v4306 = vsub.f32 %v4262, %v510
      %v4307 = vsub.f32 %v4266, %v510
      %v4308 = vsub.f32 %v4270, %v510
      %v4309 = vsub.f32 %v4274, %v510
      %v4310 = vsub.f32 %v4278, %v510
      %v4311 = vsub.f32 %v4282, %v510
      %v4312 = vsub.f32 %v4286, %v510
      %v4313 = vsub.f32 %v4290, %v510
      %v4314 = vsub.f32 %v4294, %v510
      %v4315 = vsub.f32 %v4298, %v510
      %v4316 = vand.u32 2147483647, %v4300
      %v4317 = vand.u32 2147483647, %v4301
      %v4318 = vand.u32 2147483647, %v4302
      %v4319 = vand.u32 2147483647, %v4303
      %v4320 = vand.u32 2147483647, %v4304
      %v4321 = vand.u32 2147483647, %v4305
      %v4322 = vand.u32 2147483647, %v4306
      %v4323 = vand.u32 2147483647, %v4307
      %v4324 = vand.u32 2147483647, %v4308
      %v4325 = vand.u32 2147483647, %v4309
      %v4326 = vand.u32 2147483647, %v4310
      %v4327 = vand.u32 2147483647, %v4311
      %v4328 = vand.u32 2147483647, %v4312
      %v4329 = vand.u32 2147483647, %v4313
      %v4330 = vand.u32 2147483647, %v4314
      %v4331 = vand.u32 2147483647, %v4315
      %v4332 = vsub.f32 1.0, %v4316
      %v4333 = vsub.f32 1.0, %v4317
      %v4334 = vsub.f32 1.0, %v4318
      %v4335 = vsub.f32 1.0, %v4319
      %v4336 = vsub.f32 1.0, %v4320
      %v4337 = vsub.f32 1.0, %v4321
      %v4338 = vsub.f32 1.0, %v4322
      %v4339 = vsub.f32 1.0, %v4323
      %v4340 = vsub.f32 1.0, %v4324
      %v4341 = vsub.f32 1.0, %v4325
      %v4342 = vsub.f32 1.0, %v4326
      %v4343 = vsub.f32 1.0, %v4327
      %v4344 = vsub.f32 1.0, %v4328
      %v4345 = vsub.f32 1.0, %v4329
      %v4346 = vsub.f32 1.0, %v4330
      %v4347 = vsub.f32 1.0, %v4331
      %v4348 = vmax.f32 %v4332, 0.0
      %v4349 = vmax.f32 %v4333, 0.0
      %v4350 = vmax.f32 %v4334, 0.0
      %v4351 = vmax.f32 %v4335, 0.0
      %v4352 = vmax.f32 %v4336, 0.0
      %v4353 = vmax.f32 %v4337, 0.0
      %v4354 = vmax.f32 %v4338, 0.0
      %v4355 = vmax.f32 %v4339, 0.0
      %v4356 = vmax.f32 %v4340, 0.0
      %v4357 = vmax.f32 %v4341, 0.0
      %v4358 = vmax.f32 %v4342, 0.0
      %v4359 = vmax.f32 %v4343, 0.0
      %v4360 = vmax.f32 %v4344, 0.0
      %v4361 = vmax.f32 %v4345, 0.0
      %v4362 = vmax.f32 %v4346, 0.0
      %v4363 = vmax.f32 %v4347, 0.0
      %v4364 = vpack.c.bf16 %v4221, %v4220
      %v4365 = vpack.c.bf16 %v4223, %v4222
      %v4366 = vpack.c.bf16 %v4225, %v4224
      %v4367 = vpack.c.bf16 %v4227, %v4226
      %v4368 = vpack.c.bf16 %v4229, %v4228
      %v4369 = vpack.c.bf16 %v4231, %v4230
      %v4370 = vpack.c.bf16 %v4233, %v4232
      %v4371 = vpack.c.bf16 %v4235, %v4234
      %v4373 = vsel %vm1360, %v4364, 0
      %v4376 = vsel %vm1360, %v4365, 0
      %v4379 = vsel %vm1360, %v4366, 0
      %v4382 = vsel %vm1360, %v4367, 0
      %v4385 = vsel %vm1360, %v4368, 0
      %v4388 = vsel %vm1360, %v4369, 0
      %v4391 = vsel %vm1360, %v4370, 0
      %v4394 = vsel %vm1360, %v4371, 0
      %4396 = vmatprep.subr.bf16.mxu0 0
      %4397 = vmatpush1.bf16.msra.mxu0 %v1357
      %4398 = vmatprep.subr.bf16.mxu0 0
      %4399 = vmatpush1.bf16.msra.mxu0 %v1387
      %4400 = vmatprep.subr.bf16.mxu0 0
      %4401 = vmatpush1.bf16.msra.mxu0 0
      %4402 = vmatprep.subr.bf16.mxu0 0
      %4403 = vmatpush1.bf16.msra.mxu0 0
      %4404 = vmatprep.subr.bf16.mxu0 0
      %4405 = vmatpush1.bf16.msra.mxu0 0
      %4406 = vmatprep.subr.bf16.mxu0 0
      %4407 = vmatpush1.bf16.msra.mxu0 0
      %4408 = vmatprep.subr.bf16.mxu0 0
      %4409 = vmatpush1.bf16.msra.mxu0 0
      %4410 = vmatprep.subr.bf16.mxu0 0
      %4411 = vmatpush1.bf16.msra.mxu0 0
      %4412 = vmatprep.subr.bf16.mxu0 0
      %4413 = vmatpush1.bf16.msra.mxu0 0
      %4414 = vmatprep.subr.bf16.mxu0 0
      %4415 = vmatpush1.bf16.msra.mxu0 0
      %4416 = vmatprep.subr.bf16.mxu0 0
      %4417 = vmatpush1.bf16.msra.mxu0 0
      %4418 = vmatprep.subr.bf16.mxu0 0
      %4419 = vmatpush1.bf16.msra.mxu0 0
      %4420 = vmatprep.subr.bf16.mxu0 0
      %4421 = vmatpush1.bf16.msra.mxu0 0
      %4422 = vmatprep.subr.bf16.mxu0 0
      %4423 = vmatpush1.bf16.msra.mxu0 0
      %4424 = vmatprep.subr.bf16.mxu0 0
      %4425 = vmatpush1.bf16.msra.mxu0 0
      %4426 = vmatprep.subr.bf16.mxu0 0
      %4427 = vmatpush1.bf16.msra.mxu0 0
      %4428 = vmatprep.mubr.bf16.mxu0 0
      %4429 = vmatmul.mubr.bf16.gmra.mrb[0].mxu0 %v4373
      %v4430 = vpop.f32.mrb[0].mxu0
      %v4431 = vadd.f32 0.0, %v4430
      %v4432 = vpop.f32.mrb[0].mxu0
      %v4433 = vpop.f32.mrb[0].mxu0
      %v4434 = vadd.f32 0.0, %v4433
      %v4435 = vpop.f32.mrb[0].mxu0
      %4436 = vmatprep.mubr.bf16.mxu0 0
      %4437 = vmatmul.mubr.bf16.gmra.mrb[0].mxu0 %v4376
      %v4438 = vpop.f32.mrb[0].mxu0
      %v4439 = vadd.f32 0.0, %v4438
      %v4440 = vpop.f32.mrb[0].mxu0
      %v4441 = vpop.f32.mrb[0].mxu0
      %v4442 = vadd.f32 0.0, %v4441
      %v4443 = vpop.f32.mrb[0].mxu0
      %4444 = vmatprep.mubr.bf16.mxu0 0
      %4445 = vmatmul.mubr.bf16.gmra.mrb[0].mxu0 %v4379
      %v4446 = vpop.f32.mrb[0].mxu0
      %v4447 = vadd.f32 0.0, %v4446
      %v4448 = vpop.f32.mrb[0].mxu0
      %v4449 = vpop.f32.mrb[0].mxu0
      %v4450 = vadd.f32 0.0, %v4449
      %v4451 = vpop.f32.mrb[0].mxu0
      %4452 = vmatprep.mubr.bf16.mxu0 0
      %4453 = vmatmul.mubr.bf16.gmra.mrb[0].mxu0 %v4382
      %v4454 = vpop.f32.mrb[0].mxu0
      %v4455 = vadd.f32 0.0, %v4454
      %v4456 = vpop.f32.mrb[0].mxu0
      %v4457 = vpop.f32.mrb[0].mxu0
      %v4458 = vadd.f32 0.0, %v4457
      %v4459 = vpop.f32.mrb[0].mxu0
      %4460 = vmatprep.mubr.bf16.mxu0 0
      %4461 = vmatmul.mubr.bf16.gmra.mrb[0].mxu0 %v4385
      %v4462 = vpop.f32.mrb[0].mxu0
      %v4463 = vadd.f32 0.0, %v4462
      %v4464 = vpop.f32.mrb[0].mxu0
      %v4465 = vpop.f32.mrb[0].mxu0
      %v4466 = vadd.f32 0.0, %v4465
      %v4467 = vpop.f32.mrb[0].mxu0
      %4468 = vmatprep.mubr.bf16.mxu0 0
      %4469 = vmatmul.mubr.bf16.gmra.mrb[0].mxu0 %v4388
      %v4470 = vpop.f32.mrb[0].mxu0
      %v4471 = vadd.f32 0.0, %v4470
      %v4472 = vpop.f32.mrb[0].mxu0
      %v4473 = vpop.f32.mrb[0].mxu0
      %v4474 = vadd.f32 0.0, %v4473
      %v4475 = vpop.f32.mrb[0].mxu0
      %4476 = vmatprep.mubr.bf16.mxu0 0
      %4477 = vmatmul.mubr.bf16.gmra.mrb[0].mxu0 %v4391
      %v4478 = vpop.f32.mrb[0].mxu0
      %v4479 = vadd.f32 0.0, %v4478
      %v4480 = vpop.f32.mrb[0].mxu0
      %v4481 = vpop.f32.mrb[0].mxu0
      %v4482 = vadd.f32 0.0, %v4481
      %v4483 = vpop.f32.mrb[0].mxu0
      %4484 = vmatprep.mubr.bf16.mxu0 0
      %4485 = vmatmul.mubr.bf16.gmra.mrb[0].mxu0 %v4394
      %v4486 = vpop.f32.mrb[0].mxu0
      %v4487 = vadd.f32 0.0, %v4486
      %v4488 = vpop.f32.mrb[0].mxu0
      %v4489 = vpop.f32.mrb[0].mxu0
      %v4490 = vadd.f32 0.0, %v4489
      %v4491 = vpop.f32.mrb[0].mxu0
      %4492 = vdwg.mxu0
      %v4493 = vmul.f32 %v4431, %v4348
      %v4494 = vmul.f32 %v4434, %v4349
      %v4495 = vmul.f32 %v4439, %v4350
      %v4496 = vmul.f32 %v4442, %v4351
      %v4497 = vmul.f32 %v4447, %v4352
      %v4498 = vmul.f32 %v4450, %v4353
      %v4499 = vmul.f32 %v4455, %v4354
      %v4500 = vmul.f32 %v4458, %v4355
      %v4501 = vmul.f32 %v4463, %v4356
      %v4502 = vmul.f32 %v4466, %v4357
      %v4503 = vmul.f32 %v4471, %v4358
      %v4504 = vmul.f32 %v4474, %v4359
      %v4505 = vmul.f32 %v4479, %v4360
      %v4506 = vmul.f32 %v4482, %v4361
      %v4507 = vmul.f32 %v4487, %v4362
      %v4508 = vmul.f32 %v4490, %v4363
      %v4509 = vpack.c.bf16 %v4494, %v4493
      %v4510 = vpack.c.bf16 %v4496, %v4495
      %v4511 = vpack.c.bf16 %v4498, %v4497
      %v4512 = vpack.c.bf16 %v4500, %v4499
      %v4513 = vpack.c.bf16 %v4502, %v4501
      %v4514 = vpack.c.bf16 %v4504, %v4503
      %v4515 = vpack.c.bf16 %v4506, %v4505
      %v4516 = vpack.c.bf16 %v4508, %v4507
      %s4517 = scalar_lea.vmem %s2, 108
      %v4518 = vld [vmem:[%s4517] sm:$0xf]
      %v4519 = vld [vmem:[%s4517 + $0x4] sm:$0xf]
      %v4520 = vld [vmem:[%s4517 + $0x8] sm:$0xf]
      %v4521 = vld [vmem:[%s4517 + $0xc] sm:$0xf]
      %v4522 = vld [vmem:[%s4517 + $0x10] sm:$0xf]
      %v4523 = vld [vmem:[%s4517 + $0x14] sm:$0xf]
      %v4524 = vld [vmem:[%s4517 + $0x18] sm:$0xf]
      %v4525 = vld [vmem:[%s4517 + $0x1c] sm:$0xf]
      %v4526 = vld [vmem:[%s4517 + $0x20] sm:$0xf]
      %v4536 = vunpack.c.l.b16 %v4518
      %v4537 = vunpack.c.l.b16 %v4519
      %v4538 = vunpack.c.l.b16 %v4520
      %v4539 = vunpack.c.l.b16 %v4521
      %v4540 = vunpack.c.l.b16 %v4522
      %v4541 = vunpack.c.l.b16 %v4523
      %v4542 = vunpack.c.l.b16 %v4524
      %v4543 = vunpack.c.l.b16 %v4525
      %v4544 = vunpack.c.l.b16 %v4526
      %v4545 = vpack.c.b16 %v4537, %v4536
      %v4546 = vpack.c.b16 %v4539, %v4538
      %v4547 = vpack.c.b16 %v4541, %v4540
      %v4548 = vpack.c.b16 %v4543, %v4542
      %v4549 = vpack.c.b16 %v4544, %v4544
      %v4555 = vsel %vm2429, %v4509, 0
      %v4558 = vsel %vm2429, %v4510, 0
      %v4561 = vsel %vm2429, %v4511, 0
      %v4564 = vsel %vm2429, %v4512, 0
      %v4567 = vsel %vm2429, %v4513, 0
      %v4570 = vsel %vm2429, %v4514, 0
      %v4573 = vsel %vm2429, %v4515, 0
      %v4576 = vsel %vm2429, %v4516, 0
      %v4579 = vsel %vm2454, %v4549, 0
      %4581 = vmatprep.subr.bf16.mxu0 0
      %4582 = vmatpush1.bf16.msra.mxu0 %v4545
      %4583 = vmatprep.subr.bf16.mxu0 0
      %4584 = vmatpush1.bf16.msra.mxu0 %v4546
      %4585 = vmatprep.subr.bf16.mxu0 0
      %4586 = vmatpush1.bf16.msra.mxu0 %v4547
      %4587 = vmatprep.subr.bf16.mxu0 0
      %4588 = vmatpush1.bf16.msra.mxu0 %v4548
      %4589 = vmatprep.subr.bf16.mxu0 0
      %4590 = vmatpush1.bf16.msra.mxu0 %v4579
      %4591 = vmatprep.subr.bf16.mxu0 0
      %4592 = vmatpush1.bf16.msra.mxu0 0
      %4593 = vmatprep.subr.bf16.mxu0 0
      %4594 = vmatpush1.bf16.msra.mxu0 0
      %4595 = vmatprep.subr.bf16.mxu0 0
      %4596 = vmatpush1.bf16.msra.mxu0 0
      %4597 = vmatprep.subr.bf16.mxu0 0
      %4598 = vmatpush1.bf16.msra.mxu0 0
      %4599 = vmatprep.subr.bf16.mxu0 0
      %4600 = vmatpush1.bf16.msra.mxu0 0
      %4601 = vmatprep.subr.bf16.mxu0 0
      %4602 = vmatpush1.bf16.msra.mxu0 0
      %4603 = vmatprep.subr.bf16.mxu0 0
      %4604 = vmatpush1.bf16.msra.mxu0 0
      %4605 = vmatprep.subr.bf16.mxu0 0
      %4606 = vmatpush1.bf16.msra.mxu0 0
      %4607 = vmatprep.subr.bf16.mxu0 0
      %4608 = vmatpush1.bf16.msra.mxu0 0
      %4609 = vmatprep.subr.bf16.mxu0 0
      %4610 = vmatpush1.bf16.msra.mxu0 0
      %4611 = vmatprep.subr.bf16.mxu0 0
      %4612 = vmatpush1.bf16.msra.mxu0 0
      %4613 = vmatprep.mubr.bf16.mxu0 0
      %4614 = vmatmul.mubr.bf16.gmra.mrb[0].mxu0 %v4555
      %v4615 = vpop.f32.mrb[0].mxu0
      %v4616 = vadd.f32 0.0, %v4615
      %v4617 = vpop.f32.mrb[0].mxu0
      %v4618 = vpop.f32.mrb[0].mxu0
      %v4619 = vadd.f32 0.0, %v4618
      %v4620 = vpop.f32.mrb[0].mxu0
      %4621 = vmatprep.mubr.bf16.mxu0 0
      %4622 = vmatmul.mubr.bf16.gmra.mrb[0].mxu0 %v4558
      %v4623 = vpop.f32.mrb[0].mxu0
      %v4624 = vadd.f32 0.0, %v4623
      %v4625 = vpop.f32.mrb[0].mxu0
      %v4626 = vpop.f32.mrb[0].mxu0
      %v4627 = vadd.f32 0.0, %v4626
      %v4628 = vpop.f32.mrb[0].mxu0
      %4629 = vmatprep.mubr.bf16.mxu0 0
      %4630 = vmatmul.mubr.bf16.gmra.mrb[0].mxu0 %v4561
      %v4631 = vpop.f32.mrb[0].mxu0
      %v4632 = vadd.f32 0.0, %v4631
      %v4633 = vpop.f32.mrb[0].mxu0
      %v4634 = vpop.f32.mrb[0].mxu0
      %v4635 = vadd.f32 0.0, %v4634
      %v4636 = vpop.f32.mrb[0].mxu0
      %4637 = vmatprep.mubr.bf16.mxu0 0
      %4638 = vmatmul.mubr.bf16.gmra.mrb[0].mxu0 %v4564
      %v4639 = vpop.f32.mrb[0].mxu0
      %v4640 = vadd.f32 0.0, %v4639
      %v4641 = vpop.f32.mrb[0].mxu0
      %v4642 = vpop.f32.mrb[0].mxu0
      %v4643 = vadd.f32 0.0, %v4642
      %v4644 = vpop.f32.mrb[0].mxu0
      %4645 = vmatprep.mubr.bf16.mxu0 0
      %4646 = vmatmul.mubr.bf16.gmra.mrb[0].mxu0 %v4567
      %v4647 = vpop.f32.mrb[0].mxu0
      %v4648 = vadd.f32 0.0, %v4647
      %v4649 = vpop.f32.mrb[0].mxu0
      %v4650 = vpop.f32.mrb[0].mxu0
      %v4651 = vadd.f32 0.0, %v4650
      %v4652 = vpop.f32.mrb[0].mxu0
      %4653 = vmatprep.mubr.bf16.mxu0 0
      %4654 = vmatmul.mubr.bf16.gmra.mrb[0].mxu0 %v4570
      %v4655 = vpop.f32.mrb[0].mxu0
      %v4656 = vadd.f32 0.0, %v4655
      %v4657 = vpop.f32.mrb[0].mxu0
      %v4658 = vpop.f32.mrb[0].mxu0
      %v4659 = vadd.f32 0.0, %v4658
      %v4660 = vpop.f32.mrb[0].mxu0
      %4661 = vmatprep.mubr.bf16.mxu0 0
      %4662 = vmatmul.mubr.bf16.gmra.mrb[0].mxu0 %v4573
      %v4663 = vpop.f32.mrb[0].mxu0
      %v4664 = vadd.f32 0.0, %v4663
      %v4665 = vpop.f32.mrb[0].mxu0
      %v4666 = vpop.f32.mrb[0].mxu0
      %v4667 = vadd.f32 0.0, %v4666
      %v4668 = vpop.f32.mrb[0].mxu0
      %4669 = vmatprep.mubr.bf16.mxu0 0
      %4670 = vmatmul.mubr.bf16.gmra.mrb[0].mxu0 %v4576
      %v4671 = vpop.f32.mrb[0].mxu0
      %v4672 = vadd.f32 0.0, %v4671
      %v4673 = vpop.f32.mrb[0].mxu0
      %v4674 = vpop.f32.mrb[0].mxu0
      %v4675 = vadd.f32 0.0, %v4674
      %v4676 = vpop.f32.mrb[0].mxu0
      %4677 = vdwg.mxu0
      %v4678 = vadd.f32 %v3740, %v4616
      %v4679 = vadd.f32 %v3741, %v4619
      %v4680 = vadd.f32 %v3742, %v4624
      %v4681 = vadd.f32 %v3743, %v4627
      %v4682 = vadd.f32 %v3744, %v4632
      %v4683 = vadd.f32 %v3745, %v4635
      %v4684 = vadd.f32 %v3746, %v4640
      %v4685 = vadd.f32 %v3747, %v4643
      %v4686 = vadd.f32 %v3748, %v4648
      %v4687 = vadd.f32 %v3749, %v4651
      %v4688 = vadd.f32 %v3750, %v4656
      %v4689 = vadd.f32 %v3751, %v4659
      %v4690 = vadd.f32 %v3752, %v4664
      %v4691 = vadd.f32 %v3753, %v4667
      %v4692 = vadd.f32 %v3754, %v4672
      %v4693 = vadd.f32 %v3755, %v4675
      %vm4694 = vmand %vm3820, %vm1615
      %vm4695 = vmand %vm3821, %vm1616
      %vm4696 = vmand %vm3822, %vm1617
      %vm4697 = vmand %vm3823, %vm1618
      %vm4698 = vmand %vm3824, %vm1619
      %vm4699 = vmand %vm3825, %vm1620
      %vm4700 = vmand %vm3826, %vm1621
      %vm4701 = vmand %vm3827, %vm1622
      %vm4702 = vmand %vm3828, %vm1623
      %vm4703 = vmand %vm3829, %vm1624
      %vm4704 = vmand %vm3830, %vm1625
      %vm4705 = vmand %vm3831, %vm1626
      %vm4706 = vmand %vm3832, %vm1627
      %vm4707 = vmand %vm3833, %vm1628
      %vm4708 = vmand %vm3834, %vm1629
      %vm4709 = vmand %vm3835, %vm1630
      %vm4710 = vmand %vm4694, %vm1711
      %vm4711 = vmand %vm4695, %vm1712
      %vm4712 = vmand %vm4696, %vm1713
      %vm4713 = vmand %vm4697, %vm1714
      %vm4714 = vmand %vm4698, %vm1715
      %vm4715 = vmand %vm4699, %vm1716
      %vm4716 = vmand %vm4700, %vm1717
      %vm4717 = vmand %vm4701, %vm1718
      %vm4718 = vmand %vm4702, %vm1719
      %vm4719 = vmand %vm4703, %vm1720
      %vm4720 = vmand %vm4704, %vm1721
      %vm4721 = vmand %vm4705, %vm1722
      %vm4722 = vmand %vm4706, %vm1723
      %vm4723 = vmand %vm4707, %vm1724
      %vm4724 = vmand %vm4708, %vm1725
      %vm4725 = vmand %vm4709, %vm1726
      %v4726 = vsel %vm4710, 1, 0
      %v4727 = vsel %vm4711, 1, 0
      %v4728 = vsel %vm4712, 1, 0
      %v4729 = vsel %vm4713, 1, 0
      %v4730 = vsel %vm4714, 1, 0
      %v4731 = vsel %vm4715, 1, 0
      %v4732 = vsel %vm4716, 1, 0
      %v4733 = vsel %vm4717, 1, 0
      %v4734 = vsel %vm4718, 1, 0
      %v4735 = vsel %vm4719, 1, 0
      %v4736 = vsel %vm4720, 1, 0
      %v4737 = vsel %vm4721, 1, 0
      %v4738 = vsel %vm4722, 1, 0
      %v4739 = vsel %vm4723, 1, 0
      %v4740 = vsel %vm4724, 1, 0
      %v4741 = vsel %vm4725, 1, 0
      %v4742 = vcvt.s32.f32 %v4726
      %v4743 = vcvt.s32.f32 %v4727
      %v4744 = vcvt.s32.f32 %v4728
      %v4745 = vcvt.s32.f32 %v4729
      %v4746 = vcvt.s32.f32 %v4730
      %v4747 = vcvt.s32.f32 %v4731
      %v4748 = vcvt.s32.f32 %v4732
      %v4749 = vcvt.s32.f32 %v4733
      %v4750 = vcvt.s32.f32 %v4734
      %v4751 = vcvt.s32.f32 %v4735
      %v4752 = vcvt.s32.f32 %v4736
      %v4753 = vcvt.s32.f32 %v4737
      %v4754 = vcvt.s32.f32 %v4738
      %v4755 = vcvt.s32.f32 %v4739
      %v4756 = vcvt.s32.f32 %v4740
      %v4757 = vcvt.s32.f32 %v4741
      %4774 = vrot.lane.b32.xlu0 %v4742, 18
      %v4775 = vpop.permute.xlu0 %4774
      %4776 = vrot.lane.b32.xlu0 %v4743, 18
      %v4777 = vpop.permute.xlu0 %4776
      %4778 = vrot.lane.b32.xlu0 %v4744, 18
      %v4779 = vpop.permute.xlu0 %4778
      %4780 = vrot.lane.b32.xlu0 %v4745, 18
      %v4781 = vpop.permute.xlu0 %4780
      %4782 = vrot.lane.b32.xlu0 %v4746, 18
      %v4783 = vpop.permute.xlu0 %4782
      %4784 = vrot.lane.b32.xlu0 %v4747, 18
      %v4785 = vpop.permute.xlu0 %4784
      %4786 = vrot.lane.b32.xlu0 %v4748, 18
      %v4787 = vpop.permute.xlu0 %4786
      %4788 = vrot.lane.b32.xlu0 %v4749, 18
      %v4789 = vpop.permute.xlu0 %4788
      %4790 = vrot.lane.b32.xlu0 %v4750, 18
      %v4791 = vpop.permute.xlu0 %4790
      %4792 = vrot.lane.b32.xlu0 %v4751, 18
      %v4793 = vpop.permute.xlu0 %4792
      %4794 = vrot.lane.b32.xlu0 %v4752, 18
      %v4795 = vpop.permute.xlu0 %4794
      %4796 = vrot.lane.b32.xlu0 %v4753, 18
      %v4797 = vpop.permute.xlu0 %4796
      %4798 = vrot.lane.b32.xlu0 %v4754, 18
      %v4799 = vpop.permute.xlu0 %4798
      %4800 = vrot.lane.b32.xlu0 %v4755, 18
      %v4801 = vpop.permute.xlu0 %4800
      %4802 = vrot.lane.b32.xlu0 %v4756, 18
      %v4803 = vpop.permute.xlu0 %4802
      %4804 = vrot.lane.b32.xlu0 %v4757, 18
      %v4805 = vpop.permute.xlu0 %4804
      %v4822 = vmul.f32 %v342, %v4775
      %v4823 = vmul.f32 %v344, %v4777
      %v4824 = vmul.f32 %v346, %v4779
      %v4825 = vmul.f32 %v348, %v4781
      %v4826 = vmul.f32 %v350, %v4783
      %v4827 = vmul.f32 %v352, %v4785
      %v4828 = vmul.f32 %v354, %v4787
      %v4829 = vmul.f32 %v356, %v4789
      %v4830 = vmul.f32 %v358, %v4791
      %v4831 = vmul.f32 %v360, %v4793
      %v4832 = vmul.f32 %v362, %v4795
      %v4833 = vmul.f32 %v364, %v4797
      %v4834 = vmul.f32 %v366, %v4799
      %v4835 = vmul.f32 %v368, %v4801
      %v4836 = vmul.f32 %v370, %v4803
      %v4837 = vmul.f32 %v372, %v4805
      %4838 = vset.pattern.permute.xlu0 4
      %4839 = vperm.xlu0 %4838, %v3980
      %v4840 = vpop.permute.xlu0 %4839
      %4842 = vset.pattern.permute.xlu0 4
      %4843 = vperm.xlu0 %4842, %v3981
      %v4844 = vpop.permute.xlu0 %4843
      %4846 = vset.pattern.permute.xlu0 4
      %4847 = vperm.xlu0 %4846, %v3982
      %v4848 = vpop.permute.xlu0 %4847
      %4850 = vset.pattern.permute.xlu0 4
      %4851 = vperm.xlu0 %4850, %v3983
      %v4852 = vpop.permute.xlu0 %4851
      %4854 = vset.pattern.permute.xlu0 4
      %4855 = vperm.xlu0 %4854, %v3984
      %v4856 = vpop.permute.xlu0 %4855
      %4858 = vset.pattern.permute.xlu0 4
      %4859 = vperm.xlu0 %4858, %v3985
      %v4860 = vpop.permute.xlu0 %4859
      %4862 = vset.pattern.permute.xlu0 4
      %4863 = vperm.xlu0 %4862, %v3986
      %v4864 = vpop.permute.xlu0 %4863
      %4866 = vset.pattern.permute.xlu0 4
      %4867 = vperm.xlu0 %4866, %v3987
      %v4868 = vpop.permute.xlu0 %4867
      %4870 = vset.pattern.permute.xlu0 4
      %4871 = vperm.xlu0 %4870, %v3988
      %v4872 = vpop.permute.xlu0 %4871
      %4874 = vset.pattern.permute.xlu0 4
      %4875 = vperm.xlu0 %4874, %v3989
      %v4876 = vpop.permute.xlu0 %4875
      %4878 = vset.pattern.permute.xlu0 4
      %4879 = vperm.xlu0 %4878, %v3990
      %v4880 = vpop.permute.xlu0 %4879
      %4882 = vset.pattern.permute.xlu0 4
      %4883 = vperm.xlu0 %4882, %v3991
      %v4884 = vpop.permute.xlu0 %4883
      %4886 = vset.pattern.permute.xlu0 4
      %4887 = vperm.xlu0 %4886, %v3992
      %v4888 = vpop.permute.xlu0 %4887
      %4890 = vset.pattern.permute.xlu0 4
      %4891 = vperm.xlu0 %4890, %v3993
      %v4892 = vpop.permute.xlu0 %4891
      %4894 = vset.pattern.permute.xlu0 4
      %4895 = vperm.xlu0 %4894, %v3994
      %v4896 = vpop.permute.xlu0 %4895
      %4898 = vset.pattern.permute.xlu0 4
      %4899 = vperm.xlu0 %4898, %v3995
      %v4900 = vpop.permute.xlu0 %4899
      %v4902 = vsub.f32 %v4840, %v507
      %v4903 = vsub.f32 %v4844, %v507
      %v4904 = vsub.f32 %v4848, %v507
      %v4905 = vsub.f32 %v4852, %v507
      %v4906 = vsub.f32 %v4856, %v507
      %v4907 = vsub.f32 %v4860, %v507
      %v4908 = vsub.f32 %v4864, %v507
      %v4909 = vsub.f32 %v4868, %v507
      %v4910 = vsub.f32 %v4872, %v507
      %v4911 = vsub.f32 %v4876, %v507
      %v4912 = vsub.f32 %v4880, %v507
      %v4913 = vsub.f32 %v4884, %v507
      %v4914 = vsub.f32 %v4888, %v507
      %v4915 = vsub.f32 %v4892, %v507
      %v4916 = vsub.f32 %v4896, %v507
      %v4917 = vsub.f32 %v4900, %v507
      %v4918 = vand.u32 2147483647, %v4902
      %v4919 = vand.u32 2147483647, %v4903
      %v4920 = vand.u32 2147483647, %v4904
      %v4921 = vand.u32 2147483647, %v4905
      %v4922 = vand.u32 2147483647, %v4906
      %v4923 = vand.u32 2147483647, %v4907
      %v4924 = vand.u32 2147483647, %v4908
      %v4925 = vand.u32 2147483647, %v4909
      %v4926 = vand.u32 2147483647, %v4910
      %v4927 = vand.u32 2147483647, %v4911
      %v4928 = vand.u32 2147483647, %v4912
      %v4929 = vand.u32 2147483647, %v4913
      %v4930 = vand.u32 2147483647, %v4914
      %v4931 = vand.u32 2147483647, %v4915
      %v4932 = vand.u32 2147483647, %v4916
      %v4933 = vand.u32 2147483647, %v4917
      %v4934 = vsub.f32 1.0, %v4918
      %v4935 = vsub.f32 1.0, %v4919
      %v4936 = vsub.f32 1.0, %v4920
      %v4937 = vsub.f32 1.0, %v4921
      %v4938 = vsub.f32 1.0, %v4922
      %v4939 = vsub.f32 1.0, %v4923
      %v4940 = vsub.f32 1.0, %v4924
      %v4941 = vsub.f32 1.0, %v4925
      %v4942 = vsub.f32 1.0, %v4926
      %v4943 = vsub.f32 1.0, %v4927
      %v4944 = vsub.f32 1.0, %v4928
      %v4945 = vsub.f32 1.0, %v4929
      %v4946 = vsub.f32 1.0, %v4930
      %v4947 = vsub.f32 1.0, %v4931
      %v4948 = vsub.f32 1.0, %v4932
      %v4949 = vsub.f32 1.0, %v4933
      %v4950 = vmax.f32 %v4934, 0.0
      %v4951 = vmax.f32 %v4935, 0.0
      %v4952 = vmax.f32 %v4936, 0.0
      %v4953 = vmax.f32 %v4937, 0.0
      %v4954 = vmax.f32 %v4938, 0.0
      %v4955 = vmax.f32 %v4939, 0.0
      %v4956 = vmax.f32 %v4940, 0.0
      %v4957 = vmax.f32 %v4941, 0.0
      %v4958 = vmax.f32 %v4942, 0.0
      %v4959 = vmax.f32 %v4943, 0.0
      %v4960 = vmax.f32 %v4944, 0.0
      %v4961 = vmax.f32 %v4945, 0.0
      %v4962 = vmax.f32 %v4946, 0.0
      %v4963 = vmax.f32 %v4947, 0.0
      %v4964 = vmax.f32 %v4948, 0.0
      %v4965 = vmax.f32 %v4949, 0.0
      %4967 = vset.pattern.permute.xlu0 22
      %4968 = vperm.xlu0 %4967, %v4822
      %v4969 = vpop.permute.xlu0 %4968
      %4972 = vset.pattern.permute.xlu0 22
      %4973 = vperm.xlu0 %4972, %v4823
      %v4974 = vpop.permute.xlu0 %4973
      %4977 = vset.pattern.permute.xlu0 22
      %4978 = vperm.xlu0 %4977, %v4824
      %v4979 = vpop.permute.xlu0 %4978
      %4982 = vset.pattern.permute.xlu0 22
      %4983 = vperm.xlu0 %4982, %v4825
      %v4984 = vpop.permute.xlu0 %4983
      %4987 = vset.pattern.permute.xlu0 22
      %4988 = vperm.xlu0 %4987, %v4826
      %v4989 = vpop.permute.xlu0 %4988
      %4992 = vset.pattern.permute.xlu0 22
      %4993 = vperm.xlu0 %4992, %v4827
      %v4994 = vpop.permute.xlu0 %4993
      %4997 = vset.pattern.permute.xlu0 22
      %4998 = vperm.xlu0 %4997, %v4828
      %v4999 = vpop.permute.xlu0 %4998
      %5002 = vset.pattern.permute.xlu0 22
      %5003 = vperm.xlu0 %5002, %v4829
      %v5004 = vpop.permute.xlu0 %5003
      %5007 = vset.pattern.permute.xlu0 22
      %5008 = vperm.xlu0 %5007, %v4830
      %v5009 = vpop.permute.xlu0 %5008
      %5012 = vset.pattern.permute.xlu0 22
      %5013 = vperm.xlu0 %5012, %v4831
      %v5014 = vpop.permute.xlu0 %5013
      %5017 = vset.pattern.permute.xlu0 22
      %5018 = vperm.xlu0 %5017, %v4832
      %v5019 = vpop.permute.xlu0 %5018
      %5022 = vset.pattern.permute.xlu0 22
      %5023 = vperm.xlu0 %5022, %v4833
      %v5024 = vpop.permute.xlu0 %5023
      %5027 = vset.pattern.permute.xlu0 22
      %5028 = vperm.xlu0 %5027, %v4834
      %v5029 = vpop.permute.xlu0 %5028
      %5032 = vset.pattern.permute.xlu0 22
      %5033 = vperm.xlu0 %5032, %v4835
      %v5034 = vpop.permute.xlu0 %5033
      %5037 = vset.pattern.permute.xlu0 22
      %5038 = vperm.xlu0 %5037, %v4836
      %v5039 = vpop.permute.xlu0 %5038
      %5042 = vset.pattern.permute.xlu0 22
      %5043 = vperm.xlu0 %5042, %v4837
      %v5044 = vpop.permute.xlu0 %5043
      %v5046 = vmul.f32 %v4950, %v4969
      %v5047 = vmul.f32 %v4951, %v4974
      %v5048 = vmul.f32 %v4952, %v4979
      %v5049 = vmul.f32 %v4953, %v4984
      %v5050 = vmul.f32 %v4954, %v4989
      %v5051 = vmul.f32 %v4955, %v4994
      %v5052 = vmul.f32 %v4956, %v4999
      %v5053 = vmul.f32 %v4957, %v5004
      %v5054 = vmul.f32 %v4958, %v5009
      %v5055 = vmul.f32 %v4959, %v5014
      %v5056 = vmul.f32 %v4960, %v5019
      %v5057 = vmul.f32 %v4961, %v5024
      %v5058 = vmul.f32 %v4962, %v5029
      %v5059 = vmul.f32 %v4963, %v5034
      %v5060 = vmul.f32 %v4964, %v5039
      %v5061 = vmul.f32 %v4965, %v5044
      %5062 = vset.pattern.permute.xlu0 13
      %5063 = vperm.xlu0 %5062, %v2079
      %v5064 = vpop.permute.xlu0 %5063
      %5066 = vset.pattern.permute.xlu0 13
      %5067 = vperm.xlu0 %5066, %v2080
      %v5068 = vpop.permute.xlu0 %5067
      %5070 = vset.pattern.permute.xlu0 13
      %5071 = vperm.xlu0 %5070, %v2081
      %v5072 = vpop.permute.xlu0 %5071
      %5074 = vset.pattern.permute.xlu0 13
      %5075 = vperm.xlu0 %5074, %v2082
      %v5076 = vpop.permute.xlu0 %5075
      %5078 = vset.pattern.permute.xlu0 13
      %5079 = vperm.xlu0 %5078, %v2083
      %v5080 = vpop.permute.xlu0 %5079
      %5082 = vset.pattern.permute.xlu0 13
      %5083 = vperm.xlu0 %5082, %v2084
      %v5084 = vpop.permute.xlu0 %5083
      %5086 = vset.pattern.permute.xlu0 13
      %5087 = vperm.xlu0 %5086, %v2085
      %v5088 = vpop.permute.xlu0 %5087
      %5090 = vset.pattern.permute.xlu0 13
      %5091 = vperm.xlu0 %5090, %v2086
      %v5092 = vpop.permute.xlu0 %5091
      %5094 = vset.pattern.permute.xlu0 13
      %5095 = vperm.xlu0 %5094, %v2087
      %v5096 = vpop.permute.xlu0 %5095
      %5098 = vset.pattern.permute.xlu0 13
      %5099 = vperm.xlu0 %5098, %v2088
      %v5100 = vpop.permute.xlu0 %5099
      %5102 = vset.pattern.permute.xlu0 13
      %5103 = vperm.xlu0 %5102, %v2089
      %v5104 = vpop.permute.xlu0 %5103
      %5106 = vset.pattern.permute.xlu0 13
      %5107 = vperm.xlu0 %5106, %v2090
      %v5108 = vpop.permute.xlu0 %5107
      %5110 = vset.pattern.permute.xlu0 13
      %5111 = vperm.xlu0 %5110, %v2091
      %v5112 = vpop.permute.xlu0 %5111
      %5114 = vset.pattern.permute.xlu0 13
      %5115 = vperm.xlu0 %5114, %v2092
      %v5116 = vpop.permute.xlu0 %5115
      %5118 = vset.pattern.permute.xlu0 13
      %5119 = vperm.xlu0 %5118, %v2093
      %v5120 = vpop.permute.xlu0 %5119
      %5122 = vset.pattern.permute.xlu0 13
      %5123 = vperm.xlu0 %5122, %v2094
      %v5124 = vpop.permute.xlu0 %5123
      %v5126 = vsub.f32 %v5064, %v510
      %v5127 = vsub.f32 %v5068, %v510
      %v5128 = vsub.f32 %v5072, %v510
      %v5129 = vsub.f32 %v5076, %v510
      %v5130 = vsub.f32 %v5080, %v510
      %v5131 = vsub.f32 %v5084, %v510
      %v5132 = vsub.f32 %v5088, %v510
      %v5133 = vsub.f32 %v5092, %v510
      %v5134 = vsub.f32 %v5096, %v510
      %v5135 = vsub.f32 %v5100, %v510
      %v5136 = vsub.f32 %v5104, %v510
      %v5137 = vsub.f32 %v5108, %v510
      %v5138 = vsub.f32 %v5112, %v510
      %v5139 = vsub.f32 %v5116, %v510
      %v5140 = vsub.f32 %v5120, %v510
      %v5141 = vsub.f32 %v5124, %v510
      %v5142 = vand.u32 2147483647, %v5126
      %v5143 = vand.u32 2147483647, %v5127
      %v5144 = vand.u32 2147483647, %v5128
      %v5145 = vand.u32 2147483647, %v5129
      %v5146 = vand.u32 2147483647, %v5130
      %v5147 = vand.u32 2147483647, %v5131
      %v5148 = vand.u32 2147483647, %v5132
      %v5149 = vand.u32 2147483647, %v5133
      %v5150 = vand.u32 2147483647, %v5134
      %v5151 = vand.u32 2147483647, %v5135
      %v5152 = vand.u32 2147483647, %v5136
      %v5153 = vand.u32 2147483647, %v5137
      %v5154 = vand.u32 2147483647, %v5138
      %v5155 = vand.u32 2147483647, %v5139
      %v5156 = vand.u32 2147483647, %v5140
      %v5157 = vand.u32 2147483647, %v5141
      %v5158 = vsub.f32 1.0, %v5142
      %v5159 = vsub.f32 1.0, %v5143
      %v5160 = vsub.f32 1.0, %v5144
      %v5161 = vsub.f32 1.0, %v5145
      %v5162 = vsub.f32 1.0, %v5146
      %v5163 = vsub.f32 1.0, %v5147
      %v5164 = vsub.f32 1.0, %v5148
      %v5165 = vsub.f32 1.0, %v5149
      %v5166 = vsub.f32 1.0, %v5150
      %v5167 = vsub.f32 1.0, %v5151
      %v5168 = vsub.f32 1.0, %v5152
      %v5169 = vsub.f32 1.0, %v5153
      %v5170 = vsub.f32 1.0, %v5154
      %v5171 = vsub.f32 1.0, %v5155
      %v5172 = vsub.f32 1.0, %v5156
      %v5173 = vsub.f32 1.0, %v5157
      %v5174 = vmax.f32 %v5158, 0.0
      %v5175 = vmax.f32 %v5159, 0.0
      %v5176 = vmax.f32 %v5160, 0.0
      %v5177 = vmax.f32 %v5161, 0.0
      %v5178 = vmax.f32 %v5162, 0.0
      %v5179 = vmax.f32 %v5163, 0.0
      %v5180 = vmax.f32 %v5164, 0.0
      %v5181 = vmax.f32 %v5165, 0.0
      %v5182 = vmax.f32 %v5166, 0.0
      %v5183 = vmax.f32 %v5167, 0.0
      %v5184 = vmax.f32 %v5168, 0.0
      %v5185 = vmax.f32 %v5169, 0.0
      %v5186 = vmax.f32 %v5170, 0.0
      %v5187 = vmax.f32 %v5171, 0.0
      %v5188 = vmax.f32 %v5172, 0.0
      %v5189 = vmax.f32 %v5173, 0.0
      %v5190 = vpack.c.bf16 %v5047, %v5046
      %v5191 = vpack.c.bf16 %v5049, %v5048
      %v5192 = vpack.c.bf16 %v5051, %v5050
      %v5193 = vpack.c.bf16 %v5053, %v5052
      %v5194 = vpack.c.bf16 %v5055, %v5054
      %v5195 = vpack.c.bf16 %v5057, %v5056
      %v5196 = vpack.c.bf16 %v5059, %v5058
      %v5197 = vpack.c.bf16 %v5061, %v5060
      %v5199 = vsel %vm1360, %v5190, 0
      %v5202 = vsel %vm1360, %v5191, 0
      %v5205 = vsel %vm1360, %v5192, 0
      %v5208 = vsel %vm1360, %v5193, 0
      %v5211 = vsel %vm1360, %v5194, 0
      %v5214 = vsel %vm1360, %v5195, 0
      %v5217 = vsel %vm1360, %v5196, 0
      %v5220 = vsel %vm1360, %v5197, 0
      %5222 = vmatprep.subr.bf16.mxu0 0
      %5223 = vmatpush1.bf16.msra.mxu0 %v1357
      %5224 = vmatprep.subr.bf16.mxu0 0
      %5225 = vmatpush1.bf16.msra.mxu0 %v1387
      %5226 = vmatprep.subr.bf16.mxu0 0
      %5227 = vmatpush1.bf16.msra.mxu0 0
      %5228 = vmatprep.subr.bf16.mxu0 0
      %5229 = vmatpush1.bf16.msra.mxu0 0
      %5230 = vmatprep.subr.bf16.mxu0 0
      %5231 = vmatpush1.bf16.msra.mxu0 0
      %5232 = vmatprep.subr.bf16.mxu0 0
      %5233 = vmatpush1.bf16.msra.mxu0 0
      %5234 = vmatprep.subr.bf16.mxu0 0
      %5235 = vmatpush1.bf16.msra.mxu0 0
      %5236 = vmatprep.subr.bf16.mxu0 0
      %5237 = vmatpush1.bf16.msra.mxu0 0
      %5238 = vmatprep.subr.bf16.mxu0 0
      %5239 = vmatpush1.bf16.msra.mxu0 0
      %5240 = vmatprep.subr.bf16.mxu0 0
      %5241 = vmatpush1.bf16.msra.mxu0 0
      %5242 = vmatprep.subr.bf16.mxu0 0
      %5243 = vmatpush1.bf16.msra.mxu0 0
      %5244 = vmatprep.subr.bf16.mxu0 0
      %5245 = vmatpush1.bf16.msra.mxu0 0
      %5246 = vmatprep.subr.bf16.mxu0 0
      %5247 = vmatpush1.bf16.msra.mxu0 0
      %5248 = vmatprep.subr.bf16.mxu0 0
      %5249 = vmatpush1.bf16.msra.mxu0 0
      %5250 = vmatprep.subr.bf16.mxu0 0
      %5251 = vmatpush1.bf16.msra.mxu0 0
      %5252 = vmatprep.subr.bf16.mxu0 0
      %5253 = vmatpush1.bf16.msra.mxu0 0
      %5254 = vmatprep.mubr.bf16.mxu0 0
      %5255 = vmatmul.mubr.bf16.gmra.mrb[0].mxu0 %v5199
      %v5256 = vpop.f32.mrb[0].mxu0
      %v5257 = vadd.f32 0.0, %v5256
      %v5258 = vpop.f32.mrb[0].mxu0
      %v5259 = vpop.f32.mrb[0].mxu0
      %v5260 = vadd.f32 0.0, %v5259
      %v5261 = vpop.f32.mrb[0].mxu0
      %5262 = vmatprep.mubr.bf16.mxu0 0
      %5263 = vmatmul.mubr.bf16.gmra.mrb[0].mxu0 %v5202
      %v5264 = vpop.f32.mrb[0].mxu0
      %v5265 = vadd.f32 0.0, %v5264
      %v5266 = vpop.f32.mrb[0].mxu0
      %v5267 = vpop.f32.mrb[0].mxu0
      %v5268 = vadd.f32 0.0, %v5267
      %v5269 = vpop.f32.mrb[0].mxu0
      %5270 = vmatprep.mubr.bf16.mxu0 0
      %5271 = vmatmul.mubr.bf16.gmra.mrb[0].mxu0 %v5205
      %v5272 = vpop.f32.mrb[0].mxu0
      %v5273 = vadd.f32 0.0, %v5272
      %v5274 = vpop.f32.mrb[0].mxu0
      %v5275 = vpop.f32.mrb[0].mxu0
      %v5276 = vadd.f32 0.0, %v5275
      %v5277 = vpop.f32.mrb[0].mxu0
      %5278 = vmatprep.mubr.bf16.mxu0 0
      %5279 = vmatmul.mubr.bf16.gmra.mrb[0].mxu0 %v5208
      %v5280 = vpop.f32.mrb[0].mxu0
      %v5281 = vadd.f32 0.0, %v5280
      %v5282 = vpop.f32.mrb[0].mxu0
      %v5283 = vpop.f32.mrb[0].mxu0
      %v5284 = vadd.f32 0.0, %v5283
      %v5285 = vpop.f32.mrb[0].mxu0
      %5286 = vmatprep.mubr.bf16.mxu0 0
      %5287 = vmatmul.mubr.bf16.gmra.mrb[0].mxu0 %v5211
      %v5288 = vpop.f32.mrb[0].mxu0
      %v5289 = vadd.f32 0.0, %v5288
      %v5290 = vpop.f32.mrb[0].mxu0
      %v5291 = vpop.f32.mrb[0].mxu0
      %v5292 = vadd.f32 0.0, %v5291
      %v5293 = vpop.f32.mrb[0].mxu0
      %5294 = vmatprep.mubr.bf16.mxu0 0
      %5295 = vmatmul.mubr.bf16.gmra.mrb[0].mxu0 %v5214
      %v5296 = vpop.f32.mrb[0].mxu0
      %v5297 = vadd.f32 0.0, %v5296
      %v5298 = vpop.f32.mrb[0].mxu0
      %v5299 = vpop.f32.mrb[0].mxu0
      %v5300 = vadd.f32 0.0, %v5299
      %v5301 = vpop.f32.mrb[0].mxu0
      %5302 = vmatprep.mubr.bf16.mxu0 0
      %5303 = vmatmul.mubr.bf16.gmra.mrb[0].mxu0 %v5217
      %v5304 = vpop.f32.mrb[0].mxu0
      %v5305 = vadd.f32 0.0, %v5304
      %v5306 = vpop.f32.mrb[0].mxu0
      %v5307 = vpop.f32.mrb[0].mxu0
      %v5308 = vadd.f32 0.0, %v5307
      %v5309 = vpop.f32.mrb[0].mxu0
      %5310 = vmatprep.mubr.bf16.mxu0 0
      %5311 = vmatmul.mubr.bf16.gmra.mrb[0].mxu0 %v5220
      %v5312 = vpop.f32.mrb[0].mxu0
      %v5313 = vadd.f32 0.0, %v5312
      %v5314 = vpop.f32.mrb[0].mxu0
      %v5315 = vpop.f32.mrb[0].mxu0
      %v5316 = vadd.f32 0.0, %v5315
      %v5317 = vpop.f32.mrb[0].mxu0
      %5318 = vdwg.mxu0
      %v5319 = vmul.f32 %v5257, %v5174
      %v5320 = vmul.f32 %v5260, %v5175
      %v5321 = vmul.f32 %v5265, %v5176
      %v5322 = vmul.f32 %v5268, %v5177
      %v5323 = vmul.f32 %v5273, %v5178
      %v5324 = vmul.f32 %v5276, %v5179
      %v5325 = vmul.f32 %v5281, %v5180
      %v5326 = vmul.f32 %v5284, %v5181
      %v5327 = vmul.f32 %v5289, %v5182
      %v5328 = vmul.f32 %v5292, %v5183
      %v5329 = vmul.f32 %v5297, %v5184
      %v5330 = vmul.f32 %v5300, %v5185
      %v5331 = vmul.f32 %v5305, %v5186
      %v5332 = vmul.f32 %v5308, %v5187
      %v5333 = vmul.f32 %v5313, %v5188
      %v5334 = vmul.f32 %v5316, %v5189
      %v5335 = vpack.c.bf16 %v5320, %v5319
      %v5336 = vpack.c.bf16 %v5322, %v5321
      %v5337 = vpack.c.bf16 %v5324, %v5323
      %v5338 = vpack.c.bf16 %v5326, %v5325
      %v5339 = vpack.c.bf16 %v5328, %v5327
      %v5340 = vpack.c.bf16 %v5330, %v5329
      %v5341 = vpack.c.bf16 %v5332, %v5331
      %v5342 = vpack.c.bf16 %v5334, %v5333
      %s5343 = scalar_lea.vmem %s2, 144
      %v5344 = vld [vmem:[%s5343] sm:$0xf]
      %v5345 = vld [vmem:[%s5343 + $0x4] sm:$0xf]
      %v5346 = vld [vmem:[%s5343 + $0x8] sm:$0xf]
      %v5347 = vld [vmem:[%s5343 + $0xc] sm:$0xf]
      %v5348 = vld [vmem:[%s5343 + $0x10] sm:$0xf]
      %v5349 = vld [vmem:[%s5343 + $0x14] sm:$0xf]
      %v5350 = vld [vmem:[%s5343 + $0x18] sm:$0xf]
      %v5351 = vld [vmem:[%s5343 + $0x1c] sm:$0xf]
      %v5352 = vld [vmem:[%s5343 + $0x20] sm:$0xf]
      %v5362 = vunpack.c.l.b16 %v5344
      %v5363 = vunpack.c.l.b16 %v5345
      %v5364 = vunpack.c.l.b16 %v5346
      %v5365 = vunpack.c.l.b16 %v5347
      %v5366 = vunpack.c.l.b16 %v5348
      %v5367 = vunpack.c.l.b16 %v5349
      %v5368 = vunpack.c.l.b16 %v5350
      %v5369 = vunpack.c.l.b16 %v5351
      %v5370 = vunpack.c.l.b16 %v5352
      %v5371 = vpack.c.b16 %v5363, %v5362
      %v5372 = vpack.c.b16 %v5365, %v5364
      %v5373 = vpack.c.b16 %v5367, %v5366
      %v5374 = vpack.c.b16 %v5369, %v5368
      %v5375 = vpack.c.b16 %v5370, %v5370
      %v5381 = vsel %vm2429, %v5335, 0
      %v5384 = vsel %vm2429, %v5336, 0
      %v5387 = vsel %vm2429, %v5337, 0
      %v5390 = vsel %vm2429, %v5338, 0
      %v5393 = vsel %vm2429, %v5339, 0
      %v5396 = vsel %vm2429, %v5340, 0
      %v5399 = vsel %vm2429, %v5341, 0
      %v5402 = vsel %vm2429, %v5342, 0
      %v5405 = vsel %vm2454, %v5375, 0
      %5407 = vmatprep.subr.bf16.mxu0 0
      %5408 = vmatpush1.bf16.msra.mxu0 %v5371
      %5409 = vmatprep.subr.bf16.mxu0 0
      %5410 = vmatpush1.bf16.msra.mxu0 %v5372
      %5411 = vmatprep.subr.bf16.mxu0 0
      %5412 = vmatpush1.bf16.msra.mxu0 %v5373
      %5413 = vmatprep.subr.bf16.mxu0 0
      %5414 = vmatpush1.bf16.msra.mxu0 %v5374
      %5415 = vmatprep.subr.bf16.mxu0 0
      %5416 = vmatpush1.bf16.msra.mxu0 %v5405
      %5417 = vmatprep.subr.bf16.mxu0 0
      %5418 = vmatpush1.bf16.msra.mxu0 0
      %5419 = vmatprep.subr.bf16.mxu0 0
      %5420 = vmatpush1.bf16.msra.mxu0 0
      %5421 = vmatprep.subr.bf16.mxu0 0
      %5422 = vmatpush1.bf16.msra.mxu0 0
      %5423 = vmatprep.subr.bf16.mxu0 0
      %5424 = vmatpush1.bf16.msra.mxu0 0
      %5425 = vmatprep.subr.bf16.mxu0 0
      %5426 = vmatpush1.bf16.msra.mxu0 0
      %5427 = vmatprep.subr.bf16.mxu0 0
      %5428 = vmatpush1.bf16.msra.mxu0 0
      %5429 = vmatprep.subr.bf16.mxu0 0
      %5430 = vmatpush1.bf16.msra.mxu0 0
      %5431 = vmatprep.subr.bf16.mxu0 0
      %5432 = vmatpush1.bf16.msra.mxu0 0
      %5433 = vmatprep.subr.bf16.mxu0 0
      %5434 = vmatpush1.bf16.msra.mxu0 0
      %5435 = vmatprep.subr.bf16.mxu0 0
      %5436 = vmatpush1.bf16.msra.mxu0 0
      %5437 = vmatprep.subr.bf16.mxu0 0
      %5438 = vmatpush1.bf16.msra.mxu0 0
      %5439 = vmatprep.mubr.bf16.mxu0 0
      %5440 = vmatmul.mubr.bf16.gmra.mrb[0].mxu0 %v5381
      %v5441 = vpop.f32.mrb[0].mxu0
      %v5442 = vadd.f32 0.0, %v5441
      %v5443 = vpop.f32.mrb[0].mxu0
      %v5444 = vpop.f32.mrb[0].mxu0
      %v5445 = vadd.f32 0.0, %v5444
      %v5446 = vpop.f32.mrb[0].mxu0
      %5447 = vmatprep.mubr.bf16.mxu0 0
      %5448 = vmatmul.mubr.bf16.gmra.mrb[0].mxu0 %v5384
      %v5449 = vpop.f32.mrb[0].mxu0
      %v5450 = vadd.f32 0.0, %v5449
      %v5451 = vpop.f32.mrb[0].mxu0
      %v5452 = vpop.f32.mrb[0].mxu0
      %v5453 = vadd.f32 0.0, %v5452
      %v5454 = vpop.f32.mrb[0].mxu0
      %5455 = vmatprep.mubr.bf16.mxu0 0
      %5456 = vmatmul.mubr.bf16.gmra.mrb[0].mxu0 %v5387
      %v5457 = vpop.f32.mrb[0].mxu0
      %v5458 = vadd.f32 0.0, %v5457
      %v5459 = vpop.f32.mrb[0].mxu0
      %v5460 = vpop.f32.mrb[0].mxu0
      %v5461 = vadd.f32 0.0, %v5460
      %v5462 = vpop.f32.mrb[0].mxu0
      %5463 = vmatprep.mubr.bf16.mxu0 0
      %5464 = vmatmul.mubr.bf16.gmra.mrb[0].mxu0 %v5390
      %v5465 = vpop.f32.mrb[0].mxu0
      %v5466 = vadd.f32 0.0, %v5465
      %v5467 = vpop.f32.mrb[0].mxu0
      %v5468 = vpop.f32.mrb[0].mxu0
      %v5469 = vadd.f32 0.0, %v5468
      %v5470 = vpop.f32.mrb[0].mxu0
      %5471 = vmatprep.mubr.bf16.mxu0 0
      %5472 = vmatmul.mubr.bf16.gmra.mrb[0].mxu0 %v5393
      %v5473 = vpop.f32.mrb[0].mxu0
      %v5474 = vadd.f32 0.0, %v5473
      %v5475 = vpop.f32.mrb[0].mxu0
      %v5476 = vpop.f32.mrb[0].mxu0
      %v5477 = vadd.f32 0.0, %v5476
      %v5478 = vpop.f32.mrb[0].mxu0
      %5479 = vmatprep.mubr.bf16.mxu0 0
      %5480 = vmatmul.mubr.bf16.gmra.mrb[0].mxu0 %v5396
      %v5481 = vpop.f32.mrb[0].mxu0
      %v5482 = vadd.f32 0.0, %v5481
      %v5483 = vpop.f32.mrb[0].mxu0
      %v5484 = vpop.f32.mrb[0].mxu0
      %v5485 = vadd.f32 0.0, %v5484
      %v5486 = vpop.f32.mrb[0].mxu0
      %5487 = vmatprep.mubr.bf16.mxu0 0
      %5488 = vmatmul.mubr.bf16.gmra.mrb[0].mxu0 %v5399
      %v5489 = vpop.f32.mrb[0].mxu0
      %v5490 = vadd.f32 0.0, %v5489
      %v5491 = vpop.f32.mrb[0].mxu0
      %v5492 = vpop.f32.mrb[0].mxu0
      %v5493 = vadd.f32 0.0, %v5492
      %v5494 = vpop.f32.mrb[0].mxu0
      %5495 = vmatprep.mubr.bf16.mxu0 0
      %5496 = vmatmul.mubr.bf16.gmra.mrb[0].mxu0 %v5402
      %v5497 = vpop.f32.mrb[0].mxu0
      %v5498 = vadd.f32 0.0, %v5497
      %v5499 = vpop.f32.mrb[0].mxu0
      %v5500 = vpop.f32.mrb[0].mxu0
      %v5501 = vadd.f32 0.0, %v5500
      %v5502 = vpop.f32.mrb[0].mxu0
      %5503 = vdwg.mxu0
      %v5504 = vadd.f32 %v4678, %v5442
      %v5505 = vadd.f32 %v4679, %v5445
      %v5506 = vadd.f32 %v4680, %v5450
      %v5507 = vadd.f32 %v4681, %v5453
      %v5508 = vadd.f32 %v4682, %v5458
      %v5509 = vadd.f32 %v4683, %v5461
      %v5510 = vadd.f32 %v4684, %v5466
      %v5511 = vadd.f32 %v4685, %v5469
      %v5512 = vadd.f32 %v4686, %v5474
      %v5513 = vadd.f32 %v4687, %v5477
      %v5514 = vadd.f32 %v4688, %v5482
      %v5515 = vadd.f32 %v4689, %v5485
      %v5516 = vadd.f32 %v4690, %v5490
      %v5517 = vadd.f32 %v4691, %v5493
      %v5518 = vadd.f32 %v4692, %v5498
      %v5519 = vadd.f32 %v4693, %v5501
      %vm5520 = vmand %vm3820, %vm2802
      %vm5521 = vmand %vm3821, %vm2803
      %vm5522 = vmand %vm3822, %vm2804
      %vm5523 = vmand %vm3823, %vm2805
      %vm5524 = vmand %vm3824, %vm2806
      %vm5525 = vmand %vm3825, %vm2807
      %vm5526 = vmand %vm3826, %vm2808
      %vm5527 = vmand %vm3827, %vm2809
      %vm5528 = vmand %vm3828, %vm2810
      %vm5529 = vmand %vm3829, %vm2811
      %vm5530 = vmand %vm3830, %vm2812
      %vm5531 = vmand %vm3831, %vm2813
      %vm5532 = vmand %vm3832, %vm2814
      %vm5533 = vmand %vm3833, %vm2815
      %vm5534 = vmand %vm3834, %vm2816
      %vm5535 = vmand %vm3835, %vm2817
      %vm5536 = vmand %vm5520, %vm2898
      %vm5537 = vmand %vm5521, %vm2899
      %vm5538 = vmand %vm5522, %vm2900
      %vm5539 = vmand %vm5523, %vm2901
      %vm5540 = vmand %vm5524, %vm2902
      %vm5541 = vmand %vm5525, %vm2903
      %vm5542 = vmand %vm5526, %vm2904
      %vm5543 = vmand %vm5527, %vm2905
      %vm5544 = vmand %vm5528, %vm2906
      %vm5545 = vmand %vm5529, %vm2907
      %vm5546 = vmand %vm5530, %vm2908
      %vm5547 = vmand %vm5531, %vm2909
      %vm5548 = vmand %vm5532, %vm2910
      %vm5549 = vmand %vm5533, %vm2911
      %vm5550 = vmand %vm5534, %vm2912
      %vm5551 = vmand %vm5535, %vm2913
      %v5552 = vsel %vm5536, 1, 0
      %v5553 = vsel %vm5537, 1, 0
      %v5554 = vsel %vm5538, 1, 0
      %v5555 = vsel %vm5539, 1, 0
      %v5556 = vsel %vm5540, 1, 0
      %v5557 = vsel %vm5541, 1, 0
      %v5558 = vsel %vm5542, 1, 0
      %v5559 = vsel %vm5543, 1, 0
      %v5560 = vsel %vm5544, 1, 0
      %v5561 = vsel %vm5545, 1, 0
      %v5562 = vsel %vm5546, 1, 0
      %v5563 = vsel %vm5547, 1, 0
      %v5564 = vsel %vm5548, 1, 0
      %v5565 = vsel %vm5549, 1, 0
      %v5566 = vsel %vm5550, 1, 0
      %v5567 = vsel %vm5551, 1, 0
      %v5568 = vcvt.s32.f32 %v5552
      %v5569 = vcvt.s32.f32 %v5553
      %v5570 = vcvt.s32.f32 %v5554
      %v5571 = vcvt.s32.f32 %v5555
      %v5572 = vcvt.s32.f32 %v5556
      %v5573 = vcvt.s32.f32 %v5557
      %v5574 = vcvt.s32.f32 %v5558
      %v5575 = vcvt.s32.f32 %v5559
      %v5576 = vcvt.s32.f32 %v5560
      %v5577 = vcvt.s32.f32 %v5561
      %v5578 = vcvt.s32.f32 %v5562
      %v5579 = vcvt.s32.f32 %v5563
      %v5580 = vcvt.s32.f32 %v5564
      %v5581 = vcvt.s32.f32 %v5565
      %v5582 = vcvt.s32.f32 %v5566
      %v5583 = vcvt.s32.f32 %v5567
      %5600 = vrot.lane.b32.xlu0 %v5568, 18
      %v5601 = vpop.permute.xlu0 %5600
      %5602 = vrot.lane.b32.xlu0 %v5569, 18
      %v5603 = vpop.permute.xlu0 %5602
      %5604 = vrot.lane.b32.xlu0 %v5570, 18
      %v5605 = vpop.permute.xlu0 %5604
      %5606 = vrot.lane.b32.xlu0 %v5571, 18
      %v5607 = vpop.permute.xlu0 %5606
      %5608 = vrot.lane.b32.xlu0 %v5572, 18
      %v5609 = vpop.permute.xlu0 %5608
      %5610 = vrot.lane.b32.xlu0 %v5573, 18
      %v5611 = vpop.permute.xlu0 %5610
      %5612 = vrot.lane.b32.xlu0 %v5574, 18
      %v5613 = vpop.permute.xlu0 %5612
      %5614 = vrot.lane.b32.xlu0 %v5575, 18
      %v5615 = vpop.permute.xlu0 %5614
      %5616 = vrot.lane.b32.xlu0 %v5576, 18
      %v5617 = vpop.permute.xlu0 %5616
      %5618 = vrot.lane.b32.xlu0 %v5577, 18
      %v5619 = vpop.permute.xlu0 %5618
      %5620 = vrot.lane.b32.xlu0 %v5578, 18
      %v5621 = vpop.permute.xlu0 %5620
      %5622 = vrot.lane.b32.xlu0 %v5579, 18
      %v5623 = vpop.permute.xlu0 %5622
      %5624 = vrot.lane.b32.xlu0 %v5580, 18
      %v5625 = vpop.permute.xlu0 %5624
      %5626 = vrot.lane.b32.xlu0 %v5581, 18
      %v5627 = vpop.permute.xlu0 %5626
      %5628 = vrot.lane.b32.xlu0 %v5582, 18
      %v5629 = vpop.permute.xlu0 %5628
      %5630 = vrot.lane.b32.xlu0 %v5583, 18
      %v5631 = vpop.permute.xlu0 %5630
      %v5648 = vmul.f32 %v342, %v5601
      %v5649 = vmul.f32 %v344, %v5603
      %v5650 = vmul.f32 %v346, %v5605
      %v5651 = vmul.f32 %v348, %v5607
      %v5652 = vmul.f32 %v350, %v5609
      %v5653 = vmul.f32 %v352, %v5611
      %v5654 = vmul.f32 %v354, %v5613
      %v5655 = vmul.f32 %v356, %v5615
      %v5656 = vmul.f32 %v358, %v5617
      %v5657 = vmul.f32 %v360, %v5619
      %v5658 = vmul.f32 %v362, %v5621
      %v5659 = vmul.f32 %v364, %v5623
      %v5660 = vmul.f32 %v366, %v5625
      %v5661 = vmul.f32 %v368, %v5627
      %v5662 = vmul.f32 %v370, %v5629
      %v5663 = vmul.f32 %v372, %v5631
      %5664 = vset.pattern.permute.xlu0 5
      %5665 = vperm.xlu0 %5664, %v3980
      %v5666 = vpop.permute.xlu0 %5665
      %5668 = vset.pattern.permute.xlu0 5
      %5669 = vperm.xlu0 %5668, %v3981
      %v5670 = vpop.permute.xlu0 %5669
      %5672 = vset.pattern.permute.xlu0 5
      %5673 = vperm.xlu0 %5672, %v3982
      %v5674 = vpop.permute.xlu0 %5673
      %5676 = vset.pattern.permute.xlu0 5
      %5677 = vperm.xlu0 %5676, %v3983
      %v5678 = vpop.permute.xlu0 %5677
      %5680 = vset.pattern.permute.xlu0 5
      %5681 = vperm.xlu0 %5680, %v3984
      %v5682 = vpop.permute.xlu0 %5681
      %5684 = vset.pattern.permute.xlu0 5
      %5685 = vperm.xlu0 %5684, %v3985
      %v5686 = vpop.permute.xlu0 %5685
      %5688 = vset.pattern.permute.xlu0 5
      %5689 = vperm.xlu0 %5688, %v3986
      %v5690 = vpop.permute.xlu0 %5689
      %5692 = vset.pattern.permute.xlu0 5
      %5693 = vperm.xlu0 %5692, %v3987
      %v5694 = vpop.permute.xlu0 %5693
      %5696 = vset.pattern.permute.xlu0 5
      %5697 = vperm.xlu0 %5696, %v3988
      %v5698 = vpop.permute.xlu0 %5697
      %5700 = vset.pattern.permute.xlu0 5
      %5701 = vperm.xlu0 %5700, %v3989
      %v5702 = vpop.permute.xlu0 %5701
      %5704 = vset.pattern.permute.xlu0 5
      %5705 = vperm.xlu0 %5704, %v3990
      %v5706 = vpop.permute.xlu0 %5705
      %5708 = vset.pattern.permute.xlu0 5
      %5709 = vperm.xlu0 %5708, %v3991
      %v5710 = vpop.permute.xlu0 %5709
      %5712 = vset.pattern.permute.xlu0 5
      %5713 = vperm.xlu0 %5712, %v3992
      %v5714 = vpop.permute.xlu0 %5713
      %5716 = vset.pattern.permute.xlu0 5
      %5717 = vperm.xlu0 %5716, %v3993
      %v5718 = vpop.permute.xlu0 %5717
      %5720 = vset.pattern.permute.xlu0 5
      %5721 = vperm.xlu0 %5720, %v3994
      %v5722 = vpop.permute.xlu0 %5721
      %5724 = vset.pattern.permute.xlu0 5
      %5725 = vperm.xlu0 %5724, %v3995
      %v5726 = vpop.permute.xlu0 %5725
      %v5728 = vsub.f32 %v5666, %v507
      %v5729 = vsub.f32 %v5670, %v507
      %v5730 = vsub.f32 %v5674, %v507
      %v5731 = vsub.f32 %v5678, %v507
      %v5732 = vsub.f32 %v5682, %v507
      %v5733 = vsub.f32 %v5686, %v507
      %v5734 = vsub.f32 %v5690, %v507
      %v5735 = vsub.f32 %v5694, %v507
      %v5736 = vsub.f32 %v5698, %v507
      %v5737 = vsub.f32 %v5702, %v507
      %v5738 = vsub.f32 %v5706, %v507
      %v5739 = vsub.f32 %v5710, %v507
      %v5740 = vsub.f32 %v5714, %v507
      %v5741 = vsub.f32 %v5718, %v507
      %v5742 = vsub.f32 %v5722, %v507
      %v5743 = vsub.f32 %v5726, %v507
      %v5744 = vand.u32 2147483647, %v5728
      %v5745 = vand.u32 2147483647, %v5729
      %v5746 = vand.u32 2147483647, %v5730
      %v5747 = vand.u32 2147483647, %v5731
      %v5748 = vand.u32 2147483647, %v5732
      %v5749 = vand.u32 2147483647, %v5733
      %v5750 = vand.u32 2147483647, %v5734
      %v5751 = vand.u32 2147483647, %v5735
      %v5752 = vand.u32 2147483647, %v5736
      %v5753 = vand.u32 2147483647, %v5737
      %v5754 = vand.u32 2147483647, %v5738
      %v5755 = vand.u32 2147483647, %v5739
      %v5756 = vand.u32 2147483647, %v5740
      %v5757 = vand.u32 2147483647, %v5741
      %v5758 = vand.u32 2147483647, %v5742
      %v5759 = vand.u32 2147483647, %v5743
      %v5760 = vsub.f32 1.0, %v5744
      %v5761 = vsub.f32 1.0, %v5745
      %v5762 = vsub.f32 1.0, %v5746
      %v5763 = vsub.f32 1.0, %v5747
      %v5764 = vsub.f32 1.0, %v5748
      %v5765 = vsub.f32 1.0, %v5749
      %v5766 = vsub.f32 1.0, %v5750
      %v5767 = vsub.f32 1.0, %v5751
      %v5768 = vsub.f32 1.0, %v5752
      %v5769 = vsub.f32 1.0, %v5753
      %v5770 = vsub.f32 1.0, %v5754
      %v5771 = vsub.f32 1.0, %v5755
      %v5772 = vsub.f32 1.0, %v5756
      %v5773 = vsub.f32 1.0, %v5757
      %v5774 = vsub.f32 1.0, %v5758
      %v5775 = vsub.f32 1.0, %v5759
      %v5776 = vmax.f32 %v5760, 0.0
      %v5777 = vmax.f32 %v5761, 0.0
      %v5778 = vmax.f32 %v5762, 0.0
      %v5779 = vmax.f32 %v5763, 0.0
      %v5780 = vmax.f32 %v5764, 0.0
      %v5781 = vmax.f32 %v5765, 0.0
      %v5782 = vmax.f32 %v5766, 0.0
      %v5783 = vmax.f32 %v5767, 0.0
      %v5784 = vmax.f32 %v5768, 0.0
      %v5785 = vmax.f32 %v5769, 0.0
      %v5786 = vmax.f32 %v5770, 0.0
      %v5787 = vmax.f32 %v5771, 0.0
      %v5788 = vmax.f32 %v5772, 0.0
      %v5789 = vmax.f32 %v5773, 0.0
      %v5790 = vmax.f32 %v5774, 0.0
      %v5791 = vmax.f32 %v5775, 0.0
      %5793 = vset.pattern.permute.xlu0 23
      %5794 = vperm.xlu0 %5793, %v5648
      %v5795 = vpop.permute.xlu0 %5794
      %5798 = vset.pattern.permute.xlu0 23
      %5799 = vperm.xlu0 %5798, %v5649
      %v5800 = vpop.permute.xlu0 %5799
      %5803 = vset.pattern.permute.xlu0 23
      %5804 = vperm.xlu0 %5803, %v5650
      %v5805 = vpop.permute.xlu0 %5804
      %5808 = vset.pattern.permute.xlu0 23
      %5809 = vperm.xlu0 %5808, %v5651
      %v5810 = vpop.permute.xlu0 %5809
      %5813 = vset.pattern.permute.xlu0 23
      %5814 = vperm.xlu0 %5813, %v5652
      %v5815 = vpop.permute.xlu0 %5814
      %5818 = vset.pattern.permute.xlu0 23
      %5819 = vperm.xlu0 %5818, %v5653
      %v5820 = vpop.permute.xlu0 %5819
      %5823 = vset.pattern.permute.xlu0 23
      %5824 = vperm.xlu0 %5823, %v5654
      %v5825 = vpop.permute.xlu0 %5824
      %5828 = vset.pattern.permute.xlu0 23
      %5829 = vperm.xlu0 %5828, %v5655
      %v5830 = vpop.permute.xlu0 %5829
      %5833 = vset.pattern.permute.xlu0 23
      %5834 = vperm.xlu0 %5833, %v5656
      %v5835 = vpop.permute.xlu0 %5834
      %5838 = vset.pattern.permute.xlu0 23
      %5839 = vperm.xlu0 %5838, %v5657
      %v5840 = vpop.permute.xlu0 %5839
      %5843 = vset.pattern.permute.xlu0 23
      %5844 = vperm.xlu0 %5843, %v5658
      %v5845 = vpop.permute.xlu0 %5844
      %5848 = vset.pattern.permute.xlu0 23
      %5849 = vperm.xlu0 %5848, %v5659
      %v5850 = vpop.permute.xlu0 %5849
      %5853 = vset.pattern.permute.xlu0 23
      %5854 = vperm.xlu0 %5853, %v5660
      %v5855 = vpop.permute.xlu0 %5854
      %5858 = vset.pattern.permute.xlu0 23
      %5859 = vperm.xlu0 %5858, %v5661
      %v5860 = vpop.permute.xlu0 %5859
      %5863 = vset.pattern.permute.xlu0 23
      %5864 = vperm.xlu0 %5863, %v5662
      %v5865 = vpop.permute.xlu0 %5864
      %5868 = vset.pattern.permute.xlu0 23
      %5869 = vperm.xlu0 %5868, %v5663
      %v5870 = vpop.permute.xlu0 %5869
      %v5872 = vmul.f32 %v5776, %v5795
      %v5873 = vmul.f32 %v5777, %v5800
      %v5874 = vmul.f32 %v5778, %v5805
      %v5875 = vmul.f32 %v5779, %v5810
      %v5876 = vmul.f32 %v5780, %v5815
      %v5877 = vmul.f32 %v5781, %v5820
      %v5878 = vmul.f32 %v5782, %v5825
      %v5879 = vmul.f32 %v5783, %v5830
      %v5880 = vmul.f32 %v5784, %v5835
      %v5881 = vmul.f32 %v5785, %v5840
      %v5882 = vmul.f32 %v5786, %v5845
      %v5883 = vmul.f32 %v5787, %v5850
      %v5884 = vmul.f32 %v5788, %v5855
      %v5885 = vmul.f32 %v5789, %v5860
      %v5886 = vmul.f32 %v5790, %v5865
      %v5887 = vmul.f32 %v5791, %v5870
      %5888 = vset.pattern.permute.xlu0 14
      %5889 = vperm.xlu0 %5888, %v3266
      %v5890 = vpop.permute.xlu0 %5889
      %5892 = vset.pattern.permute.xlu0 14
      %5893 = vperm.xlu0 %5892, %v3267
      %v5894 = vpop.permute.xlu0 %5893
      %5896 = vset.pattern.permute.xlu0 14
      %5897 = vperm.xlu0 %5896, %v3268
      %v5898 = vpop.permute.xlu0 %5897
      %5900 = vset.pattern.permute.xlu0 14
      %5901 = vperm.xlu0 %5900, %v3269
      %v5902 = vpop.permute.xlu0 %5901
      %5904 = vset.pattern.permute.xlu0 14
      %5905 = vperm.xlu0 %5904, %v3270
      %v5906 = vpop.permute.xlu0 %5905
      %5908 = vset.pattern.permute.xlu0 14
      %5909 = vperm.xlu0 %5908, %v3271
      %v5910 = vpop.permute.xlu0 %5909
      %5912 = vset.pattern.permute.xlu0 14
      %5913 = vperm.xlu0 %5912, %v3272
      %v5914 = vpop.permute.xlu0 %5913
      %5916 = vset.pattern.permute.xlu0 14
      %5917 = vperm.xlu0 %5916, %v3273
      %v5918 = vpop.permute.xlu0 %5917
      %5920 = vset.pattern.permute.xlu0 14
      %5921 = vperm.xlu0 %5920, %v3274
      %v5922 = vpop.permute.xlu0 %5921
      %5924 = vset.pattern.permute.xlu0 14
      %5925 = vperm.xlu0 %5924, %v3275
      %v5926 = vpop.permute.xlu0 %5925
      %5928 = vset.pattern.permute.xlu0 14
      %5929 = vperm.xlu0 %5928, %v3276
      %v5930 = vpop.permute.xlu0 %5929
      %5932 = vset.pattern.permute.xlu0 14
      %5933 = vperm.xlu0 %5932, %v3277
      %v5934 = vpop.permute.xlu0 %5933
      %5936 = vset.pattern.permute.xlu0 14
      %5937 = vperm.xlu0 %5936, %v3278
      %v5938 = vpop.permute.xlu0 %5937
      %5940 = vset.pattern.permute.xlu0 14
      %5941 = vperm.xlu0 %5940, %v3279
      %v5942 = vpop.permute.xlu0 %5941
      %5944 = vset.pattern.permute.xlu0 14
      %5945 = vperm.xlu0 %5944, %v3280
      %v5946 = vpop.permute.xlu0 %5945
      %5948 = vset.pattern.permute.xlu0 14
      %5949 = vperm.xlu0 %5948, %v3281
      %v5950 = vpop.permute.xlu0 %5949
      %v5952 = vsub.f32 %v5890, %v510
      %v5953 = vsub.f32 %v5894, %v510
      %v5954 = vsub.f32 %v5898, %v510
      %v5955 = vsub.f32 %v5902, %v510
      %v5956 = vsub.f32 %v5906, %v510
      %v5957 = vsub.f32 %v5910, %v510
      %v5958 = vsub.f32 %v5914, %v510
      %v5959 = vsub.f32 %v5918, %v510
      %v5960 = vsub.f32 %v5922, %v510
      %v5961 = vsub.f32 %v5926, %v510
      %v5962 = vsub.f32 %v5930, %v510
      %v5963 = vsub.f32 %v5934, %v510
      %v5964 = vsub.f32 %v5938, %v510
      %v5965 = vsub.f32 %v5942, %v510
      %v5966 = vsub.f32 %v5946, %v510
      %v5967 = vsub.f32 %v5950, %v510
      %v5968 = vand.u32 2147483647, %v5952
      %v5969 = vand.u32 2147483647, %v5953
      %v5970 = vand.u32 2147483647, %v5954
      %v5971 = vand.u32 2147483647, %v5955
      %v5972 = vand.u32 2147483647, %v5956
      %v5973 = vand.u32 2147483647, %v5957
      %v5974 = vand.u32 2147483647, %v5958
      %v5975 = vand.u32 2147483647, %v5959
      %v5976 = vand.u32 2147483647, %v5960
      %v5977 = vand.u32 2147483647, %v5961
      %v5978 = vand.u32 2147483647, %v5962
      %v5979 = vand.u32 2147483647, %v5963
      %v5980 = vand.u32 2147483647, %v5964
      %v5981 = vand.u32 2147483647, %v5965
      %v5982 = vand.u32 2147483647, %v5966
      %v5983 = vand.u32 2147483647, %v5967
      %v5984 = vsub.f32 1.0, %v5968
      %v5985 = vsub.f32 1.0, %v5969
      %v5986 = vsub.f32 1.0, %v5970
      %v5987 = vsub.f32 1.0, %v5971
      %v5988 = vsub.f32 1.0, %v5972
      %v5989 = vsub.f32 1.0, %v5973
      %v5990 = vsub.f32 1.0, %v5974
      %v5991 = vsub.f32 1.0, %v5975
      %v5992 = vsub.f32 1.0, %v5976
      %v5993 = vsub.f32 1.0, %v5977
      %v5994 = vsub.f32 1.0, %v5978
      %v5995 = vsub.f32 1.0, %v5979
      %v5996 = vsub.f32 1.0, %v5980
      %v5997 = vsub.f32 1.0, %v5981
      %v5998 = vsub.f32 1.0, %v5982
      %v5999 = vsub.f32 1.0, %v5983
      %v6000 = vmax.f32 %v5984, 0.0
      %v6001 = vmax.f32 %v5985, 0.0
      %v6002 = vmax.f32 %v5986, 0.0
      %v6003 = vmax.f32 %v5987, 0.0
      %v6004 = vmax.f32 %v5988, 0.0
      %v6005 = vmax.f32 %v5989, 0.0
      %v6006 = vmax.f32 %v5990, 0.0
      %v6007 = vmax.f32 %v5991, 0.0
      %v6008 = vmax.f32 %v5992, 0.0
      %v6009 = vmax.f32 %v5993, 0.0
      %v6010 = vmax.f32 %v5994, 0.0
      %v6011 = vmax.f32 %v5995, 0.0
      %v6012 = vmax.f32 %v5996, 0.0
      %v6013 = vmax.f32 %v5997, 0.0
      %v6014 = vmax.f32 %v5998, 0.0
      %v6015 = vmax.f32 %v5999, 0.0
      %v6016 = vpack.c.bf16 %v5873, %v5872
      %v6017 = vpack.c.bf16 %v5875, %v5874
      %v6018 = vpack.c.bf16 %v5877, %v5876
      %v6019 = vpack.c.bf16 %v5879, %v5878
      %v6020 = vpack.c.bf16 %v5881, %v5880
      %v6021 = vpack.c.bf16 %v5883, %v5882
      %v6022 = vpack.c.bf16 %v5885, %v5884
      %v6023 = vpack.c.bf16 %v5887, %v5886
      %v6025 = vsel %vm1360, %v6016, 0
      %v6028 = vsel %vm1360, %v6017, 0
      %v6031 = vsel %vm1360, %v6018, 0
      %v6034 = vsel %vm1360, %v6019, 0
      %v6037 = vsel %vm1360, %v6020, 0
      %v6040 = vsel %vm1360, %v6021, 0
      %v6043 = vsel %vm1360, %v6022, 0
      %v6046 = vsel %vm1360, %v6023, 0
      %6048 = vmatprep.subr.bf16.mxu0 0
      %6049 = vmatpush1.bf16.msra.mxu0 %v1357
      %6050 = vmatprep.subr.bf16.mxu0 0
      %6051 = vmatpush1.bf16.msra.mxu0 %v1387
      %6052 = vmatprep.subr.bf16.mxu0 0
      %6053 = vmatpush1.bf16.msra.mxu0 0
      %6054 = vmatprep.subr.bf16.mxu0 0
      %6055 = vmatpush1.bf16.msra.mxu0 0
      %6056 = vmatprep.subr.bf16.mxu0 0
      %6057 = vmatpush1.bf16.msra.mxu0 0
      %6058 = vmatprep.subr.bf16.mxu0 0
      %6059 = vmatpush1.bf16.msra.mxu0 0
      %6060 = vmatprep.subr.bf16.mxu0 0
      %6061 = vmatpush1.bf16.msra.mxu0 0
      %6062 = vmatprep.subr.bf16.mxu0 0
      %6063 = vmatpush1.bf16.msra.mxu0 0
      %6064 = vmatprep.subr.bf16.mxu0 0
      %6065 = vmatpush1.bf16.msra.mxu0 0
      %6066 = vmatprep.subr.bf16.mxu0 0
      %6067 = vmatpush1.bf16.msra.mxu0 0
      %6068 = vmatprep.subr.bf16.mxu0 0
      %6069 = vmatpush1.bf16.msra.mxu0 0
      %6070 = vmatprep.subr.bf16.mxu0 0
      %6071 = vmatpush1.bf16.msra.mxu0 0
      %6072 = vmatprep.subr.bf16.mxu0 0
      %6073 = vmatpush1.bf16.msra.mxu0 0
      %6074 = vmatprep.subr.bf16.mxu0 0
      %6075 = vmatpush1.bf16.msra.mxu0 0
      %6076 = vmatprep.subr.bf16.mxu0 0
      %6077 = vmatpush1.bf16.msra.mxu0 0
      %6078 = vmatprep.subr.bf16.mxu0 0
      %6079 = vmatpush1.bf16.msra.mxu0 0
      %6080 = vmatprep.mubr.bf16.mxu0 0
      %6081 = vmatmul.mubr.bf16.gmra.mrb[0].mxu0 %v6025
      %v6082 = vpop.f32.mrb[0].mxu0
      %v6083 = vadd.f32 0.0, %v6082
      %v6084 = vpop.f32.mrb[0].mxu0
      %v6085 = vpop.f32.mrb[0].mxu0
      %v6086 = vadd.f32 0.0, %v6085
      %v6087 = vpop.f32.mrb[0].mxu0
      %6088 = vmatprep.mubr.bf16.mxu0 0
      %6089 = vmatmul.mubr.bf16.gmra.mrb[0].mxu0 %v6028
      %v6090 = vpop.f32.mrb[0].mxu0
      %v6091 = vadd.f32 0.0, %v6090
      %v6092 = vpop.f32.mrb[0].mxu0
      %v6093 = vpop.f32.mrb[0].mxu0
      %v6094 = vadd.f32 0.0, %v6093
      %v6095 = vpop.f32.mrb[0].mxu0
      %6096 = vmatprep.mubr.bf16.mxu0 0
      %6097 = vmatmul.mubr.bf16.gmra.mrb[0].mxu0 %v6031
      %v6098 = vpop.f32.mrb[0].mxu0
      %v6099 = vadd.f32 0.0, %v6098
      %v6100 = vpop.f32.mrb[0].mxu0
      %v6101 = vpop.f32.mrb[0].mxu0
      %v6102 = vadd.f32 0.0, %v6101
      %v6103 = vpop.f32.mrb[0].mxu0
      %6104 = vmatprep.mubr.bf16.mxu0 0
      %6105 = vmatmul.mubr.bf16.gmra.mrb[0].mxu0 %v6034
      %v6106 = vpop.f32.mrb[0].mxu0
      %v6107 = vadd.f32 0.0, %v6106
      %v6108 = vpop.f32.mrb[0].mxu0
      %v6109 = vpop.f32.mrb[0].mxu0
      %v6110 = vadd.f32 0.0, %v6109
      %v6111 = vpop.f32.mrb[0].mxu0
      %6112 = vmatprep.mubr.bf16.mxu0 0
      %6113 = vmatmul.mubr.bf16.gmra.mrb[0].mxu0 %v6037
      %v6114 = vpop.f32.mrb[0].mxu0
      %v6115 = vadd.f32 0.0, %v6114
      %v6116 = vpop.f32.mrb[0].mxu0
      %v6117 = vpop.f32.mrb[0].mxu0
      %v6118 = vadd.f32 0.0, %v6117
      %v6119 = vpop.f32.mrb[0].mxu0
      %6120 = vmatprep.mubr.bf16.mxu0 0
      %6121 = vmatmul.mubr.bf16.gmra.mrb[0].mxu0 %v6040
      %v6122 = vpop.f32.mrb[0].mxu0
      %v6123 = vadd.f32 0.0, %v6122
      %v6124 = vpop.f32.mrb[0].mxu0
      %v6125 = vpop.f32.mrb[0].mxu0
      %v6126 = vadd.f32 0.0, %v6125
      %v6127 = vpop.f32.mrb[0].mxu0
      %6128 = vmatprep.mubr.bf16.mxu0 0
      %6129 = vmatmul.mubr.bf16.gmra.mrb[0].mxu0 %v6043
      %v6130 = vpop.f32.mrb[0].mxu0
      %v6131 = vadd.f32 0.0, %v6130
      %v6132 = vpop.f32.mrb[0].mxu0
      %v6133 = vpop.f32.mrb[0].mxu0
      %v6134 = vadd.f32 0.0, %v6133
      %v6135 = vpop.f32.mrb[0].mxu0
      %6136 = vmatprep.mubr.bf16.mxu0 0
      %6137 = vmatmul.mubr.bf16.gmra.mrb[0].mxu0 %v6046
      %v6138 = vpop.f32.mrb[0].mxu0
      %v6139 = vadd.f32 0.0, %v6138
      %v6140 = vpop.f32.mrb[0].mxu0
      %v6141 = vpop.f32.mrb[0].mxu0
      %v6142 = vadd.f32 0.0, %v6141
      %v6143 = vpop.f32.mrb[0].mxu0
      %6144 = vdwg.mxu0
      %v6145 = vmul.f32 %v6083, %v6000
      %v6146 = vmul.f32 %v6086, %v6001
      %v6147 = vmul.f32 %v6091, %v6002
      %v6148 = vmul.f32 %v6094, %v6003
      %v6149 = vmul.f32 %v6099, %v6004
      %v6150 = vmul.f32 %v6102, %v6005
      %v6151 = vmul.f32 %v6107, %v6006
      %v6152 = vmul.f32 %v6110, %v6007
      %v6153 = vmul.f32 %v6115, %v6008
      %v6154 = vmul.f32 %v6118, %v6009
      %v6155 = vmul.f32 %v6123, %v6010
      %v6156 = vmul.f32 %v6126, %v6011
      %v6157 = vmul.f32 %v6131, %v6012
      %v6158 = vmul.f32 %v6134, %v6013
      %v6159 = vmul.f32 %v6139, %v6014
      %v6160 = vmul.f32 %v6142, %v6015
      %v6161 = vpack.c.bf16 %v6146, %v6145
      %v6162 = vpack.c.bf16 %v6148, %v6147
      %v6163 = vpack.c.bf16 %v6150, %v6149
      %v6164 = vpack.c.bf16 %v6152, %v6151
      %v6165 = vpack.c.bf16 %v6154, %v6153
      %v6166 = vpack.c.bf16 %v6156, %v6155
      %v6167 = vpack.c.bf16 %v6158, %v6157
      %v6168 = vpack.c.bf16 %v6160, %v6159
      %s6169 = scalar_lea.vmem %s2, 180
      %v6170 = vld [vmem:[%s6169] sm:$0xf]
      %v6171 = vld [vmem:[%s6169 + $0x4] sm:$0xf]
      %v6172 = vld [vmem:[%s6169 + $0x8] sm:$0xf]
      %v6173 = vld [vmem:[%s6169 + $0xc] sm:$0xf]
      %v6174 = vld [vmem:[%s6169 + $0x10] sm:$0xf]
      %v6175 = vld [vmem:[%s6169 + $0x14] sm:$0xf]
      %v6176 = vld [vmem:[%s6169 + $0x18] sm:$0xf]
      %v6177 = vld [vmem:[%s6169 + $0x1c] sm:$0xf]
      %v6178 = vld [vmem:[%s6169 + $0x20] sm:$0xf]
      %v6188 = vunpack.c.l.b16 %v6170
      %v6189 = vunpack.c.l.b16 %v6171
      %v6190 = vunpack.c.l.b16 %v6172
      %v6191 = vunpack.c.l.b16 %v6173
      %v6192 = vunpack.c.l.b16 %v6174
      %v6193 = vunpack.c.l.b16 %v6175
      %v6194 = vunpack.c.l.b16 %v6176
      %v6195 = vunpack.c.l.b16 %v6177
      %v6196 = vunpack.c.l.b16 %v6178
      %v6197 = vpack.c.b16 %v6189, %v6188
      %v6198 = vpack.c.b16 %v6191, %v6190
      %v6199 = vpack.c.b16 %v6193, %v6192
      %v6200 = vpack.c.b16 %v6195, %v6194
      %v6201 = vpack.c.b16 %v6196, %v6196
      %v6207 = vsel %vm2429, %v6161, 0
      %v6210 = vsel %vm2429, %v6162, 0
      %v6213 = vsel %vm2429, %v6163, 0
      %v6216 = vsel %vm2429, %v6164, 0
      %v6219 = vsel %vm2429, %v6165, 0
      %v6222 = vsel %vm2429, %v6166, 0
      %v6225 = vsel %vm2429, %v6167, 0
      %v6228 = vsel %vm2429, %v6168, 0
      %v6231 = vsel %vm2454, %v6201, 0
      %6233 = vmatprep.subr.bf16.mxu0 0
      %6234 = vmatpush1.bf16.msra.mxu0 %v6197
      %6235 = vmatprep.subr.bf16.mxu0 0
      %6236 = vmatpush1.bf16.msra.mxu0 %v6198
      %6237 = vmatprep.subr.bf16.mxu0 0
      %6238 = vmatpush1.bf16.msra.mxu0 %v6199
      %6239 = vmatprep.subr.bf16.mxu0 0
      %6240 = vmatpush1.bf16.msra.mxu0 %v6200
      %6241 = vmatprep.subr.bf16.mxu0 0
      %6242 = vmatpush1.bf16.msra.mxu0 %v6231
      %6243 = vmatprep.subr.bf16.mxu0 0
      %6244 = vmatpush1.bf16.msra.mxu0 0
      %6245 = vmatprep.subr.bf16.mxu0 0
      %6246 = vmatpush1.bf16.msra.mxu0 0
      %6247 = vmatprep.subr.bf16.mxu0 0
      %6248 = vmatpush1.bf16.msra.mxu0 0
      %6249 = vmatprep.subr.bf16.mxu0 0
      %6250 = vmatpush1.bf16.msra.mxu0 0
      %6251 = vmatprep.subr.bf16.mxu0 0
      %6252 = vmatpush1.bf16.msra.mxu0 0
      %6253 = vmatprep.subr.bf16.mxu0 0
      %6254 = vmatpush1.bf16.msra.mxu0 0
      %6255 = vmatprep.subr.bf16.mxu0 0
      %6256 = vmatpush1.bf16.msra.mxu0 0
      %6257 = vmatprep.subr.bf16.mxu0 0
      %6258 = vmatpush1.bf16.msra.mxu0 0
      %6259 = vmatprep.subr.bf16.mxu0 0
      %6260 = vmatpush1.bf16.msra.mxu0 0
      %6261 = vmatprep.subr.bf16.mxu0 0
      %6262 = vmatpush1.bf16.msra.mxu0 0
      %6263 = vmatprep.subr.bf16.mxu0 0
      %6264 = vmatpush1.bf16.msra.mxu0 0
      %6265 = vmatprep.mubr.bf16.mxu0 0
      %6266 = vmatmul.mubr.bf16.gmra.mrb[0].mxu0 %v6207
      %v6267 = vpop.f32.mrb[0].mxu0
      %v6268 = vadd.f32 0.0, %v6267
      %v6269 = vpop.f32.mrb[0].mxu0
      %v6270 = vpop.f32.mrb[0].mxu0
      %v6271 = vadd.f32 0.0, %v6270
      %v6272 = vpop.f32.mrb[0].mxu0
      %6273 = vmatprep.mubr.bf16.mxu0 0
      %6274 = vmatmul.mubr.bf16.gmra.mrb[0].mxu0 %v6210
      %v6275 = vpop.f32.mrb[0].mxu0
      %v6276 = vadd.f32 0.0, %v6275
      %v6277 = vpop.f32.mrb[0].mxu0
      %v6278 = vpop.f32.mrb[0].mxu0
      %v6279 = vadd.f32 0.0, %v6278
      %v6280 = vpop.f32.mrb[0].mxu0
      %6281 = vmatprep.mubr.bf16.mxu0 0
      %6282 = vmatmul.mubr.bf16.gmra.mrb[0].mxu0 %v6213
      %v6283 = vpop.f32.mrb[0].mxu0
      %v6284 = vadd.f32 0.0, %v6283
      %v6285 = vpop.f32.mrb[0].mxu0
      %v6286 = vpop.f32.mrb[0].mxu0
      %v6287 = vadd.f32 0.0, %v6286
      %v6288 = vpop.f32.mrb[0].mxu0
      %6289 = vmatprep.mubr.bf16.mxu0 0
      %6290 = vmatmul.mubr.bf16.gmra.mrb[0].mxu0 %v6216
      %v6291 = vpop.f32.mrb[0].mxu0
      %v6292 = vadd.f32 0.0, %v6291
      %v6293 = vpop.f32.mrb[0].mxu0
      %v6294 = vpop.f32.mrb[0].mxu0
      %v6295 = vadd.f32 0.0, %v6294
      %v6296 = vpop.f32.mrb[0].mxu0
      %6297 = vmatprep.mubr.bf16.mxu0 0
      %6298 = vmatmul.mubr.bf16.gmra.mrb[0].mxu0 %v6219
      %v6299 = vpop.f32.mrb[0].mxu0
      %v6300 = vadd.f32 0.0, %v6299
      %v6301 = vpop.f32.mrb[0].mxu0
      %v6302 = vpop.f32.mrb[0].mxu0
      %v6303 = vadd.f32 0.0, %v6302
      %v6304 = vpop.f32.mrb[0].mxu0
      %6305 = vmatprep.mubr.bf16.mxu0 0
      %6306 = vmatmul.mubr.bf16.gmra.mrb[0].mxu0 %v6222
      %v6307 = vpop.f32.mrb[0].mxu0
      %v6308 = vadd.f32 0.0, %v6307
      %v6309 = vpop.f32.mrb[0].mxu0
      %v6310 = vpop.f32.mrb[0].mxu0
      %v6311 = vadd.f32 0.0, %v6310
      %v6312 = vpop.f32.mrb[0].mxu0
      %6313 = vmatprep.mubr.bf16.mxu0 0
      %6314 = vmatmul.mubr.bf16.gmra.mrb[0].mxu0 %v6225
      %v6315 = vpop.f32.mrb[0].mxu0
      %v6316 = vadd.f32 0.0, %v6315
      %v6317 = vpop.f32.mrb[0].mxu0
      %v6318 = vpop.f32.mrb[0].mxu0
      %v6319 = vadd.f32 0.0, %v6318
      %v6320 = vpop.f32.mrb[0].mxu0
      %6321 = vmatprep.mubr.bf16.mxu0 0
      %6322 = vmatmul.mubr.bf16.gmra.mrb[0].mxu0 %v6228
      %v6323 = vpop.f32.mrb[0].mxu0
      %v6324 = vadd.f32 0.0, %v6323
      %v6325 = vpop.f32.mrb[0].mxu0
      %v6326 = vpop.f32.mrb[0].mxu0
      %v6327 = vadd.f32 0.0, %v6326
      %v6328 = vpop.f32.mrb[0].mxu0
      %6329 = vdwg.mxu0
      %v6330 = vadd.f32 %v5504, %v6268
      %v6331 = vadd.f32 %v5505, %v6271
      %v6332 = vadd.f32 %v5506, %v6276
      %v6333 = vadd.f32 %v5507, %v6279
      %v6334 = vadd.f32 %v5508, %v6284
      %v6335 = vadd.f32 %v5509, %v6287
      %v6336 = vadd.f32 %v5510, %v6292
      %v6337 = vadd.f32 %v5511, %v6295
      %v6338 = vadd.f32 %v5512, %v6300
      %v6339 = vadd.f32 %v5513, %v6303
      %v6340 = vadd.f32 %v5514, %v6308
      %v6341 = vadd.f32 %v5515, %v6311
      %v6342 = vadd.f32 %v5516, %v6316
      %v6343 = vadd.f32 %v5517, %v6319
      %v6344 = vadd.f32 %v5518, %v6324
      %v6345 = vadd.f32 %v5519, %v6327
      %v6346 = vadd.f32 %v457, 1.0
      %v6347 = vadd.f32 %v458, 1.0
      %v6348 = vadd.f32 %v459, 1.0
      %v6349 = vadd.f32 %v460, 1.0
      %v6350 = vadd.f32 %v461, 1.0
      %v6351 = vadd.f32 %v462, 1.0
      %v6352 = vadd.f32 %v463, 1.0
      %v6353 = vadd.f32 %v464, 1.0
      %v6354 = vadd.f32 %v465, 1.0
      %v6355 = vadd.f32 %v466, 1.0
      %v6356 = vadd.f32 %v467, 1.0
      %v6357 = vadd.f32 %v468, 1.0
      %v6358 = vadd.f32 %v469, 1.0
      %v6359 = vadd.f32 %v470, 1.0
      %v6360 = vadd.f32 %v471, 1.0
      %v6361 = vadd.f32 %v472, 1.0
      %v6362 = vadd.f32 %v6346, %v258
      %v6363 = vadd.f32 %v6347, %v259
      %v6364 = vadd.f32 %v6348, %v260
      %v6365 = vadd.f32 %v6349, %v261
      %v6366 = vadd.f32 %v6350, %v262
      %v6367 = vadd.f32 %v6351, %v263
      %v6368 = vadd.f32 %v6352, %v264
      %v6369 = vadd.f32 %v6353, %v265
      %v6370 = vadd.f32 %v6354, %v266
      %v6371 = vadd.f32 %v6355, %v267
      %v6372 = vadd.f32 %v6356, %v268
      %v6373 = vadd.f32 %v6357, %v269
      %v6374 = vadd.f32 %v6358, %v270
      %v6375 = vadd.f32 %v6359, %v271
      %v6376 = vadd.f32 %v6360, %v272
      %v6377 = vadd.f32 %v6361, %v273
      %vm6378 = vcmp.gt.f32.partialorder %v6362, -1.0
      %vm6379 = vcmp.gt.f32.partialorder %v6363, -1.0
      %vm6380 = vcmp.gt.f32.partialorder %v6364, -1.0
      %vm6381 = vcmp.gt.f32.partialorder %v6365, -1.0
      %vm6382 = vcmp.gt.f32.partialorder %v6366, -1.0
      %vm6383 = vcmp.gt.f32.partialorder %v6367, -1.0
      %vm6384 = vcmp.gt.f32.partialorder %v6368, -1.0
      %vm6385 = vcmp.gt.f32.partialorder %v6369, -1.0
      %vm6386 = vcmp.gt.f32.partialorder %v6370, -1.0
      %vm6387 = vcmp.gt.f32.partialorder %v6371, -1.0
      %vm6388 = vcmp.gt.f32.partialorder %v6372, -1.0
      %vm6389 = vcmp.gt.f32.partialorder %v6373, -1.0
      %vm6390 = vcmp.gt.f32.partialorder %v6374, -1.0
      %vm6391 = vcmp.gt.f32.partialorder %v6375, -1.0
      %vm6392 = vcmp.gt.f32.partialorder %v6376, -1.0
      %vm6393 = vcmp.gt.f32.partialorder %v6377, -1.0
      %vm6394 = vcmp.lt.f32.partialorder %v6362, 16.0
      %vm6395 = vcmp.lt.f32.partialorder %v6363, 16.0
      %vm6396 = vcmp.lt.f32.partialorder %v6364, 16.0
      %vm6397 = vcmp.lt.f32.partialorder %v6365, 16.0
      %vm6398 = vcmp.lt.f32.partialorder %v6366, 16.0
      %vm6399 = vcmp.lt.f32.partialorder %v6367, 16.0
      %vm6400 = vcmp.lt.f32.partialorder %v6368, 16.0
      %vm6401 = vcmp.lt.f32.partialorder %v6369, 16.0
      %vm6402 = vcmp.lt.f32.partialorder %v6370, 16.0
      %vm6403 = vcmp.lt.f32.partialorder %v6371, 16.0
      %vm6404 = vcmp.lt.f32.partialorder %v6372, 16.0
      %vm6405 = vcmp.lt.f32.partialorder %v6373, 16.0
      %vm6406 = vcmp.lt.f32.partialorder %v6374, 16.0
      %vm6407 = vcmp.lt.f32.partialorder %v6375, 16.0
      %vm6408 = vcmp.lt.f32.partialorder %v6376, 16.0
      %vm6409 = vcmp.lt.f32.partialorder %v6377, 16.0
      %vm6410 = vmand %vm6378, %vm6394
      %vm6411 = vmand %vm6379, %vm6395
      %vm6412 = vmand %vm6380, %vm6396
      %vm6413 = vmand %vm6381, %vm6397
      %vm6414 = vmand %vm6382, %vm6398
      %vm6415 = vmand %vm6383, %vm6399
      %vm6416 = vmand %vm6384, %vm6400
      %vm6417 = vmand %vm6385, %vm6401
      %vm6418 = vmand %vm6386, %vm6402
      %vm6419 = vmand %vm6387, %vm6403
      %vm6420 = vmand %vm6388, %vm6404
      %vm6421 = vmand %vm6389, %vm6405
      %vm6422 = vmand %vm6390, %vm6406
      %vm6423 = vmand %vm6391, %vm6407
      %vm6424 = vmand %vm6392, %vm6408
      %vm6425 = vmand %vm6393, %vm6409
      %vm6426 = vmand %vm6410, %vm687
      %vm6427 = vmand %vm6411, %vm688
      %vm6428 = vmand %vm6412, %vm689
      %vm6429 = vmand %vm6413, %vm690
      %vm6430 = vmand %vm6414, %vm691
      %vm6431 = vmand %vm6415, %vm692
      %vm6432 = vmand %vm6416, %vm693
      %vm6433 = vmand %vm6417, %vm694
      %vm6434 = vmand %vm6418, %vm695
      %vm6435 = vmand %vm6419, %vm696
      %vm6436 = vmand %vm6420, %vm697
      %vm6437 = vmand %vm6421, %vm698
      %vm6438 = vmand %vm6422, %vm699
      %vm6439 = vmand %vm6423, %vm700
      %vm6440 = vmand %vm6424, %vm701
      %vm6441 = vmand %vm6425, %vm702
      %vm6442 = vmand %vm6426, %vm783
      %vm6443 = vmand %vm6427, %vm784
      %vm6444 = vmand %vm6428, %vm785
      %vm6445 = vmand %vm6429, %vm786
      %vm6446 = vmand %vm6430, %vm787
      %vm6447 = vmand %vm6431, %vm788
      %vm6448 = vmand %vm6432, %vm789
      %vm6449 = vmand %vm6433, %vm790
      %vm6450 = vmand %vm6434, %vm791
      %vm6451 = vmand %vm6435, %vm792
      %vm6452 = vmand %vm6436, %vm793
      %vm6453 = vmand %vm6437, %vm794
      %vm6454 = vmand %vm6438, %vm795
      %vm6455 = vmand %vm6439, %vm796
      %vm6456 = vmand %vm6440, %vm797
      %vm6457 = vmand %vm6441, %vm798
      %v6458 = vsel %vm6442, 1, 0
      %v6459 = vsel %vm6443, 1, 0
      %v6460 = vsel %vm6444, 1, 0
      %v6461 = vsel %vm6445, 1, 0
      %v6462 = vsel %vm6446, 1, 0
      %v6463 = vsel %vm6447, 1, 0
      %v6464 = vsel %vm6448, 1, 0
      %v6465 = vsel %vm6449, 1, 0
      %v6466 = vsel %vm6450, 1, 0
      %v6467 = vsel %vm6451, 1, 0
      %v6468 = vsel %vm6452, 1, 0
      %v6469 = vsel %vm6453, 1, 0
      %v6470 = vsel %vm6454, 1, 0
      %v6471 = vsel %vm6455, 1, 0
      %v6472 = vsel %vm6456, 1, 0
      %v6473 = vsel %vm6457, 1, 0
      %v6474 = vcvt.s32.f32 %v6458
      %v6475 = vcvt.s32.f32 %v6459
      %v6476 = vcvt.s32.f32 %v6460
      %v6477 = vcvt.s32.f32 %v6461
      %v6478 = vcvt.s32.f32 %v6462
      %v6479 = vcvt.s32.f32 %v6463
      %v6480 = vcvt.s32.f32 %v6464
      %v6481 = vcvt.s32.f32 %v6465
      %v6482 = vcvt.s32.f32 %v6466
      %v6483 = vcvt.s32.f32 %v6467
      %v6484 = vcvt.s32.f32 %v6468
      %v6485 = vcvt.s32.f32 %v6469
      %v6486 = vcvt.s32.f32 %v6470
      %v6487 = vcvt.s32.f32 %v6471
      %v6488 = vcvt.s32.f32 %v6472
      %v6489 = vcvt.s32.f32 %v6473
      %6506 = vrot.lane.b32.xlu0 %v6474, 18
      %v6507 = vpop.permute.xlu0 %6506
      %6508 = vrot.lane.b32.xlu0 %v6475, 18
      %v6509 = vpop.permute.xlu0 %6508
      %6510 = vrot.lane.b32.xlu0 %v6476, 18
      %v6511 = vpop.permute.xlu0 %6510
      %6512 = vrot.lane.b32.xlu0 %v6477, 18
      %v6513 = vpop.permute.xlu0 %6512
      %6514 = vrot.lane.b32.xlu0 %v6478, 18
      %v6515 = vpop.permute.xlu0 %6514
      %6516 = vrot.lane.b32.xlu0 %v6479, 18
      %v6517 = vpop.permute.xlu0 %6516
      %6518 = vrot.lane.b32.xlu0 %v6480, 18
      %v6519 = vpop.permute.xlu0 %6518
      %6520 = vrot.lane.b32.xlu0 %v6481, 18
      %v6521 = vpop.permute.xlu0 %6520
      %6522 = vrot.lane.b32.xlu0 %v6482, 18
      %v6523 = vpop.permute.xlu0 %6522
      %6524 = vrot.lane.b32.xlu0 %v6483, 18
      %v6525 = vpop.permute.xlu0 %6524
      %6526 = vrot.lane.b32.xlu0 %v6484, 18
      %v6527 = vpop.permute.xlu0 %6526
      %6528 = vrot.lane.b32.xlu0 %v6485, 18
      %v6529 = vpop.permute.xlu0 %6528
      %6530 = vrot.lane.b32.xlu0 %v6486, 18
      %v6531 = vpop.permute.xlu0 %6530
      %6532 = vrot.lane.b32.xlu0 %v6487, 18
      %v6533 = vpop.permute.xlu0 %6532
      %6534 = vrot.lane.b32.xlu0 %v6488, 18
      %v6535 = vpop.permute.xlu0 %6534
      %6536 = vrot.lane.b32.xlu0 %v6489, 18
      %v6537 = vpop.permute.xlu0 %6536
      %v6554 = vmul.f32 %v342, %v6507
      %v6555 = vmul.f32 %v344, %v6509
      %v6556 = vmul.f32 %v346, %v6511
      %v6557 = vmul.f32 %v348, %v6513
      %v6558 = vmul.f32 %v350, %v6515
      %v6559 = vmul.f32 %v352, %v6517
      %v6560 = vmul.f32 %v354, %v6519
      %v6561 = vmul.f32 %v356, %v6521
      %v6562 = vmul.f32 %v358, %v6523
      %v6563 = vmul.f32 %v360, %v6525
      %v6564 = vmul.f32 %v362, %v6527
      %v6565 = vmul.f32 %v364, %v6529
      %v6566 = vmul.f32 %v366, %v6531
      %v6567 = vmul.f32 %v368, %v6533
      %v6568 = vmul.f32 %v370, %v6535
      %v6569 = vmul.f32 %v372, %v6537
      %v6570 = vadd.f32 %v6362, 1.0
      %v6571 = vadd.f32 %v6363, 1.0
      %v6572 = vadd.f32 %v6364, 1.0
      %v6573 = vadd.f32 %v6365, 1.0
      %v6574 = vadd.f32 %v6366, 1.0
      %v6575 = vadd.f32 %v6367, 1.0
      %v6576 = vadd.f32 %v6368, 1.0
      %v6577 = vadd.f32 %v6369, 1.0
      %v6578 = vadd.f32 %v6370, 1.0
      %v6579 = vadd.f32 %v6371, 1.0
      %v6580 = vadd.f32 %v6372, 1.0
      %v6581 = vadd.f32 %v6373, 1.0
      %v6582 = vadd.f32 %v6374, 1.0
      %v6583 = vadd.f32 %v6375, 1.0
      %v6584 = vadd.f32 %v6376, 1.0
      %v6585 = vadd.f32 %v6377, 1.0
      %6587 = vset.pattern.permute.xlu0 6
      %6588 = vperm.xlu0 %6587, %v6570
      %v6589 = vpop.permute.xlu0 %6588
      %6592 = vset.pattern.permute.xlu0 6
      %6593 = vperm.xlu0 %6592, %v6571
      %v6594 = vpop.permute.xlu0 %6593
      %6597 = vset.pattern.permute.xlu0 6
      %6598 = vperm.xlu0 %6597, %v6572
      %v6599 = vpop.permute.xlu0 %6598
      %6602 = vset.pattern.permute.xlu0 6
      %6603 = vperm.xlu0 %6602, %v6573
      %v6604 = vpop.permute.xlu0 %6603
      %6607 = vset.pattern.permute.xlu0 6
      %6608 = vperm.xlu0 %6607, %v6574
      %v6609 = vpop.permute.xlu0 %6608
      %6612 = vset.pattern.permute.xlu0 6
      %6613 = vperm.xlu0 %6612, %v6575
      %v6614 = vpop.permute.xlu0 %6613
      %6617 = vset.pattern.permute.xlu0 6
      %6618 = vperm.xlu0 %6617, %v6576
      %v6619 = vpop.permute.xlu0 %6618
      %6622 = vset.pattern.permute.xlu0 6
      %6623 = vperm.xlu0 %6622, %v6577
      %v6624 = vpop.permute.xlu0 %6623
      %6627 = vset.pattern.permute.xlu0 6
      %6628 = vperm.xlu0 %6627, %v6578
      %v6629 = vpop.permute.xlu0 %6628
      %6632 = vset.pattern.permute.xlu0 6
      %6633 = vperm.xlu0 %6632, %v6579
      %v6634 = vpop.permute.xlu0 %6633
      %6637 = vset.pattern.permute.xlu0 6
      %6638 = vperm.xlu0 %6637, %v6580
      %v6639 = vpop.permute.xlu0 %6638
      %6642 = vset.pattern.permute.xlu0 6
      %6643 = vperm.xlu0 %6642, %v6581
      %v6644 = vpop.permute.xlu0 %6643
      %6647 = vset.pattern.permute.xlu0 6
      %6648 = vperm.xlu0 %6647, %v6582
      %v6649 = vpop.permute.xlu0 %6648
      %6652 = vset.pattern.permute.xlu0 6
      %6653 = vperm.xlu0 %6652, %v6583
      %v6654 = vpop.permute.xlu0 %6653
      %6657 = vset.pattern.permute.xlu0 6
      %6658 = vperm.xlu0 %6657, %v6584
      %v6659 = vpop.permute.xlu0 %6658
      %6662 = vset.pattern.permute.xlu0 6
      %6663 = vperm.xlu0 %6662, %v6585
      %v6664 = vpop.permute.xlu0 %6663
      %v6666 = vsub.f32 %v6589, %v507
      %v6667 = vsub.f32 %v6594, %v507
      %v6668 = vsub.f32 %v6599, %v507
      %v6669 = vsub.f32 %v6604, %v507
      %v6670 = vsub.f32 %v6609, %v507
      %v6671 = vsub.f32 %v6614, %v507
      %v6672 = vsub.f32 %v6619, %v507
      %v6673 = vsub.f32 %v6624, %v507
      %v6674 = vsub.f32 %v6629, %v507
      %v6675 = vsub.f32 %v6634, %v507
      %v6676 = vsub.f32 %v6639, %v507
      %v6677 = vsub.f32 %v6644, %v507
      %v6678 = vsub.f32 %v6649, %v507
      %v6679 = vsub.f32 %v6654, %v507
      %v6680 = vsub.f32 %v6659, %v507
      %v6681 = vsub.f32 %v6664, %v507
      %v6682 = vand.u32 2147483647, %v6666
      %v6683 = vand.u32 2147483647, %v6667
      %v6684 = vand.u32 2147483647, %v6668
      %v6685 = vand.u32 2147483647, %v6669
      %v6686 = vand.u32 2147483647, %v6670
      %v6687 = vand.u32 2147483647, %v6671
      %v6688 = vand.u32 2147483647, %v6672
      %v6689 = vand.u32 2147483647, %v6673
      %v6690 = vand.u32 2147483647, %v6674
      %v6691 = vand.u32 2147483647, %v6675
      %v6692 = vand.u32 2147483647, %v6676
      %v6693 = vand.u32 2147483647, %v6677
      %v6694 = vand.u32 2147483647, %v6678
      %v6695 = vand.u32 2147483647, %v6679
      %v6696 = vand.u32 2147483647, %v6680
      %v6697 = vand.u32 2147483647, %v6681
      %v6698 = vsub.f32 1.0, %v6682
      %v6699 = vsub.f32 1.0, %v6683
      %v6700 = vsub.f32 1.0, %v6684
      %v6701 = vsub.f32 1.0, %v6685
      %v6702 = vsub.f32 1.0, %v6686
      %v6703 = vsub.f32 1.0, %v6687
      %v6704 = vsub.f32 1.0, %v6688
      %v6705 = vsub.f32 1.0, %v6689
      %v6706 = vsub.f32 1.0, %v6690
      %v6707 = vsub.f32 1.0, %v6691
      %v6708 = vsub.f32 1.0, %v6692
      %v6709 = vsub.f32 1.0, %v6693
      %v6710 = vsub.f32 1.0, %v6694
      %v6711 = vsub.f32 1.0, %v6695
      %v6712 = vsub.f32 1.0, %v6696
      %v6713 = vsub.f32 1.0, %v6697
      %v6714 = vmax.f32 %v6698, 0.0
      %v6715 = vmax.f32 %v6699, 0.0
      %v6716 = vmax.f32 %v6700, 0.0
      %v6717 = vmax.f32 %v6701, 0.0
      %v6718 = vmax.f32 %v6702, 0.0
      %v6719 = vmax.f32 %v6703, 0.0
      %v6720 = vmax.f32 %v6704, 0.0
      %v6721 = vmax.f32 %v6705, 0.0
      %v6722 = vmax.f32 %v6706, 0.0
      %v6723 = vmax.f32 %v6707, 0.0
      %v6724 = vmax.f32 %v6708, 0.0
      %v6725 = vmax.f32 %v6709, 0.0
      %v6726 = vmax.f32 %v6710, 0.0
      %v6727 = vmax.f32 %v6711, 0.0
      %v6728 = vmax.f32 %v6712, 0.0
      %v6729 = vmax.f32 %v6713, 0.0
      %6731 = vset.pattern.permute.xlu0 24
      %6732 = vperm.xlu0 %6731, %v6554
      %v6733 = vpop.permute.xlu0 %6732
      %6736 = vset.pattern.permute.xlu0 24
      %6737 = vperm.xlu0 %6736, %v6555
      %v6738 = vpop.permute.xlu0 %6737
      %6741 = vset.pattern.permute.xlu0 24
      %6742 = vperm.xlu0 %6741, %v6556
      %v6743 = vpop.permute.xlu0 %6742
      %6746 = vset.pattern.permute.xlu0 24
      %6747 = vperm.xlu0 %6746, %v6557
      %v6748 = vpop.permute.xlu0 %6747
      %6751 = vset.pattern.permute.xlu0 24
      %6752 = vperm.xlu0 %6751, %v6558
      %v6753 = vpop.permute.xlu0 %6752
      %6756 = vset.pattern.permute.xlu0 24
      %6757 = vperm.xlu0 %6756, %v6559
      %v6758 = vpop.permute.xlu0 %6757
      %6761 = vset.pattern.permute.xlu0 24
      %6762 = vperm.xlu0 %6761, %v6560
      %v6763 = vpop.permute.xlu0 %6762
      %6766 = vset.pattern.permute.xlu0 24
      %6767 = vperm.xlu0 %6766, %v6561
      %v6768 = vpop.permute.xlu0 %6767
      %6771 = vset.pattern.permute.xlu0 24
      %6772 = vperm.xlu0 %6771, %v6562
      %v6773 = vpop.permute.xlu0 %6772
      %6776 = vset.pattern.permute.xlu0 24
      %6777 = vperm.xlu0 %6776, %v6563
      %v6778 = vpop.permute.xlu0 %6777
      %6781 = vset.pattern.permute.xlu0 24
      %6782 = vperm.xlu0 %6781, %v6564
      %v6783 = vpop.permute.xlu0 %6782
      %6786 = vset.pattern.permute.xlu0 24
      %6787 = vperm.xlu0 %6786, %v6565
      %v6788 = vpop.permute.xlu0 %6787
      %6791 = vset.pattern.permute.xlu0 24
      %6792 = vperm.xlu0 %6791, %v6566
      %v6793 = vpop.permute.xlu0 %6792
      %6796 = vset.pattern.permute.xlu0 24
      %6797 = vperm.xlu0 %6796, %v6567
      %v6798 = vpop.permute.xlu0 %6797
      %6801 = vset.pattern.permute.xlu0 24
      %6802 = vperm.xlu0 %6801, %v6568
      %v6803 = vpop.permute.xlu0 %6802
      %6806 = vset.pattern.permute.xlu0 24
      %6807 = vperm.xlu0 %6806, %v6569
      %v6808 = vpop.permute.xlu0 %6807
      %v6810 = vmul.f32 %v6714, %v6733
      %v6811 = vmul.f32 %v6715, %v6738
      %v6812 = vmul.f32 %v6716, %v6743
      %v6813 = vmul.f32 %v6717, %v6748
      %v6814 = vmul.f32 %v6718, %v6753
      %v6815 = vmul.f32 %v6719, %v6758
      %v6816 = vmul.f32 %v6720, %v6763
      %v6817 = vmul.f32 %v6721, %v6768
      %v6818 = vmul.f32 %v6722, %v6773
      %v6819 = vmul.f32 %v6723, %v6778
      %v6820 = vmul.f32 %v6724, %v6783
      %v6821 = vmul.f32 %v6725, %v6788
      %v6822 = vmul.f32 %v6726, %v6793
      %v6823 = vmul.f32 %v6727, %v6798
      %v6824 = vmul.f32 %v6728, %v6803
      %v6825 = vmul.f32 %v6729, %v6808
      %6826 = vset.pattern.permute.xlu0 15
      %6827 = vperm.xlu0 %6826, %v1183
      %v6828 = vpop.permute.xlu0 %6827
      %6830 = vset.pattern.permute.xlu0 15
      %6831 = vperm.xlu0 %6830, %v1184
      %v6832 = vpop.permute.xlu0 %6831
      %6834 = vset.pattern.permute.xlu0 15
      %6835 = vperm.xlu0 %6834, %v1185
      %v6836 = vpop.permute.xlu0 %6835
      %6838 = vset.pattern.permute.xlu0 15
      %6839 = vperm.xlu0 %6838, %v1186
      %v6840 = vpop.permute.xlu0 %6839
      %6842 = vset.pattern.permute.xlu0 15
      %6843 = vperm.xlu0 %6842, %v1187
      %v6844 = vpop.permute.xlu0 %6843
      %6846 = vset.pattern.permute.xlu0 15
      %6847 = vperm.xlu0 %6846, %v1188
      %v6848 = vpop.permute.xlu0 %6847
      %6850 = vset.pattern.permute.xlu0 15
      %6851 = vperm.xlu0 %6850, %v1189
      %v6852 = vpop.permute.xlu0 %6851
      %6854 = vset.pattern.permute.xlu0 15
      %6855 = vperm.xlu0 %6854, %v1190
      %v6856 = vpop.permute.xlu0 %6855
      %6858 = vset.pattern.permute.xlu0 15
      %6859 = vperm.xlu0 %6858, %v1191
      %v6860 = vpop.permute.xlu0 %6859
      %6862 = vset.pattern.permute.xlu0 15
      %6863 = vperm.xlu0 %6862, %v1192
      %v6864 = vpop.permute.xlu0 %6863
      %6866 = vset.pattern.permute.xlu0 15
      %6867 = vperm.xlu0 %6866, %v1193
      %v6868 = vpop.permute.xlu0 %6867
      %6870 = vset.pattern.permute.xlu0 15
      %6871 = vperm.xlu0 %6870, %v1194
      %v6872 = vpop.permute.xlu0 %6871
      %6874 = vset.pattern.permute.xlu0 15
      %6875 = vperm.xlu0 %6874, %v1195
      %v6876 = vpop.permute.xlu0 %6875
      %6878 = vset.pattern.permute.xlu0 15
      %6879 = vperm.xlu0 %6878, %v1196
      %v6880 = vpop.permute.xlu0 %6879
      %6882 = vset.pattern.permute.xlu0 15
      %6883 = vperm.xlu0 %6882, %v1197
      %v6884 = vpop.permute.xlu0 %6883
      %6886 = vset.pattern.permute.xlu0 15
      %6887 = vperm.xlu0 %6886, %v1198
      %v6888 = vpop.permute.xlu0 %6887
      %v6890 = vsub.f32 %v6828, %v510
      %v6891 = vsub.f32 %v6832, %v510
      %v6892 = vsub.f32 %v6836, %v510
      %v6893 = vsub.f32 %v6840, %v510
      %v6894 = vsub.f32 %v6844, %v510
      %v6895 = vsub.f32 %v6848, %v510
      %v6896 = vsub.f32 %v6852, %v510
      %v6897 = vsub.f32 %v6856, %v510
      %v6898 = vsub.f32 %v6860, %v510
      %v6899 = vsub.f32 %v6864, %v510
      %v6900 = vsub.f32 %v6868, %v510
      %v6901 = vsub.f32 %v6872, %v510
      %v6902 = vsub.f32 %v6876, %v510
      %v6903 = vsub.f32 %v6880, %v510
      %v6904 = vsub.f32 %v6884, %v510
      %v6905 = vsub.f32 %v6888, %v510
      %v6906 = vand.u32 2147483647, %v6890
      %v6907 = vand.u32 2147483647, %v6891
      %v6908 = vand.u32 2147483647, %v6892
      %v6909 = vand.u32 2147483647, %v6893
      %v6910 = vand.u32 2147483647, %v6894
      %v6911 = vand.u32 2147483647, %v6895
      %v6912 = vand.u32 2147483647, %v6896
      %v6913 = vand.u32 2147483647, %v6897
      %v6914 = vand.u32 2147483647, %v6898
      %v6915 = vand.u32 2147483647, %v6899
      %v6916 = vand.u32 2147483647, %v6900
      %v6917 = vand.u32 2147483647, %v6901
      %v6918 = vand.u32 2147483647, %v6902
      %v6919 = vand.u32 2147483647, %v6903
      %v6920 = vand.u32 2147483647, %v6904
      %v6921 = vand.u32 2147483647, %v6905
      %v6922 = vsub.f32 1.0, %v6906
      %v6923 = vsub.f32 1.0, %v6907
      %v6924 = vsub.f32 1.0, %v6908
      %v6925 = vsub.f32 1.0, %v6909
      %v6926 = vsub.f32 1.0, %v6910
      %v6927 = vsub.f32 1.0, %v6911
      %v6928 = vsub.f32 1.0, %v6912
      %v6929 = vsub.f32 1.0, %v6913
      %v6930 = vsub.f32 1.0, %v6914
      %v6931 = vsub.f32 1.0, %v6915
      %v6932 = vsub.f32 1.0, %v6916
      %v6933 = vsub.f32 1.0, %v6917
      %v6934 = vsub.f32 1.0, %v6918
      %v6935 = vsub.f32 1.0, %v6919
      %v6936 = vsub.f32 1.0, %v6920
      %v6937 = vsub.f32 1.0, %v6921
      %v6938 = vmax.f32 %v6922, 0.0
      %v6939 = vmax.f32 %v6923, 0.0
      %v6940 = vmax.f32 %v6924, 0.0
      %v6941 = vmax.f32 %v6925, 0.0
      %v6942 = vmax.f32 %v6926, 0.0
      %v6943 = vmax.f32 %v6927, 0.0
      %v6944 = vmax.f32 %v6928, 0.0
      %v6945 = vmax.f32 %v6929, 0.0
      %v6946 = vmax.f32 %v6930, 0.0
      %v6947 = vmax.f32 %v6931, 0.0
      %v6948 = vmax.f32 %v6932, 0.0
      %v6949 = vmax.f32 %v6933, 0.0
      %v6950 = vmax.f32 %v6934, 0.0
      %v6951 = vmax.f32 %v6935, 0.0
      %v6952 = vmax.f32 %v6936, 0.0
      %v6953 = vmax.f32 %v6937, 0.0
      %v6954 = vpack.c.bf16 %v6811, %v6810
      %v6955 = vpack.c.bf16 %v6813, %v6812
      %v6956 = vpack.c.bf16 %v6815, %v6814
      %v6957 = vpack.c.bf16 %v6817, %v6816
      %v6958 = vpack.c.bf16 %v6819, %v6818
      %v6959 = vpack.c.bf16 %v6821, %v6820
      %v6960 = vpack.c.bf16 %v6823, %v6822
      %v6961 = vpack.c.bf16 %v6825, %v6824
      %v6963 = vsel %vm1360, %v6954, 0
      %v6966 = vsel %vm1360, %v6955, 0
      %v6969 = vsel %vm1360, %v6956, 0
      %v6972 = vsel %vm1360, %v6957, 0
      %v6975 = vsel %vm1360, %v6958, 0
      %v6978 = vsel %vm1360, %v6959, 0
      %v6981 = vsel %vm1360, %v6960, 0
      %v6984 = vsel %vm1360, %v6961, 0
      %6986 = vmatprep.subr.bf16.mxu0 0
      %6987 = vmatpush1.bf16.msra.mxu0 %v1357
      %6988 = vmatprep.subr.bf16.mxu0 0
      %6989 = vmatpush1.bf16.msra.mxu0 %v1387
      %6990 = vmatprep.subr.bf16.mxu0 0
      %6991 = vmatpush1.bf16.msra.mxu0 0
      %6992 = vmatprep.subr.bf16.mxu0 0
      %6993 = vmatpush1.bf16.msra.mxu0 0
      %6994 = vmatprep.subr.bf16.mxu0 0
      %6995 = vmatpush1.bf16.msra.mxu0 0
      %6996 = vmatprep.subr.bf16.mxu0 0
      %6997 = vmatpush1.bf16.msra.mxu0 0
      %6998 = vmatprep.subr.bf16.mxu0 0
      %6999 = vmatpush1.bf16.msra.mxu0 0
      %7000 = vmatprep.subr.bf16.mxu0 0
      %7001 = vmatpush1.bf16.msra.mxu0 0
      %7002 = vmatprep.subr.bf16.mxu0 0
      %7003 = vmatpush1.bf16.msra.mxu0 0
      %7004 = vmatprep.subr.bf16.mxu0 0
      %7005 = vmatpush1.bf16.msra.mxu0 0
      %7006 = vmatprep.subr.bf16.mxu0 0
      %7007 = vmatpush1.bf16.msra.mxu0 0
      %7008 = vmatprep.subr.bf16.mxu0 0
      %7009 = vmatpush1.bf16.msra.mxu0 0
      %7010 = vmatprep.subr.bf16.mxu0 0
      %7011 = vmatpush1.bf16.msra.mxu0 0
      %7012 = vmatprep.subr.bf16.mxu0 0
      %7013 = vmatpush1.bf16.msra.mxu0 0
      %7014 = vmatprep.subr.bf16.mxu0 0
      %7015 = vmatpush1.bf16.msra.mxu0 0
      %7016 = vmatprep.subr.bf16.mxu0 0
      %7017 = vmatpush1.bf16.msra.mxu0 0
      %7018 = vmatprep.mubr.bf16.mxu0 0
      %7019 = vmatmul.mubr.bf16.gmra.mrb[0].mxu0 %v6963
      %v7020 = vpop.f32.mrb[0].mxu0
      %v7021 = vadd.f32 0.0, %v7020
      %v7022 = vpop.f32.mrb[0].mxu0
      %v7023 = vpop.f32.mrb[0].mxu0
      %v7024 = vadd.f32 0.0, %v7023
      %v7025 = vpop.f32.mrb[0].mxu0
      %7026 = vmatprep.mubr.bf16.mxu0 0
      %7027 = vmatmul.mubr.bf16.gmra.mrb[0].mxu0 %v6966
      %v7028 = vpop.f32.mrb[0].mxu0
      %v7029 = vadd.f32 0.0, %v7028
      %v7030 = vpop.f32.mrb[0].mxu0
      %v7031 = vpop.f32.mrb[0].mxu0
      %v7032 = vadd.f32 0.0, %v7031
      %v7033 = vpop.f32.mrb[0].mxu0
      %7034 = vmatprep.mubr.bf16.mxu0 0
      %7035 = vmatmul.mubr.bf16.gmra.mrb[0].mxu0 %v6969
      %v7036 = vpop.f32.mrb[0].mxu0
      %v7037 = vadd.f32 0.0, %v7036
      %v7038 = vpop.f32.mrb[0].mxu0
      %v7039 = vpop.f32.mrb[0].mxu0
      %v7040 = vadd.f32 0.0, %v7039
      %v7041 = vpop.f32.mrb[0].mxu0
      %7042 = vmatprep.mubr.bf16.mxu0 0
      %7043 = vmatmul.mubr.bf16.gmra.mrb[0].mxu0 %v6972
      %v7044 = vpop.f32.mrb[0].mxu0
      %v7045 = vadd.f32 0.0, %v7044
      %v7046 = vpop.f32.mrb[0].mxu0
      %v7047 = vpop.f32.mrb[0].mxu0
      %v7048 = vadd.f32 0.0, %v7047
      %v7049 = vpop.f32.mrb[0].mxu0
      %7050 = vmatprep.mubr.bf16.mxu0 0
      %7051 = vmatmul.mubr.bf16.gmra.mrb[0].mxu0 %v6975
      %v7052 = vpop.f32.mrb[0].mxu0
      %v7053 = vadd.f32 0.0, %v7052
      %v7054 = vpop.f32.mrb[0].mxu0
      %v7055 = vpop.f32.mrb[0].mxu0
      %v7056 = vadd.f32 0.0, %v7055
      %v7057 = vpop.f32.mrb[0].mxu0
      %7058 = vmatprep.mubr.bf16.mxu0 0
      %7059 = vmatmul.mubr.bf16.gmra.mrb[0].mxu0 %v6978
      %v7060 = vpop.f32.mrb[0].mxu0
      %v7061 = vadd.f32 0.0, %v7060
      %v7062 = vpop.f32.mrb[0].mxu0
      %v7063 = vpop.f32.mrb[0].mxu0
      %v7064 = vadd.f32 0.0, %v7063
      %v7065 = vpop.f32.mrb[0].mxu0
      %7066 = vmatprep.mubr.bf16.mxu0 0
      %7067 = vmatmul.mubr.bf16.gmra.mrb[0].mxu0 %v6981
      %v7068 = vpop.f32.mrb[0].mxu0
      %v7069 = vadd.f32 0.0, %v7068
      %v7070 = vpop.f32.mrb[0].mxu0
      %v7071 = vpop.f32.mrb[0].mxu0
      %v7072 = vadd.f32 0.0, %v7071
      %v7073 = vpop.f32.mrb[0].mxu0
      %7074 = vmatprep.mubr.bf16.mxu0 0
      %7075 = vmatmul.mubr.bf16.gmra.mrb[0].mxu0 %v6984
      %v7076 = vpop.f32.mrb[0].mxu0
      %v7077 = vadd.f32 0.0, %v7076
      %v7078 = vpop.f32.mrb[0].mxu0
      %v7079 = vpop.f32.mrb[0].mxu0
      %v7080 = vadd.f32 0.0, %v7079
      %v7081 = vpop.f32.mrb[0].mxu0
      %7082 = vdwg.mxu0
      %v7083 = vmul.f32 %v7021, %v6938
      %v7084 = vmul.f32 %v7024, %v6939
      %v7085 = vmul.f32 %v7029, %v6940
      %v7086 = vmul.f32 %v7032, %v6941
      %v7087 = vmul.f32 %v7037, %v6942
      %v7088 = vmul.f32 %v7040, %v6943
      %v7089 = vmul.f32 %v7045, %v6944
      %v7090 = vmul.f32 %v7048, %v6945
      %v7091 = vmul.f32 %v7053, %v6946
      %v7092 = vmul.f32 %v7056, %v6947
      %v7093 = vmul.f32 %v7061, %v6948
      %v7094 = vmul.f32 %v7064, %v6949
      %v7095 = vmul.f32 %v7069, %v6950
      %v7096 = vmul.f32 %v7072, %v6951
      %v7097 = vmul.f32 %v7077, %v6952
      %v7098 = vmul.f32 %v7080, %v6953
      %v7099 = vpack.c.bf16 %v7084, %v7083
      %v7100 = vpack.c.bf16 %v7086, %v7085
      %v7101 = vpack.c.bf16 %v7088, %v7087
      %v7102 = vpack.c.bf16 %v7090, %v7089
      %v7103 = vpack.c.bf16 %v7092, %v7091
      %v7104 = vpack.c.bf16 %v7094, %v7093
      %v7105 = vpack.c.bf16 %v7096, %v7095
      %v7106 = vpack.c.bf16 %v7098, %v7097
      %s7107 = scalar_lea.vmem %s2, 216
      %v7108 = vld [vmem:[%s7107] sm:$0xf]
      %v7109 = vld [vmem:[%s7107 + $0x4] sm:$0xf]
      %v7110 = vld [vmem:[%s7107 + $0x8] sm:$0xf]
      %v7111 = vld [vmem:[%s7107 + $0xc] sm:$0xf]
      %v7112 = vld [vmem:[%s7107 + $0x10] sm:$0xf]
      %v7113 = vld [vmem:[%s7107 + $0x14] sm:$0xf]
      %v7114 = vld [vmem:[%s7107 + $0x18] sm:$0xf]
      %v7115 = vld [vmem:[%s7107 + $0x1c] sm:$0xf]
      %v7116 = vld [vmem:[%s7107 + $0x20] sm:$0xf]
      %v7126 = vunpack.c.l.b16 %v7108
      %v7127 = vunpack.c.l.b16 %v7109
      %v7128 = vunpack.c.l.b16 %v7110
      %v7129 = vunpack.c.l.b16 %v7111
      %v7130 = vunpack.c.l.b16 %v7112
      %v7131 = vunpack.c.l.b16 %v7113
      %v7132 = vunpack.c.l.b16 %v7114
      %v7133 = vunpack.c.l.b16 %v7115
      %v7134 = vunpack.c.l.b16 %v7116
      %v7135 = vpack.c.b16 %v7127, %v7126
      %v7136 = vpack.c.b16 %v7129, %v7128
      %v7137 = vpack.c.b16 %v7131, %v7130
      %v7138 = vpack.c.b16 %v7133, %v7132
      %v7139 = vpack.c.b16 %v7134, %v7134
      %v7145 = vsel %vm2429, %v7099, 0
      %v7148 = vsel %vm2429, %v7100, 0
      %v7151 = vsel %vm2429, %v7101, 0
      %v7154 = vsel %vm2429, %v7102, 0
      %v7157 = vsel %vm2429, %v7103, 0
      %v7160 = vsel %vm2429, %v7104, 0
      %v7163 = vsel %vm2429, %v7105, 0
      %v7166 = vsel %vm2429, %v7106, 0
      %v7169 = vsel %vm2454, %v7139, 0
      %7171 = vmatprep.subr.bf16.mxu0 0
      %7172 = vmatpush1.bf16.msra.mxu0 %v7135
      %7173 = vmatprep.subr.bf16.mxu0 0
      %7174 = vmatpush1.bf16.msra.mxu0 %v7136
      %7175 = vmatprep.subr.bf16.mxu0 0
      %7176 = vmatpush1.bf16.msra.mxu0 %v7137
      %7177 = vmatprep.subr.bf16.mxu0 0
      %7178 = vmatpush1.bf16.msra.mxu0 %v7138
      %7179 = vmatprep.subr.bf16.mxu0 0
      %7180 = vmatpush1.bf16.msra.mxu0 %v7169
      %7181 = vmatprep.subr.bf16.mxu0 0
      %7182 = vmatpush1.bf16.msra.mxu0 0
      %7183 = vmatprep.subr.bf16.mxu0 0
      %7184 = vmatpush1.bf16.msra.mxu0 0
      %7185 = vmatprep.subr.bf16.mxu0 0
      %7186 = vmatpush1.bf16.msra.mxu0 0
      %7187 = vmatprep.subr.bf16.mxu0 0
      %7188 = vmatpush1.bf16.msra.mxu0 0
      %7189 = vmatprep.subr.bf16.mxu0 0
      %7190 = vmatpush1.bf16.msra.mxu0 0
      %7191 = vmatprep.subr.bf16.mxu0 0
      %7192 = vmatpush1.bf16.msra.mxu0 0
      %7193 = vmatprep.subr.bf16.mxu0 0
      %7194 = vmatpush1.bf16.msra.mxu0 0
      %7195 = vmatprep.subr.bf16.mxu0 0
      %7196 = vmatpush1.bf16.msra.mxu0 0
      %7197 = vmatprep.subr.bf16.mxu0 0
      %7198 = vmatpush1.bf16.msra.mxu0 0
      %7199 = vmatprep.subr.bf16.mxu0 0
      %7200 = vmatpush1.bf16.msra.mxu0 0
      %7201 = vmatprep.subr.bf16.mxu0 0
      %7202 = vmatpush1.bf16.msra.mxu0 0
      %7203 = vmatprep.mubr.bf16.mxu0 0
      %7204 = vmatmul.mubr.bf16.gmra.mrb[0].mxu0 %v7145
      %v7205 = vpop.f32.mrb[0].mxu0
      %v7206 = vadd.f32 0.0, %v7205
      %v7207 = vpop.f32.mrb[0].mxu0
      %v7208 = vpop.f32.mrb[0].mxu0
      %v7209 = vadd.f32 0.0, %v7208
      %v7210 = vpop.f32.mrb[0].mxu0
      %7211 = vmatprep.mubr.bf16.mxu0 0
      %7212 = vmatmul.mubr.bf16.gmra.mrb[0].mxu0 %v7148
      %v7213 = vpop.f32.mrb[0].mxu0
      %v7214 = vadd.f32 0.0, %v7213
      %v7215 = vpop.f32.mrb[0].mxu0
      %v7216 = vpop.f32.mrb[0].mxu0
      %v7217 = vadd.f32 0.0, %v7216
      %v7218 = vpop.f32.mrb[0].mxu0
      %7219 = vmatprep.mubr.bf16.mxu0 0
      %7220 = vmatmul.mubr.bf16.gmra.mrb[0].mxu0 %v7151
      %v7221 = vpop.f32.mrb[0].mxu0
      %v7222 = vadd.f32 0.0, %v7221
      %v7223 = vpop.f32.mrb[0].mxu0
      %v7224 = vpop.f32.mrb[0].mxu0
      %v7225 = vadd.f32 0.0, %v7224
      %v7226 = vpop.f32.mrb[0].mxu0
      %7227 = vmatprep.mubr.bf16.mxu0 0
      %7228 = vmatmul.mubr.bf16.gmra.mrb[0].mxu0 %v7154
      %v7229 = vpop.f32.mrb[0].mxu0
      %v7230 = vadd.f32 0.0, %v7229
      %v7231 = vpop.f32.mrb[0].mxu0
      %v7232 = vpop.f32.mrb[0].mxu0
      %v7233 = vadd.f32 0.0, %v7232
      %v7234 = vpop.f32.mrb[0].mxu0
      %7235 = vmatprep.mubr.bf16.mxu0 0
      %7236 = vmatmul.mubr.bf16.gmra.mrb[0].mxu0 %v7157
      %v7237 = vpop.f32.mrb[0].mxu0
      %v7238 = vadd.f32 0.0, %v7237
      %v7239 = vpop.f32.mrb[0].mxu0
      %v7240 = vpop.f32.mrb[0].mxu0
      %v7241 = vadd.f32 0.0, %v7240
      %v7242 = vpop.f32.mrb[0].mxu0
      %7243 = vmatprep.mubr.bf16.mxu0 0
      %7244 = vmatmul.mubr.bf16.gmra.mrb[0].mxu0 %v7160
      %v7245 = vpop.f32.mrb[0].mxu0
      %v7246 = vadd.f32 0.0, %v7245
      %v7247 = vpop.f32.mrb[0].mxu0
      %v7248 = vpop.f32.mrb[0].mxu0
      %v7249 = vadd.f32 0.0, %v7248
      %v7250 = vpop.f32.mrb[0].mxu0
      %7251 = vmatprep.mubr.bf16.mxu0 0
      %7252 = vmatmul.mubr.bf16.gmra.mrb[0].mxu0 %v7163
      %v7253 = vpop.f32.mrb[0].mxu0
      %v7254 = vadd.f32 0.0, %v7253
      %v7255 = vpop.f32.mrb[0].mxu0
      %v7256 = vpop.f32.mrb[0].mxu0
      %v7257 = vadd.f32 0.0, %v7256
      %v7258 = vpop.f32.mrb[0].mxu0
      %7259 = vmatprep.mubr.bf16.mxu0 0
      %7260 = vmatmul.mubr.bf16.gmra.mrb[0].mxu0 %v7166
      %v7261 = vpop.f32.mrb[0].mxu0
      %v7262 = vadd.f32 0.0, %v7261
      %v7263 = vpop.f32.mrb[0].mxu0
      %v7264 = vpop.f32.mrb[0].mxu0
      %v7265 = vadd.f32 0.0, %v7264
      %v7266 = vpop.f32.mrb[0].mxu0
      %7267 = vdwg.mxu0
      %v7268 = vadd.f32 %v6330, %v7206
      %v7269 = vadd.f32 %v6331, %v7209
      %v7270 = vadd.f32 %v6332, %v7214
      %v7271 = vadd.f32 %v6333, %v7217
      %v7272 = vadd.f32 %v6334, %v7222
      %v7273 = vadd.f32 %v6335, %v7225
      %v7274 = vadd.f32 %v6336, %v7230
      %v7275 = vadd.f32 %v6337, %v7233
      %v7276 = vadd.f32 %v6338, %v7238
      %v7277 = vadd.f32 %v6339, %v7241
      %v7278 = vadd.f32 %v6340, %v7246
      %v7279 = vadd.f32 %v6341, %v7249
      %v7280 = vadd.f32 %v6342, %v7254
      %v7281 = vadd.f32 %v6343, %v7257
      %v7282 = vadd.f32 %v6344, %v7262
      %v7283 = vadd.f32 %v6345, %v7265
      %vm7284 = vmand %vm6410, %vm1615
      %vm7285 = vmand %vm6411, %vm1616
      %vm7286 = vmand %vm6412, %vm1617
      %vm7287 = vmand %vm6413, %vm1618
      %vm7288 = vmand %vm6414, %vm1619
      %vm7289 = vmand %vm6415, %vm1620
      %vm7290 = vmand %vm6416, %vm1621
      %vm7291 = vmand %vm6417, %vm1622
      %vm7292 = vmand %vm6418, %vm1623
      %vm7293 = vmand %vm6419, %vm1624
      %vm7294 = vmand %vm6420, %vm1625
      %vm7295 = vmand %vm6421, %vm1626
      %vm7296 = vmand %vm6422, %vm1627
      %vm7297 = vmand %vm6423, %vm1628
      %vm7298 = vmand %vm6424, %vm1629
      %vm7299 = vmand %vm6425, %vm1630
      %vm7300 = vmand %vm7284, %vm1711
      %vm7301 = vmand %vm7285, %vm1712
      %vm7302 = vmand %vm7286, %vm1713
      %vm7303 = vmand %vm7287, %vm1714
      %vm7304 = vmand %vm7288, %vm1715
      %vm7305 = vmand %vm7289, %vm1716
      %vm7306 = vmand %vm7290, %vm1717
      %vm7307 = vmand %vm7291, %vm1718
      %vm7308 = vmand %vm7292, %vm1719
      %vm7309 = vmand %vm7293, %vm1720
      %vm7310 = vmand %vm7294, %vm1721
      %vm7311 = vmand %vm7295, %vm1722
      %vm7312 = vmand %vm7296, %vm1723
      %vm7313 = vmand %vm7297, %vm1724
      %vm7314 = vmand %vm7298, %vm1725
      %vm7315 = vmand %vm7299, %vm1726
      %v7316 = vsel %vm7300, 1, 0
      %v7317 = vsel %vm7301, 1, 0
      %v7318 = vsel %vm7302, 1, 0
      %v7319 = vsel %vm7303, 1, 0
      %v7320 = vsel %vm7304, 1, 0
      %v7321 = vsel %vm7305, 1, 0
      %v7322 = vsel %vm7306, 1, 0
      %v7323 = vsel %vm7307, 1, 0
      %v7324 = vsel %vm7308, 1, 0
      %v7325 = vsel %vm7309, 1, 0
      %v7326 = vsel %vm7310, 1, 0
      %v7327 = vsel %vm7311, 1, 0
      %v7328 = vsel %vm7312, 1, 0
      %v7329 = vsel %vm7313, 1, 0
      %v7330 = vsel %vm7314, 1, 0
      %v7331 = vsel %vm7315, 1, 0
      %v7332 = vcvt.s32.f32 %v7316
      %v7333 = vcvt.s32.f32 %v7317
      %v7334 = vcvt.s32.f32 %v7318
      %v7335 = vcvt.s32.f32 %v7319
      %v7336 = vcvt.s32.f32 %v7320
      %v7337 = vcvt.s32.f32 %v7321
      %v7338 = vcvt.s32.f32 %v7322
      %v7339 = vcvt.s32.f32 %v7323
      %v7340 = vcvt.s32.f32 %v7324
      %v7341 = vcvt.s32.f32 %v7325
      %v7342 = vcvt.s32.f32 %v7326
      %v7343 = vcvt.s32.f32 %v7327
      %v7344 = vcvt.s32.f32 %v7328
      %v7345 = vcvt.s32.f32 %v7329
      %v7346 = vcvt.s32.f32 %v7330
      %v7347 = vcvt.s32.f32 %v7331
      %7364 = vrot.lane.b32.xlu0 %v7332, 18
      %v7365 = vpop.permute.xlu0 %7364
      %7366 = vrot.lane.b32.xlu0 %v7333, 18
      %v7367 = vpop.permute.xlu0 %7366
      %7368 = vrot.lane.b32.xlu0 %v7334, 18
      %v7369 = vpop.permute.xlu0 %7368
      %7370 = vrot.lane.b32.xlu0 %v7335, 18
      %v7371 = vpop.permute.xlu0 %7370
      %7372 = vrot.lane.b32.xlu0 %v7336, 18
      %v7373 = vpop.permute.xlu0 %7372
      %7374 = vrot.lane.b32.xlu0 %v7337, 18
      %v7375 = vpop.permute.xlu0 %7374
      %7376 = vrot.lane.b32.xlu0 %v7338, 18
      %v7377 = vpop.permute.xlu0 %7376
      %7378 = vrot.lane.b32.xlu0 %v7339, 18
      %v7379 = vpop.permute.xlu0 %7378
      %7380 = vrot.lane.b32.xlu0 %v7340, 18
      %v7381 = vpop.permute.xlu0 %7380
      %7382 = vrot.lane.b32.xlu0 %v7341, 18
      %v7383 = vpop.permute.xlu0 %7382
      %7384 = vrot.lane.b32.xlu0 %v7342, 18
      %v7385 = vpop.permute.xlu0 %7384
      %7386 = vrot.lane.b32.xlu0 %v7343, 18
      %v7387 = vpop.permute.xlu0 %7386
      %7388 = vrot.lane.b32.xlu0 %v7344, 18
      %v7389 = vpop.permute.xlu0 %7388
      %7390 = vrot.lane.b32.xlu0 %v7345, 18
      %v7391 = vpop.permute.xlu0 %7390
      %7392 = vrot.lane.b32.xlu0 %v7346, 18
      %v7393 = vpop.permute.xlu0 %7392
      %7394 = vrot.lane.b32.xlu0 %v7347, 18
      %v7395 = vpop.permute.xlu0 %7394
      %v7412 = vmul.f32 %v342, %v7365
      %v7413 = vmul.f32 %v344, %v7367
      %v7414 = vmul.f32 %v346, %v7369
      %v7415 = vmul.f32 %v348, %v7371
      %v7416 = vmul.f32 %v350, %v7373
      %v7417 = vmul.f32 %v352, %v7375
      %v7418 = vmul.f32 %v354, %v7377
      %v7419 = vmul.f32 %v356, %v7379
      %v7420 = vmul.f32 %v358, %v7381
      %v7421 = vmul.f32 %v360, %v7383
      %v7422 = vmul.f32 %v362, %v7385
      %v7423 = vmul.f32 %v364, %v7387
      %v7424 = vmul.f32 %v366, %v7389
      %v7425 = vmul.f32 %v368, %v7391
      %v7426 = vmul.f32 %v370, %v7393
      %v7427 = vmul.f32 %v372, %v7395
      %7428 = vset.pattern.permute.xlu0 7
      %7429 = vperm.xlu0 %7428, %v6570
      %v7430 = vpop.permute.xlu0 %7429
      %7432 = vset.pattern.permute.xlu0 7
      %7433 = vperm.xlu0 %7432, %v6571
      %v7434 = vpop.permute.xlu0 %7433
      %7436 = vset.pattern.permute.xlu0 7
      %7437 = vperm.xlu0 %7436, %v6572
      %v7438 = vpop.permute.xlu0 %7437
      %7440 = vset.pattern.permute.xlu0 7
      %7441 = vperm.xlu0 %7440, %v6573
      %v7442 = vpop.permute.xlu0 %7441
      %7444 = vset.pattern.permute.xlu0 7
      %7445 = vperm.xlu0 %7444, %v6574
      %v7446 = vpop.permute.xlu0 %7445
      %7448 = vset.pattern.permute.xlu0 7
      %7449 = vperm.xlu0 %7448, %v6575
      %v7450 = vpop.permute.xlu0 %7449
      %7452 = vset.pattern.permute.xlu0 7
      %7453 = vperm.xlu0 %7452, %v6576
      %v7454 = vpop.permute.xlu0 %7453
      %7456 = vset.pattern.permute.xlu0 7
      %7457 = vperm.xlu0 %7456, %v6577
      %v7458 = vpop.permute.xlu0 %7457
      %7460 = vset.pattern.permute.xlu0 7
      %7461 = vperm.xlu0 %7460, %v6578
      %v7462 = vpop.permute.xlu0 %7461
      %7464 = vset.pattern.permute.xlu0 7
      %7465 = vperm.xlu0 %7464, %v6579
      %v7466 = vpop.permute.xlu0 %7465
      %7468 = vset.pattern.permute.xlu0 7
      %7469 = vperm.xlu0 %7468, %v6580
      %v7470 = vpop.permute.xlu0 %7469
      %7472 = vset.pattern.permute.xlu0 7
      %7473 = vperm.xlu0 %7472, %v6581
      %v7474 = vpop.permute.xlu0 %7473
      %7476 = vset.pattern.permute.xlu0 7
      %7477 = vperm.xlu0 %7476, %v6582
      %v7478 = vpop.permute.xlu0 %7477
      %7480 = vset.pattern.permute.xlu0 7
      %7481 = vperm.xlu0 %7480, %v6583
      %v7482 = vpop.permute.xlu0 %7481
      %7484 = vset.pattern.permute.xlu0 7
      %7485 = vperm.xlu0 %7484, %v6584
      %v7486 = vpop.permute.xlu0 %7485
      %7488 = vset.pattern.permute.xlu0 7
      %7489 = vperm.xlu0 %7488, %v6585
      %v7490 = vpop.permute.xlu0 %7489
      %v7492 = vsub.f32 %v7430, %v507
      %v7493 = vsub.f32 %v7434, %v507
      %v7494 = vsub.f32 %v7438, %v507
      %v7495 = vsub.f32 %v7442, %v507
      %v7496 = vsub.f32 %v7446, %v507
      %v7497 = vsub.f32 %v7450, %v507
      %v7498 = vsub.f32 %v7454, %v507
      %v7499 = vsub.f32 %v7458, %v507
      %v7500 = vsub.f32 %v7462, %v507
      %v7501 = vsub.f32 %v7466, %v507
      %v7502 = vsub.f32 %v7470, %v507
      %v7503 = vsub.f32 %v7474, %v507
      %v7504 = vsub.f32 %v7478, %v507
      %v7505 = vsub.f32 %v7482, %v507
      %v7506 = vsub.f32 %v7486, %v507
      %v7507 = vsub.f32 %v7490, %v507
      %v7508 = vand.u32 2147483647, %v7492
      %v7509 = vand.u32 2147483647, %v7493
      %v7510 = vand.u32 2147483647, %v7494
      %v7511 = vand.u32 2147483647, %v7495
      %v7512 = vand.u32 2147483647, %v7496
      %v7513 = vand.u32 2147483647, %v7497
      %v7514 = vand.u32 2147483647, %v7498
      %v7515 = vand.u32 2147483647, %v7499
      %v7516 = vand.u32 2147483647, %v7500
      %v7517 = vand.u32 2147483647, %v7501
      %v7518 = vand.u32 2147483647, %v7502
      %v7519 = vand.u32 2147483647, %v7503
      %v7520 = vand.u32 2147483647, %v7504
      %v7521 = vand.u32 2147483647, %v7505
      %v7522 = vand.u32 2147483647, %v7506
      %v7523 = vand.u32 2147483647, %v7507
      %v7524 = vsub.f32 1.0, %v7508
      %v7525 = vsub.f32 1.0, %v7509
      %v7526 = vsub.f32 1.0, %v7510
      %v7527 = vsub.f32 1.0, %v7511
      %v7528 = vsub.f32 1.0, %v7512
      %v7529 = vsub.f32 1.0, %v7513
      %v7530 = vsub.f32 1.0, %v7514
      %v7531 = vsub.f32 1.0, %v7515
      %v7532 = vsub.f32 1.0, %v7516
      %v7533 = vsub.f32 1.0, %v7517
      %v7534 = vsub.f32 1.0, %v7518
      %v7535 = vsub.f32 1.0, %v7519
      %v7536 = vsub.f32 1.0, %v7520
      %v7537 = vsub.f32 1.0, %v7521
      %v7538 = vsub.f32 1.0, %v7522
      %v7539 = vsub.f32 1.0, %v7523
      %v7540 = vmax.f32 %v7524, 0.0
      %v7541 = vmax.f32 %v7525, 0.0
      %v7542 = vmax.f32 %v7526, 0.0
      %v7543 = vmax.f32 %v7527, 0.0
      %v7544 = vmax.f32 %v7528, 0.0
      %v7545 = vmax.f32 %v7529, 0.0
      %v7546 = vmax.f32 %v7530, 0.0
      %v7547 = vmax.f32 %v7531, 0.0
      %v7548 = vmax.f32 %v7532, 0.0
      %v7549 = vmax.f32 %v7533, 0.0
      %v7550 = vmax.f32 %v7534, 0.0
      %v7551 = vmax.f32 %v7535, 0.0
      %v7552 = vmax.f32 %v7536, 0.0
      %v7553 = vmax.f32 %v7537, 0.0
      %v7554 = vmax.f32 %v7538, 0.0
      %v7555 = vmax.f32 %v7539, 0.0
      %7557 = vset.pattern.permute.xlu0 25
      %7558 = vperm.xlu0 %7557, %v7412
      %v7559 = vpop.permute.xlu0 %7558
      %7562 = vset.pattern.permute.xlu0 25
      %7563 = vperm.xlu0 %7562, %v7413
      %v7564 = vpop.permute.xlu0 %7563
      %7567 = vset.pattern.permute.xlu0 25
      %7568 = vperm.xlu0 %7567, %v7414
      %v7569 = vpop.permute.xlu0 %7568
      %7572 = vset.pattern.permute.xlu0 25
      %7573 = vperm.xlu0 %7572, %v7415
      %v7574 = vpop.permute.xlu0 %7573
      %7577 = vset.pattern.permute.xlu0 25
      %7578 = vperm.xlu0 %7577, %v7416
      %v7579 = vpop.permute.xlu0 %7578
      %7582 = vset.pattern.permute.xlu0 25
      %7583 = vperm.xlu0 %7582, %v7417
      %v7584 = vpop.permute.xlu0 %7583
      %7587 = vset.pattern.permute.xlu0 25
      %7588 = vperm.xlu0 %7587, %v7418
      %v7589 = vpop.permute.xlu0 %7588
      %7592 = vset.pattern.permute.xlu0 25
      %7593 = vperm.xlu0 %7592, %v7419
      %v7594 = vpop.permute.xlu0 %7593
      %7597 = vset.pattern.permute.xlu0 25
      %7598 = vperm.xlu0 %7597, %v7420
      %v7599 = vpop.permute.xlu0 %7598
      %7602 = vset.pattern.permute.xlu0 25
      %7603 = vperm.xlu0 %7602, %v7421
      %v7604 = vpop.permute.xlu0 %7603
      %7607 = vset.pattern.permute.xlu0 25
      %7608 = vperm.xlu0 %7607, %v7422
      %v7609 = vpop.permute.xlu0 %7608
      %7612 = vset.pattern.permute.xlu0 25
      %7613 = vperm.xlu0 %7612, %v7423
      %v7614 = vpop.permute.xlu0 %7613
      %7617 = vset.pattern.permute.xlu0 25
      %7618 = vperm.xlu0 %7617, %v7424
      %v7619 = vpop.permute.xlu0 %7618
      %7622 = vset.pattern.permute.xlu0 25
      %7623 = vperm.xlu0 %7622, %v7425
      %v7624 = vpop.permute.xlu0 %7623
      %7627 = vset.pattern.permute.xlu0 25
      %7628 = vperm.xlu0 %7627, %v7426
      %v7629 = vpop.permute.xlu0 %7628
      %7632 = vset.pattern.permute.xlu0 25
      %7633 = vperm.xlu0 %7632, %v7427
      %v7634 = vpop.permute.xlu0 %7633
      %v7636 = vmul.f32 %v7540, %v7559
      %v7637 = vmul.f32 %v7541, %v7564
      %v7638 = vmul.f32 %v7542, %v7569
      %v7639 = vmul.f32 %v7543, %v7574
      %v7640 = vmul.f32 %v7544, %v7579
      %v7641 = vmul.f32 %v7545, %v7584
      %v7642 = vmul.f32 %v7546, %v7589
      %v7643 = vmul.f32 %v7547, %v7594
      %v7644 = vmul.f32 %v7548, %v7599
      %v7645 = vmul.f32 %v7549, %v7604
      %v7646 = vmul.f32 %v7550, %v7609
      %v7647 = vmul.f32 %v7551, %v7614
      %v7648 = vmul.f32 %v7552, %v7619
      %v7649 = vmul.f32 %v7553, %v7624
      %v7650 = vmul.f32 %v7554, %v7629
      %v7651 = vmul.f32 %v7555, %v7634
      %7652 = vset.pattern.permute.xlu0 16
      %7653 = vperm.xlu0 %7652, %v2079
      %v7654 = vpop.permute.xlu0 %7653
      %7656 = vset.pattern.permute.xlu0 16
      %7657 = vperm.xlu0 %7656, %v2080
      %v7658 = vpop.permute.xlu0 %7657
      %7660 = vset.pattern.permute.xlu0 16
      %7661 = vperm.xlu0 %7660, %v2081
      %v7662 = vpop.permute.xlu0 %7661
      %7664 = vset.pattern.permute.xlu0 16
      %7665 = vperm.xlu0 %7664, %v2082
      %v7666 = vpop.permute.xlu0 %7665
      %7668 = vset.pattern.permute.xlu0 16
      %7669 = vperm.xlu0 %7668, %v2083
      %v7670 = vpop.permute.xlu0 %7669
      %7672 = vset.pattern.permute.xlu0 16
      %7673 = vperm.xlu0 %7672, %v2084
      %v7674 = vpop.permute.xlu0 %7673
      %7676 = vset.pattern.permute.xlu0 16
      %7677 = vperm.xlu0 %7676, %v2085
      %v7678 = vpop.permute.xlu0 %7677
      %7680 = vset.pattern.permute.xlu0 16
      %7681 = vperm.xlu0 %7680, %v2086
      %v7682 = vpop.permute.xlu0 %7681
      %7684 = vset.pattern.permute.xlu0 16
      %7685 = vperm.xlu0 %7684, %v2087
      %v7686 = vpop.permute.xlu0 %7685
      %7688 = vset.pattern.permute.xlu0 16
      %7689 = vperm.xlu0 %7688, %v2088
      %v7690 = vpop.permute.xlu0 %7689
      %7692 = vset.pattern.permute.xlu0 16
      %7693 = vperm.xlu0 %7692, %v2089
      %v7694 = vpop.permute.xlu0 %7693
      %7696 = vset.pattern.permute.xlu0 16
      %7697 = vperm.xlu0 %7696, %v2090
      %v7698 = vpop.permute.xlu0 %7697
      %7700 = vset.pattern.permute.xlu0 16
      %7701 = vperm.xlu0 %7700, %v2091
      %v7702 = vpop.permute.xlu0 %7701
      %7704 = vset.pattern.permute.xlu0 16
      %7705 = vperm.xlu0 %7704, %v2092
      %v7706 = vpop.permute.xlu0 %7705
      %7708 = vset.pattern.permute.xlu0 16
      %7709 = vperm.xlu0 %7708, %v2093
      %v7710 = vpop.permute.xlu0 %7709
      %7712 = vset.pattern.permute.xlu0 16
      %7713 = vperm.xlu0 %7712, %v2094
      %v7714 = vpop.permute.xlu0 %7713
      %v7716 = vsub.f32 %v7654, %v510
      %v7717 = vsub.f32 %v7658, %v510
      %v7718 = vsub.f32 %v7662, %v510
      %v7719 = vsub.f32 %v7666, %v510
      %v7720 = vsub.f32 %v7670, %v510
      %v7721 = vsub.f32 %v7674, %v510
      %v7722 = vsub.f32 %v7678, %v510
      %v7723 = vsub.f32 %v7682, %v510
      %v7724 = vsub.f32 %v7686, %v510
      %v7725 = vsub.f32 %v7690, %v510
      %v7726 = vsub.f32 %v7694, %v510
      %v7727 = vsub.f32 %v7698, %v510
      %v7728 = vsub.f32 %v7702, %v510
      %v7729 = vsub.f32 %v7706, %v510
      %v7730 = vsub.f32 %v7710, %v510
      %v7731 = vsub.f32 %v7714, %v510
      %v7732 = vand.u32 2147483647, %v7716
      %v7733 = vand.u32 2147483647, %v7717
      %v7734 = vand.u32 2147483647, %v7718
      %v7735 = vand.u32 2147483647, %v7719
      %v7736 = vand.u32 2147483647, %v7720
      %v7737 = vand.u32 2147483647, %v7721
      %v7738 = vand.u32 2147483647, %v7722
      %v7739 = vand.u32 2147483647, %v7723
      %v7740 = vand.u32 2147483647, %v7724
      %v7741 = vand.u32 2147483647, %v7725
      %v7742 = vand.u32 2147483647, %v7726
      %v7743 = vand.u32 2147483647, %v7727
      %v7744 = vand.u32 2147483647, %v7728
      %v7745 = vand.u32 2147483647, %v7729
      %v7746 = vand.u32 2147483647, %v7730
      %v7747 = vand.u32 2147483647, %v7731
      %v7748 = vsub.f32 1.0, %v7732
      %v7749 = vsub.f32 1.0, %v7733
      %v7750 = vsub.f32 1.0, %v7734
      %v7751 = vsub.f32 1.0, %v7735
      %v7752 = vsub.f32 1.0, %v7736
      %v7753 = vsub.f32 1.0, %v7737
      %v7754 = vsub.f32 1.0, %v7738
      %v7755 = vsub.f32 1.0, %v7739
      %v7756 = vsub.f32 1.0, %v7740
      %v7757 = vsub.f32 1.0, %v7741
      %v7758 = vsub.f32 1.0, %v7742
      %v7759 = vsub.f32 1.0, %v7743
      %v7760 = vsub.f32 1.0, %v7744
      %v7761 = vsub.f32 1.0, %v7745
      %v7762 = vsub.f32 1.0, %v7746
      %v7763 = vsub.f32 1.0, %v7747
      %v7764 = vmax.f32 %v7748, 0.0
      %v7765 = vmax.f32 %v7749, 0.0
      %v7766 = vmax.f32 %v7750, 0.0
      %v7767 = vmax.f32 %v7751, 0.0
      %v7768 = vmax.f32 %v7752, 0.0
      %v7769 = vmax.f32 %v7753, 0.0
      %v7770 = vmax.f32 %v7754, 0.0
      %v7771 = vmax.f32 %v7755, 0.0
      %v7772 = vmax.f32 %v7756, 0.0
      %v7773 = vmax.f32 %v7757, 0.0
      %v7774 = vmax.f32 %v7758, 0.0
      %v7775 = vmax.f32 %v7759, 0.0
      %v7776 = vmax.f32 %v7760, 0.0
      %v7777 = vmax.f32 %v7761, 0.0
      %v7778 = vmax.f32 %v7762, 0.0
      %v7779 = vmax.f32 %v7763, 0.0
      %v7780 = vpack.c.bf16 %v7637, %v7636
      %v7781 = vpack.c.bf16 %v7639, %v7638
      %v7782 = vpack.c.bf16 %v7641, %v7640
      %v7783 = vpack.c.bf16 %v7643, %v7642
      %v7784 = vpack.c.bf16 %v7645, %v7644
      %v7785 = vpack.c.bf16 %v7647, %v7646
      %v7786 = vpack.c.bf16 %v7649, %v7648
      %v7787 = vpack.c.bf16 %v7651, %v7650
      %v7789 = vsel %vm1360, %v7780, 0
      %v7792 = vsel %vm1360, %v7781, 0
      %v7795 = vsel %vm1360, %v7782, 0
      %v7798 = vsel %vm1360, %v7783, 0
      %v7801 = vsel %vm1360, %v7784, 0
      %v7804 = vsel %vm1360, %v7785, 0
      %v7807 = vsel %vm1360, %v7786, 0
      %v7810 = vsel %vm1360, %v7787, 0
      %7812 = vmatprep.subr.bf16.mxu0 0
      %7813 = vmatpush1.bf16.msra.mxu0 %v1357
      %7814 = vmatprep.subr.bf16.mxu0 0
      %7815 = vmatpush1.bf16.msra.mxu0 %v1387
      %7816 = vmatprep.subr.bf16.mxu0 0
      %7817 = vmatpush1.bf16.msra.mxu0 0
      %7818 = vmatprep.subr.bf16.mxu0 0
      %7819 = vmatpush1.bf16.msra.mxu0 0
      %7820 = vmatprep.subr.bf16.mxu0 0
      %7821 = vmatpush1.bf16.msra.mxu0 0
      %7822 = vmatprep.subr.bf16.mxu0 0
      %7823 = vmatpush1.bf16.msra.mxu0 0
      %7824 = vmatprep.subr.bf16.mxu0 0
      %7825 = vmatpush1.bf16.msra.mxu0 0
      %7826 = vmatprep.subr.bf16.mxu0 0
      %7827 = vmatpush1.bf16.msra.mxu0 0
      %7828 = vmatprep.subr.bf16.mxu0 0
      %7829 = vmatpush1.bf16.msra.mxu0 0
      %7830 = vmatprep.subr.bf16.mxu0 0
      %7831 = vmatpush1.bf16.msra.mxu0 0
      %7832 = vmatprep.subr.bf16.mxu0 0
      %7833 = vmatpush1.bf16.msra.mxu0 0
      %7834 = vmatprep.subr.bf16.mxu0 0
      %7835 = vmatpush1.bf16.msra.mxu0 0
      %7836 = vmatprep.subr.bf16.mxu0 0
      %7837 = vmatpush1.bf16.msra.mxu0 0
      %7838 = vmatprep.subr.bf16.mxu0 0
      %7839 = vmatpush1.bf16.msra.mxu0 0
      %7840 = vmatprep.subr.bf16.mxu0 0
      %7841 = vmatpush1.bf16.msra.mxu0 0
      %7842 = vmatprep.subr.bf16.mxu0 0
      %7843 = vmatpush1.bf16.msra.mxu0 0
      %7844 = vmatprep.mubr.bf16.mxu0 0
      %7845 = vmatmul.mubr.bf16.gmra.mrb[0].mxu0 %v7789
      %v7846 = vpop.f32.mrb[0].mxu0
      %v7847 = vadd.f32 0.0, %v7846
      %v7848 = vpop.f32.mrb[0].mxu0
      %v7849 = vpop.f32.mrb[0].mxu0
      %v7850 = vadd.f32 0.0, %v7849
      %v7851 = vpop.f32.mrb[0].mxu0
      %7852 = vmatprep.mubr.bf16.mxu0 0
      %7853 = vmatmul.mubr.bf16.gmra.mrb[0].mxu0 %v7792
      %v7854 = vpop.f32.mrb[0].mxu0
      %v7855 = vadd.f32 0.0, %v7854
      %v7856 = vpop.f32.mrb[0].mxu0
      %v7857 = vpop.f32.mrb[0].mxu0
      %v7858 = vadd.f32 0.0, %v7857
      %v7859 = vpop.f32.mrb[0].mxu0
      %7860 = vmatprep.mubr.bf16.mxu0 0
      %7861 = vmatmul.mubr.bf16.gmra.mrb[0].mxu0 %v7795
      %v7862 = vpop.f32.mrb[0].mxu0
      %v7863 = vadd.f32 0.0, %v7862
      %v7864 = vpop.f32.mrb[0].mxu0
      %v7865 = vpop.f32.mrb[0].mxu0
      %v7866 = vadd.f32 0.0, %v7865
      %v7867 = vpop.f32.mrb[0].mxu0
      %7868 = vmatprep.mubr.bf16.mxu0 0
      %7869 = vmatmul.mubr.bf16.gmra.mrb[0].mxu0 %v7798
      %v7870 = vpop.f32.mrb[0].mxu0
      %v7871 = vadd.f32 0.0, %v7870
      %v7872 = vpop.f32.mrb[0].mxu0
      %v7873 = vpop.f32.mrb[0].mxu0
      %v7874 = vadd.f32 0.0, %v7873
      %v7875 = vpop.f32.mrb[0].mxu0
      %7876 = vmatprep.mubr.bf16.mxu0 0
      %7877 = vmatmul.mubr.bf16.gmra.mrb[0].mxu0 %v7801
      %v7878 = vpop.f32.mrb[0].mxu0
      %v7879 = vadd.f32 0.0, %v7878
      %v7880 = vpop.f32.mrb[0].mxu0
      %v7881 = vpop.f32.mrb[0].mxu0
      %v7882 = vadd.f32 0.0, %v7881
      %v7883 = vpop.f32.mrb[0].mxu0
      %7884 = vmatprep.mubr.bf16.mxu0 0
      %7885 = vmatmul.mubr.bf16.gmra.mrb[0].mxu0 %v7804
      %v7886 = vpop.f32.mrb[0].mxu0
      %v7887 = vadd.f32 0.0, %v7886
      %v7888 = vpop.f32.mrb[0].mxu0
      %v7889 = vpop.f32.mrb[0].mxu0
      %v7890 = vadd.f32 0.0, %v7889
      %v7891 = vpop.f32.mrb[0].mxu0
      %7892 = vmatprep.mubr.bf16.mxu0 0
      %7893 = vmatmul.mubr.bf16.gmra.mrb[0].mxu0 %v7807
      %v7894 = vpop.f32.mrb[0].mxu0
      %v7895 = vadd.f32 0.0, %v7894
      %v7896 = vpop.f32.mrb[0].mxu0
      %v7897 = vpop.f32.mrb[0].mxu0
      %v7898 = vadd.f32 0.0, %v7897
      %v7899 = vpop.f32.mrb[0].mxu0
      %7900 = vmatprep.mubr.bf16.mxu0 0
      %7901 = vmatmul.mubr.bf16.gmra.mrb[0].mxu0 %v7810
      %v7902 = vpop.f32.mrb[0].mxu0
      %v7903 = vadd.f32 0.0, %v7902
      %v7904 = vpop.f32.mrb[0].mxu0
      %v7905 = vpop.f32.mrb[0].mxu0
      %v7906 = vadd.f32 0.0, %v7905
      %v7907 = vpop.f32.mrb[0].mxu0
      %7908 = vdwg.mxu0
      %v7909 = vmul.f32 %v7847, %v7764
      %v7910 = vmul.f32 %v7850, %v7765
      %v7911 = vmul.f32 %v7855, %v7766
      %v7912 = vmul.f32 %v7858, %v7767
      %v7913 = vmul.f32 %v7863, %v7768
      %v7914 = vmul.f32 %v7866, %v7769
      %v7915 = vmul.f32 %v7871, %v7770
      %v7916 = vmul.f32 %v7874, %v7771
      %v7917 = vmul.f32 %v7879, %v7772
      %v7918 = vmul.f32 %v7882, %v7773
      %v7919 = vmul.f32 %v7887, %v7774
      %v7920 = vmul.f32 %v7890, %v7775
      %v7921 = vmul.f32 %v7895, %v7776
      %v7922 = vmul.f32 %v7898, %v7777
      %v7923 = vmul.f32 %v7903, %v7778
      %v7924 = vmul.f32 %v7906, %v7779
      %v7925 = vpack.c.bf16 %v7910, %v7909
      %v7926 = vpack.c.bf16 %v7912, %v7911
      %v7927 = vpack.c.bf16 %v7914, %v7913
      %v7928 = vpack.c.bf16 %v7916, %v7915
      %v7929 = vpack.c.bf16 %v7918, %v7917
      %v7930 = vpack.c.bf16 %v7920, %v7919
      %v7931 = vpack.c.bf16 %v7922, %v7921
      %v7932 = vpack.c.bf16 %v7924, %v7923
      %s7933 = scalar_lea.vmem %s2, 252
      %v7934 = vld [vmem:[%s7933] sm:$0xf]
      %v7935 = vld [vmem:[%s7933 + $0x4] sm:$0xf]
      %v7936 = vld [vmem:[%s7933 + $0x8] sm:$0xf]
      %v7937 = vld [vmem:[%s7933 + $0xc] sm:$0xf]
      %v7938 = vld [vmem:[%s7933 + $0x10] sm:$0xf]
      %v7939 = vld [vmem:[%s7933 + $0x14] sm:$0xf]
      %v7940 = vld [vmem:[%s7933 + $0x18] sm:$0xf]
      %v7941 = vld [vmem:[%s7933 + $0x1c] sm:$0xf]
      %v7942 = vld [vmem:[%s7933 + $0x20] sm:$0xf]
      %v7952 = vunpack.c.l.b16 %v7934
      %v7953 = vunpack.c.l.b16 %v7935
      %v7954 = vunpack.c.l.b16 %v7936
      %v7955 = vunpack.c.l.b16 %v7937
      %v7956 = vunpack.c.l.b16 %v7938
      %v7957 = vunpack.c.l.b16 %v7939
      %v7958 = vunpack.c.l.b16 %v7940
      %v7959 = vunpack.c.l.b16 %v7941
      %v7960 = vunpack.c.l.b16 %v7942
      %v7961 = vpack.c.b16 %v7953, %v7952
      %v7962 = vpack.c.b16 %v7955, %v7954
      %v7963 = vpack.c.b16 %v7957, %v7956
      %v7964 = vpack.c.b16 %v7959, %v7958
      %v7965 = vpack.c.b16 %v7960, %v7960
      %v7971 = vsel %vm2429, %v7925, 0
      %v7974 = vsel %vm2429, %v7926, 0
      %v7977 = vsel %vm2429, %v7927, 0
      %v7980 = vsel %vm2429, %v7928, 0
      %v7983 = vsel %vm2429, %v7929, 0
      %v7986 = vsel %vm2429, %v7930, 0
      %v7989 = vsel %vm2429, %v7931, 0
      %v7992 = vsel %vm2429, %v7932, 0
      %v7995 = vsel %vm2454, %v7965, 0
      %7997 = vmatprep.subr.bf16.mxu0 0
      %7998 = vmatpush1.bf16.msra.mxu0 %v7961
      %7999 = vmatprep.subr.bf16.mxu0 0
      %8000 = vmatpush1.bf16.msra.mxu0 %v7962
      %8001 = vmatprep.subr.bf16.mxu0 0
      %8002 = vmatpush1.bf16.msra.mxu0 %v7963
      %8003 = vmatprep.subr.bf16.mxu0 0
      %8004 = vmatpush1.bf16.msra.mxu0 %v7964
      %8005 = vmatprep.subr.bf16.mxu0 0
      %8006 = vmatpush1.bf16.msra.mxu0 %v7995
      %8007 = vmatprep.subr.bf16.mxu0 0
      %8008 = vmatpush1.bf16.msra.mxu0 0
      %8009 = vmatprep.subr.bf16.mxu0 0
      %8010 = vmatpush1.bf16.msra.mxu0 0
      %8011 = vmatprep.subr.bf16.mxu0 0
      %8012 = vmatpush1.bf16.msra.mxu0 0
      %8013 = vmatprep.subr.bf16.mxu0 0
      %8014 = vmatpush1.bf16.msra.mxu0 0
      %8015 = vmatprep.subr.bf16.mxu0 0
      %8016 = vmatpush1.bf16.msra.mxu0 0
      %8017 = vmatprep.subr.bf16.mxu0 0
      %8018 = vmatpush1.bf16.msra.mxu0 0
      %8019 = vmatprep.subr.bf16.mxu0 0
      %8020 = vmatpush1.bf16.msra.mxu0 0
      %8021 = vmatprep.subr.bf16.mxu0 0
      %8022 = vmatpush1.bf16.msra.mxu0 0
      %8023 = vmatprep.subr.bf16.mxu0 0
      %8024 = vmatpush1.bf16.msra.mxu0 0
      %8025 = vmatprep.subr.bf16.mxu0 0
      %8026 = vmatpush1.bf16.msra.mxu0 0
      %8027 = vmatprep.subr.bf16.mxu0 0
      %8028 = vmatpush1.bf16.msra.mxu0 0
      %8029 = vmatprep.mubr.bf16.mxu0 0
      %8030 = vmatmul.mubr.bf16.gmra.mrb[0].mxu0 %v7971
      %v8031 = vpop.f32.mrb[0].mxu0
      %v8032 = vadd.f32 0.0, %v8031
      %v8033 = vpop.f32.mrb[0].mxu0
      %v8034 = vpop.f32.mrb[0].mxu0
      %v8035 = vadd.f32 0.0, %v8034
      %v8036 = vpop.f32.mrb[0].mxu0
      %8037 = vmatprep.mubr.bf16.mxu0 0
      %8038 = vmatmul.mubr.bf16.gmra.mrb[0].mxu0 %v7974
      %v8039 = vpop.f32.mrb[0].mxu0
      %v8040 = vadd.f32 0.0, %v8039
      %v8041 = vpop.f32.mrb[0].mxu0
      %v8042 = vpop.f32.mrb[0].mxu0
      %v8043 = vadd.f32 0.0, %v8042
      %v8044 = vpop.f32.mrb[0].mxu0
      %8045 = vmatprep.mubr.bf16.mxu0 0
      %8046 = vmatmul.mubr.bf16.gmra.mrb[0].mxu0 %v7977
      %v8047 = vpop.f32.mrb[0].mxu0
      %v8048 = vadd.f32 0.0, %v8047
      %v8049 = vpop.f32.mrb[0].mxu0
      %v8050 = vpop.f32.mrb[0].mxu0
      %v8051 = vadd.f32 0.0, %v8050
      %v8052 = vpop.f32.mrb[0].mxu0
      %8053 = vmatprep.mubr.bf16.mxu0 0
      %8054 = vmatmul.mubr.bf16.gmra.mrb[0].mxu0 %v7980
      %v8055 = vpop.f32.mrb[0].mxu0
      %v8056 = vadd.f32 0.0, %v8055
      %v8057 = vpop.f32.mrb[0].mxu0
      %v8058 = vpop.f32.mrb[0].mxu0
      %v8059 = vadd.f32 0.0, %v8058
      %v8060 = vpop.f32.mrb[0].mxu0
      %8061 = vmatprep.mubr.bf16.mxu0 0
      %8062 = vmatmul.mubr.bf16.gmra.mrb[0].mxu0 %v7983
      %v8063 = vpop.f32.mrb[0].mxu0
      %v8064 = vadd.f32 0.0, %v8063
      %v8065 = vpop.f32.mrb[0].mxu0
      %v8066 = vpop.f32.mrb[0].mxu0
      %v8067 = vadd.f32 0.0, %v8066
      %v8068 = vpop.f32.mrb[0].mxu0
      %8069 = vmatprep.mubr.bf16.mxu0 0
      %8070 = vmatmul.mubr.bf16.gmra.mrb[0].mxu0 %v7986
      %v8071 = vpop.f32.mrb[0].mxu0
      %v8072 = vadd.f32 0.0, %v8071
      %v8073 = vpop.f32.mrb[0].mxu0
      %v8074 = vpop.f32.mrb[0].mxu0
      %v8075 = vadd.f32 0.0, %v8074
      %v8076 = vpop.f32.mrb[0].mxu0
      %8077 = vmatprep.mubr.bf16.mxu0 0
      %8078 = vmatmul.mubr.bf16.gmra.mrb[0].mxu0 %v7989
      %v8079 = vpop.f32.mrb[0].mxu0
      %v8080 = vadd.f32 0.0, %v8079
      %v8081 = vpop.f32.mrb[0].mxu0
      %v8082 = vpop.f32.mrb[0].mxu0
      %v8083 = vadd.f32 0.0, %v8082
      %v8084 = vpop.f32.mrb[0].mxu0
      %8085 = vmatprep.mubr.bf16.mxu0 0
      %8086 = vmatmul.mubr.bf16.gmra.mrb[0].mxu0 %v7992
      %v8087 = vpop.f32.mrb[0].mxu0
      %v8088 = vadd.f32 0.0, %v8087
      %v8089 = vpop.f32.mrb[0].mxu0
      %v8090 = vpop.f32.mrb[0].mxu0
      %v8091 = vadd.f32 0.0, %v8090
      %v8092 = vpop.f32.mrb[0].mxu0
      %8093 = vdwg.mxu0
      %v8094 = vadd.f32 %v7268, %v8032
      %v8095 = vadd.f32 %v7269, %v8035
      %v8096 = vadd.f32 %v7270, %v8040
      %v8097 = vadd.f32 %v7271, %v8043
      %v8098 = vadd.f32 %v7272, %v8048
      %v8099 = vadd.f32 %v7273, %v8051
      %v8100 = vadd.f32 %v7274, %v8056
      %v8101 = vadd.f32 %v7275, %v8059
      %v8102 = vadd.f32 %v7276, %v8064
      %v8103 = vadd.f32 %v7277, %v8067
      %v8104 = vadd.f32 %v7278, %v8072
      %v8105 = vadd.f32 %v7279, %v8075
      %v8106 = vadd.f32 %v7280, %v8080
      %v8107 = vadd.f32 %v7281, %v8083
      %v8108 = vadd.f32 %v7282, %v8088
      %v8109 = vadd.f32 %v7283, %v8091
      %vm8110 = vmand %vm6410, %vm2802
      %vm8111 = vmand %vm6411, %vm2803
      %vm8112 = vmand %vm6412, %vm2804
      %vm8113 = vmand %vm6413, %vm2805
      %vm8114 = vmand %vm6414, %vm2806
      %vm8115 = vmand %vm6415, %vm2807
      %vm8116 = vmand %vm6416, %vm2808
      %vm8117 = vmand %vm6417, %vm2809
      %vm8118 = vmand %vm6418, %vm2810
      %vm8119 = vmand %vm6419, %vm2811
      %vm8120 = vmand %vm6420, %vm2812
      %vm8121 = vmand %vm6421, %vm2813
      %vm8122 = vmand %vm6422, %vm2814
      %vm8123 = vmand %vm6423, %vm2815
      %vm8124 = vmand %vm6424, %vm2816
      %vm8125 = vmand %vm6425, %vm2817
      %vm8126 = vmand %vm8110, %vm2898
      %vm8127 = vmand %vm8111, %vm2899
      %vm8128 = vmand %vm8112, %vm2900
      %vm8129 = vmand %vm8113, %vm2901
      %vm8130 = vmand %vm8114, %vm2902
      %vm8131 = vmand %vm8115, %vm2903
      %vm8132 = vmand %vm8116, %vm2904
      %vm8133 = vmand %vm8117, %vm2905
      %vm8134 = vmand %vm8118, %vm2906
      %vm8135 = vmand %vm8119, %vm2907
      %vm8136 = vmand %vm8120, %vm2908
      %vm8137 = vmand %vm8121, %vm2909
      %vm8138 = vmand %vm8122, %vm2910
      %vm8139 = vmand %vm8123, %vm2911
      %vm8140 = vmand %vm8124, %vm2912
      %vm8141 = vmand %vm8125, %vm2913
      %v8142 = vsel %vm8126, 1, 0
      %v8143 = vsel %vm8127, 1, 0
      %v8144 = vsel %vm8128, 1, 0
      %v8145 = vsel %vm8129, 1, 0
      %v8146 = vsel %vm8130, 1, 0
      %v8147 = vsel %vm8131, 1, 0
      %v8148 = vsel %vm8132, 1, 0
      %v8149 = vsel %vm8133, 1, 0
      %v8150 = vsel %vm8134, 1, 0
      %v8151 = vsel %vm8135, 1, 0
      %v8152 = vsel %vm8136, 1, 0
      %v8153 = vsel %vm8137, 1, 0
      %v8154 = vsel %vm8138, 1, 0
      %v8155 = vsel %vm8139, 1, 0
      %v8156 = vsel %vm8140, 1, 0
      %v8157 = vsel %vm8141, 1, 0
      %v8158 = vcvt.s32.f32 %v8142
      %v8159 = vcvt.s32.f32 %v8143
      %v8160 = vcvt.s32.f32 %v8144
      %v8161 = vcvt.s32.f32 %v8145
      %v8162 = vcvt.s32.f32 %v8146
      %v8163 = vcvt.s32.f32 %v8147
      %v8164 = vcvt.s32.f32 %v8148
      %v8165 = vcvt.s32.f32 %v8149
      %v8166 = vcvt.s32.f32 %v8150
      %v8167 = vcvt.s32.f32 %v8151
      %v8168 = vcvt.s32.f32 %v8152
      %v8169 = vcvt.s32.f32 %v8153
      %v8170 = vcvt.s32.f32 %v8154
      %v8171 = vcvt.s32.f32 %v8155
      %v8172 = vcvt.s32.f32 %v8156
      %v8173 = vcvt.s32.f32 %v8157
      %8190 = vrot.lane.b32.xlu0 %v8158, 18
      %v8191 = vpop.permute.xlu0 %8190
      %8192 = vrot.lane.b32.xlu0 %v8159, 18
      %v8193 = vpop.permute.xlu0 %8192
      %8194 = vrot.lane.b32.xlu0 %v8160, 18
      %v8195 = vpop.permute.xlu0 %8194
      %8196 = vrot.lane.b32.xlu0 %v8161, 18
      %v8197 = vpop.permute.xlu0 %8196
      %8198 = vrot.lane.b32.xlu0 %v8162, 18
      %v8199 = vpop.permute.xlu0 %8198
      %8200 = vrot.lane.b32.xlu0 %v8163, 18
      %v8201 = vpop.permute.xlu0 %8200
      %8202 = vrot.lane.b32.xlu0 %v8164, 18
      %v8203 = vpop.permute.xlu0 %8202
      %8204 = vrot.lane.b32.xlu0 %v8165, 18
      %v8205 = vpop.permute.xlu0 %8204
      %8206 = vrot.lane.b32.xlu0 %v8166, 18
      %v8207 = vpop.permute.xlu0 %8206
      %8208 = vrot.lane.b32.xlu0 %v8167, 18
      %v8209 = vpop.permute.xlu0 %8208
      %8210 = vrot.lane.b32.xlu0 %v8168, 18
      %v8211 = vpop.permute.xlu0 %8210
      %8212 = vrot.lane.b32.xlu0 %v8169, 18
      %v8213 = vpop.permute.xlu0 %8212
      %8214 = vrot.lane.b32.xlu0 %v8170, 18
      %v8215 = vpop.permute.xlu0 %8214
      %8216 = vrot.lane.b32.xlu0 %v8171, 18
      %v8217 = vpop.permute.xlu0 %8216
      %8218 = vrot.lane.b32.xlu0 %v8172, 18
      %v8219 = vpop.permute.xlu0 %8218
      %8220 = vrot.lane.b32.xlu0 %v8173, 18
      %v8221 = vpop.permute.xlu0 %8220
      %v8238 = vmul.f32 %v342, %v8191
      %v8239 = vmul.f32 %v344, %v8193
      %v8240 = vmul.f32 %v346, %v8195
      %v8241 = vmul.f32 %v348, %v8197
      %v8242 = vmul.f32 %v350, %v8199
      %v8243 = vmul.f32 %v352, %v8201
      %v8244 = vmul.f32 %v354, %v8203
      %v8245 = vmul.f32 %v356, %v8205
      %v8246 = vmul.f32 %v358, %v8207
      %v8247 = vmul.f32 %v360, %v8209
      %v8248 = vmul.f32 %v362, %v8211
      %v8249 = vmul.f32 %v364, %v8213
      %v8250 = vmul.f32 %v366, %v8215
      %v8251 = vmul.f32 %v368, %v8217
      %v8252 = vmul.f32 %v370, %v8219
      %v8253 = vmul.f32 %v372, %v8221
      %8254 = vset.pattern.permute.xlu0 8
      %8255 = vperm.xlu0 %8254, %v6570
      %v8256 = vpop.permute.xlu0 %8255
      %8258 = vset.pattern.permute.xlu0 8
      %8259 = vperm.xlu0 %8258, %v6571
      %v8260 = vpop.permute.xlu0 %8259
      %8262 = vset.pattern.permute.xlu0 8
      %8263 = vperm.xlu0 %8262, %v6572
      %v8264 = vpop.permute.xlu0 %8263
      %8266 = vset.pattern.permute.xlu0 8
      %8267 = vperm.xlu0 %8266, %v6573
      %v8268 = vpop.permute.xlu0 %8267
      %8270 = vset.pattern.permute.xlu0 8
      %8271 = vperm.xlu0 %8270, %v6574
      %v8272 = vpop.permute.xlu0 %8271
      %8274 = vset.pattern.permute.xlu0 8
      %8275 = vperm.xlu0 %8274, %v6575
      %v8276 = vpop.permute.xlu0 %8275
      %8278 = vset.pattern.permute.xlu0 8
      %8279 = vperm.xlu0 %8278, %v6576
      %v8280 = vpop.permute.xlu0 %8279
      %8282 = vset.pattern.permute.xlu0 8
      %8283 = vperm.xlu0 %8282, %v6577
      %v8284 = vpop.permute.xlu0 %8283
      %8286 = vset.pattern.permute.xlu0 8
      %8287 = vperm.xlu0 %8286, %v6578
      %v8288 = vpop.permute.xlu0 %8287
      %8290 = vset.pattern.permute.xlu0 8
      %8291 = vperm.xlu0 %8290, %v6579
      %v8292 = vpop.permute.xlu0 %8291
      %8294 = vset.pattern.permute.xlu0 8
      %8295 = vperm.xlu0 %8294, %v6580
      %v8296 = vpop.permute.xlu0 %8295
      %8298 = vset.pattern.permute.xlu0 8
      %8299 = vperm.xlu0 %8298, %v6581
      %v8300 = vpop.permute.xlu0 %8299
      %8302 = vset.pattern.permute.xlu0 8
      %8303 = vperm.xlu0 %8302, %v6582
      %v8304 = vpop.permute.xlu0 %8303
      %8306 = vset.pattern.permute.xlu0 8
      %8307 = vperm.xlu0 %8306, %v6583
      %v8308 = vpop.permute.xlu0 %8307
      %8310 = vset.pattern.permute.xlu0 8
      %8311 = vperm.xlu0 %8310, %v6584
      %v8312 = vpop.permute.xlu0 %8311
      %8314 = vset.pattern.permute.xlu0 8
      %8315 = vperm.xlu0 %8314, %v6585
      %v8316 = vpop.permute.xlu0 %8315
      %v8318 = vsub.f32 %v8256, %v507
      %v8319 = vsub.f32 %v8260, %v507
      %v8320 = vsub.f32 %v8264, %v507
      %v8321 = vsub.f32 %v8268, %v507
      %v8322 = vsub.f32 %v8272, %v507
      %v8323 = vsub.f32 %v8276, %v507
      %v8324 = vsub.f32 %v8280, %v507
      %v8325 = vsub.f32 %v8284, %v507
      %v8326 = vsub.f32 %v8288, %v507
      %v8327 = vsub.f32 %v8292, %v507
      %v8328 = vsub.f32 %v8296, %v507
      %v8329 = vsub.f32 %v8300, %v507
      %v8330 = vsub.f32 %v8304, %v507
      %v8331 = vsub.f32 %v8308, %v507
      %v8332 = vsub.f32 %v8312, %v507
      %v8333 = vsub.f32 %v8316, %v507
      %v8334 = vand.u32 2147483647, %v8318
      %v8335 = vand.u32 2147483647, %v8319
      %v8336 = vand.u32 2147483647, %v8320
      %v8337 = vand.u32 2147483647, %v8321
      %v8338 = vand.u32 2147483647, %v8322
      %v8339 = vand.u32 2147483647, %v8323
      %v8340 = vand.u32 2147483647, %v8324
      %v8341 = vand.u32 2147483647, %v8325
      %v8342 = vand.u32 2147483647, %v8326
      %v8343 = vand.u32 2147483647, %v8327
      %v8344 = vand.u32 2147483647, %v8328
      %v8345 = vand.u32 2147483647, %v8329
      %v8346 = vand.u32 2147483647, %v8330
      %v8347 = vand.u32 2147483647, %v8331
      %v8348 = vand.u32 2147483647, %v8332
      %v8349 = vand.u32 2147483647, %v8333
      %v8350 = vsub.f32 1.0, %v8334
      %v8351 = vsub.f32 1.0, %v8335
      %v8352 = vsub.f32 1.0, %v8336
      %v8353 = vsub.f32 1.0, %v8337
      %v8354 = vsub.f32 1.0, %v8338
      %v8355 = vsub.f32 1.0, %v8339
      %v8356 = vsub.f32 1.0, %v8340
      %v8357 = vsub.f32 1.0, %v8341
      %v8358 = vsub.f32 1.0, %v8342
      %v8359 = vsub.f32 1.0, %v8343
      %v8360 = vsub.f32 1.0, %v8344
      %v8361 = vsub.f32 1.0, %v8345
      %v8362 = vsub.f32 1.0, %v8346
      %v8363 = vsub.f32 1.0, %v8347
      %v8364 = vsub.f32 1.0, %v8348
      %v8365 = vsub.f32 1.0, %v8349
      %v8366 = vmax.f32 %v8350, 0.0
      %v8367 = vmax.f32 %v8351, 0.0
      %v8368 = vmax.f32 %v8352, 0.0
      %v8369 = vmax.f32 %v8353, 0.0
      %v8370 = vmax.f32 %v8354, 0.0
      %v8371 = vmax.f32 %v8355, 0.0
      %v8372 = vmax.f32 %v8356, 0.0
      %v8373 = vmax.f32 %v8357, 0.0
      %v8374 = vmax.f32 %v8358, 0.0
      %v8375 = vmax.f32 %v8359, 0.0
      %v8376 = vmax.f32 %v8360, 0.0
      %v8377 = vmax.f32 %v8361, 0.0
      %v8378 = vmax.f32 %v8362, 0.0
      %v8379 = vmax.f32 %v8363, 0.0
      %v8380 = vmax.f32 %v8364, 0.0
      %v8381 = vmax.f32 %v8365, 0.0
      %8383 = vset.pattern.permute.xlu0 26
      %8384 = vperm.xlu0 %8383, %v8238
      %v8385 = vpop.permute.xlu0 %8384
      %8388 = vset.pattern.permute.xlu0 26
      %8389 = vperm.xlu0 %8388, %v8239
      %v8390 = vpop.permute.xlu0 %8389
      %8393 = vset.pattern.permute.xlu0 26
      %8394 = vperm.xlu0 %8393, %v8240
      %v8395 = vpop.permute.xlu0 %8394
      %8398 = vset.pattern.permute.xlu0 26
      %8399 = vperm.xlu0 %8398, %v8241
      %v8400 = vpop.permute.xlu0 %8399
      %8403 = vset.pattern.permute.xlu0 26
      %8404 = vperm.xlu0 %8403, %v8242
      %v8405 = vpop.permute.xlu0 %8404
      %8408 = vset.pattern.permute.xlu0 26
      %8409 = vperm.xlu0 %8408, %v8243
      %v8410 = vpop.permute.xlu0 %8409
      %8413 = vset.pattern.permute.xlu0 26
      %8414 = vperm.xlu0 %8413, %v8244
      %v8415 = vpop.permute.xlu0 %8414
      %8418 = vset.pattern.permute.xlu0 26
      %8419 = vperm.xlu0 %8418, %v8245
      %v8420 = vpop.permute.xlu0 %8419
      %8423 = vset.pattern.permute.xlu0 26
      %8424 = vperm.xlu0 %8423, %v8246
      %v8425 = vpop.permute.xlu0 %8424
      %8428 = vset.pattern.permute.xlu0 26
      %8429 = vperm.xlu0 %8428, %v8247
      %v8430 = vpop.permute.xlu0 %8429
      %8433 = vset.pattern.permute.xlu0 26
      %8434 = vperm.xlu0 %8433, %v8248
      %v8435 = vpop.permute.xlu0 %8434
      %8438 = vset.pattern.permute.xlu0 26
      %8439 = vperm.xlu0 %8438, %v8249
      %v8440 = vpop.permute.xlu0 %8439
      %8443 = vset.pattern.permute.xlu0 26
      %8444 = vperm.xlu0 %8443, %v8250
      %v8445 = vpop.permute.xlu0 %8444
      %8448 = vset.pattern.permute.xlu0 26
      %8449 = vperm.xlu0 %8448, %v8251
      %v8450 = vpop.permute.xlu0 %8449
      %8453 = vset.pattern.permute.xlu0 26
      %8454 = vperm.xlu0 %8453, %v8252
      %v8455 = vpop.permute.xlu0 %8454
      %8458 = vset.pattern.permute.xlu0 26
      %8459 = vperm.xlu0 %8458, %v8253
      %v8460 = vpop.permute.xlu0 %8459
      %v8462 = vmul.f32 %v8366, %v8385
      %v8463 = vmul.f32 %v8367, %v8390
      %v8464 = vmul.f32 %v8368, %v8395
      %v8465 = vmul.f32 %v8369, %v8400
      %v8466 = vmul.f32 %v8370, %v8405
      %v8467 = vmul.f32 %v8371, %v8410
      %v8468 = vmul.f32 %v8372, %v8415
      %v8469 = vmul.f32 %v8373, %v8420
      %v8470 = vmul.f32 %v8374, %v8425
      %v8471 = vmul.f32 %v8375, %v8430
      %v8472 = vmul.f32 %v8376, %v8435
      %v8473 = vmul.f32 %v8377, %v8440
      %v8474 = vmul.f32 %v8378, %v8445
      %v8475 = vmul.f32 %v8379, %v8450
      %v8476 = vmul.f32 %v8380, %v8455
      %v8477 = vmul.f32 %v8381, %v8460
      %8478 = vset.pattern.permute.xlu0 17
      %8479 = vperm.xlu0 %8478, %v3266
      %v8480 = vpop.permute.xlu0 %8479
      %8482 = vset.pattern.permute.xlu0 17
      %8483 = vperm.xlu0 %8482, %v3267
      %v8484 = vpop.permute.xlu0 %8483
      %8486 = vset.pattern.permute.xlu0 17
      %8487 = vperm.xlu0 %8486, %v3268
      %v8488 = vpop.permute.xlu0 %8487
      %8490 = vset.pattern.permute.xlu0 17
      %8491 = vperm.xlu0 %8490, %v3269
      %v8492 = vpop.permute.xlu0 %8491
      %8494 = vset.pattern.permute.xlu0 17
      %8495 = vperm.xlu0 %8494, %v3270
      %v8496 = vpop.permute.xlu0 %8495
      %8498 = vset.pattern.permute.xlu0 17
      %8499 = vperm.xlu0 %8498, %v3271
      %v8500 = vpop.permute.xlu0 %8499
      %8502 = vset.pattern.permute.xlu0 17
      %8503 = vperm.xlu0 %8502, %v3272
      %v8504 = vpop.permute.xlu0 %8503
      %8506 = vset.pattern.permute.xlu0 17
      %8507 = vperm.xlu0 %8506, %v3273
      %v8508 = vpop.permute.xlu0 %8507
      %8510 = vset.pattern.permute.xlu0 17
      %8511 = vperm.xlu0 %8510, %v3274
      %v8512 = vpop.permute.xlu0 %8511
      %8514 = vset.pattern.permute.xlu0 17
      %8515 = vperm.xlu0 %8514, %v3275
      %v8516 = vpop.permute.xlu0 %8515
      %8518 = vset.pattern.permute.xlu0 17
      %8519 = vperm.xlu0 %8518, %v3276
      %v8520 = vpop.permute.xlu0 %8519
      %8522 = vset.pattern.permute.xlu0 17
      %8523 = vperm.xlu0 %8522, %v3277
      %v8524 = vpop.permute.xlu0 %8523
      %8526 = vset.pattern.permute.xlu0 17
      %8527 = vperm.xlu0 %8526, %v3278
      %v8528 = vpop.permute.xlu0 %8527
      %8530 = vset.pattern.permute.xlu0 17
      %8531 = vperm.xlu0 %8530, %v3279
      %v8532 = vpop.permute.xlu0 %8531
      %8534 = vset.pattern.permute.xlu0 17
      %8535 = vperm.xlu0 %8534, %v3280
      %v8536 = vpop.permute.xlu0 %8535
      %8538 = vset.pattern.permute.xlu0 17
      %8539 = vperm.xlu0 %8538, %v3281
      %v8540 = vpop.permute.xlu0 %8539
      %v8542 = vsub.f32 %v8480, %v510
      %v8543 = vsub.f32 %v8484, %v510
      %v8544 = vsub.f32 %v8488, %v510
      %v8545 = vsub.f32 %v8492, %v510
      %v8546 = vsub.f32 %v8496, %v510
      %v8547 = vsub.f32 %v8500, %v510
      %v8548 = vsub.f32 %v8504, %v510
      %v8549 = vsub.f32 %v8508, %v510
      %v8550 = vsub.f32 %v8512, %v510
      %v8551 = vsub.f32 %v8516, %v510
      %v8552 = vsub.f32 %v8520, %v510
      %v8553 = vsub.f32 %v8524, %v510
      %v8554 = vsub.f32 %v8528, %v510
      %v8555 = vsub.f32 %v8532, %v510
      %v8556 = vsub.f32 %v8536, %v510
      %v8557 = vsub.f32 %v8540, %v510
      %v8558 = vand.u32 2147483647, %v8542
      %v8559 = vand.u32 2147483647, %v8543
      %v8560 = vand.u32 2147483647, %v8544
      %v8561 = vand.u32 2147483647, %v8545
      %v8562 = vand.u32 2147483647, %v8546
      %v8563 = vand.u32 2147483647, %v8547
      %v8564 = vand.u32 2147483647, %v8548
      %v8565 = vand.u32 2147483647, %v8549
      %v8566 = vand.u32 2147483647, %v8550
      %v8567 = vand.u32 2147483647, %v8551
      %v8568 = vand.u32 2147483647, %v8552
      %v8569 = vand.u32 2147483647, %v8553
      %v8570 = vand.u32 2147483647, %v8554
      %v8571 = vand.u32 2147483647, %v8555
      %v8572 = vand.u32 2147483647, %v8556
      %v8573 = vand.u32 2147483647, %v8557
      %v8574 = vsub.f32 1.0, %v8558
      %v8575 = vsub.f32 1.0, %v8559
      %v8576 = vsub.f32 1.0, %v8560
      %v8577 = vsub.f32 1.0, %v8561
      %v8578 = vsub.f32 1.0, %v8562
      %v8579 = vsub.f32 1.0, %v8563
      %v8580 = vsub.f32 1.0, %v8564
      %v8581 = vsub.f32 1.0, %v8565
      %v8582 = vsub.f32 1.0, %v8566
      %v8583 = vsub.f32 1.0, %v8567
      %v8584 = vsub.f32 1.0, %v8568
      %v8585 = vsub.f32 1.0, %v8569
      %v8586 = vsub.f32 1.0, %v8570
      %v8587 = vsub.f32 1.0, %v8571
      %v8588 = vsub.f32 1.0, %v8572
      %v8589 = vsub.f32 1.0, %v8573
      %v8590 = vmax.f32 %v8574, 0.0
      %v8591 = vmax.f32 %v8575, 0.0
      %v8592 = vmax.f32 %v8576, 0.0
      %v8593 = vmax.f32 %v8577, 0.0
      %v8594 = vmax.f32 %v8578, 0.0
      %v8595 = vmax.f32 %v8579, 0.0
      %v8596 = vmax.f32 %v8580, 0.0
      %v8597 = vmax.f32 %v8581, 0.0
      %v8598 = vmax.f32 %v8582, 0.0
      %v8599 = vmax.f32 %v8583, 0.0
      %v8600 = vmax.f32 %v8584, 0.0
      %v8601 = vmax.f32 %v8585, 0.0
      %v8602 = vmax.f32 %v8586, 0.0
      %v8603 = vmax.f32 %v8587, 0.0
      %v8604 = vmax.f32 %v8588, 0.0
      %v8605 = vmax.f32 %v8589, 0.0
      %v8606 = vpack.c.bf16 %v8463, %v8462
      %v8607 = vpack.c.bf16 %v8465, %v8464
      %v8608 = vpack.c.bf16 %v8467, %v8466
      %v8609 = vpack.c.bf16 %v8469, %v8468
      %v8610 = vpack.c.bf16 %v8471, %v8470
      %v8611 = vpack.c.bf16 %v8473, %v8472
      %v8612 = vpack.c.bf16 %v8475, %v8474
      %v8613 = vpack.c.bf16 %v8477, %v8476
      %v8615 = vsel %vm1360, %v8606, 0
      %v8618 = vsel %vm1360, %v8607, 0
      %v8621 = vsel %vm1360, %v8608, 0
      %v8624 = vsel %vm1360, %v8609, 0
      %v8627 = vsel %vm1360, %v8610, 0
      %v8630 = vsel %vm1360, %v8611, 0
      %v8633 = vsel %vm1360, %v8612, 0
      %v8636 = vsel %vm1360, %v8613, 0
      %8638 = vmatprep.subr.bf16.mxu0 0
      %8639 = vmatpush1.bf16.msra.mxu0 %v1357
      %8640 = vmatprep.subr.bf16.mxu0 0
      %8641 = vmatpush1.bf16.msra.mxu0 %v1387
      %8642 = vmatprep.subr.bf16.mxu0 0
      %8643 = vmatpush1.bf16.msra.mxu0 0
      %8644 = vmatprep.subr.bf16.mxu0 0
      %8645 = vmatpush1.bf16.msra.mxu0 0
      %8646 = vmatprep.subr.bf16.mxu0 0
      %8647 = vmatpush1.bf16.msra.mxu0 0
      %8648 = vmatprep.subr.bf16.mxu0 0
      %8649 = vmatpush1.bf16.msra.mxu0 0
      %8650 = vmatprep.subr.bf16.mxu0 0
      %8651 = vmatpush1.bf16.msra.mxu0 0
      %8652 = vmatprep.subr.bf16.mxu0 0
      %8653 = vmatpush1.bf16.msra.mxu0 0
      %8654 = vmatprep.subr.bf16.mxu0 0
      %8655 = vmatpush1.bf16.msra.mxu0 0
      %8656 = vmatprep.subr.bf16.mxu0 0
      %8657 = vmatpush1.bf16.msra.mxu0 0
      %8658 = vmatprep.subr.bf16.mxu0 0
      %8659 = vmatpush1.bf16.msra.mxu0 0
      %8660 = vmatprep.subr.bf16.mxu0 0
      %8661 = vmatpush1.bf16.msra.mxu0 0
      %8662 = vmatprep.subr.bf16.mxu0 0
      %8663 = vmatpush1.bf16.msra.mxu0 0
      %8664 = vmatprep.subr.bf16.mxu0 0
      %8665 = vmatpush1.bf16.msra.mxu0 0
      %8666 = vmatprep.subr.bf16.mxu0 0
      %8667 = vmatpush1.bf16.msra.mxu0 0
      %8668 = vmatprep.subr.bf16.mxu0 0
      %8669 = vmatpush1.bf16.msra.mxu0 0
      %8670 = vmatprep.mubr.bf16.mxu0 0
      %8671 = vmatmul.mubr.bf16.gmra.mrb[0].mxu0 %v8615
      %v8672 = vpop.f32.mrb[0].mxu0
      %v8673 = vadd.f32 0.0, %v8672
      %v8674 = vpop.f32.mrb[0].mxu0
      %v8675 = vpop.f32.mrb[0].mxu0
      %v8676 = vadd.f32 0.0, %v8675
      %v8677 = vpop.f32.mrb[0].mxu0
      %8678 = vmatprep.mubr.bf16.mxu0 0
      %8679 = vmatmul.mubr.bf16.gmra.mrb[0].mxu0 %v8618
      %v8680 = vpop.f32.mrb[0].mxu0
      %v8681 = vadd.f32 0.0, %v8680
      %v8682 = vpop.f32.mrb[0].mxu0
      %v8683 = vpop.f32.mrb[0].mxu0
      %v8684 = vadd.f32 0.0, %v8683
      %v8685 = vpop.f32.mrb[0].mxu0
      %8686 = vmatprep.mubr.bf16.mxu0 0
      %8687 = vmatmul.mubr.bf16.gmra.mrb[0].mxu0 %v8621
      %v8688 = vpop.f32.mrb[0].mxu0
      %v8689 = vadd.f32 0.0, %v8688
      %v8690 = vpop.f32.mrb[0].mxu0
      %v8691 = vpop.f32.mrb[0].mxu0
      %v8692 = vadd.f32 0.0, %v8691
      %v8693 = vpop.f32.mrb[0].mxu0
      %8694 = vmatprep.mubr.bf16.mxu0 0
      %8695 = vmatmul.mubr.bf16.gmra.mrb[0].mxu0 %v8624
      %v8696 = vpop.f32.mrb[0].mxu0
      %v8697 = vadd.f32 0.0, %v8696
      %v8698 = vpop.f32.mrb[0].mxu0
      %v8699 = vpop.f32.mrb[0].mxu0
      %v8700 = vadd.f32 0.0, %v8699
      %v8701 = vpop.f32.mrb[0].mxu0
      %8702 = vmatprep.mubr.bf16.mxu0 0
      %8703 = vmatmul.mubr.bf16.gmra.mrb[0].mxu0 %v8627
      %v8704 = vpop.f32.mrb[0].mxu0
      %v8705 = vadd.f32 0.0, %v8704
      %v8706 = vpop.f32.mrb[0].mxu0
      %v8707 = vpop.f32.mrb[0].mxu0
      %v8708 = vadd.f32 0.0, %v8707
      %v8709 = vpop.f32.mrb[0].mxu0
      %8710 = vmatprep.mubr.bf16.mxu0 0
      %8711 = vmatmul.mubr.bf16.gmra.mrb[0].mxu0 %v8630
      %v8712 = vpop.f32.mrb[0].mxu0
      %v8713 = vadd.f32 0.0, %v8712
      %v8714 = vpop.f32.mrb[0].mxu0
      %v8715 = vpop.f32.mrb[0].mxu0
      %v8716 = vadd.f32 0.0, %v8715
      %v8717 = vpop.f32.mrb[0].mxu0
      %8718 = vmatprep.mubr.bf16.mxu0 0
      %8719 = vmatmul.mubr.bf16.gmra.mrb[0].mxu0 %v8633
      %v8720 = vpop.f32.mrb[0].mxu0
      %v8721 = vadd.f32 0.0, %v8720
      %v8722 = vpop.f32.mrb[0].mxu0
      %v8723 = vpop.f32.mrb[0].mxu0
      %v8724 = vadd.f32 0.0, %v8723
      %v8725 = vpop.f32.mrb[0].mxu0
      %8726 = vmatprep.mubr.bf16.mxu0 0
      %8727 = vmatmul.mubr.bf16.gmra.mrb[0].mxu0 %v8636
      %v8728 = vpop.f32.mrb[0].mxu0
      %v8729 = vadd.f32 0.0, %v8728
      %v8730 = vpop.f32.mrb[0].mxu0
      %v8731 = vpop.f32.mrb[0].mxu0
      %v8732 = vadd.f32 0.0, %v8731
      %v8733 = vpop.f32.mrb[0].mxu0
      %8734 = vdwg.mxu0
      %v8735 = vmul.f32 %v8673, %v8590
      %v8736 = vmul.f32 %v8676, %v8591
      %v8737 = vmul.f32 %v8681, %v8592
      %v8738 = vmul.f32 %v8684, %v8593
      %v8739 = vmul.f32 %v8689, %v8594
      %v8740 = vmul.f32 %v8692, %v8595
      %v8741 = vmul.f32 %v8697, %v8596
      %v8742 = vmul.f32 %v8700, %v8597
      %v8743 = vmul.f32 %v8705, %v8598
      %v8744 = vmul.f32 %v8708, %v8599
      %v8745 = vmul.f32 %v8713, %v8600
      %v8746 = vmul.f32 %v8716, %v8601
      %v8747 = vmul.f32 %v8721, %v8602
      %v8748 = vmul.f32 %v8724, %v8603
      %v8749 = vmul.f32 %v8729, %v8604
      %v8750 = vmul.f32 %v8732, %v8605
      %v8751 = vpack.c.bf16 %v8736, %v8735
      %v8752 = vpack.c.bf16 %v8738, %v8737
      %v8753 = vpack.c.bf16 %v8740, %v8739
      %v8754 = vpack.c.bf16 %v8742, %v8741
      %v8755 = vpack.c.bf16 %v8744, %v8743
      %v8756 = vpack.c.bf16 %v8746, %v8745
      %v8757 = vpack.c.bf16 %v8748, %v8747
      %v8758 = vpack.c.bf16 %v8750, %v8749
      %s8759 = scalar_lea.vmem %s2, 288
      %v8760 = vld [vmem:[%s8759] sm:$0xf]
      %v8761 = vld [vmem:[%s8759 + $0x4] sm:$0xf]
      %v8762 = vld [vmem:[%s8759 + $0x8] sm:$0xf]
      %v8763 = vld [vmem:[%s8759 + $0xc] sm:$0xf]
      %v8764 = vld [vmem:[%s8759 + $0x10] sm:$0xf]
      %v8765 = vld [vmem:[%s8759 + $0x14] sm:$0xf]
      %v8766 = vld [vmem:[%s8759 + $0x18] sm:$0xf]
      %v8767 = vld [vmem:[%s8759 + $0x1c] sm:$0xf]
      %v8768 = vld [vmem:[%s8759 + $0x20] sm:$0xf]
      %v8778 = vunpack.c.l.b16 %v8760
      %v8779 = vunpack.c.l.b16 %v8761
      %v8780 = vunpack.c.l.b16 %v8762
      %v8781 = vunpack.c.l.b16 %v8763
      %v8782 = vunpack.c.l.b16 %v8764
      %v8783 = vunpack.c.l.b16 %v8765
      %v8784 = vunpack.c.l.b16 %v8766
      %v8785 = vunpack.c.l.b16 %v8767
      %v8786 = vunpack.c.l.b16 %v8768
      %v8787 = vpack.c.b16 %v8779, %v8778
      %v8788 = vpack.c.b16 %v8781, %v8780
      %v8789 = vpack.c.b16 %v8783, %v8782
      %v8790 = vpack.c.b16 %v8785, %v8784
      %v8791 = vpack.c.b16 %v8786, %v8786
      %v8797 = vsel %vm2429, %v8751, 0
      %v8800 = vsel %vm2429, %v8752, 0
      %v8803 = vsel %vm2429, %v8753, 0
      %v8806 = vsel %vm2429, %v8754, 0
      %v8809 = vsel %vm2429, %v8755, 0
      %v8812 = vsel %vm2429, %v8756, 0
      %v8815 = vsel %vm2429, %v8757, 0
      %v8818 = vsel %vm2429, %v8758, 0
      %v8821 = vsel %vm2454, %v8791, 0
      %8823 = vmatprep.subr.bf16.mxu0 0
      %8824 = vmatpush1.bf16.msra.mxu0 %v8787
      %8825 = vmatprep.subr.bf16.mxu0 0
      %8826 = vmatpush1.bf16.msra.mxu0 %v8788
      %8827 = vmatprep.subr.bf16.mxu0 0
      %8828 = vmatpush1.bf16.msra.mxu0 %v8789
      %8829 = vmatprep.subr.bf16.mxu0 0
      %8830 = vmatpush1.bf16.msra.mxu0 %v8790
      %8831 = vmatprep.subr.bf16.mxu0 0
      %8832 = vmatpush1.bf16.msra.mxu0 %v8821
      %8833 = vmatprep.subr.bf16.mxu0 0
      %8834 = vmatpush1.bf16.msra.mxu0 0
      %8835 = vmatprep.subr.bf16.mxu0 0
      %8836 = vmatpush1.bf16.msra.mxu0 0
      %8837 = vmatprep.subr.bf16.mxu0 0
      %8838 = vmatpush1.bf16.msra.mxu0 0
      %8839 = vmatprep.subr.bf16.mxu0 0
      %8840 = vmatpush1.bf16.msra.mxu0 0
      %8841 = vmatprep.subr.bf16.mxu0 0
      %8842 = vmatpush1.bf16.msra.mxu0 0
      %8843 = vmatprep.subr.bf16.mxu0 0
      %8844 = vmatpush1.bf16.msra.mxu0 0
      %8845 = vmatprep.subr.bf16.mxu0 0
      %8846 = vmatpush1.bf16.msra.mxu0 0
      %8847 = vmatprep.subr.bf16.mxu0 0
      %8848 = vmatpush1.bf16.msra.mxu0 0
      %8849 = vmatprep.subr.bf16.mxu0 0
      %8850 = vmatpush1.bf16.msra.mxu0 0
      %8851 = vmatprep.subr.bf16.mxu0 0
      %8852 = vmatpush1.bf16.msra.mxu0 0
      %8853 = vmatprep.subr.bf16.mxu0 0
      %8854 = vmatpush1.bf16.msra.mxu0 0
      %8855 = vmatprep.mubr.bf16.mxu0 0
      %8856 = vmatmul.mubr.bf16.gmra.mrb[0].mxu0 %v8797
      %v8857 = vpop.f32.mrb[0].mxu0
      %v8858 = vadd.f32 0.0, %v8857
      %v8859 = vpop.f32.mrb[0].mxu0
      %v8860 = vpop.f32.mrb[0].mxu0
      %v8861 = vadd.f32 0.0, %v8860
      %v8862 = vpop.f32.mrb[0].mxu0
      %8863 = vmatprep.mubr.bf16.mxu0 0
      %8864 = vmatmul.mubr.bf16.gmra.mrb[0].mxu0 %v8800
      %v8865 = vpop.f32.mrb[0].mxu0
      %v8866 = vadd.f32 0.0, %v8865
      %v8867 = vpop.f32.mrb[0].mxu0
      %v8868 = vpop.f32.mrb[0].mxu0
      %v8869 = vadd.f32 0.0, %v8868
      %v8870 = vpop.f32.mrb[0].mxu0
      %8871 = vmatprep.mubr.bf16.mxu0 0
      %8872 = vmatmul.mubr.bf16.gmra.mrb[0].mxu0 %v8803
      %v8873 = vpop.f32.mrb[0].mxu0
      %v8874 = vadd.f32 0.0, %v8873
      %v8875 = vpop.f32.mrb[0].mxu0
      %v8876 = vpop.f32.mrb[0].mxu0
      %v8877 = vadd.f32 0.0, %v8876
      %v8878 = vpop.f32.mrb[0].mxu0
      %8879 = vmatprep.mubr.bf16.mxu0 0
      %8880 = vmatmul.mubr.bf16.gmra.mrb[0].mxu0 %v8806
      %v8881 = vpop.f32.mrb[0].mxu0
      %v8882 = vadd.f32 0.0, %v8881
      %v8883 = vpop.f32.mrb[0].mxu0
      %v8884 = vpop.f32.mrb[0].mxu0
      %v8885 = vadd.f32 0.0, %v8884
      %v8886 = vpop.f32.mrb[0].mxu0
      %8887 = vmatprep.mubr.bf16.mxu0 0
      %8888 = vmatmul.mubr.bf16.gmra.mrb[0].mxu0 %v8809
      %v8889 = vpop.f32.mrb[0].mxu0
      %v8890 = vadd.f32 0.0, %v8889
      %v8891 = vpop.f32.mrb[0].mxu0
      %v8892 = vpop.f32.mrb[0].mxu0
      %v8893 = vadd.f32 0.0, %v8892
      %v8894 = vpop.f32.mrb[0].mxu0
      %8895 = vmatprep.mubr.bf16.mxu0 0
      %8896 = vmatmul.mubr.bf16.gmra.mrb[0].mxu0 %v8812
      %v8897 = vpop.f32.mrb[0].mxu0
      %v8898 = vadd.f32 0.0, %v8897
      %v8899 = vpop.f32.mrb[0].mxu0
      %v8900 = vpop.f32.mrb[0].mxu0
      %v8901 = vadd.f32 0.0, %v8900
      %v8902 = vpop.f32.mrb[0].mxu0
      %8903 = vmatprep.mubr.bf16.mxu0 0
      %8904 = vmatmul.mubr.bf16.gmra.mrb[0].mxu0 %v8815
      %v8905 = vpop.f32.mrb[0].mxu0
      %v8906 = vadd.f32 0.0, %v8905
      %v8907 = vpop.f32.mrb[0].mxu0
      %v8908 = vpop.f32.mrb[0].mxu0
      %v8909 = vadd.f32 0.0, %v8908
      %v8910 = vpop.f32.mrb[0].mxu0
      %8911 = vmatprep.mubr.bf16.mxu0 0
      %8912 = vmatmul.mubr.bf16.gmra.mrb[0].mxu0 %v8818
      %v8913 = vpop.f32.mrb[0].mxu0
      %v8914 = vadd.f32 0.0, %v8913
      %v8915 = vpop.f32.mrb[0].mxu0
      %v8916 = vpop.f32.mrb[0].mxu0
      %v8917 = vadd.f32 0.0, %v8916
      %v8918 = vpop.f32.mrb[0].mxu0
      %8919 = vdwg.mxu0
      %v8920 = vadd.f32 %v8094, %v8858
      %v8921 = vadd.f32 %v8095, %v8861
      %v8922 = vadd.f32 %v8096, %v8866
      %v8923 = vadd.f32 %v8097, %v8869
      %v8924 = vadd.f32 %v8098, %v8874
      %v8925 = vadd.f32 %v8099, %v8877
      %v8926 = vadd.f32 %v8100, %v8882
      %v8927 = vadd.f32 %v8101, %v8885
      %v8928 = vadd.f32 %v8102, %v8890
      %v8929 = vadd.f32 %v8103, %v8893
      %v8930 = vadd.f32 %v8104, %v8898
      %v8931 = vadd.f32 %v8105, %v8901
      %v8932 = vadd.f32 %v8106, %v8906
      %v8933 = vadd.f32 %v8107, %v8909
      %v8934 = vadd.f32 %v8108, %v8914
      %v8935 = vadd.f32 %v8109, %v8917
      %v8936 = vld [vmem:[%s3] sm:$0x1]
      %v8938 = vlaneseq
      %v8939 = vshrl.u32 %v8938, 7
      %v8940 = vsub.s32 0, %v8939
      %v8941 = vrot.slane %v8936, %v8940
      %v8943 = vadd.f32 %v8920, %v8941
      %v8944 = vadd.f32 %v8921, %v8941
      %v8945 = vadd.f32 %v8922, %v8941
      %v8946 = vadd.f32 %v8923, %v8941
      %v8947 = vadd.f32 %v8924, %v8941
      %v8948 = vadd.f32 %v8925, %v8941
      %v8949 = vadd.f32 %v8926, %v8941
      %v8950 = vadd.f32 %v8927, %v8941
      %v8951 = vadd.f32 %v8928, %v8941
      %v8952 = vadd.f32 %v8929, %v8941
      %v8953 = vadd.f32 %v8930, %v8941
      %v8954 = vadd.f32 %v8931, %v8941
      %v8955 = vadd.f32 %v8932, %v8941
      %v8956 = vadd.f32 %v8933, %v8941
      %v8957 = vadd.f32 %v8934, %v8941
      %v8958 = vadd.f32 %v8935, %v8941
      %v8959 = vmax.f32 %v8943, 0.0
      %v8960 = vmax.f32 %v8944, 0.0
      %v8961 = vmax.f32 %v8945, 0.0
      %v8962 = vmax.f32 %v8946, 0.0
      %v8963 = vmax.f32 %v8947, 0.0
      %v8964 = vmax.f32 %v8948, 0.0
      %v8965 = vmax.f32 %v8949, 0.0
      %v8966 = vmax.f32 %v8950, 0.0
      %v8967 = vmax.f32 %v8951, 0.0
      %v8968 = vmax.f32 %v8952, 0.0
      %v8969 = vmax.f32 %v8953, 0.0
      %v8970 = vmax.f32 %v8954, 0.0
      %v8971 = vmax.f32 %v8955, 0.0
      %v8972 = vmax.f32 %v8956, 0.0
      %v8973 = vmax.f32 %v8957, 0.0
      %v8974 = vmax.f32 %v8958, 0.0
      %vm8975 = vcmask 64512
      %8976 = vst.msk [vmem:[%s255] sm:$0xff] %vm8975, %v8959
      %8977 = vst.msk [vmem:[%s255 + $0x8] sm:$0xff] %vm8975, %v8960
      %8978 = vst.msk [vmem:[%s255 + $0x10] sm:$0xff] %vm8975, %v8961
      %8979 = vst.msk [vmem:[%s255 + $0x18] sm:$0xff] %vm8975, %v8962
      %8980 = vst.msk [vmem:[%s255 + $0x20] sm:$0xff] %vm8975, %v8963
      %8981 = vst.msk [vmem:[%s255 + $0x28] sm:$0xff] %vm8975, %v8964
      %8982 = vst.msk [vmem:[%s255 + $0x30] sm:$0xff] %vm8975, %v8965
      %8983 = vst.msk [vmem:[%s255 + $0x38] sm:$0xff] %vm8975, %v8966
      %8984 = vst.msk [vmem:[%s255 + $0x40] sm:$0xff] %vm8975, %v8967
      %8985 = vst.msk [vmem:[%s255 + $0x48] sm:$0xff] %vm8975, %v8968
      %8986 = vst.msk [vmem:[%s255 + $0x50] sm:$0xff] %vm8975, %v8969
      %8987 = vst.msk [vmem:[%s255 + $0x58] sm:$0xff] %vm8975, %v8970
      %8988 = vst.msk [vmem:[%s255 + $0x60] sm:$0xff] %vm8975, %v8971
      %8989 = vst.msk [vmem:[%s255 + $0x68] sm:$0xff] %vm8975, %v8972
      %8990 = vst.msk [vmem:[%s255 + $0x70] sm:$0xff] %vm8975, %v8973
      %8991 = vst.msk [vmem:[%s255 + $0x78] sm:$0xff] %vm8975, %v8974
      %s8992 = smul.u32 16, %s20
      %p8993 = scmp.lt.s32.totalorder %s19, 1
      %s8994 = scalar_select %p8993, %s19, 1
      %p8995 = scmp.lt.s32.totalorder %s8992, 31
      %s8996 = scalar_select %p8995, %s8992, 31
      %s8997 = smul.addr %s8994, 32
      %s8998 = sadd.s32 %s8996, %s8997
      %s8999 = smul.addr %s8998, 8
      %s9000 = scalar_lea.vmem %s4, %s8999
      // Predicated region
      $region37: #{tpu_custom_call.1} parent=35 // pred_check
        %p9001 = pneg %p143
      $region38: #{tpu_custom_call.1} parent=35 // pred_check_branch
        %9003 = sbr.rel (%p9001) target = $region40
      $region39: #{tpu_custom_call.1} parent=35 // pred_region
        %s9004 = smul.u32 16, %s20
      $region40: #{tpu_custom_call.1} parent=35 // pred_fallthru
        _
    $region36: #{tpu_custom_call.1} parent=5 // pred_fallthru
      _
    %p9005 = scmp.le.s32.totalorder 2, %s10
    // Predicated region
    $region41: #{tpu_custom_call.1} parent=5 // pred_check
      %p9006 = pneg %p9005
    $region42: #{tpu_custom_call.1} parent=5 // pred_check_branch
      %9008 = sbr.rel (%p9006) target = $region44
    $region43: #{tpu_custom_call.1} parent=5 // pred_region
      %s9009 = ssub.s32 %s10, 2
      // Predicated region
      $region45: #{tpu_custom_call.1} parent=43 // pred_check
        %p9010 = pneg %p149
      $region46: #{tpu_custom_call.1} parent=43 // pred_check_branch
        %9012 = sbr.rel (%p9010) target = $region48
      $region47: #{tpu_custom_call.1} parent=43 // pred_region
        %s9013 = smul.u32 16, %s22
        %p9014 = scmp.lt.s32.totalorder %s21, 1
        %s9015 = scalar_select %p9014, %s21, 1
        %p9016 = scmp.lt.s32.totalorder %s9013, 31
        %s9017 = scalar_select %p9016, %s9013, 31
        %s9018 = smul.addr %s9015, 32
        %s9019 = sadd.s32 %s9017, %s9018
        %s9020 = smul.addr %s9019, 8
        %s9021 = scalar_lea.vmem %s4, %s9020
      $region48: #{tpu_custom_call.1} parent=43 // pred_fallthru
        _
    $region44: #{tpu_custom_call.1} parent=5 // pred_fallthru
      _
  $region6: #{tpu_custom_call.1} parent=0 // loop_footer
    %s14 = sadd.s32 1, %s10
  $region7: #{tpu_custom_call.1} parent=0 // loop_footer_branch
    %9 = sbr.rel target = $region3
  $region8: #{tpu_custom_call.1} parent=0 // loop_exit
    _

</llo_original>
